<compile_context>
chip_gen: v6e
topology: v6e:2x2x1
jax: 0.10.0
libtpu: 0.0.40
codegen_flags: <defaults>
</compile_context>

<pallas_src>
import functools

import jax
import jax.numpy as jnp
from jax.experimental import pallas as pl
from jax.experimental.pallas import tpu as pltpu

EPS = 1e-5
_LANE = 128


# ----------------------------------------------------------------------------
# Small layout helpers (plain JAX, run once per call).
# ----------------------------------------------------------------------------
def _round_up(n, m=_LANE):
    return ((n + m - 1) // m) * m


def _pad_axis(a, axis, target):
    pad = target - a.shape[axis]
    if pad == 0:
        return a
    cfg = [(0, 0)] * a.ndim
    cfg[axis] = (0, pad)
    return jnp.pad(a, cfg)


def _fold_weights(w_hwio, cin_p, cout_p):
    """(3,3,Cin,Cout) HWIO -> (kh, Cin_p, 3*Cout_p), kw folded into matmul N.

    result[kh, ci, kw*Cout_p + co] == w[kh, kw, ci, co]
    """
    kh, kw, cin, cout = w_hwio.shape
    wp = jnp.pad(w_hwio, ((0, 0), (0, 0), (0, cin_p - cin), (0, cout_p - cout)))
    return jnp.transpose(wp, (0, 2, 1, 3)).reshape(kh, cin_p, kw * cout_p)


def _pick_tile_h(H, W, cin_p, cout_p, budget_bytes=8 * 1024 * 1024):
    """Largest divisor of H whose per-grid-step VMEM footprint fits the budget.

    Conservative budget keeps the kernel under the scoped-VMEM defaults of all
    TPU generations (v5e 16 MiB, v6e 32 MiB, v7x 32 MiB scoped / 64 MiB phys).
    """
    def est(th):
        x_blk = 2 * th * W * cin_p            # double-buffered input block
        x_val = (th + 2) * W * cin_p          # in-kernel activation value (+halo)
        acc = th * W * 3 * cout_p             # matmul accumulator (kw folded in N)
        out = 2 * th * W * cout_p             # conv output value + shifted temps
        y_blk = 2 * th * W * cout_p           # double-buffered output block
        return 4 * (x_blk + x_val + acc + out + y_blk)

    for th in range(min(H, 256), 0, -1):
        if H % th == 0 and est(th) <= budget_bytes:
            return th
    return 1


# ----------------------------------------------------------------------------
# Kernel 1: 3x3 "same" conv (no bias), optionally with the previous layer's
# BN scale/shift + ReLU fused into the input load, plus per-tile partial
# per-channel sum / sum-of-squares (for the BatchNorm batch statistics).
# ----------------------------------------------------------------------------
def _conv3x3_kernel(x_blk_ref, x_any_ref, w_ref, scale_ref, shift_ref,
                    y_ref, psum_ref, pssq_ref,
                    halo_ref, sem, *, fuse_bn_relu):
    # x_blk_ref: (1, TH, W, Cin)       auto-pipelined row block
    # x_any_ref: (N, H, W, Cin)        raw HBM alias (halo rows only)
    # w_ref:     (3, Cin, 3*Cout)      kh-major, kw folded into N
    # scale/shift: (1, Cin)            BN of the *previous* layer (if fused)
    # y_ref:     (1, TH, W, Cout)
    # psum/pssq: (1, 1, 1, Cout)       per-tile partial stats
    # halo_ref:  (2, 1, W, Cin) VMEM scratch, sem: DMA semaphores (2,)
    TH = x_blk_ref.shape[1]
    W = x_blk_ref.shape[2]
    Cin = x_blk_ref.shape[3]
    Cout = y_ref.shape[3]

    n = pl.program_id(0)
    t = pl.program_id(1)
    n_h = pl.num_programs(1)
    r0 = t * TH

    has_top = t > 0
    has_bot = t < n_h - 1

    # --- fetch the 1-row halos with small manual DMAs (interior tiles only).
    # Both copies are started before either wait so the two transfers overlap.
    @pl.when(has_top)
    def _():
        pltpu.make_async_copy(
            x_any_ref.at[pl.ds(n, 1), pl.ds(r0 - 1, 1)],
            halo_ref.at[pl.ds(0, 1)], sem.at[0]).start()

    @pl.when(has_bot)
    def _():
        pltpu.make_async_copy(
            x_any_ref.at[pl.ds(n, 1), pl.ds(r0 + TH, 1)],
            halo_ref.at[pl.ds(1, 1)], sem.at[1]).start()

    @pl.when(has_top)
    def _():
        pltpu.make_async_copy(
            x_any_ref.at[pl.ds(n, 1), pl.ds(r0 - 1, 1)],
            halo_ref.at[pl.ds(0, 1)], sem.at[0]).wait()

    @pl.when(has_bot)
    def _():
        pltpu.make_async_copy(
            x_any_ref.at[pl.ds(n, 1), pl.ds(r0 + TH, 1)],
            halo_ref.at[pl.ds(1, 1)], sem.at[1]).wait()

    hl = halo_ref[...]                       # (2, 1, W, Cin)
    top = hl[0]                              # (1, W, Cin)
    bot = hl[1]                              # (1, W, Cin)
    mid = x_blk_ref[0]                       # (TH, W, Cin)

    # Fused BN(prev layer) + ReLU on the input, if requested.
    if fuse_bn_relu:
        sc = scale_ref[...].reshape(1, 1, Cin)
        sh = shift_ref[...].reshape(1, 1, Cin)
        top = jnp.maximum(top * sc + sh, 0.0)
        mid = jnp.maximum(mid * sc + sh, 0.0)
        bot = jnp.maximum(bot * sc + sh, 0.0)

    # Zero-pad rows at the image border (conv's zero padding; also clears
    # un-DMA'd garbage in the halo rows).  Only the 2 halo rows are masked —
    # the interior block never needs it.
    top = jnp.where(has_top, top, 0.0)
    bot = jnp.where(has_bot, bot, 0.0)

    xr = jnp.concatenate([top, mid, bot], axis=0)        # (TH+2, W, Cin)

    # Conv as 3 MXU matmuls: kh via free row slices, kw folded into N.
    acc = jnp.zeros((TH * W, 3 * Cout), jnp.float32)
    for kh in range(3):
        a = xr[kh:kh + TH].reshape(TH * W, Cin)
        acc = acc + jnp.dot(a, w_ref[kh], preferred_element_type=jnp.float32)

    r3 = acc.reshape(TH, W, 3 * Cout)
    p0 = r3[:, :, 0:Cout]            # kw = 0 taps
    p1 = r3[:, :, Cout:2 * Cout]     # kw = 1 taps
    p2 = r3[:, :, 2 * Cout:]         # kw = 2 taps
    zcol = jnp.zeros((TH, 1, Cout), jnp.float32)
    out = p1 + jnp.concatenate([zcol, p0[:, :W - 1, :]], axis=1)   # shift right
    out = out + jnp.concatenate([p2[:, 1:, :], zcol], axis=1)      # shift left

    y_ref[...] = out.reshape(1, TH, W, Cout).astype(y_ref.dtype)

    # Partial BatchNorm statistics for this tile (pre-BN conv output).
    psum_ref[...] = jnp.sum(out, axis=(0, 1)).reshape(1, 1, 1, Cout)
    pssq_ref[...] = jnp.sum(out * out, axis=(0, 1)).reshape(1, 1, 1, Cout)


def _conv3x3_bn_stats(x, w_folded, scale, shift, *, fuse_bn_relu, tile_h):
    """Returns (y, partial_sum, partial_sumsq) with partials of shape (N,nH,1,C)."""
    N, H, W, Cin = x.shape
    Cout3 = w_folded.shape[-1]
    Cout = Cout3 // 3
    TH = tile_h
    nH = H // TH

    kernel = functools.partial(_conv3x3_kernel, fuse_bn_relu=fuse_bn_relu)
    return pl.pallas_call(
        kernel,
        out_shape=(
            jax.ShapeDtypeStruct((N, H, W, Cout), jnp.float32),
            jax.ShapeDtypeStruct((N, nH, 1, Cout), jnp.float32),
            jax.ShapeDtypeStruct((N, nH, 1, Cout), jnp.float32),
        ),
        grid=(N, nH),
        in_specs=[
            pl.BlockSpec((1, TH, W, Cin), lambda n, t: (n, t, 0, 0)),
            pl.BlockSpec(memory_space=pl.ANY),          # HBM alias for halo DMAs
            pl.BlockSpec((3, Cin, Cout3), lambda n, t: (0, 0, 0)),
            pl.BlockSpec((1, Cin), lambda n, t: (0, 0)),
            pl.BlockSpec((1, Cin), lambda n, t: (0, 0)),
        ],
        out_specs=(
            pl.BlockSpec((1, TH, W, Cout), lambda n, t: (n, t, 0, 0)),
            pl.BlockSpec((1, 1, 1, Cout), lambda n, t: (n, t, 0, 0)),
            pl.BlockSpec((1, 1, 1, Cout), lambda n, t: (n, t, 0, 0)),
        ),
        scratch_shapes=[
            pltpu.VMEM((2, 1, W, Cin), jnp.float32),
            pltpu.SemaphoreType.DMA((2,)),
        ],
        compiler_params=pltpu.CompilerParams(
            dimension_semantics=("parallel", "parallel"),
            vmem_limit_bytes=32 * 1024 * 1024,
        ),
    )(x, x, w_folded, scale.reshape(1, Cin), shift.reshape(1, Cin))


# ----------------------------------------------------------------------------
# Kernel 2: final fused affine BatchNorm (precomputed scale/shift) + ReLU.
# (Only needed for the *last* BN+ReLU; the first one is fused into conv #2.)
# ----------------------------------------------------------------------------
def _bn_relu_kernel(y_ref, scale_ref, shift_ref, o_ref):
    y = y_ref[...]                                      # (1, TH, W, C)
    sc = scale_ref[...].reshape(1, 1, 1, -1)
    sh = shift_ref[...].reshape(1, 1, 1, -1)
    o_ref[...] = jnp.maximum(y * sc + sh, 0.0).astype(o_ref.dtype)


def _bn_relu(y, scale, shift, *, tile_h):
    N, H, W, C = y.shape
    TH = tile_h
    return pl.pallas_call(
        _bn_relu_kernel,
        out_shape=jax.ShapeDtypeStruct((N, H, W, C), jnp.float32),
        grid=(N, H // TH),
        in_specs=[
            pl.BlockSpec((1, TH, W, C), lambda n, t: (n, t, 0, 0)),
            pl.BlockSpec((1, C), lambda n, t: (0, 0)),
            pl.BlockSpec((1, C), lambda n, t: (0, 0)),
        ],
        out_specs=pl.BlockSpec((1, TH, W, C), lambda n, t: (n, t, 0, 0)),
        compiler_params=pltpu.CompilerParams(
            dimension_semantics=("parallel", "parallel"),
            vmem_limit_bytes=32 * 1024 * 1024,
        ),
    )(y, scale.reshape(1, C), shift.reshape(1, C))


# ----------------------------------------------------------------------------
# DoubleConv forward (NCHW in / NCHW out, like the PyTorch module).
# ----------------------------------------------------------------------------
def double_conv(x_nchw, params):
    N, Cin, H, W = x_nchw.shape
    w1, w2 = params["w1"], params["w2"]
    Cmid, Cout = w1.shape[3], w2.shape[3]
    Cpi, Cpm, Cpo = _round_up(Cin), _round_up(Cmid), _round_up(Cout)

    x = jnp.transpose(x_nchw, (0, 2, 3, 1))             # NHWC
    x = _pad_axis(x, 3, Cpi)                            # lane-dense channels

    w1f = _fold_weights(w1, Cpi, Cpm)                   # (3, Cpi, 3*Cpm)
    w2f = _fold_weights(w2, Cpm, Cpo)                   # (3, Cpm, 3*Cpo)
    g1 = _pad_axis(params["gamma1"], 0, Cpm)
    b1 = _pad_axis(params["beta1"], 0, Cpm)
    g2 = _pad_axis(params["gamma2"], 0, Cpo)
    b2 = _pad_axis(params["beta2"], 0, Cpo)

    n_elem = N * H * W

    def finalize(psum, pssq, gamma, beta):
        s = jnp.sum(psum, axis=(0, 1, 2))
        q = jnp.sum(pssq, axis=(0, 1, 2))
        mean = s / n_elem
        var = jnp.maximum(q / n_elem - mean * mean, 0.0)   # biased var (BN train)
        scale = gamma * jax.lax.rsqrt(var + EPS)
        shift = beta - mean * scale
        return scale, shift

    # conv1 (+ partial BN1 stats)
    th1 = _pick_tile_h(H, W, Cpi, Cpm)
    y1, ps1, pq1 = _conv3x3_bn_stats(
        x, w1f,
        jnp.ones((Cpi,), jnp.float32), jnp.zeros((Cpi,), jnp.float32),
        fuse_bn_relu=False, tile_h=th1)
    sc1, sh1 = finalize(ps1, pq1, g1, b1)

    # conv2 with BN1 + ReLU fused into its input load (+ partial BN2 stats)
    th2 = _pick_tile_h(H, W, Cpm, Cpo)
    y2, ps2, pq2 = _conv3x3_bn_stats(
        y1, w2f, sc1, sh1, fuse_bn_relu=True, tile_h=th2)
    sc2, sh2 = finalize(ps2, pq2, g2, b2)

    # final BN2 + ReLU (single fused elementwise pass)
    out_p = _bn_relu(y2, sc2, sh2, tile_h=th2)

    out = out_p[..., :Cout]
    return jnp.transpose(out, (0, 3, 1, 2))              # -> NCHW


# ----------------------------------------------------------------------------
# Pure-JAX reference for verification.
# ----------------------------------------------------------------------------
def double_conv_ref(x_nchw, params):
    x = jnp.transpose(x_nchw, (0, 2, 3, 1))

    def block(h, w, gamma, beta):
        y = jax.lax.conv_general_dilated(
            h, w, window_strides=(1, 1), padding="SAME",
            dimension_numbers=("NHWC", "HWIO", "NHWC"))
        m = jnp.mean(y, axis=(0, 1, 2))
        v = jnp.var(y, axis=(0, 1, 2))
        return jnp.maximum((y - m) / jnp.sqrt(v + EPS) * gamma + beta, 0.0)

    h = block(x, params["w1"], params["gamma1"], params["beta1"])
    h = block(h, params["w2"], params["gamma2"], params["beta2"])
    return jnp.transpose(h, (0, 3, 1, 2))


def init_params(key, in_channels, out_channels, mid_channels=None):
    if not mid_channels:
        mid_channels = out_channels
    k1, k2, k3, k4 = jax.random.split(key, 4)
    std1 = (2.0 / (9 * in_channels)) ** 0.5
    std2 = (2.0 / (9 * mid_channels)) ** 0.5
    return {
        # conv weights stored HWIO: (3, 3, Cin, Cout)
        "w1": std1 * jax.random.normal(k1, (3, 3, in_channels, mid_channels),
                                       jnp.float32),
        "w2": std2 * jax.random.normal(k2, (3, 3, mid_channels, out_channels),
                                       jnp.float32),
        "gamma1": 1.0 + 0.1 * jax.random.normal(k3, (mid_channels,), jnp.float32),
        "beta1": jnp.zeros((mid_channels,), jnp.float32),
        "gamma2": 1.0 + 0.1 * jax.random.normal(k4, (out_channels,), jnp.float32),
        "beta2": jnp.zeros((out_channels,), jnp.float32),
    }


if __name__ == "__main__":
    key = jax.random.PRNGKey(0)
    kx, kp = jax.random.split(key)

    N, Cin, H, W = 2, 4, 16, 16
    Cout = 8
    x = jax.random.normal(kx, (N, Cin, H, W), jnp.float32)   # NCHW (PyTorch)
    params = init_params(kp, Cin, Cout)

    fwd = jax.jit(double_conv)
    out = jax.block_until_ready(fwd(x, params))
    ref = jax.block_until_ready(double_conv_ref(x, params))

    assert out.shape == (N, Cout, H, W), out.shape
    max_err = float(jnp.max(jnp.abs(out - ref)))
    assert jnp.allclose(out, ref, atol=2e-3, rtol=2e-3), max_err
    print("KERNEL_OK")
</pallas_src>

<mosaic_0001>
module attributes {stable_mosaic.version = 11 : i64} {
  func.func @_conv3x3_kernel(%arg0: i32, %arg1: i32, %arg2: memref<1x16x16x128xf32, #tpu.memory_space<vmem>>, %arg3: memref<2x16x16x128xf32, #tpu.memory_space<any>>, %arg4: memref<3x128x384xf32, #tpu.memory_space<vmem>>, %arg5: memref<1x128xf32, #tpu.memory_space<vmem>>, %arg6: memref<1x128xf32, #tpu.memory_space<vmem>>, %arg7: memref<1x16x16x128xf32, #tpu.memory_space<vmem>>, %arg8: memref<1x1x1x128xf32, #tpu.memory_space<vmem>>, %arg9: memref<1x1x1x128xf32, #tpu.memory_space<vmem>>, %arg10: memref<2x1x16x128xf32, #tpu.memory_space<vmem>>, %arg11: memref<2x!tpu.dma_semaphore, #tpu.memory_space<semaphore_mem>>) attributes {dimension_semantics = [#tpu.dimension_semantics<parallel>, #tpu.dimension_semantics<parallel>], iteration_bounds = array<i64: 2, 1>, scalar_prefetch = 0 : i64, scratch_operands = 2 : i64, tpu.core_type = #tpu.core_type<tc>, window_params = [{transform_indices = @transform_0, window_bounds = array<i64: 1, 16, 16, 128>}, {}, {pipeline_mode = #tpu.pipeline_mode<synchronous>, transform_indices = @transform_2, window_bounds = array<i64: 3, 128, 384>}, {pipeline_mode = #tpu.pipeline_mode<synchronous>, transform_indices = @transform_3, window_bounds = array<i64: 1, 128>}, {pipeline_mode = #tpu.pipeline_mode<synchronous>, transform_indices = @transform_4, window_bounds = array<i64: 1, 128>}, {transform_indices = @transform_5, window_bounds = array<i64: 1, 16, 16, 128>}, {transform_indices = @transform_6, window_bounds = array<i64: 1, 1, 1, 128>}, {transform_indices = @transform_7, window_bounds = array<i64: 1, 1, 1, 128>}]} {
    %c16_i32 = arith.constant 16 : i32
    %0 = arith.muli %arg1, %c16_i32 : i32
    %c0_i32 = arith.constant 0 : i32
    %1 = arith.cmpi sgt, %arg1, %c0_i32 : i32
    %c0_i32_0 = arith.constant 0 : i32
    %2 = arith.cmpi slt, %arg1, %c0_i32_0 : i32
    %3 = arith.extui %1 : i1 to i32
    %c0_i32_1 = arith.constant 0 : i32
    %4 = arith.cmpi ne, %3, %c0_i32_1 : i32
    scf.if %4 {
      %c1_i32 = arith.constant 1 : i32
      %62 = arith.subi %0, %c1_i32 : i32
      %c0_i32_39 = arith.constant 0 : i32
      %c0_i32_40 = arith.constant 0 : i32
      %c0_i32_41 = arith.constant 0 : i32
      %63 = tpu.memref_slice %arg3[%arg0, %62, %c0_i32_40, %c0_i32_41] : memref<2x16x16x128xf32, #tpu.memory_space<any>> -> memref<1x1x16x128xf32, #tpu.memory_space<any>>
      %c0_i32_42 = arith.constant 0 : i32
      %c0_i32_43 = arith.constant 0 : i32
      %c0_i32_44 = arith.constant 0 : i32
      %c0_i32_45 = arith.constant 0 : i32
      %64 = tpu.memref_slice %arg10[%c0_i32_42, %c0_i32_43, %c0_i32_44, %c0_i32_45] : memref<2x1x16x128xf32, #tpu.memory_space<vmem>> -> memref<1x1x16x128xf32, #tpu.memory_space<vmem>>
      %65 = tpu.memref_slice %arg11[%c0_i32_39] : memref<2x!tpu.dma_semaphore, #tpu.memory_space<semaphore_mem>> -> memref<1x!tpu.dma_semaphore, #tpu.memory_space<semaphore_mem>>
      %66 = tpu.memref_squeeze %65 : memref<1x!tpu.dma_semaphore, #tpu.memory_space<semaphore_mem>> -> memref<!tpu.dma_semaphore, #tpu.memory_space<semaphore_mem>>
      tpu.enqueue_dma source(%63 : memref<1x1x16x128xf32, #tpu.memory_space<any>>) target(%64 : memref<1x1x16x128xf32, #tpu.memory_space<vmem>>) target_semaphore(%66 : memref<!tpu.dma_semaphore, #tpu.memory_space<semaphore_mem>>)
    } else {
    }
    %5 = arith.extui %2 : i1 to i32
    %c0_i32_2 = arith.constant 0 : i32
    %6 = arith.cmpi ne, %5, %c0_i32_2 : i32
    scf.if %6 {
      %c16_i32_39 = arith.constant 16 : i32
      %62 = arith.addi %0, %c16_i32_39 : i32
      %c1_i32 = arith.constant 1 : i32
      %c0_i32_40 = arith.constant 0 : i32
      %c0_i32_41 = arith.constant 0 : i32
      %63 = tpu.memref_slice %arg3[%arg0, %62, %c0_i32_40, %c0_i32_41] : memref<2x16x16x128xf32, #tpu.memory_space<any>> -> memref<1x1x16x128xf32, #tpu.memory_space<any>>
      %c1_i32_42 = arith.constant 1 : i32
      %c0_i32_43 = arith.constant 0 : i32
      %c0_i32_44 = arith.constant 0 : i32
      %c0_i32_45 = arith.constant 0 : i32
      %64 = tpu.memref_slice %arg10[%c1_i32_42, %c0_i32_43, %c0_i32_44, %c0_i32_45] : memref<2x1x16x128xf32, #tpu.memory_space<vmem>> -> memref<1x1x16x128xf32, #tpu.memory_space<vmem>>
      %65 = tpu.memref_slice %arg11[%c1_i32] : memref<2x!tpu.dma_semaphore, #tpu.memory_space<semaphore_mem>> -> memref<1x!tpu.dma_semaphore, #tpu.memory_space<semaphore_mem>>
      %66 = tpu.memref_squeeze %65 : memref<1x!tpu.dma_semaphore, #tpu.memory_space<semaphore_mem>> -> memref<!tpu.dma_semaphore, #tpu.memory_space<semaphore_mem>>
      tpu.enqueue_dma source(%63 : memref<1x1x16x128xf32, #tpu.memory_space<any>>) target(%64 : memref<1x1x16x128xf32, #tpu.memory_space<vmem>>) target_semaphore(%66 : memref<!tpu.dma_semaphore, #tpu.memory_space<semaphore_mem>>)
    } else {
    }
    %7 = arith.extui %1 : i1 to i32
    %c0_i32_3 = arith.constant 0 : i32
    %8 = arith.cmpi ne, %7, %c0_i32_3 : i32
    scf.if %8 {
      %c1_i32 = arith.constant 1 : i32
      %62 = arith.subi %0, %c1_i32 : i32
      %c0_i32_39 = arith.constant 0 : i32
      %c0_i32_40 = arith.constant 0 : i32
      %c0_i32_41 = arith.constant 0 : i32
      %63 = tpu.memref_slice %arg3[%arg0, %62, %c0_i32_40, %c0_i32_41] : memref<2x16x16x128xf32, #tpu.memory_space<any>> -> memref<1x1x16x128xf32, #tpu.memory_space<any>>
      %c0_i32_42 = arith.constant 0 : i32
      %c0_i32_43 = arith.constant 0 : i32
      %c0_i32_44 = arith.constant 0 : i32
      %c0_i32_45 = arith.constant 0 : i32
      %64 = tpu.memref_slice %arg10[%c0_i32_42, %c0_i32_43, %c0_i32_44, %c0_i32_45] : memref<2x1x16x128xf32, #tpu.memory_space<vmem>> -> memref<1x1x16x128xf32, #tpu.memory_space<vmem>>
      %65 = tpu.memref_slice %arg11[%c0_i32_39] : memref<2x!tpu.dma_semaphore, #tpu.memory_space<semaphore_mem>> -> memref<1x!tpu.dma_semaphore, #tpu.memory_space<semaphore_mem>>
      %66 = tpu.memref_squeeze %65 : memref<1x!tpu.dma_semaphore, #tpu.memory_space<semaphore_mem>> -> memref<!tpu.dma_semaphore, #tpu.memory_space<semaphore_mem>>
      tpu.wait_dma2 semaphore(%66 : memref<!tpu.dma_semaphore, #tpu.memory_space<semaphore_mem>>) src(%63 : memref<1x1x16x128xf32, #tpu.memory_space<any>>) dst(%64 : memref<1x1x16x128xf32, #tpu.memory_space<vmem>>)
    } else {
    }
    %9 = arith.extui %2 : i1 to i32
    %c0_i32_4 = arith.constant 0 : i32
    %10 = arith.cmpi ne, %9, %c0_i32_4 : i32
    scf.if %10 {
      %c16_i32_39 = arith.constant 16 : i32
      %62 = arith.addi %0, %c16_i32_39 : i32
      %c1_i32 = arith.constant 1 : i32
      %c0_i32_40 = arith.constant 0 : i32
      %c0_i32_41 = arith.constant 0 : i32
      %63 = tpu.memref_slice %arg3[%arg0, %62, %c0_i32_40, %c0_i32_41] : memref<2x16x16x128xf32, #tpu.memory_space<any>> -> memref<1x1x16x128xf32, #tpu.memory_space<any>>
      %c1_i32_42 = arith.constant 1 : i32
      %c0_i32_43 = arith.constant 0 : i32
      %c0_i32_44 = arith.constant 0 : i32
      %c0_i32_45 = arith.constant 0 : i32
      %64 = tpu.memref_slice %arg10[%c1_i32_42, %c0_i32_43, %c0_i32_44, %c0_i32_45] : memref<2x1x16x128xf32, #tpu.memory_space<vmem>> -> memref<1x1x16x128xf32, #tpu.memory_space<vmem>>
      %65 = tpu.memref_slice %arg11[%c1_i32] : memref<2x!tpu.dma_semaphore, #tpu.memory_space<semaphore_mem>> -> memref<1x!tpu.dma_semaphore, #tpu.memory_space<semaphore_mem>>
      %66 = tpu.memref_squeeze %65 : memref<1x!tpu.dma_semaphore, #tpu.memory_space<semaphore_mem>> -> memref<!tpu.dma_semaphore, #tpu.memory_space<semaphore_mem>>
      tpu.wait_dma2 semaphore(%66 : memref<!tpu.dma_semaphore, #tpu.memory_space<semaphore_mem>>) src(%63 : memref<1x1x16x128xf32, #tpu.memory_space<any>>) dst(%64 : memref<1x1x16x128xf32, #tpu.memory_space<vmem>>)
    } else {
    }
    %c0 = arith.constant 0 : index
    %c0_5 = arith.constant 0 : index
    %c0_6 = arith.constant 0 : index
    %c0_7 = arith.constant 0 : index
    %11 = vector.load %arg10[%c0, %c0_5, %c0_6, %c0_7] : memref<2x1x16x128xf32, #tpu.memory_space<vmem>>, vector<2x1x16x128xf32>
    %12 = vector.extract_strided_slice %11 {offsets = [0, 0, 0, 0], sizes = [1, 1, 16, 128], strides = [1, 1, 1, 1]} : vector<2x1x16x128xf32> to vector<1x1x16x128xf32>
    %13 = vector.shape_cast %12 : vector<1x1x16x128xf32> to vector<1x16x128xf32>
    %14 = vector.extract_strided_slice %11 {offsets = [1, 0, 0, 0], sizes = [1, 1, 16, 128], strides = [1, 1, 1, 1]} : vector<2x1x16x128xf32> to vector<1x1x16x128xf32>
    %15 = vector.shape_cast %14 : vector<1x1x16x128xf32> to vector<1x16x128xf32>
    %c0_8 = arith.constant 0 : index
    %c0_9 = arith.constant 0 : index
    %c0_10 = arith.constant 0 : index
    %c0_11 = arith.constant 0 : index
    %16 = vector.load %arg2[%c0_8, %c0_9, %c0_10, %c0_11] : memref<1x16x16x128xf32, #tpu.memory_space<vmem>>, vector<1x16x16x128xf32>
    %17 = vector.shape_cast %16 : vector<1x16x16x128xf32> to vector<16x16x128xf32>
    %cst = arith.constant 0.000000e+00 : f32
    %18 = vector.broadcast %cst : f32 to vector<1x16x128xf32>
    %19 = arith.select %1, %13, %18 : vector<1x16x128xf32>
    %cst_12 = arith.constant 0.000000e+00 : f32
    %20 = vector.broadcast %cst_12 : f32 to vector<1x16x128xf32>
    %21 = arith.select %2, %15, %20 : vector<1x16x128xf32>
    %22 = tpu.concatenate %19, %17, %21 in 0 : vector<1x16x128xf32>, vector<16x16x128xf32>, vector<1x16x128xf32> -> vector<18x16x128xf32>
    %cst_13 = arith.constant 0.000000e+00 : f32
    %23 = vector.broadcast %cst_13 : f32 to vector<256x384xf32>
    %24 = vector.extract_strided_slice %22 {offsets = [0, 0, 0], sizes = [16, 16, 128], strides = [1, 1, 1]} : vector<18x16x128xf32> to vector<16x16x128xf32>
    %25 = vector.shape_cast %24 : vector<16x16x128xf32> to vector<256x128xf32>
    %c0_14 = arith.constant 0 : index
    %c0_15 = arith.constant 0 : index
    %c0_16 = arith.constant 0 : index
    %26 = vector.load %arg4[%c0_14, %c0_15, %c0_16] : memref<3x128x384xf32, #tpu.memory_space<vmem>>, vector<1x128x384xf32>
    %27 = vector.shape_cast %26 : vector<1x128x384xf32> to vector<128x384xf32>
    %cst_17 = arith.constant dense<0.000000e+00> : vector<256x384xf32>
    %28 = tpu.matmul %25, %27, %cst_17 {dimension_numbers = #tpu.dot_dimension_numbers<[1], [0], [0], [1], [0, 0, 1, 1], [], []>} : vector<256x128xf32>, vector<128x384xf32>, vector<256x384xf32> -> vector<256x384xf32>
    %29 = arith.addf %23, %28 : vector<256x384xf32>
    %30 = vector.extract_strided_slice %22 {offsets = [1, 0, 0], sizes = [16, 16, 128], strides = [1, 1, 1]} : vector<18x16x128xf32> to vector<16x16x128xf32>
    %31 = vector.shape_cast %30 : vector<16x16x128xf32> to vector<256x128xf32>
    %c1 = arith.constant 1 : index
    %c0_18 = arith.constant 0 : index
    %c0_19 = arith.constant 0 : index
    %32 = vector.load %arg4[%c1, %c0_18, %c0_19] : memref<3x128x384xf32, #tpu.memory_space<vmem>>, vector<1x128x384xf32>
    %33 = vector.shape_cast %32 : vector<1x128x384xf32> to vector<128x384xf32>
    %cst_20 = arith.constant dense<0.000000e+00> : vector<256x384xf32>
    %34 = tpu.matmul %31, %33, %cst_20 {dimension_numbers = #tpu.dot_dimension_numbers<[1], [0], [0], [1], [0, 0, 1, 1], [], []>} : vector<256x128xf32>, vector<128x384xf32>, vector<256x384xf32> -> vector<256x384xf32>
    %35 = arith.addf %29, %34 : vector<256x384xf32>
    %36 = vector.extract_strided_slice %22 {offsets = [2, 0, 0], sizes = [16, 16, 128], strides = [1, 1, 1]} : vector<18x16x128xf32> to vector<16x16x128xf32>
    %37 = vector.shape_cast %36 : vector<16x16x128xf32> to vector<256x128xf32>
    %c2 = arith.constant 2 : index
    %c0_21 = arith.constant 0 : index
    %c0_22 = arith.constant 0 : index
    %38 = vector.load %arg4[%c2, %c0_21, %c0_22] : memref<3x128x384xf32, #tpu.memory_space<vmem>>, vector<1x128x384xf32>
    %39 = vector.shape_cast %38 : vector<1x128x384xf32> to vector<128x384xf32>
    %cst_23 = arith.constant dense<0.000000e+00> : vector<256x384xf32>
    %40 = tpu.matmul %37, %39, %cst_23 {dimension_numbers = #tpu.dot_dimension_numbers<[1], [0], [0], [1], [0, 0, 1, 1], [], []>} : vector<256x128xf32>, vector<128x384xf32>, vector<256x384xf32> -> vector<256x384xf32>
    %41 = arith.addf %35, %40 : vector<256x384xf32>
    %42 = vector.shape_cast %41 : vector<256x384xf32> to vector<16x16x384xf32>
    %43 = vector.extract_strided_slice %42 {offsets = [0, 0, 0], sizes = [16, 16, 128], strides = [1, 1, 1]} : vector<16x16x384xf32> to vector<16x16x128xf32>
    %44 = vector.extract_strided_slice %42 {offsets = [0, 0, 128], sizes = [16, 16, 128], strides = [1, 1, 1]} : vector<16x16x384xf32> to vector<16x16x128xf32>
    %45 = vector.extract_strided_slice %42 {offsets = [0, 0, 256], sizes = [16, 16, 128], strides = [1, 1, 1]} : vector<16x16x384xf32> to vector<16x16x128xf32>
    %cst_24 = arith.constant 0.000000e+00 : f32
    %46 = vector.broadcast %cst_24 : f32 to vector<16x1x128xf32>
    %47 = vector.extract_strided_slice %43 {offsets = [0, 0, 0], sizes = [16, 15, 128], strides = [1, 1, 1]} : vector<16x16x128xf32> to vector<16x15x128xf32>
    %48 = tpu.concatenate %46, %47 in 1 : vector<16x1x128xf32>, vector<16x15x128xf32> -> vector<16x16x128xf32>
    %49 = arith.addf %44, %48 : vector<16x16x128xf32>
    %50 = vector.extract_strided_slice %45 {offsets = [0, 1, 0], sizes = [16, 15, 128], strides = [1, 1, 1]} : vector<16x16x128xf32> to vector<16x15x128xf32>
    %51 = tpu.concatenate %50, %46 in 1 : vector<16x15x128xf32>, vector<16x1x128xf32> -> vector<16x16x128xf32>
    %52 = arith.addf %49, %51 : vector<16x16x128xf32>
    %53 = vector.shape_cast %52 : vector<16x16x128xf32> to vector<1x16x16x128xf32>
    %c0_25 = arith.constant 0 : index
    %c0_26 = arith.constant 0 : index
    %c0_27 = arith.constant 0 : index
    %c0_28 = arith.constant 0 : index
    %54 = vector.load %arg7[%c0_25, %c0_26, %c0_27, %c0_28] : memref<1x16x16x128xf32, #tpu.memory_space<vmem>>, vector<1x16x16x128xf32>
    tpu.vector_store %arg7[%c0_25, %c0_26, %c0_27, %c0_28], %53 {strides = array<i32>} : memref<1x16x16x128xf32, #tpu.memory_space<vmem>>, vector<1x16x16x128xf32>,
    %cst_29 = arith.constant dense<0.000000e+00> : vector<128xf32>
    %55 = vector.multi_reduction <add>, %52, %cst_29 [0, 1] : vector<16x16x128xf32> to vector<128xf32>
    %56 = vector.shape_cast %55 : vector<128xf32> to vector<1x1x1x128xf32>
    %c0_30 = arith.constant 0 : index
    %c0_31 = arith.constant 0 : index
    %c0_32 = arith.constant 0 : index
    %c0_33 = arith.constant 0 : index
    %57 = vector.load %arg8[%c0_30, %c0_31, %c0_32, %c0_33] : memref<1x1x1x128xf32, #tpu.memory_space<vmem>>, vector<1x1x1x128xf32>
    tpu.vector_store %arg8[%c0_30, %c0_31, %c0_32, %c0_33], %56 {strides = array<i32>} : memref<1x1x1x128xf32, #tpu.memory_space<vmem>>, vector<1x1x1x128xf32>,
    %58 = arith.mulf %52, %52 : vector<16x16x128xf32>
    %cst_34 = arith.constant dense<0.000000e+00> : vector<128xf32>
    %59 = vector.multi_reduction <add>, %58, %cst_34 [0, 1] : vector<16x16x128xf32> to vector<128xf32>
    %60 = vector.shape_cast %59 : vector<128xf32> to vector<1x1x1x128xf32>
    %c0_35 = arith.constant 0 : index
    %c0_36 = arith.constant 0 : index
    %c0_37 = arith.constant 0 : index
    %c0_38 = arith.constant 0 : index
    %61 = vector.load %arg9[%c0_35, %c0_36, %c0_37, %c0_38] : memref<1x1x1x128xf32, #tpu.memory_space<vmem>>, vector<1x1x1x128xf32>
    tpu.vector_store %arg9[%c0_35, %c0_36, %c0_37, %c0_38], %60 {strides = array<i32>} : memref<1x1x1x128xf32, #tpu.memory_space<vmem>>, vector<1x1x1x128xf32>,
    return
  }
  func.func @transform_0(%arg0: i32, %arg1: i32) -> (i32, i32, i32, i32) {
    %c0_i32 = arith.constant 0 : i32
    %c0_i32_0 = arith.constant 0 : i32
    %c0_i32_1 = arith.constant 0 : i32
    return %arg0, %arg1, %c0_i32, %c0_i32_0 : i32, i32, i32, i32
  }
  func.func @transform_2(%arg0: i32, %arg1: i32) -> (i32, i32, i32) {
    %c0_i32 = arith.constant 0 : i32
    %c0_i32_0 = arith.constant 0 : i32
    %c0_i32_1 = arith.constant 0 : i32
    %c0_i32_2 = arith.constant 0 : i32
    return %c0_i32, %c0_i32_0, %c0_i32_1 : i32, i32, i32
  }
  func.func @transform_3(%arg0: i32, %arg1: i32) -> (i32, i32) {
    %c0_i32 = arith.constant 0 : i32
    %c0_i32_0 = arith.constant 0 : i32
    %c0_i32_1 = arith.constant 0 : i32
    return %c0_i32, %c0_i32_0 : i32, i32
  }
  func.func @transform_4(%arg0: i32, %arg1: i32) -> (i32, i32) {
    %c0_i32 = arith.constant 0 : i32
    %c0_i32_0 = arith.constant 0 : i32
    %c0_i32_1 = arith.constant 0 : i32
    return %c0_i32, %c0_i32_0 : i32, i32
  }
  func.func @transform_5(%arg0: i32, %arg1: i32) -> (i32, i32, i32, i32) {
    %c0_i32 = arith.constant 0 : i32
    %c0_i32_0 = arith.constant 0 : i32
    %c0_i32_1 = arith.constant 0 : i32
    return %arg0, %arg1, %c0_i32, %c0_i32_0 : i32, i32, i32, i32
  }
  func.func @transform_6(%arg0: i32, %arg1: i32) -> (i32, i32, i32, i32) {
    %c0_i32 = arith.constant 0 : i32
    %c0_i32_0 = arith.constant 0 : i32
    %c0_i32_1 = arith.constant 0 : i32
    return %arg0, %arg1, %c0_i32, %c0_i32_0 : i32, i32, i32, i32
  }
  func.func @transform_7(%arg0: i32, %arg1: i32) -> (i32, i32, i32, i32) {
    %c0_i32 = arith.constant 0 : i32
    %c0_i32_0 = arith.constant 0 : i32
    %c0_i32_1 = arith.constant 0 : i32
    return %arg0, %arg1, %c0_i32, %c0_i32_0 : i32, i32, i32, i32
  }
}

module attributes {stable_mosaic.version = 11 : i64} {
  func.func @_conv3x3_kernel(%arg0: i32, %arg1: i32, %arg2: memref<1x16x16x128xf32, #tpu.memory_space<vmem>>, %arg3: memref<2x16x16x128xf32, #tpu.memory_space<any>>, %arg4: memref<3x128x384xf32, #tpu.memory_space<vmem>>, %arg5: memref<1x128xf32, #tpu.memory_space<vmem>>, %arg6: memref<1x128xf32, #tpu.memory_space<vmem>>, %arg7: memref<1x16x16x128xf32, #tpu.memory_space<vmem>>, %arg8: memref<1x1x1x128xf32, #tpu.memory_space<vmem>>, %arg9: memref<1x1x1x128xf32, #tpu.memory_space<vmem>>, %arg10: memref<2x1x16x128xf32, #tpu.memory_space<vmem>>, %arg11: memref<2x!tpu.dma_semaphore, #tpu.memory_space<semaphore_mem>>) attributes {dimension_semantics = [#tpu.dimension_semantics<parallel>, #tpu.dimension_semantics<parallel>], iteration_bounds = array<i64: 2, 1>, scalar_prefetch = 0 : i64, scratch_operands = 2 : i64, tpu.core_type = #tpu.core_type<tc>, window_params = [{transform_indices = @transform_0, window_bounds = array<i64: 1, 16, 16, 128>}, {}, {pipeline_mode = #tpu.pipeline_mode<synchronous>, transform_indices = @transform_2, window_bounds = array<i64: 3, 128, 384>}, {pipeline_mode = #tpu.pipeline_mode<synchronous>, transform_indices = @transform_3, window_bounds = array<i64: 1, 128>}, {pipeline_mode = #tpu.pipeline_mode<synchronous>, transform_indices = @transform_4, window_bounds = array<i64: 1, 128>}, {transform_indices = @transform_5, window_bounds = array<i64: 1, 16, 16, 128>}, {transform_indices = @transform_6, window_bounds = array<i64: 1, 1, 1, 128>}, {transform_indices = @transform_7, window_bounds = array<i64: 1, 1, 1, 128>}]} {
    %c16_i32 = arith.constant 16 : i32
    %0 = arith.muli %arg1, %c16_i32 : i32
    %c0_i32 = arith.constant 0 : i32
    %1 = arith.cmpi sgt, %arg1, %c0_i32 : i32
    %c0_i32_0 = arith.constant 0 : i32
    %2 = arith.cmpi slt, %arg1, %c0_i32_0 : i32
    %3 = arith.extui %1 : i1 to i32
    %c0_i32_1 = arith.constant 0 : i32
    %4 = arith.cmpi ne, %3, %c0_i32_1 : i32
    scf.if %4 {
      %c1_i32 = arith.constant 1 : i32
      %84 = arith.subi %0, %c1_i32 : i32
      %c0_i32_46 = arith.constant 0 : i32
      %c0_i32_47 = arith.constant 0 : i32
      %c0_i32_48 = arith.constant 0 : i32
      %85 = tpu.memref_slice %arg3[%arg0, %84, %c0_i32_47, %c0_i32_48] : memref<2x16x16x128xf32, #tpu.memory_space<any>> -> memref<1x1x16x128xf32, #tpu.memory_space<any>>
      %c0_i32_49 = arith.constant 0 : i32
      %c0_i32_50 = arith.constant 0 : i32
      %c0_i32_51 = arith.constant 0 : i32
      %c0_i32_52 = arith.constant 0 : i32
      %86 = tpu.memref_slice %arg10[%c0_i32_49, %c0_i32_50, %c0_i32_51, %c0_i32_52] : memref<2x1x16x128xf32, #tpu.memory_space<vmem>> -> memref<1x1x16x128xf32, #tpu.memory_space<vmem>>
      %87 = tpu.memref_slice %arg11[%c0_i32_46] : memref<2x!tpu.dma_semaphore, #tpu.memory_space<semaphore_mem>> -> memref<1x!tpu.dma_semaphore, #tpu.memory_space<semaphore_mem>>
      %88 = tpu.memref_squeeze %87 : memref<1x!tpu.dma_semaphore, #tpu.memory_space<semaphore_mem>> -> memref<!tpu.dma_semaphore, #tpu.memory_space<semaphore_mem>>
      tpu.enqueue_dma source(%85 : memref<1x1x16x128xf32, #tpu.memory_space<any>>) target(%86 : memref<1x1x16x128xf32, #tpu.memory_space<vmem>>) target_semaphore(%88 : memref<!tpu.dma_semaphore, #tpu.memory_space<semaphore_mem>>)
    } else {
    }
    %5 = arith.extui %2 : i1 to i32
    %c0_i32_2 = arith.constant 0 : i32
    %6 = arith.cmpi ne, %5, %c0_i32_2 : i32
    scf.if %6 {
      %c16_i32_46 = arith.constant 16 : i32
      %84 = arith.addi %0, %c16_i32_46 : i32
      %c1_i32 = arith.constant 1 : i32
      %c0_i32_47 = arith.constant 0 : i32
      %c0_i32_48 = arith.constant 0 : i32
      %85 = tpu.memref_slice %arg3[%arg0, %84, %c0_i32_47, %c0_i32_48] : memref<2x16x16x128xf32, #tpu.memory_space<any>> -> memref<1x1x16x128xf32, #tpu.memory_space<any>>
      %c1_i32_49 = arith.constant 1 : i32
      %c0_i32_50 = arith.constant 0 : i32
      %c0_i32_51 = arith.constant 0 : i32
      %c0_i32_52 = arith.constant 0 : i32
      %86 = tpu.memref_slice %arg10[%c1_i32_49, %c0_i32_50, %c0_i32_51, %c0_i32_52] : memref<2x1x16x128xf32, #tpu.memory_space<vmem>> -> memref<1x1x16x128xf32, #tpu.memory_space<vmem>>
      %87 = tpu.memref_slice %arg11[%c1_i32] : memref<2x!tpu.dma_semaphore, #tpu.memory_space<semaphore_mem>> -> memref<1x!tpu.dma_semaphore, #tpu.memory_space<semaphore_mem>>
      %88 = tpu.memref_squeeze %87 : memref<1x!tpu.dma_semaphore, #tpu.memory_space<semaphore_mem>> -> memref<!tpu.dma_semaphore, #tpu.memory_space<semaphore_mem>>
      tpu.enqueue_dma source(%85 : memref<1x1x16x128xf32, #tpu.memory_space<any>>) target(%86 : memref<1x1x16x128xf32, #tpu.memory_space<vmem>>) target_semaphore(%88 : memref<!tpu.dma_semaphore, #tpu.memory_space<semaphore_mem>>)
    } else {
    }
    %7 = arith.extui %1 : i1 to i32
    %c0_i32_3 = arith.constant 0 : i32
    %8 = arith.cmpi ne, %7, %c0_i32_3 : i32
    scf.if %8 {
      %c1_i32 = arith.constant 1 : i32
      %84 = arith.subi %0, %c1_i32 : i32
      %c0_i32_46 = arith.constant 0 : i32
      %c0_i32_47 = arith.constant 0 : i32
      %c0_i32_48 = arith.constant 0 : i32
      %85 = tpu.memref_slice %arg3[%arg0, %84, %c0_i32_47, %c0_i32_48] : memref<2x16x16x128xf32, #tpu.memory_space<any>> -> memref<1x1x16x128xf32, #tpu.memory_space<any>>
      %c0_i32_49 = arith.constant 0 : i32
      %c0_i32_50 = arith.constant 0 : i32
      %c0_i32_51 = arith.constant 0 : i32
      %c0_i32_52 = arith.constant 0 : i32
      %86 = tpu.memref_slice %arg10[%c0_i32_49, %c0_i32_50, %c0_i32_51, %c0_i32_52] : memref<2x1x16x128xf32, #tpu.memory_space<vmem>> -> memref<1x1x16x128xf32, #tpu.memory_space<vmem>>
      %87 = tpu.memref_slice %arg11[%c0_i32_46] : memref<2x!tpu.dma_semaphore, #tpu.memory_space<semaphore_mem>> -> memref<1x!tpu.dma_semaphore, #tpu.memory_space<semaphore_mem>>
      %88 = tpu.memref_squeeze %87 : memref<1x!tpu.dma_semaphore, #tpu.memory_space<semaphore_mem>> -> memref<!tpu.dma_semaphore, #tpu.memory_space<semaphore_mem>>
      tpu.wait_dma2 semaphore(%88 : memref<!tpu.dma_semaphore, #tpu.memory_space<semaphore_mem>>) src(%85 : memref<1x1x16x128xf32, #tpu.memory_space<any>>) dst(%86 : memref<1x1x16x128xf32, #tpu.memory_space<vmem>>)
    } else {
    }
    %9 = arith.extui %2 : i1 to i32
    %c0_i32_4 = arith.constant 0 : i32
    %10 = arith.cmpi ne, %9, %c0_i32_4 : i32
    scf.if %10 {
      %c16_i32_46 = arith.constant 16 : i32
      %84 = arith.addi %0, %c16_i32_46 : i32
      %c1_i32 = arith.constant 1 : i32
      %c0_i32_47 = arith.constant 0 : i32
      %c0_i32_48 = arith.constant 0 : i32
      %85 = tpu.memref_slice %arg3[%arg0, %84, %c0_i32_47, %c0_i32_48] : memref<2x16x16x128xf32, #tpu.memory_space<any>> -> memref<1x1x16x128xf32, #tpu.memory_space<any>>
      %c1_i32_49 = arith.constant 1 : i32
      %c0_i32_50 = arith.constant 0 : i32
      %c0_i32_51 = arith.constant 0 : i32
      %c0_i32_52 = arith.constant 0 : i32
      %86 = tpu.memref_slice %arg10[%c1_i32_49, %c0_i32_50, %c0_i32_51, %c0_i32_52] : memref<2x1x16x128xf32, #tpu.memory_space<vmem>> -> memref<1x1x16x128xf32, #tpu.memory_space<vmem>>
      %87 = tpu.memref_slice %arg11[%c1_i32] : memref<2x!tpu.dma_semaphore, #tpu.memory_space<semaphore_mem>> -> memref<1x!tpu.dma_semaphore, #tpu.memory_space<semaphore_mem>>
      %88 = tpu.memref_squeeze %87 : memref<1x!tpu.dma_semaphore, #tpu.memory_space<semaphore_mem>> -> memref<!tpu.dma_semaphore, #tpu.memory_space<semaphore_mem>>
      tpu.wait_dma2 semaphore(%88 : memref<!tpu.dma_semaphore, #tpu.memory_space<semaphore_mem>>) src(%85 : memref<1x1x16x128xf32, #tpu.memory_space<any>>) dst(%86 : memref<1x1x16x128xf32, #tpu.memory_space<vmem>>)
    } else {
    }
    %c0 = arith.constant 0 : index
    %c0_5 = arith.constant 0 : index
    %c0_6 = arith.constant 0 : index
    %c0_7 = arith.constant 0 : index
    %11 = vector.load %arg10[%c0, %c0_5, %c0_6, %c0_7] : memref<2x1x16x128xf32, #tpu.memory_space<vmem>>, vector<2x1x16x128xf32>
    %12 = vector.extract_strided_slice %11 {offsets = [0, 0, 0, 0], sizes = [1, 1, 16, 128], strides = [1, 1, 1, 1]} : vector<2x1x16x128xf32> to vector<1x1x16x128xf32>
    %13 = vector.shape_cast %12 : vector<1x1x16x128xf32> to vector<1x16x128xf32>
    %14 = vector.extract_strided_slice %11 {offsets = [1, 0, 0, 0], sizes = [1, 1, 16, 128], strides = [1, 1, 1, 1]} : vector<2x1x16x128xf32> to vector<1x1x16x128xf32>
    %15 = vector.shape_cast %14 : vector<1x1x16x128xf32> to vector<1x16x128xf32>
    %c0_8 = arith.constant 0 : index
    %c0_9 = arith.constant 0 : index
    %c0_10 = arith.constant 0 : index
    %c0_11 = arith.constant 0 : index
    %16 = vector.load %arg2[%c0_8, %c0_9, %c0_10, %c0_11] : memref<1x16x16x128xf32, #tpu.memory_space<vmem>>, vector<1x16x16x128xf32>
    %17 = vector.shape_cast %16 : vector<1x16x16x128xf32> to vector<16x16x128xf32>
    %c0_12 = arith.constant 0 : index
    %c0_13 = arith.constant 0 : index
    %18 = vector.load %arg5[%c0_12, %c0_13] : memref<1x128xf32, #tpu.memory_space<vmem>>, vector<1x128xf32>
    %19 = vector.shape_cast %18 : vector<1x128xf32> to vector<1x1x128xf32>
    %c0_14 = arith.constant 0 : index
    %c0_15 = arith.constant 0 : index
    %20 = vector.load %arg6[%c0_14, %c0_15] : memref<1x128xf32, #tpu.memory_space<vmem>>, vector<1x128xf32>
    %21 = vector.shape_cast %20 : vector<1x128xf32> to vector<1x1x128xf32>
    %22 = vector.broadcast %19 : vector<1x1x128xf32> to vector<1x16x128xf32>
    %23 = arith.mulf %13, %22 : vector<1x16x128xf32>
    %24 = vector.broadcast %21 : vector<1x1x128xf32> to vector<1x16x128xf32>
    %25 = arith.addf %23, %24 : vector<1x16x128xf32>
    %cst = arith.constant 0.000000e+00 : f32
    %26 = vector.broadcast %cst : f32 to vector<1x16x128xf32>
    %27 = arith.maximumf %25, %26 : vector<1x16x128xf32>
    %28 = vector.broadcast %19 : vector<1x1x128xf32> to vector<16x16x128xf32>
    %29 = arith.mulf %17, %28 : vector<16x16x128xf32>
    %30 = vector.broadcast %21 : vector<1x1x128xf32> to vector<16x16x128xf32>
    %31 = arith.addf %29, %30 : vector<16x16x128xf32>
    %cst_16 = arith.constant 0.000000e+00 : f32
    %32 = vector.broadcast %cst_16 : f32 to vector<16x16x128xf32>
    %33 = arith.maximumf %31, %32 : vector<16x16x128xf32>
    %34 = vector.broadcast %19 : vector<1x1x128xf32> to vector<1x16x128xf32>
    %35 = arith.mulf %15, %34 : vector<1x16x128xf32>
    %36 = vector.broadcast %21 : vector<1x1x128xf32> to vector<1x16x128xf32>
    %37 = arith.addf %35, %36 : vector<1x16x128xf32>
    %cst_17 = arith.constant 0.000000e+00 : f32
    %38 = vector.broadcast %cst_17 : f32 to vector<1x16x128xf32>
    %39 = arith.maximumf %37, %38 : vector<1x16x128xf32>
    %cst_18 = arith.constant 0.000000e+00 : f32
    %40 = vector.broadcast %cst_18 : f32 to vector<1x16x128xf32>
    %41 = arith.select %1, %27, %40 : vector<1x16x128xf32>
    %cst_19 = arith.constant 0.000000e+00 : f32
    %42 = vector.broadcast %cst_19 : f32 to vector<1x16x128xf32>
    %43 = arith.select %2, %39, %42 : vector<1x16x128xf32>
    %44 = tpu.concatenate %41, %33, %43 in 0 : vector<1x16x128xf32>, vector<16x16x128xf32>, vector<1x16x128xf32> -> vector<18x16x128xf32>
    %cst_20 = arith.constant 0.000000e+00 : f32
    %45 = vector.broadcast %cst_20 : f32 to vector<256x384xf32>
    %46 = vector.extract_strided_slice %44 {offsets = [0, 0, 0], sizes = [16, 16, 128], strides = [1, 1, 1]} : vector<18x16x128xf32> to vector<16x16x128xf32>
    %47 = vector.shape_cast %46 : vector<16x16x128xf32> to vector<256x128xf32>
    %c0_21 = arith.constant 0 : index
    %c0_22 = arith.constant 0 : index
    %c0_23 = arith.constant 0 : index
    %48 = vector.load %arg4[%c0_21, %c0_22, %c0_23] : memref<3x128x384xf32, #tpu.memory_space<vmem>>, vector<1x128x384xf32>
    %49 = vector.shape_cast %48 : vector<1x128x384xf32> to vector<128x384xf32>
    %cst_24 = arith.constant dense<0.000000e+00> : vector<256x384xf32>
    %50 = tpu.matmul %47, %49, %cst_24 {dimension_numbers = #tpu.dot_dimension_numbers<[1], [0], [0], [1], [0, 0, 1, 1], [], []>} : vector<256x128xf32>, vector<128x384xf32>, vector<256x384xf32> -> vector<256x384xf32>
    %51 = arith.addf %45, %50 : vector<256x384xf32>
    %52 = vector.extract_strided_slice %44 {offsets = [1, 0, 0], sizes = [16, 16, 128], strides = [1, 1, 1]} : vector<18x16x128xf32> to vector<16x16x128xf32>
    %53 = vector.shape_cast %52 : vector<16x16x128xf32> to vector<256x128xf32>
    %c1 = arith.constant 1 : index
    %c0_25 = arith.constant 0 : index
    %c0_26 = arith.constant 0 : index
    %54 = vector.load %arg4[%c1, %c0_25, %c0_26] : memref<3x128x384xf32, #tpu.memory_space<vmem>>, vector<1x128x384xf32>
    %55 = vector.shape_cast %54 : vector<1x128x384xf32> to vector<128x384xf32>
    %cst_27 = arith.constant dense<0.000000e+00> : vector<256x384xf32>
    %56 = tpu.matmul %53, %55, %cst_27 {dimension_numbers = #tpu.dot_dimension_numbers<[1], [0], [0], [1], [0, 0, 1, 1], [], []>} : vector<256x128xf32>, vector<128x384xf32>, vector<256x384xf32> -> vector<256x384xf32>
    %57 = arith.addf %51, %56 : vector<256x384xf32>
    %58 = vector.extract_strided_slice %44 {offsets = [2, 0, 0], sizes = [16, 16, 128], strides = [1, 1, 1]} : vector<18x16x128xf32> to vector<16x16x128xf32>
    %59 = vector.shape_cast %58 : vector<16x16x128xf32> to vector<256x128xf32>
    %c2 = arith.constant 2 : index
    %c0_28 = arith.constant 0 : index
    %c0_29 = arith.constant 0 : index
    %60 = vector.load %arg4[%c2, %c0_28, %c0_29] : memref<3x128x384xf32, #tpu.memory_space<vmem>>, vector<1x128x384xf32>
    %61 = vector.shape_cast %60 : vector<1x128x384xf32> to vector<128x384xf32>
    %cst_30 = arith.constant dense<0.000000e+00> : vector<256x384xf32>
    %62 = tpu.matmul %59, %61, %cst_30 {dimension_numbers = #tpu.dot_dimension_numbers<[1], [0], [0], [1], [0, 0, 1, 1], [], []>} : vector<256x128xf32>, vector<128x384xf32>, vector<256x384xf32> -> vector<256x384xf32>
    %63 = arith.addf %57, %62 : vector<256x384xf32>
    %64 = vector.shape_cast %63 : vector<256x384xf32> to vector<16x16x384xf32>
    %65 = vector.extract_strided_slice %64 {offsets = [0, 0, 0], sizes = [16, 16, 128], strides = [1, 1, 1]} : vector<16x16x384xf32> to vector<16x16x128xf32>
    %66 = vector.extract_strided_slice %64 {offsets = [0, 0, 128], sizes = [16, 16, 128], strides = [1, 1, 1]} : vector<16x16x384xf32> to vector<16x16x128xf32>
    %67 = vector.extract_strided_slice %64 {offsets = [0, 0, 256], sizes = [16, 16, 128], strides = [1, 1, 1]} : vector<16x16x384xf32> to vector<16x16x128xf32>
    %cst_31 = arith.constant 0.000000e+00 : f32
    %68 = vector.broadcast %cst_31 : f32 to vector<16x1x128xf32>
    %69 = vector.extract_strided_slice %65 {offsets = [0, 0, 0], sizes = [16, 15, 128], strides = [1, 1, 1]} : vector<16x16x128xf32> to vector<16x15x128xf32>
    %70 = tpu.concatenate %68, %69 in 1 : vector<16x1x128xf32>, vector<16x15x128xf32> -> vector<16x16x128xf32>
    %71 = arith.addf %66, %70 : vector<16x16x128xf32>
    %72 = vector.extract_strided_slice %67 {offsets = [0, 1, 0], sizes = [16, 15, 128], strides = [1, 1, 1]} : vector<16x16x128xf32> to vector<16x15x128xf32>
    %73 = tpu.concatenate %72, %68 in 1 : vector<16x15x128xf32>, vector<16x1x128xf32> -> vector<16x16x128xf32>
    %74 = arith.addf %71, %73 : vector<16x16x128xf32>
    %75 = vector.shape_cast %74 : vector<16x16x128xf32> to vector<1x16x16x128xf32>
    %c0_32 = arith.constant 0 : index
    %c0_33 = arith.constant 0 : index
    %c0_34 = arith.constant 0 : index
    %c0_35 = arith.constant 0 : index
    %76 = vector.load %arg7[%c0_32, %c0_33, %c0_34, %c0_35] : memref<1x16x16x128xf32, #tpu.memory_space<vmem>>, vector<1x16x16x128xf32>
    tpu.vector_store %arg7[%c0_32, %c0_33, %c0_34, %c0_35], %75 {strides = array<i32>} : memref<1x16x16x128xf32, #tpu.memory_space<vmem>>, vector<1x16x16x128xf32>,
    %cst_36 = arith.constant dense<0.000000e+00> : vector<128xf32>
    %77 = vector.multi_reduction <add>, %74, %cst_36 [0, 1] : vector<16x16x128xf32> to vector<128xf32>
    %78 = vector.shape_cast %77 : vector<128xf32> to vector<1x1x1x128xf32>
    %c0_37 = arith.constant 0 : index
    %c0_38 = arith.constant 0 : index
    %c0_39 = arith.constant 0 : index
    %c0_40 = arith.constant 0 : index
    %79 = vector.load %arg8[%c0_37, %c0_38, %c0_39, %c0_40] : memref<1x1x1x128xf32, #tpu.memory_space<vmem>>, vector<1x1x1x128xf32>
    tpu.vector_store %arg8[%c0_37, %c0_38, %c0_39, %c0_40], %78 {strides = array<i32>} : memref<1x1x1x128xf32, #tpu.memory_space<vmem>>, vector<1x1x1x128xf32>,
    %80 = arith.mulf %74, %74 : vector<16x16x128xf32>
    %cst_41 = arith.constant dense<0.000000e+00> : vector<128xf32>
    %81 = vector.multi_reduction <add>, %80, %cst_41 [0, 1] : vector<16x16x128xf32> to vector<128xf32>
    %82 = vector.shape_cast %81 : vector<128xf32> to vector<1x1x1x128xf32>
    %c0_42 = arith.constant 0 : index
    %c0_43 = arith.constant 0 : index
    %c0_44 = arith.constant 0 : index
    %c0_45 = arith.constant 0 : index
    %83 = vector.load %arg9[%c0_42, %c0_43, %c0_44, %c0_45] : memref<1x1x1x128xf32, #tpu.memory_space<vmem>>, vector<1x1x1x128xf32>
    tpu.vector_store %arg9[%c0_42, %c0_43, %c0_44, %c0_45], %82 {strides = array<i32>} : memref<1x1x1x128xf32, #tpu.memory_space<vmem>>, vector<1x1x1x128xf32>,
    return
  }
  func.func @transform_0(%arg0: i32, %arg1: i32) -> (i32, i32, i32, i32) {
    %c0_i32 = arith.constant 0 : i32
    %c0_i32_0 = arith.constant 0 : i32
    %c0_i32_1 = arith.constant 0 : i32
    return %arg0, %arg1, %c0_i32, %c0_i32_0 : i32, i32, i32, i32
  }
  func.func @transform_2(%arg0: i32, %arg1: i32) -> (i32, i32, i32) {
    %c0_i32 = arith.constant 0 : i32
    %c0_i32_0 = arith.constant 0 : i32
    %c0_i32_1 = arith.constant 0 : i32
    %c0_i32_2 = arith.constant 0 : i32
    return %c0_i32, %c0_i32_0, %c0_i32_1 : i32, i32, i32
  }
  func.func @transform_3(%arg0: i32, %arg1: i32) -> (i32, i32) {
    %c0_i32 = arith.constant 0 : i32
    %c0_i32_0 = arith.constant 0 : i32
    %c0_i32_1 = arith.constant 0 : i32
    return %c0_i32, %c0_i32_0 : i32, i32
  }
  func.func @transform_4(%arg0: i32, %arg1: i32) -> (i32, i32) {
    %c0_i32 = arith.constant 0 : i32
    %c0_i32_0 = arith.constant 0 : i32
    %c0_i32_1 = arith.constant 0 : i32
    return %c0_i32, %c0_i32_0 : i32, i32
  }
  func.func @transform_5(%arg0: i32, %arg1: i32) -> (i32, i32, i32, i32) {
    %c0_i32 = arith.constant 0 : i32
    %c0_i32_0 = arith.constant 0 : i32
    %c0_i32_1 = arith.constant 0 : i32
    return %arg0, %arg1, %c0_i32, %c0_i32_0 : i32, i32, i32, i32
  }
  func.func @transform_6(%arg0: i32, %arg1: i32) -> (i32, i32, i32, i32) {
    %c0_i32 = arith.constant 0 : i32
    %c0_i32_0 = arith.constant 0 : i32
    %c0_i32_1 = arith.constant 0 : i32
    return %arg0, %arg1, %c0_i32, %c0_i32_0 : i32, i32, i32, i32
  }
  func.func @transform_7(%arg0: i32, %arg1: i32) -> (i32, i32, i32, i32) {
    %c0_i32 = arith.constant 0 : i32
    %c0_i32_0 = arith.constant 0 : i32
    %c0_i32_1 = arith.constant 0 : i32
    return %arg0, %arg1, %c0_i32, %c0_i32_0 : i32, i32, i32, i32
  }
}

module attributes {stable_mosaic.version = 11 : i64} {
  func.func @_bn_relu_kernel(%arg0: i32, %arg1: i32, %arg2: memref<1x16x16x128xf32, #tpu.memory_space<vmem>>, %arg3: memref<1x128xf32, #tpu.memory_space<vmem>>, %arg4: memref<1x128xf32, #tpu.memory_space<vmem>>, %arg5: memref<1x16x16x128xf32, #tpu.memory_space<vmem>>) attributes {dimension_semantics = [#tpu.dimension_semantics<parallel>, #tpu.dimension_semantics<parallel>], iteration_bounds = array<i64: 2, 1>, scalar_prefetch = 0 : i64, scratch_operands = 0 : i64, tpu.core_type = #tpu.core_type<tc>, window_params = [{transform_indices = @transform_0, window_bounds = array<i64: 1, 16, 16, 128>}, {pipeline_mode = #tpu.pipeline_mode<synchronous>, transform_indices = @transform_1, window_bounds = array<i64: 1, 128>}, {pipeline_mode = #tpu.pipeline_mode<synchronous>, transform_indices = @transform_2, window_bounds = array<i64: 1, 128>}, {transform_indices = @transform_3, window_bounds = array<i64: 1, 16, 16, 128>}]} {
    %c0 = arith.constant 0 : index
    %c0_0 = arith.constant 0 : index
    %c0_1 = arith.constant 0 : index
    %c0_2 = arith.constant 0 : index
    %0 = vector.load %arg2[%c0, %c0_0, %c0_1, %c0_2] : memref<1x16x16x128xf32, #tpu.memory_space<vmem>>, vector<1x16x16x128xf32>
    %c0_3 = arith.constant 0 : index
    %c0_4 = arith.constant 0 : index
    %1 = vector.load %arg3[%c0_3, %c0_4] : memref<1x128xf32, #tpu.memory_space<vmem>>, vector<1x128xf32>
    %2 = vector.shape_cast %1 : vector<1x128xf32> to vector<1x1x1x128xf32>
    %c0_5 = arith.constant 0 : index
    %c0_6 = arith.constant 0 : index
    %3 = vector.load %arg4[%c0_5, %c0_6] : memref<1x128xf32, #tpu.memory_space<vmem>>, vector<1x128xf32>
    %4 = vector.shape_cast %3 : vector<1x128xf32> to vector<1x1x1x128xf32>
    %5 = vector.broadcast %2 : vector<1x1x1x128xf32> to vector<1x16x16x128xf32>
    %6 = arith.mulf %0, %5 : vector<1x16x16x128xf32>
    %7 = vector.broadcast %4 : vector<1x1x1x128xf32> to vector<1x16x16x128xf32>
    %8 = arith.addf %6, %7 : vector<1x16x16x128xf32>
    %cst = arith.constant 0.000000e+00 : f32
    %9 = vector.broadcast %cst : f32 to vector<1x16x16x128xf32>
    %10 = arith.maximumf %8, %9 : vector<1x16x16x128xf32>
    %c0_7 = arith.constant 0 : index
    %c0_8 = arith.constant 0 : index
    %c0_9 = arith.constant 0 : index
    %c0_10 = arith.constant 0 : index
    %11 = vector.load %arg5[%c0_7, %c0_8, %c0_9, %c0_10] : memref<1x16x16x128xf32, #tpu.memory_space<vmem>>, vector<1x16x16x128xf32>
    tpu.vector_store %arg5[%c0_7, %c0_8, %c0_9, %c0_10], %10 {strides = array<i32>} : memref<1x16x16x128xf32, #tpu.memory_space<vmem>>, vector<1x16x16x128xf32>,
    return
  }
  func.func @transform_0(%arg0: i32, %arg1: i32) -> (i32, i32, i32, i32) {
    %c0_i32 = arith.constant 0 : i32
    %c0_i32_0 = arith.constant 0 : i32
    %c0_i32_1 = arith.constant 0 : i32
    return %arg0, %arg1, %c0_i32, %c0_i32_0 : i32, i32, i32, i32
  }
  func.func @transform_1(%arg0: i32, %arg1: i32) -> (i32, i32) {
    %c0_i32 = arith.constant 0 : i32
    %c0_i32_0 = arith.constant 0 : i32
    %c0_i32_1 = arith.constant 0 : i32
    return %c0_i32, %c0_i32_0 : i32, i32
  }
  func.func @transform_2(%arg0: i32, %arg1: i32) -> (i32, i32) {
    %c0_i32 = arith.constant 0 : i32
    %c0_i32_0 = arith.constant 0 : i32
    %c0_i32_1 = arith.constant 0 : i32
    return %c0_i32, %c0_i32_0 : i32, i32
  }
  func.func @transform_3(%arg0: i32, %arg1: i32) -> (i32, i32, i32, i32) {
    %c0_i32 = arith.constant 0 : i32
    %c0_i32_0 = arith.constant 0 : i32
    %c0_i32_1 = arith.constant 0 : i32
    return %arg0, %arg1, %c0_i32, %c0_i32_0 : i32, i32, i32, i32
  }
}

</mosaic_0001>

<llo_original>
// kernel: double_conv.5
$region0: #{double_conv.5}
  #allocation0 [shape = 'u32[]', space=smem, size = 0x4, offset = 0x4, fixed_abs, tag = 'smem constant byte address 0x4 - core index']
  #allocation1 [shape = 'u32[144,128]{1,0:T(1,128)}', space=vmem, size = 0x12000, scoped, tag = 'internal scratch']
  %s0 = inlined_call_operand.vmem [shape: f32[2,16,16,128], index: 0, kind: input, shape index: {}]
  %s1 = inlined_call_operand.vmem [shape: f32[1,128], index: 1, kind: input, shape index: {}]
  %s2 = inlined_call_operand.vmem [shape: f32[1,128], index: 2, kind: input, shape index: {}]
  %s3 = inlined_call_operand.vmem [shape: f32[2,16,16,128], index: 3, kind: output, shape index: {}]
  %s4 = sld [smem:[#allocation0]]
  $region45: #{double_conv.5} parent=0
    _
  %s6 = ssub.s32 1, %s4
  %s7 = scalar_select 0, %s6, %s4
  loop: start=0, step=1, limit=4
  $region2: #{double_conv.5} parent=0 // loop_pre_header
    _
  $region3: #{double_conv.5} parent=0 // loop_header
    %s9 = sphi 0, %s13
    %p10 = scmp.ge.s32.totalorder %s9, 4
    %s16 = sphi 0, %s28
    %s17 = sphi 0, %s24
    %s18 = sphi 0, %s16
    %s19 = sphi 0, %s17
    %s20 = sphi 0, %s18
    %s21 = sphi 0, %s19
    %s33 = sphi 0, %s35
    %s36 = sphi 0, %s33
    %s37 = sphi 0, %s36
    %s53 = sphi 0, %s37
    %s57 = sphi 0, %s57
    %s59 = sphi 0, %s57
    %s60 = sphi 0, %s59
    %s74 = sphi 0, %s60
    %s78 = sphi 0, %s78
    %s80 = sphi 0, %s78
    %s81 = sphi 0, %s80
    %s95 = sphi 0, %s81
    %s103 = sphi 0, %s105
    %s106 = sphi 0, %s103
    %s107 = sphi 0, %s106
    %s123 = sphi 0, %s107
  $region4: #{double_conv.5} parent=0 // loop_header_branch
    %12 = sbr.rel (%p10) target = $region8
  $region5: #{double_conv.5} parent=0 // loop_body
    %s14 = ssub.s32 %s9, 1
    %s15 = ssub.s32 %s9, 2
    %s22 = sadd.s32 1, %s17
    %p23 = scmp.ge.s32.totalorder %s22, 1
    %s24 = scalar_select %p23, 0, %s22
    %s25 = sadd.s32 1, %s16
    %s26 = scalar_select %p23, %s25, %s16
    %p27 = scmp.ge.s32.totalorder %s26, 2
    %s28 = scalar_select %p27, 0, %s26
    %s29 = ssub.s32 %s16, %s28
    %s30 = ssub.s32 %s17, %s24
    %s31 = sor.u32 %s29, %s30
    %p32 = scmp.eq.s32.totalorder %s31, 0
    %s34 = sadd.s32 %s33, 1
    %s35 = scalar_select %p32, %s33, %s34
    %p38 = pneg %p32
    %p39 = scmp.eq.s32.totalorder %s9, 1
    %p40 = por %p38, %p39
    %p41 = scmp.ne.s32.totalorder %s33, %s36
    %p42 = scmp.eq.s32.totalorder %s9, 0
    %p43 = por %p41, %p42
    %p44 = scmp.ne.s32.totalorder %s33, %s36
    %p45 = scmp.eq.s32.totalorder %s14, 1
    %p46 = por %p44, %p45
    %p47 = scmp.ne.s32.totalorder %s36, %s37
    %p48 = scmp.eq.s32.totalorder %s14, 0
    %p49 = por %p47, %p48
    %p50 = scmp.ne.s32.totalorder %s36, %s37
    %p51 = scmp.eq.s32.totalorder %s15, 1
    %p52 = por %p50, %p51
    %p54 = scmp.ne.s32.totalorder %s37, %s53
    %p55 = scmp.eq.s32.totalorder %s15, 0
    %p56 = por %p54, %p55
    %s58 = sadd.s32 %s57, 1
    %p61 = scmp.eq.s32.totalorder %s9, 1
    %p62 = scmp.ne.s32.totalorder %s57, %s59
    %p63 = scmp.eq.s32.totalorder %s9, 0
    %p64 = por %p62, %p63
    %p65 = scmp.ne.s32.totalorder %s57, %s59
    %p66 = scmp.eq.s32.totalorder %s14, 1
    %p67 = por %p65, %p66
    %p68 = scmp.ne.s32.totalorder %s59, %s60
    %p69 = scmp.eq.s32.totalorder %s14, 0
    %p70 = por %p68, %p69
    %p71 = scmp.ne.s32.totalorder %s59, %s60
    %p72 = scmp.eq.s32.totalorder %s15, 1
    %p73 = por %p71, %p72
    %p75 = scmp.ne.s32.totalorder %s60, %s74
    %p76 = scmp.eq.s32.totalorder %s15, 0
    %p77 = por %p75, %p76
    %s79 = sadd.s32 %s78, 1
    %p82 = scmp.eq.s32.totalorder %s9, 1
    %p83 = scmp.ne.s32.totalorder %s78, %s80
    %p84 = scmp.eq.s32.totalorder %s9, 0
    %p85 = por %p83, %p84
    %p86 = scmp.ne.s32.totalorder %s78, %s80
    %p87 = scmp.eq.s32.totalorder %s14, 1
    %p88 = por %p86, %p87
    %p89 = scmp.ne.s32.totalorder %s80, %s81
    %p90 = scmp.eq.s32.totalorder %s14, 0
    %p91 = por %p89, %p90
    %p92 = scmp.ne.s32.totalorder %s80, %s81
    %p93 = scmp.eq.s32.totalorder %s15, 1
    %p94 = por %p92, %p93
    %p96 = scmp.ne.s32.totalorder %s81, %s95
    %p97 = scmp.eq.s32.totalorder %s15, 0
    %p98 = por %p96, %p97
    %s99 = ssub.s32 %s16, %s28
    %s100 = ssub.s32 %s17, %s24
    %s101 = sor.u32 %s99, %s100
    %p102 = scmp.eq.s32.totalorder %s101, 0
    %s104 = sadd.s32 %s103, 1
    %s105 = scalar_select %p102, %s103, %s104
    %p108 = pneg %p102
    %p109 = scmp.eq.s32.totalorder %s9, 1
    %p110 = por %p108, %p109
    %p111 = scmp.ne.s32.totalorder %s103, %s106
    %p112 = scmp.eq.s32.totalorder %s9, 0
    %p113 = por %p111, %p112
    %p114 = scmp.ne.s32.totalorder %s103, %s106
    %p115 = scmp.eq.s32.totalorder %s14, 1
    %p116 = por %p114, %p115
    %p117 = scmp.ne.s32.totalorder %s106, %s107
    %p118 = scmp.eq.s32.totalorder %s14, 0
    %p119 = por %p117, %p118
    %p120 = scmp.ne.s32.totalorder %s106, %s107
    %p121 = scmp.eq.s32.totalorder %s15, 1
    %p122 = por %p120, %p121
    %p124 = scmp.ne.s32.totalorder %s107, %s123
    %p125 = scmp.eq.s32.totalorder %s15, 0
    %p126 = por %p124, %p125
    %p127 = scmp.le.s32.totalorder 1, %s9
    %p128 = scmp.lt.s32.totalorder %s9, 3
    %p129 = pnand %p127, %p128
    %p130 = pneg %p129
    // Predicated region
    $region9: #{double_conv.5} parent=5 // pred_check
      _
    $region10: #{double_conv.5} parent=5 // pred_check_branch
      %132 = sbr.rel (%p129) target = $region12
    $region11: #{double_conv.5} parent=5 // pred_region
      %s133 = ssub.s32 %s9, 1
      // Predicated region
      $region13: #{double_conv.5} parent=11 // pred_check
        %p134 = pneg %p70
      $region14: #{double_conv.5} parent=11 // pred_check_branch
        %136 = sbr.rel (%p134) target = $region16
      $region15: #{double_conv.5} parent=11 // pred_region
        _
      $region16: #{double_conv.5} parent=11 // pred_fallthru
        _
      // Predicated region
      $region17: #{double_conv.5} parent=11 // pred_check
        %p137 = pneg %p91
      $region18: #{double_conv.5} parent=11 // pred_check_branch
        %139 = sbr.rel (%p137) target = $region20
      $region19: #{double_conv.5} parent=11 // pred_region
        _
      $region20: #{double_conv.5} parent=11 // pred_fallthru
        _
    $region12: #{double_conv.5} parent=5 // pred_fallthru
      _
    %p140 = scmp.lt.s32.totalorder %s9, 2
    // Predicated region
    $region21: #{double_conv.5} parent=5 // pred_check
      %p141 = pneg %p140
    $region22: #{double_conv.5} parent=5 // pred_check_branch
      %143 = sbr.rel (%p141) target = $region24
    $region23: #{double_conv.5} parent=5 // pred_region
      // Predicated region
      $region25: #{double_conv.5} parent=23 // pred_check
        %p144 = pneg %p43
      $region26: #{double_conv.5} parent=23 // pred_check_branch
        %146 = sbr.rel (%p144) target = $region28
      $region27: #{double_conv.5} parent=23 // pred_region
        %s147 = smul.u32 16, %s17
        %p148 = scmp.lt.s32.totalorder %s16, 1
        %s149 = scalar_select %p148, %s16, 1
        %p150 = scmp.lt.s32.totalorder %s147, 15
        %s151 = scalar_select %p150, %s147, 15
        %s152 = smul.addr %s151, 2
        %s153 = smul.addr %s149, 32
        %s154 = sadd.s32 %s152, %s153
        %s155 = smul.addr %s154, 8
        %s156 = scalar_lea.vmem %s0, %s155
        %s157 = smul.u32 16, %s17
      $region28: #{double_conv.5} parent=23 // pred_fallthru
        _
    $region24: #{double_conv.5} parent=5 // pred_fallthru
      _
    %p158 = scmp.le.s32.totalorder 1, %s9
    %p159 = scmp.lt.s32.totalorder %s9, 3
    %p160 = pnand %p158, %p159
    %p161 = pneg %p160
    // Predicated region
    $region29: #{double_conv.5} parent=5 // pred_check
      _
    $region30: #{double_conv.5} parent=5 // pred_check_branch
      %163 = sbr.rel (%p160) target = $region32
    $region31: #{double_conv.5} parent=5 // pred_region
      %s164 = ssub.s32 %s9, 1
      %s165 = smul.u32 16, %s19
      %p166 = scmp.lt.s32.totalorder %s18, 1
      %s167 = scalar_select %p166, %s18, 1
      %p168 = scmp.lt.s32.totalorder %s165, 15
      %s169 = scalar_select %p168, %s165, 15
      %s170 = smul.addr %s169, 2
      %s171 = smul.addr %s167, 32
      %s172 = sadd.s32 %s170, %s171
      %s173 = smul.addr %s172, 8
      %s174 = scalar_lea.vmem %s0, %s173
      %p175 = pneg %p49
      %p176 = pneg %p46
      %p177 = pneg %p70
      %p178 = pneg %p67
      %p179 = pneg %p91
      %p180 = pneg %p88
      %p181 = pneg %p119
      %p182 = pneg %p116
      %s183 = smul.u32 16, %s19
      %p184 = scmp.lt.s32.totalorder %s18, 1
      %s185 = scalar_select %p184, %s18, 1
      %p186 = scmp.lt.s32.totalorder %s183, 15
      %s187 = scalar_select %p186, %s183, 15
      %s188 = smul.addr %s187, 2
      %s189 = smul.addr %s185, 32
      %s190 = sadd.s32 %s188, %s189
      %s191 = smul.addr %s190, 8
      %s192 = scalar_lea.vmem %s3, %s191
      %s193 = smul.u32 16, %s19
      %p194 = scmp.lt.s32.totalorder %s18, 1
      %s195 = scalar_select %p194, %s18, 1
      %p196 = scmp.lt.s32.totalorder %s193, 15
      %s197 = scalar_select %p196, %s193, 15
      %s198 = smul.addr %s197, 2
      %s199 = smul.addr %s195, 32
      %s200 = sadd.s32 %s198, %s199
      %s201 = smul.addr %s200, 8
      %s202 = scalar_lea.vmem %s0, %s201
      %s203 = smul.u32 16, %s19
      %s204 = smul.u32 16, %s19
      %p205 = scmp.lt.s32.totalorder %s18, 1
      %s206 = scalar_select %p205, %s18, 1
      %p207 = scmp.lt.s32.totalorder %s204, 15
      %s208 = scalar_select %p207, %s204, 15
      %s209 = smul.addr %s208, 2
      %s210 = smul.addr %s206, 32
      %s211 = sadd.s32 %s209, %s210
      %s212 = smul.addr %s211, 8
      %s213 = scalar_lea.vmem %s3, %s212
      %s214 = smul.u32 16, %s19
      %v215 = vld [vmem:[%s202] sm:$0xff]
      %v216 = vld [vmem:[%s202 + $0x8] sm:$0xff]
      %v217 = vld [vmem:[%s202 + $0x10] sm:$0xff]
      %v218 = vld [vmem:[%s202 + $0x18] sm:$0xff]
      %v219 = vld [vmem:[%s202 + $0x20] sm:$0xff]
      %v220 = vld [vmem:[%s202 + $0x28] sm:$0xff]
      %v221 = vld [vmem:[%s202 + $0x30] sm:$0xff]
      %v222 = vld [vmem:[%s202 + $0x38] sm:$0xff]
      %v223 = vld [vmem:[%s202 + $0x40] sm:$0xff]
      %v224 = vld [vmem:[%s202 + $0x48] sm:$0xff]
      %v225 = vld [vmem:[%s202 + $0x50] sm:$0xff]
      %v226 = vld [vmem:[%s202 + $0x58] sm:$0xff]
      %v227 = vld [vmem:[%s202 + $0x60] sm:$0xff]
      %v228 = vld [vmem:[%s202 + $0x68] sm:$0xff]
      %v229 = vld [vmem:[%s202 + $0x70] sm:$0xff]
      %v230 = vld [vmem:[%s202 + $0x78] sm:$0xff]
      %v231 = vld [vmem:[%s202 + $0x80] sm:$0xff]
      %v232 = vld [vmem:[%s202 + $0x88] sm:$0xff]
      %v233 = vld [vmem:[%s202 + $0x90] sm:$0xff]
      %v234 = vld [vmem:[%s202 + $0x98] sm:$0xff]
      %v235 = vld [vmem:[%s202 + $0xa0] sm:$0xff]
      %v236 = vld [vmem:[%s202 + $0xa8] sm:$0xff]
      %v237 = vld [vmem:[%s202 + $0xb0] sm:$0xff]
      %v238 = vld [vmem:[%s202 + $0xb8] sm:$0xff]
      %v239 = vld [vmem:[%s202 + $0xc0] sm:$0xff]
      %v240 = vld [vmem:[%s202 + $0xc8] sm:$0xff]
      %v241 = vld [vmem:[%s202 + $0xd0] sm:$0xff]
      %v242 = vld [vmem:[%s202 + $0xd8] sm:$0xff]
      %v243 = vld [vmem:[%s202 + $0xe0] sm:$0xff]
      %v244 = vld [vmem:[%s202 + $0xe8] sm:$0xff]
      %v245 = vld [vmem:[%s202 + $0xf0] sm:$0xff]
      %v246 = vld [vmem:[%s202 + $0xf8] sm:$0xff]
      %v247 = vld [vmem:[%s1] sm:$0x1]
      %v248 = vld [vmem:[%s2] sm:$0x1]
      %v250 = vlaneseq
      %v251 = vshrl.u32 %v250, 7
      %v252 = vsub.s32 0, %v251
      %v253 = vrot.slane %v247, %v252
      %v255 = vmul.f32 %v215, %v253
      %v256 = vmul.f32 %v216, %v253
      %v257 = vmul.f32 %v217, %v253
      %v258 = vmul.f32 %v218, %v253
      %v259 = vmul.f32 %v219, %v253
      %v260 = vmul.f32 %v220, %v253
      %v261 = vmul.f32 %v221, %v253
      %v262 = vmul.f32 %v222, %v253
      %v263 = vmul.f32 %v223, %v253
      %v264 = vmul.f32 %v224, %v253
      %v265 = vmul.f32 %v225, %v253
      %v266 = vmul.f32 %v226, %v253
      %v267 = vmul.f32 %v227, %v253
      %v268 = vmul.f32 %v228, %v253
      %v269 = vmul.f32 %v229, %v253
      %v270 = vmul.f32 %v230, %v253
      %v271 = vmul.f32 %v231, %v253
      %v272 = vmul.f32 %v232, %v253
      %v273 = vmul.f32 %v233, %v253
      %v274 = vmul.f32 %v234, %v253
      %v275 = vmul.f32 %v235, %v253
      %v276 = vmul.f32 %v236, %v253
      %v277 = vmul.f32 %v237, %v253
      %v278 = vmul.f32 %v238, %v253
      %v279 = vmul.f32 %v239, %v253
      %v280 = vmul.f32 %v240, %v253
      %v281 = vmul.f32 %v241, %v253
      %v282 = vmul.f32 %v242, %v253
      %v283 = vmul.f32 %v243, %v253
      %v284 = vmul.f32 %v244, %v253
      %v285 = vmul.f32 %v245, %v253
      %v286 = vmul.f32 %v246, %v253
      %v288 = vlaneseq
      %v289 = vshrl.u32 %v288, 7
      %v290 = vsub.s32 0, %v289
      %v291 = vrot.slane %v248, %v290
      %v293 = vadd.f32 %v255, %v291
      %v294 = vadd.f32 %v256, %v291
      %v295 = vadd.f32 %v257, %v291
      %v296 = vadd.f32 %v258, %v291
      %v297 = vadd.f32 %v259, %v291
      %v298 = vadd.f32 %v260, %v291
      %v299 = vadd.f32 %v261, %v291
      %v300 = vadd.f32 %v262, %v291
      %v301 = vadd.f32 %v263, %v291
      %v302 = vadd.f32 %v264, %v291
      %v303 = vadd.f32 %v265, %v291
      %v304 = vadd.f32 %v266, %v291
      %v305 = vadd.f32 %v267, %v291
      %v306 = vadd.f32 %v268, %v291
      %v307 = vadd.f32 %v269, %v291
      %v308 = vadd.f32 %v270, %v291
      %v309 = vadd.f32 %v271, %v291
      %v310 = vadd.f32 %v272, %v291
      %v311 = vadd.f32 %v273, %v291
      %v312 = vadd.f32 %v274, %v291
      %v313 = vadd.f32 %v275, %v291
      %v314 = vadd.f32 %v276, %v291
      %v315 = vadd.f32 %v277, %v291
      %v316 = vadd.f32 %v278, %v291
      %v317 = vadd.f32 %v279, %v291
      %v318 = vadd.f32 %v280, %v291
      %v319 = vadd.f32 %v281, %v291
      %v320 = vadd.f32 %v282, %v291
      %v321 = vadd.f32 %v283, %v291
      %v322 = vadd.f32 %v284, %v291
      %v323 = vadd.f32 %v285, %v291
      %v324 = vadd.f32 %v286, %v291
      %v325 = vmax.f32 %v293, 0.0
      %v326 = vmax.f32 %v294, 0.0
      %v327 = vmax.f32 %v295, 0.0
      %v328 = vmax.f32 %v296, 0.0
      %v329 = vmax.f32 %v297, 0.0
      %v330 = vmax.f32 %v298, 0.0
      %v331 = vmax.f32 %v299, 0.0
      %v332 = vmax.f32 %v300, 0.0
      %v333 = vmax.f32 %v301, 0.0
      %v334 = vmax.f32 %v302, 0.0
      %v335 = vmax.f32 %v303, 0.0
      %v336 = vmax.f32 %v304, 0.0
      %v337 = vmax.f32 %v305, 0.0
      %v338 = vmax.f32 %v306, 0.0
      %v339 = vmax.f32 %v307, 0.0
      %v340 = vmax.f32 %v308, 0.0
      %v341 = vmax.f32 %v309, 0.0
      %v342 = vmax.f32 %v310, 0.0
      %v343 = vmax.f32 %v311, 0.0
      %v344 = vmax.f32 %v312, 0.0
      %v345 = vmax.f32 %v313, 0.0
      %v346 = vmax.f32 %v314, 0.0
      %v347 = vmax.f32 %v315, 0.0
      %v348 = vmax.f32 %v316, 0.0
      %v349 = vmax.f32 %v317, 0.0
      %v350 = vmax.f32 %v318, 0.0
      %v351 = vmax.f32 %v319, 0.0
      %v352 = vmax.f32 %v320, 0.0
      %v353 = vmax.f32 %v321, 0.0
      %v354 = vmax.f32 %v322, 0.0
      %v355 = vmax.f32 %v323, 0.0
      %v356 = vmax.f32 %v324, 0.0
      %357 = vst [vmem:[%s213] sm:$0xff] %v325
      %358 = vst [vmem:[%s213 + $0x8] sm:$0xff] %v326
      %359 = vst [vmem:[%s213 + $0x10] sm:$0xff] %v327
      %360 = vst [vmem:[%s213 + $0x18] sm:$0xff] %v328
      %361 = vst [vmem:[%s213 + $0x20] sm:$0xff] %v329
      %362 = vst [vmem:[%s213 + $0x28] sm:$0xff] %v330
      %363 = vst [vmem:[%s213 + $0x30] sm:$0xff] %v331
      %364 = vst [vmem:[%s213 + $0x38] sm:$0xff] %v332
      %365 = vst [vmem:[%s213 + $0x40] sm:$0xff] %v333
      %366 = vst [vmem:[%s213 + $0x48] sm:$0xff] %v334
      %367 = vst [vmem:[%s213 + $0x50] sm:$0xff] %v335
      %368 = vst [vmem:[%s213 + $0x58] sm:$0xff] %v336
      %369 = vst [vmem:[%s213 + $0x60] sm:$0xff] %v337
      %370 = vst [vmem:[%s213 + $0x68] sm:$0xff] %v338
      %371 = vst [vmem:[%s213 + $0x70] sm:$0xff] %v339
      %372 = vst [vmem:[%s213 + $0x78] sm:$0xff] %v340
      %373 = vst [vmem:[%s213 + $0x80] sm:$0xff] %v341
      %374 = vst [vmem:[%s213 + $0x88] sm:$0xff] %v342
      %375 = vst [vmem:[%s213 + $0x90] sm:$0xff] %v343
      %376 = vst [vmem:[%s213 + $0x98] sm:$0xff] %v344
      %377 = vst [vmem:[%s213 + $0xa0] sm:$0xff] %v345
      %378 = vst [vmem:[%s213 + $0xa8] sm:$0xff] %v346
      %379 = vst [vmem:[%s213 + $0xb0] sm:$0xff] %v347
      %380 = vst [vmem:[%s213 + $0xb8] sm:$0xff] %v348
      %381 = vst [vmem:[%s213 + $0xc0] sm:$0xff] %v349
      %382 = vst [vmem:[%s213 + $0xc8] sm:$0xff] %v350
      %383 = vst [vmem:[%s213 + $0xd0] sm:$0xff] %v351
      %384 = vst [vmem:[%s213 + $0xd8] sm:$0xff] %v352
      %385 = vst [vmem:[%s213 + $0xe0] sm:$0xff] %v353
      %386 = vst [vmem:[%s213 + $0xe8] sm:$0xff] %v354
      %387 = vst [vmem:[%s213 + $0xf0] sm:$0xff] %v355
      %388 = vst [vmem:[%s213 + $0xf8] sm:$0xff] %v356
      %s389 = smul.u32 16, %s19
      %p390 = scmp.lt.s32.totalorder %s18, 1
      %s391 = scalar_select %p390, %s18, 1
      %p392 = scmp.lt.s32.totalorder %s389, 15
      %s393 = scalar_select %p392, %s389, 15
      %s394 = smul.addr %s393, 2
      %s395 = smul.addr %s391, 32
      %s396 = sadd.s32 %s394, %s395
      %s397 = smul.addr %s396, 8
      %s398 = scalar_lea.vmem %s3, %s397
      // Predicated region
      $region33: #{double_conv.5} parent=31 // pred_check
        %p399 = pneg %p116
      $region34: #{double_conv.5} parent=31 // pred_check_branch
        %401 = sbr.rel (%p399) target = $region36
      $region35: #{double_conv.5} parent=31 // pred_region
        %s402 = smul.u32 16, %s19
      $region36: #{double_conv.5} parent=31 // pred_fallthru
        _
    $region32: #{double_conv.5} parent=5 // pred_fallthru
      _
    %p403 = scmp.le.s32.totalorder 2, %s9
    // Predicated region
    $region37: #{double_conv.5} parent=5 // pred_check
      %p404 = pneg %p403
    $region38: #{double_conv.5} parent=5 // pred_check_branch
      %406 = sbr.rel (%p404) target = $region40
    $region39: #{double_conv.5} parent=5 // pred_region
      %s407 = ssub.s32 %s9, 2
      // Predicated region
      $region41: #{double_conv.5} parent=39 // pred_check
        %p408 = pneg %p122
      $region42: #{double_conv.5} parent=39 // pred_check_branch
        %410 = sbr.rel (%p408) target = $region44
      $region43: #{double_conv.5} parent=39 // pred_region
        %s411 = smul.u32 16, %s21
        %p412 = scmp.lt.s32.totalorder %s20, 1
        %s413 = scalar_select %p412, %s20, 1
        %p414 = scmp.lt.s32.totalorder %s411, 15
        %s415 = scalar_select %p414, %s411, 15
        %s416 = smul.addr %s415, 2
        %s417 = smul.addr %s413, 32
        %s418 = sadd.s32 %s416, %s417
        %s419 = smul.addr %s418, 8
        %s420 = scalar_lea.vmem %s3, %s419
      $region44: #{double_conv.5} parent=39 // pred_fallthru
        _
    $region40: #{double_conv.5} parent=5 // pred_fallthru
      _
  $region6: #{double_conv.5} parent=0 // loop_footer
    %s13 = sadd.s32 1, %s9
  $region7: #{double_conv.5} parent=0 // loop_footer_branch
    %8 = sbr.rel target = $region3
  $region8: #{double_conv.5} parent=0 // loop_exit
    _

// kernel: double_conv.3
$region0: #{double_conv.3}
  #allocation0 [shape = 'u32[]', space=smem, size = 0x4, offset = 0x4, fixed_abs, tag = 'smem constant byte address 0x4 - core index']
  #allocation1 [shape = 'u32[144,128]{1,0:T(1,128)}', space=vmem, size = 0x12000, scoped, tag = 'internal scratch']
  #allocation2 [shape = 'f32[2,1,16,128]{3,2,1,0:T(8,128)}', space=vmem, size = 0x4000, scoped, tag = 'scratch operand']
  #allocation3 [shape = 's32[2]{0}', space=sflag, size = 0x8, scoped, tag = 'scratch operand']
  #allocation4 [shape = 's32[]', space=sflag, size = 0x4, offset = 0, fixed_abs, tag = 'sflag constant byte address 0x0 - dummy sync flag']
  #allocation5 [shape = 's32[]', space=sflag, size = 0x4, offset = 0, fixed_abs, tag = 'sflag constant byte address 0x0 - dummy sync flag']
  %s0 = inlined_call_operand.vmem [shape: f32[2,16,16,128], index: 0, kind: input, shape index: {}, may-alias: {0,1}]
  %s1 = inlined_call_operand.vmem [shape: f32[2,16,16,128], index: 1, kind: input, shape index: {}, may-alias: {0,1}]
  %s2 = inlined_call_operand.vmem [shape: f32[3,128,384], index: 2, kind: input, shape index: {}]
  %s3 = inlined_call_operand.vmem [shape: f32[1,128], index: 3, kind: input, shape index: {}]
  %s4 = inlined_call_operand.vmem [shape: f32[1,128], index: 4, kind: input, shape index: {}]
  %s5 = inlined_call_operand.vmem [shape: f32[2,16,16,128], index: 5, kind: output, shape index: {0}]
  %s6 = inlined_call_operand.vmem [shape: f32[2,1,1,128], index: 6, kind: output, shape index: {1}]
  %s7 = inlined_call_operand.vmem [shape: f32[2,1,1,128], index: 7, kind: output, shape index: {2}]
  %8 = xla_tuple %s5, %s6, %s7
  %s9 = sld [smem:[#allocation0]]
  $region149: #{double_conv.3} parent=0
    _
  %s11 = ssub.s32 1, %s9
  %s12 = scalar_select 0, %s11, %s9
  loop: start=0, step=1, limit=4
  $region2: #{double_conv.3} parent=0 // loop_pre_header
    _
  $region3: #{double_conv.3} parent=0 // loop_header
    %s14 = sphi 0, %s18
    %p15 = scmp.ge.s32.totalorder %s14, 4
    %s21 = sphi 0, %s33
    %s22 = sphi 0, %s29
    %s23 = sphi 0, %s21
    %s24 = sphi 0, %s22
    %s25 = sphi 0, %s23
    %s26 = sphi 0, %s24
    %s38 = sphi 0, %s40
    %s41 = sphi 0, %s38
    %s42 = sphi 0, %s41
    %s58 = sphi 0, %s42
    %s62 = sphi 0, %s62
    %s64 = sphi 0, %s62
    %s65 = sphi 0, %s64
    %s79 = sphi 0, %s65
    %s83 = sphi 0, %s83
    %s85 = sphi 0, %s83
    %s86 = sphi 0, %s85
    %s100 = sphi 0, %s86
    %s104 = sphi 0, %s104
    %s106 = sphi 0, %s104
    %s107 = sphi 0, %s106
    %s121 = sphi 0, %s107
    %s129 = sphi 0, %s131
    %s132 = sphi 0, %s129
    %s133 = sphi 0, %s132
    %s149 = sphi 0, %s133
    %s157 = sphi 0, %s159
    %s160 = sphi 0, %s157
    %s161 = sphi 0, %s160
    %s177 = sphi 0, %s161
    %s185 = sphi 0, %s187
    %s188 = sphi 0, %s185
    %s189 = sphi 0, %s188
    %s205 = sphi 0, %s189
  $region4: #{double_conv.3} parent=0 // loop_header_branch
    %17 = sbr.rel (%p15) target = $region8
  $region5: #{double_conv.3} parent=0 // loop_body
    %s19 = ssub.s32 %s14, 1
    %s20 = ssub.s32 %s14, 2
    %s27 = sadd.s32 1, %s22
    %p28 = scmp.ge.s32.totalorder %s27, 1
    %s29 = scalar_select %p28, 0, %s27
    %s30 = sadd.s32 1, %s21
    %s31 = scalar_select %p28, %s30, %s21
    %p32 = scmp.ge.s32.totalorder %s31, 2
    %s33 = scalar_select %p32, 0, %s31
    %s34 = ssub.s32 %s21, %s33
    %s35 = ssub.s32 %s22, %s29
    %s36 = sor.u32 %s34, %s35
    %p37 = scmp.eq.s32.totalorder %s36, 0
    %s39 = sadd.s32 %s38, 1
    %s40 = scalar_select %p37, %s38, %s39
    %p43 = pneg %p37
    %p44 = scmp.eq.s32.totalorder %s14, 1
    %p45 = por %p43, %p44
    %p46 = scmp.ne.s32.totalorder %s38, %s41
    %p47 = scmp.eq.s32.totalorder %s14, 0
    %p48 = por %p46, %p47
    %p49 = scmp.ne.s32.totalorder %s38, %s41
    %p50 = scmp.eq.s32.totalorder %s19, 1
    %p51 = por %p49, %p50
    %p52 = scmp.ne.s32.totalorder %s41, %s42
    %p53 = scmp.eq.s32.totalorder %s19, 0
    %p54 = por %p52, %p53
    %p55 = scmp.ne.s32.totalorder %s41, %s42
    %p56 = scmp.eq.s32.totalorder %s20, 1
    %p57 = por %p55, %p56
    %p59 = scmp.ne.s32.totalorder %s42, %s58
    %p60 = scmp.eq.s32.totalorder %s20, 0
    %p61 = por %p59, %p60
    %s63 = sadd.s32 %s62, 1
    %p66 = scmp.eq.s32.totalorder %s14, 1
    %p67 = scmp.ne.s32.totalorder %s62, %s64
    %p68 = scmp.eq.s32.totalorder %s14, 0
    %p69 = por %p67, %p68
    %p70 = scmp.ne.s32.totalorder %s62, %s64
    %p71 = scmp.eq.s32.totalorder %s19, 1
    %p72 = por %p70, %p71
    %p73 = scmp.ne.s32.totalorder %s64, %s65
    %p74 = scmp.eq.s32.totalorder %s19, 0
    %p75 = por %p73, %p74
    %p76 = scmp.ne.s32.totalorder %s64, %s65
    %p77 = scmp.eq.s32.totalorder %s20, 1
    %p78 = por %p76, %p77
    %p80 = scmp.ne.s32.totalorder %s65, %s79
    %p81 = scmp.eq.s32.totalorder %s20, 0
    %p82 = por %p80, %p81
    %s84 = sadd.s32 %s83, 1
    %p87 = scmp.eq.s32.totalorder %s14, 1
    %p88 = scmp.ne.s32.totalorder %s83, %s85
    %p89 = scmp.eq.s32.totalorder %s14, 0
    %p90 = por %p88, %p89
    %p91 = scmp.ne.s32.totalorder %s83, %s85
    %p92 = scmp.eq.s32.totalorder %s19, 1
    %p93 = por %p91, %p92
    %p94 = scmp.ne.s32.totalorder %s85, %s86
    %p95 = scmp.eq.s32.totalorder %s19, 0
    %p96 = por %p94, %p95
    %p97 = scmp.ne.s32.totalorder %s85, %s86
    %p98 = scmp.eq.s32.totalorder %s20, 1
    %p99 = por %p97, %p98
    %p101 = scmp.ne.s32.totalorder %s86, %s100
    %p102 = scmp.eq.s32.totalorder %s20, 0
    %p103 = por %p101, %p102
    %s105 = sadd.s32 %s104, 1
    %p108 = scmp.eq.s32.totalorder %s14, 1
    %p109 = scmp.ne.s32.totalorder %s104, %s106
    %p110 = scmp.eq.s32.totalorder %s14, 0
    %p111 = por %p109, %p110
    %p112 = scmp.ne.s32.totalorder %s104, %s106
    %p113 = scmp.eq.s32.totalorder %s19, 1
    %p114 = por %p112, %p113
    %p115 = scmp.ne.s32.totalorder %s106, %s107
    %p116 = scmp.eq.s32.totalorder %s19, 0
    %p117 = por %p115, %p116
    %p118 = scmp.ne.s32.totalorder %s106, %s107
    %p119 = scmp.eq.s32.totalorder %s20, 1
    %p120 = por %p118, %p119
    %p122 = scmp.ne.s32.totalorder %s107, %s121
    %p123 = scmp.eq.s32.totalorder %s20, 0
    %p124 = por %p122, %p123
    %s125 = ssub.s32 %s21, %s33
    %s126 = ssub.s32 %s22, %s29
    %s127 = sor.u32 %s125, %s126
    %p128 = scmp.eq.s32.totalorder %s127, 0
    %s130 = sadd.s32 %s129, 1
    %s131 = scalar_select %p128, %s129, %s130
    %p134 = pneg %p128
    %p135 = scmp.eq.s32.totalorder %s14, 1
    %p136 = por %p134, %p135
    %p137 = scmp.ne.s32.totalorder %s129, %s132
    %p138 = scmp.eq.s32.totalorder %s14, 0
    %p139 = por %p137, %p138
    %p140 = scmp.ne.s32.totalorder %s129, %s132
    %p141 = scmp.eq.s32.totalorder %s19, 1
    %p142 = por %p140, %p141
    %p143 = scmp.ne.s32.totalorder %s132, %s133
    %p144 = scmp.eq.s32.totalorder %s19, 0
    %p145 = por %p143, %p144
    %p146 = scmp.ne.s32.totalorder %s132, %s133
    %p147 = scmp.eq.s32.totalorder %s20, 1
    %p148 = por %p146, %p147
    %p150 = scmp.ne.s32.totalorder %s133, %s149
    %p151 = scmp.eq.s32.totalorder %s20, 0
    %p152 = por %p150, %p151
    %s153 = ssub.s32 %s21, %s33
    %s154 = ssub.s32 %s22, %s29
    %s155 = sor.u32 %s153, %s154
    %p156 = scmp.eq.s32.totalorder %s155, 0
    %s158 = sadd.s32 %s157, 1
    %s159 = scalar_select %p156, %s157, %s158
    %p162 = pneg %p156
    %p163 = scmp.eq.s32.totalorder %s14, 1
    %p164 = por %p162, %p163
    %p165 = scmp.ne.s32.totalorder %s157, %s160
    %p166 = scmp.eq.s32.totalorder %s14, 0
    %p167 = por %p165, %p166
    %p168 = scmp.ne.s32.totalorder %s157, %s160
    %p169 = scmp.eq.s32.totalorder %s19, 1
    %p170 = por %p168, %p169
    %p171 = scmp.ne.s32.totalorder %s160, %s161
    %p172 = scmp.eq.s32.totalorder %s19, 0
    %p173 = por %p171, %p172
    %p174 = scmp.ne.s32.totalorder %s160, %s161
    %p175 = scmp.eq.s32.totalorder %s20, 1
    %p176 = por %p174, %p175
    %p178 = scmp.ne.s32.totalorder %s161, %s177
    %p179 = scmp.eq.s32.totalorder %s20, 0
    %p180 = por %p178, %p179
    %s181 = ssub.s32 %s21, %s33
    %s182 = ssub.s32 %s22, %s29
    %s183 = sor.u32 %s181, %s182
    %p184 = scmp.eq.s32.totalorder %s183, 0
    %s186 = sadd.s32 %s185, 1
    %s187 = scalar_select %p184, %s185, %s186
    %p190 = pneg %p184
    %p191 = scmp.eq.s32.totalorder %s14, 1
    %p192 = por %p190, %p191
    %p193 = scmp.ne.s32.totalorder %s185, %s188
    %p194 = scmp.eq.s32.totalorder %s14, 0
    %p195 = por %p193, %p194
    %p196 = scmp.ne.s32.totalorder %s185, %s188
    %p197 = scmp.eq.s32.totalorder %s19, 1
    %p198 = por %p196, %p197
    %p199 = scmp.ne.s32.totalorder %s188, %s189
    %p200 = scmp.eq.s32.totalorder %s19, 0
    %p201 = por %p199, %p200
    %p202 = scmp.ne.s32.totalorder %s188, %s189
    %p203 = scmp.eq.s32.totalorder %s20, 1
    %p204 = por %p202, %p203
    %p206 = scmp.ne.s32.totalorder %s189, %s205
    %p207 = scmp.eq.s32.totalorder %s20, 0
    %p208 = por %p206, %p207
    %p209 = scmp.le.s32.totalorder 1, %s14
    %p210 = scmp.lt.s32.totalorder %s14, 3
    %p211 = pnand %p209, %p210
    %p212 = pneg %p211
    // Predicated region
    $region9: #{double_conv.3} parent=5 // pred_check
      _
    $region10: #{double_conv.3} parent=5 // pred_check_branch
      %214 = sbr.rel (%p211) target = $region12
    $region11: #{double_conv.3} parent=5 // pred_region
      %s215 = ssub.s32 %s14, 1
      // Predicated region
      $region13: #{double_conv.3} parent=11 // pred_check
        %p216 = pneg %p75
      $region14: #{double_conv.3} parent=11 // pred_check_branch
        %218 = sbr.rel (%p216) target = $region16
      $region15: #{double_conv.3} parent=11 // pred_region
        _
      $region16: #{double_conv.3} parent=11 // pred_fallthru
        _
      // Predicated region
      $region17: #{double_conv.3} parent=11 // pred_check
        %p219 = pneg %p96
      $region18: #{double_conv.3} parent=11 // pred_check_branch
        %221 = sbr.rel (%p219) target = $region20
      $region19: #{double_conv.3} parent=11 // pred_region
        _
      $region20: #{double_conv.3} parent=11 // pred_fallthru
        _
      // Predicated region
      $region21: #{double_conv.3} parent=11 // pred_check
        %p222 = pneg %p117
      $region22: #{double_conv.3} parent=11 // pred_check_branch
        %224 = sbr.rel (%p222) target = $region24
      $region23: #{double_conv.3} parent=11 // pred_region
        _
      $region24: #{double_conv.3} parent=11 // pred_fallthru
        _
    $region12: #{double_conv.3} parent=5 // pred_fallthru
      _
    %p225 = scmp.lt.s32.totalorder %s14, 2
    // Predicated region
    $region25: #{double_conv.3} parent=5 // pred_check
      %p226 = pneg %p225
    $region26: #{double_conv.3} parent=5 // pred_check_branch
      %228 = sbr.rel (%p226) target = $region28
    $region27: #{double_conv.3} parent=5 // pred_region
      // Predicated region
      $region29: #{double_conv.3} parent=27 // pred_check
        %p229 = pneg %p48
      $region30: #{double_conv.3} parent=27 // pred_check_branch
        %231 = sbr.rel (%p229) target = $region32
      $region31: #{double_conv.3} parent=27 // pred_region
        %s232 = smul.u32 16, %s22
        %p233 = scmp.lt.s32.totalorder %s21, 1
        %s234 = scalar_select %p233, %s21, 1
        %p235 = scmp.lt.s32.totalorder %s232, 15
        %s236 = scalar_select %p235, %s232, 15
        %s237 = smul.addr %s236, 2
        %s238 = smul.addr %s234, 32
        %s239 = sadd.s32 %s237, %s238
        %s240 = smul.addr %s239, 8
        %s241 = scalar_lea.vmem %s0, %s240
        %s242 = smul.u32 16, %s22
      $region32: #{double_conv.3} parent=27 // pred_fallthru
        _
    $region28: #{double_conv.3} parent=5 // pred_fallthru
      _
    %p243 = scmp.le.s32.totalorder 1, %s14
    %p244 = scmp.lt.s32.totalorder %s14, 3
    %p245 = pnand %p243, %p244
    %p246 = pneg %p245
    // Predicated region
    $region33: #{double_conv.3} parent=5 // pred_check
      _
    $region34: #{double_conv.3} parent=5 // pred_check_branch
      %248 = sbr.rel (%p245) target = $region36
    $region35: #{double_conv.3} parent=5 // pred_region
      %s249 = ssub.s32 %s14, 1
      %s250 = smul.u32 16, %s24
      %p251 = scmp.lt.s32.totalorder %s23, 1
      %s252 = scalar_select %p251, %s23, 1
      %p253 = scmp.lt.s32.totalorder %s250, 15
      %s254 = scalar_select %p253, %s250, 15
      %s255 = smul.addr %s254, 2
      %s256 = smul.addr %s252, 32
      %s257 = sadd.s32 %s255, %s256
      %s258 = smul.addr %s257, 8
      %s259 = scalar_lea.vmem %s0, %s258
      %p260 = pneg %p54
      %p261 = pneg %p51
      %p262 = pneg %p75
      %p263 = pneg %p72
      %p264 = pneg %p96
      %p265 = pneg %p93
      %p266 = pneg %p117
      %p267 = pneg %p114
      %p268 = pneg %p145
      %p269 = pneg %p142
      %s270 = smul.u32 16, %s24
      %p271 = scmp.lt.s32.totalorder %s23, 1
      %s272 = scalar_select %p271, %s23, 1
      %p273 = scmp.lt.s32.totalorder %s270, 15
      %s274 = scalar_select %p273, %s270, 15
      %s275 = smul.addr %s274, 2
      %s276 = smul.addr %s272, 32
      %s277 = sadd.s32 %s275, %s276
      %s278 = smul.addr %s277, 8
      %s279 = scalar_lea.vmem %s5, %s278
      %p280 = pneg %p173
      %p281 = pneg %p170
      %p282 = scmp.lt.s32.totalorder %s23, 1
      %s283 = scalar_select %p282, %s23, 1
      %p284 = scmp.lt.s32.totalorder %s24, 0
      %s285 = scalar_select %p284, %s24, 0
      %s286 = sadd.s32 %s285, %s283
      %s287 = scalar_lea.vmem %s6, %s286
      %p288 = pneg %p201
      %p289 = pneg %p198
      %p290 = scmp.lt.s32.totalorder %s23, 1
      %s291 = scalar_select %p290, %s23, 1
      %p292 = scmp.lt.s32.totalorder %s24, 0
      %s293 = scalar_select %p292, %s24, 0
      %s294 = sadd.s32 %s293, %s291
      %s295 = scalar_lea.vmem %s7, %s294
      %s296 = smul.u32 16, %s24
      %p297 = scmp.lt.s32.totalorder %s23, 1
      %s298 = scalar_select %p297, %s23, 1
      %p299 = scmp.lt.s32.totalorder %s296, 15
      %s300 = scalar_select %p299, %s296, 15
      %s301 = smul.addr %s300, 2
      %s302 = smul.addr %s298, 32
      %s303 = sadd.s32 %s301, %s302
      %s304 = smul.addr %s303, 8
      %s305 = scalar_lea.vmem %s0, %s304
      %s306 = smul.u32 16, %s24
      %s307 = smul.u32 16, %s24
      %p308 = scmp.lt.s32.totalorder %s23, 1
      %s309 = scalar_select %p308, %s23, 1
      %p310 = scmp.lt.s32.totalorder %s307, 15
      %s311 = scalar_select %p310, %s307, 15
      %s312 = smul.addr %s311, 2
      %s313 = smul.addr %s309, 32
      %s314 = sadd.s32 %s312, %s313
      %s315 = smul.addr %s314, 8
      %s316 = scalar_lea.vmem %s5, %s315
      %s317 = smul.u32 16, %s24
      %p318 = scmp.lt.s32.totalorder %s23, 1
      %s319 = scalar_select %p318, %s23, 1
      %p320 = scmp.lt.s32.totalorder %s24, 0
      %s321 = scalar_select %p320, %s24, 0
      %s322 = sadd.s32 %s321, %s319
      %s323 = scalar_lea.vmem %s6, %s322
      %p324 = scmp.lt.s32.totalorder %s23, 1
      %s325 = scalar_select %p324, %s23, 1
      %p326 = scmp.lt.s32.totalorder %s24, 0
      %s327 = scalar_select %p326, %s24, 0
      %s328 = sadd.s32 %s327, %s325
      %s329 = scalar_lea.vmem %s7, %s328
      %s330 = smul.u32 %s24, 16
      %p331 = scmp.gt.s32.totalorder %s24, 0
      %p332 = scmp.lt.s32.totalorder %s24, 0
      // Predicated region
      $region37: #{double_conv.3} parent=35 // pred_check
        %p333 = pneg %p331
      $region38: #{double_conv.3} parent=35 // pred_check_branch
        %335 = sbr.rel (%p333) target = $region40
      $region39: #{double_conv.3} parent=35 // pred_region
        %s336 = ssub.s32 %s330, 1
        %s337 = smul.u32 %s336, 16
        %s338 = smul.u32 %s23, 256
        %s339 = sadd.s32 %s337, %s338
        %s340 = scalar_lea.vmem %s1, %s339
        %p342 = scmp.lt.u32.totalorder 16, 8
        %p343 = pneg %p342
        // Predicated region
        $region41: #{double_conv.3} parent=39 // pred_check
          _
        $region42: #{double_conv.3} parent=39 // pred_check_branch
          %345 = sbr.rel (%p342) target = $region44
        $region43: #{double_conv.3} parent=39 // pred_region
          %s361 = sand.u32 16, 7
          %p362 = scmp.eq.s32.totalorder %s361, 0
          // Predicated region
          $region56: #{double_conv.3} parent=43 // pred_check
            %p363 = pneg %p362
          $region57: #{double_conv.3} parent=43 // pred_check_branch
            %365 = sbr.rel (%p363) target = $region59
          $region58: #{double_conv.3} parent=43 // pred_region
            loop: start=0, step=1, limit=1
            $region60: #{double_conv.3} parent=58 // loop_pre_header
              _
            $region61: #{double_conv.3} parent=58 // loop_header
              %s367 = sphi 0, %s371
              %p368 = scmp.ge.s32.totalorder %s367, 1
              %s372 = sphi %s340, %s340
              %s373 = sphi [#allocation2], [#allocation2]
            $region62: #{double_conv.3} parent=58 // loop_header_branch
              %370 = sbr.rel (%p368) target = $region66
            $region63: #{double_conv.3} parent=58 // loop_body
              %v374 = vld [vmem:[%s372] sm:$0xff]
              %375 = vst [vmem:[%s373] sm:$0xff] %v374
              %v376 = vld [vmem:[%s372 + $0x8] sm:$0xff]
              %377 = vst [vmem:[%s373 + $0x8] sm:$0xff] %v376
            $region64: #{double_conv.3} parent=58 // loop_footer
              %s371 = sadd.s32 1, %s367
            $region65: #{double_conv.3} parent=58 // loop_footer_branch
              %366 = sbr.rel target = $region61
            $region66: #{double_conv.3} parent=58 // loop_exit
              _
          $region59: #{double_conv.3} parent=43 // pred_fallthru
            _
          %p378 = pneg %p362
          // Predicated region
          $region67: #{double_conv.3} parent=43 // pred_check
            _
          $region68: #{double_conv.3} parent=43 // pred_check_branch
            %380 = sbr.rel (%p362) target = $region70
          $region69: #{double_conv.3} parent=43 // pred_region
            %s381 = sand.u32 16, 7
          $region70: #{double_conv.3} parent=43 // pred_fallthru
            _
        $region44: #{double_conv.3} parent=39 // pred_fallthru
          _
        // Predicated region
        $region45: #{double_conv.3} parent=39 // pred_check
          %p346 = pneg %p342
        $region46: #{double_conv.3} parent=39 // pred_check_branch
          %348 = sbr.rel (%p346) target = $region48
        $region47: #{double_conv.3} parent=39 // pred_region
          %s349 = sshll.u32 1, 16
          %s350 = ssub.s32 %s349, 1
          loop: start=0, step=1, limit=1
          $region49: #{double_conv.3} parent=47 // loop_pre_header
            _
          $region50: #{double_conv.3} parent=47 // loop_header
            %s352 = sphi 0, %s356
            %p353 = scmp.ge.s32.totalorder %s352, 1
            %s357 = sphi %s340, %s340
            %s358 = sphi [#allocation2], [#allocation2]
          $region51: #{double_conv.3} parent=47 // loop_header_branch
            %355 = sbr.rel (%p353) target = $region55
          $region52: #{double_conv.3} parent=47 // loop_body
            %v359 = vld [vmem:[%s357] sm:%s350]
            %360 = vst [vmem:[%s358] sm:%s350] %v359
          $region53: #{double_conv.3} parent=47 // loop_footer
            %s356 = sadd.s32 1, %s352
          $region54: #{double_conv.3} parent=47 // loop_footer_branch
            %351 = sbr.rel target = $region50
          $region55: #{double_conv.3} parent=47 // loop_exit
            _
        $region48: #{double_conv.3} parent=39 // pred_fallthru
          _
        // Predicated region
        $region71: #{double_conv.3} parent=39 // pred_check
          _
        $region72: #{double_conv.3} parent=39 // pred_check_branch
          %384 = sbr.rel (0) target = $region74
        $region73: #{double_conv.3} parent=39 // pred_region
          %385 = vsyncadd [#allocation3], 256
        $region74: #{double_conv.3} parent=39 // pred_fallthru
          _
      $region40: #{double_conv.3} parent=35 // pred_fallthru
        _
      // Predicated region
      $region75: #{double_conv.3} parent=35 // pred_check
        %p386 = pneg %p332
      $region76: #{double_conv.3} parent=35 // pred_check_branch
        %388 = sbr.rel (%p386) target = $region78
      $region77: #{double_conv.3} parent=35 // pred_region
        %s389 = sadd.s32 %s330, 16
        %s390 = smul.u32 %s389, 16
        %s391 = smul.u32 %s23, 256
        %s392 = sadd.s32 %s390, %s391
        %s393 = scalar_lea.vmem %s1, %s392
        %s394 = scalar_lea.vmem [#allocation2], 16
        %s395 = scalar_lea.sflag [#allocation3], 1
        %p397 = scmp.lt.u32.totalorder 16, 8
        %p398 = pneg %p397
        // Predicated region
        $region79: #{double_conv.3} parent=77 // pred_check
          _
        $region80: #{double_conv.3} parent=77 // pred_check_branch
          %400 = sbr.rel (%p397) target = $region82
        $region81: #{double_conv.3} parent=77 // pred_region
          %s416 = sand.u32 16, 7
          %p417 = scmp.eq.s32.totalorder %s416, 0
          // Predicated region
          $region94: #{double_conv.3} parent=81 // pred_check
            %p418 = pneg %p417
          $region95: #{double_conv.3} parent=81 // pred_check_branch
            %420 = sbr.rel (%p418) target = $region97
          $region96: #{double_conv.3} parent=81 // pred_region
            loop: start=0, step=1, limit=1
            $region98: #{double_conv.3} parent=96 // loop_pre_header
              _
            $region99: #{double_conv.3} parent=96 // loop_header
              %s422 = sphi 0, %s426
              %p423 = scmp.ge.s32.totalorder %s422, 1
              %s427 = sphi %s393, %s393
              %s428 = sphi %s394, %s394
            $region100: #{double_conv.3} parent=96 // loop_header_branch
              %425 = sbr.rel (%p423) target = $region104
            $region101: #{double_conv.3} parent=96 // loop_body
              %v429 = vld [vmem:[%s427] sm:$0xff]
              %430 = vst [vmem:[%s428] sm:$0xff] %v429
              %v431 = vld [vmem:[%s427 + $0x8] sm:$0xff]
              %432 = vst [vmem:[%s428 + $0x8] sm:$0xff] %v431
            $region102: #{double_conv.3} parent=96 // loop_footer
              %s426 = sadd.s32 1, %s422
            $region103: #{double_conv.3} parent=96 // loop_footer_branch
              %421 = sbr.rel target = $region99
            $region104: #{double_conv.3} parent=96 // loop_exit
              _
          $region97: #{double_conv.3} parent=81 // pred_fallthru
            _
          %p433 = pneg %p417
          // Predicated region
          $region105: #{double_conv.3} parent=81 // pred_check
            _
          $region106: #{double_conv.3} parent=81 // pred_check_branch
            %435 = sbr.rel (%p417) target = $region108
          $region107: #{double_conv.3} parent=81 // pred_region
            %s436 = sand.u32 16, 7
          $region108: #{double_conv.3} parent=81 // pred_fallthru
            _
        $region82: #{double_conv.3} parent=77 // pred_fallthru
          _
        // Predicated region
        $region83: #{double_conv.3} parent=77 // pred_check
          %p401 = pneg %p397
        $region84: #{double_conv.3} parent=77 // pred_check_branch
          %403 = sbr.rel (%p401) target = $region86
        $region85: #{double_conv.3} parent=77 // pred_region
          %s404 = sshll.u32 1, 16
          %s405 = ssub.s32 %s404, 1
          loop: start=0, step=1, limit=1
          $region87: #{double_conv.3} parent=85 // loop_pre_header
            _
          $region88: #{double_conv.3} parent=85 // loop_header
            %s407 = sphi 0, %s411
            %p408 = scmp.ge.s32.totalorder %s407, 1
            %s412 = sphi %s393, %s393
            %s413 = sphi %s394, %s394
          $region89: #{double_conv.3} parent=85 // loop_header_branch
            %410 = sbr.rel (%p408) target = $region93
          $region90: #{double_conv.3} parent=85 // loop_body
            %v414 = vld [vmem:[%s412] sm:%s405]
            %415 = vst [vmem:[%s413] sm:%s405] %v414
          $region91: #{double_conv.3} parent=85 // loop_footer
            %s411 = sadd.s32 1, %s407
          $region92: #{double_conv.3} parent=85 // loop_footer_branch
            %406 = sbr.rel target = $region88
          $region93: #{double_conv.3} parent=85 // loop_exit
            _
        $region86: #{double_conv.3} parent=77 // pred_fallthru
          _
        // Predicated region
        $region109: #{double_conv.3} parent=77 // pred_check
          _
        $region110: #{double_conv.3} parent=77 // pred_check_branch
          %439 = sbr.rel (0) target = $region112
        $region111: #{double_conv.3} parent=77 // pred_region
          %440 = vsyncadd %s395, 256
        $region112: #{double_conv.3} parent=77 // pred_fallthru
          _
      $region78: #{double_conv.3} parent=35 // pred_fallthru
        _
      // Predicated region
      $region113: #{double_conv.3} parent=35 // pred_check
        %p441 = pneg %p331
      $region114: #{double_conv.3} parent=35 // pred_check_branch
        %443 = sbr.rel (%p441) target = $region116
      $region115: #{double_conv.3} parent=35 // pred_region
        %s444 = smul.u32 1, 1
        %s445 = smul.u32 %s444, 16
        %s446 = smul.u32 %s445, 1
        %s447 = sshll.u32 %s446, 4
        %448 = dma.done [#allocation3], %s447
      $region116: #{double_conv.3} parent=35 // pred_fallthru
        _
      // Predicated region
      $region117: #{double_conv.3} parent=35 // pred_check
        %p449 = pneg %p332
      $region118: #{double_conv.3} parent=35 // pred_check_branch
        %451 = sbr.rel (%p449) target = $region120
      $region119: #{double_conv.3} parent=35 // pred_region
        %s452 = scalar_lea.sflag [#allocation3], 1
        %s453 = smul.u32 1, 1
        %s454 = smul.u32 %s453, 16
        %s455 = smul.u32 %s454, 1
        %s456 = sshll.u32 %s455, 4
        %457 = dma.done %s452, %s456
      $region120: #{double_conv.3} parent=35 // pred_fallthru
        _
      %v458 = vld [vmem:[#allocation2] sm:$0xff]
      %v459 = vld [vmem:[#allocation2 + $0x8] sm:$0xff]
      %v460 = vld [vmem:[#allocation2 + $0x10] sm:$0xff]
      %v461 = vld [vmem:[#allocation2 + $0x18] sm:$0xff]
      %v462 = vld [vmem:[%s305] sm:$0xff]
      %v463 = vld [vmem:[%s305 + $0x8] sm:$0xff]
      %v464 = vld [vmem:[%s305 + $0x10] sm:$0xff]
      %v465 = vld [vmem:[%s305 + $0x18] sm:$0xff]
      %v466 = vld [vmem:[%s305 + $0x20] sm:$0xff]
      %v467 = vld [vmem:[%s305 + $0x28] sm:$0xff]
      %v468 = vld [vmem:[%s305 + $0x30] sm:$0xff]
      %v469 = vld [vmem:[%s305 + $0x38] sm:$0xff]
      %v470 = vld [vmem:[%s305 + $0x40] sm:$0xff]
      %v471 = vld [vmem:[%s305 + $0x48] sm:$0xff]
      %v472 = vld [vmem:[%s305 + $0x50] sm:$0xff]
      %v473 = vld [vmem:[%s305 + $0x58] sm:$0xff]
      %v474 = vld [vmem:[%s305 + $0x60] sm:$0xff]
      %v475 = vld [vmem:[%s305 + $0x68] sm:$0xff]
      %v476 = vld [vmem:[%s305 + $0x70] sm:$0xff]
      %v477 = vld [vmem:[%s305 + $0x78] sm:$0xff]
      %v478 = vld [vmem:[%s305 + $0x80] sm:$0xff]
      %v479 = vld [vmem:[%s305 + $0x88] sm:$0xff]
      %v480 = vld [vmem:[%s305 + $0x90] sm:$0xff]
      %v481 = vld [vmem:[%s305 + $0x98] sm:$0xff]
      %v482 = vld [vmem:[%s305 + $0xa0] sm:$0xff]
      %v483 = vld [vmem:[%s305 + $0xa8] sm:$0xff]
      %v484 = vld [vmem:[%s305 + $0xb0] sm:$0xff]
      %v485 = vld [vmem:[%s305 + $0xb8] sm:$0xff]
      %v486 = vld [vmem:[%s305 + $0xc0] sm:$0xff]
      %v487 = vld [vmem:[%s305 + $0xc8] sm:$0xff]
      %v488 = vld [vmem:[%s305 + $0xd0] sm:$0xff]
      %v489 = vld [vmem:[%s305 + $0xd8] sm:$0xff]
      %v490 = vld [vmem:[%s305 + $0xe0] sm:$0xff]
      %v491 = vld [vmem:[%s305 + $0xe8] sm:$0xff]
      %v492 = vld [vmem:[%s305 + $0xf0] sm:$0xff]
      %v493 = vld [vmem:[%s305 + $0xf8] sm:$0xff]
      %s494 = scalar_select %p331, 1, 0
      %v495 = vstv %s494
      %vm496 = vcmp.eq.s32.totalorder %v495, 1
      %v497 = vsel %vm496, %v458, 0.0
      %v498 = vsel %vm496, %v459, 0.0
      %s499 = scalar_select %p332, 1, 0
      %v500 = vstv %s499
      %vm501 = vcmp.eq.s32.totalorder %v500, 1
      %v502 = vsel %vm501, %v460, 0.0
      %v503 = vsel %vm501, %v461, 0.0
      %v504 = vld [vmem:[%s2] sm:$0xff]
      %v505 = vld [vmem:[%s2 + $0x8] sm:$0xff]
      %v506 = vld [vmem:[%s2 + $0x10] sm:$0xff]
      %v507 = vld [vmem:[%s2 + $0x18] sm:$0xff]
      %v508 = vld [vmem:[%s2 + $0x20] sm:$0xff]
      %v509 = vld [vmem:[%s2 + $0x28] sm:$0xff]
      %v510 = vld [vmem:[%s2 + $0x30] sm:$0xff]
      %v511 = vld [vmem:[%s2 + $0x38] sm:$0xff]
      %v512 = vld [vmem:[%s2 + $0x40] sm:$0xff]
      %v513 = vld [vmem:[%s2 + $0x48] sm:$0xff]
      %v514 = vld [vmem:[%s2 + $0x50] sm:$0xff]
      %v515 = vld [vmem:[%s2 + $0x58] sm:$0xff]
      %v516 = vld [vmem:[%s2 + $0x60] sm:$0xff]
      %v517 = vld [vmem:[%s2 + $0x68] sm:$0xff]
      %v518 = vld [vmem:[%s2 + $0x70] sm:$0xff]
      %v519 = vld [vmem:[%s2 + $0x78] sm:$0xff]
      %v520 = vld [vmem:[%s2 + $0x80] sm:$0xff]
      %v521 = vld [vmem:[%s2 + $0x88] sm:$0xff]
      %v522 = vld [vmem:[%s2 + $0x90] sm:$0xff]
      %v523 = vld [vmem:[%s2 + $0x98] sm:$0xff]
      %v524 = vld [vmem:[%s2 + $0xa0] sm:$0xff]
      %v525 = vld [vmem:[%s2 + $0xa8] sm:$0xff]
      %v526 = vld [vmem:[%s2 + $0xb0] sm:$0xff]
      %v527 = vld [vmem:[%s2 + $0xb8] sm:$0xff]
      %v528 = vld [vmem:[%s2 + $0xc0] sm:$0xff]
      %v529 = vld [vmem:[%s2 + $0xc8] sm:$0xff]
      %v530 = vld [vmem:[%s2 + $0xd0] sm:$0xff]
      %v531 = vld [vmem:[%s2 + $0xd8] sm:$0xff]
      %v532 = vld [vmem:[%s2 + $0xe0] sm:$0xff]
      %v533 = vld [vmem:[%s2 + $0xe8] sm:$0xff]
      %v534 = vld [vmem:[%s2 + $0xf0] sm:$0xff]
      %v535 = vld [vmem:[%s2 + $0xf8] sm:$0xff]
      %v536 = vld [vmem:[%s2 + $0x100] sm:$0xff]
      %v537 = vld [vmem:[%s2 + $0x108] sm:$0xff]
      %v538 = vld [vmem:[%s2 + $0x110] sm:$0xff]
      %v539 = vld [vmem:[%s2 + $0x118] sm:$0xff]
      %v540 = vld [vmem:[%s2 + $0x120] sm:$0xff]
      %v541 = vld [vmem:[%s2 + $0x128] sm:$0xff]
      %v542 = vld [vmem:[%s2 + $0x130] sm:$0xff]
      %v543 = vld [vmem:[%s2 + $0x138] sm:$0xff]
      %v544 = vld [vmem:[%s2 + $0x140] sm:$0xff]
      %v545 = vld [vmem:[%s2 + $0x148] sm:$0xff]
      %v546 = vld [vmem:[%s2 + $0x150] sm:$0xff]
      %v547 = vld [vmem:[%s2 + $0x158] sm:$0xff]
      %v548 = vld [vmem:[%s2 + $0x160] sm:$0xff]
      %v549 = vld [vmem:[%s2 + $0x168] sm:$0xff]
      %v550 = vld [vmem:[%s2 + $0x170] sm:$0xff]
      %v551 = vld [vmem:[%s2 + $0x178] sm:$0xff]
      %s552 = scalar_lea.vmem %s2, 384
      %v553 = vld [vmem:[%s552] sm:$0xff]
      %v554 = vld [vmem:[%s552 + $0x8] sm:$0xff]
      %v555 = vld [vmem:[%s552 + $0x10] sm:$0xff]
      %v556 = vld [vmem:[%s552 + $0x18] sm:$0xff]
      %v557 = vld [vmem:[%s552 + $0x20] sm:$0xff]
      %v558 = vld [vmem:[%s552 + $0x28] sm:$0xff]
      %v559 = vld [vmem:[%s552 + $0x30] sm:$0xff]
      %v560 = vld [vmem:[%s552 + $0x38] sm:$0xff]
      %v561 = vld [vmem:[%s552 + $0x40] sm:$0xff]
      %v562 = vld [vmem:[%s552 + $0x48] sm:$0xff]
      %v563 = vld [vmem:[%s552 + $0x50] sm:$0xff]
      %v564 = vld [vmem:[%s552 + $0x58] sm:$0xff]
      %v565 = vld [vmem:[%s552 + $0x60] sm:$0xff]
      %v566 = vld [vmem:[%s552 + $0x68] sm:$0xff]
      %v567 = vld [vmem:[%s552 + $0x70] sm:$0xff]
      %v568 = vld [vmem:[%s552 + $0x78] sm:$0xff]
      %v569 = vld [vmem:[%s552 + $0x80] sm:$0xff]
      %v570 = vld [vmem:[%s552 + $0x88] sm:$0xff]
      %v571 = vld [vmem:[%s552 + $0x90] sm:$0xff]
      %v572 = vld [vmem:[%s552 + $0x98] sm:$0xff]
      %v573 = vld [vmem:[%s552 + $0xa0] sm:$0xff]
      %v574 = vld [vmem:[%s552 + $0xa8] sm:$0xff]
      %v575 = vld [vmem:[%s552 + $0xb0] sm:$0xff]
      %v576 = vld [vmem:[%s552 + $0xb8] sm:$0xff]
      %v577 = vld [vmem:[%s552 + $0xc0] sm:$0xff]
      %v578 = vld [vmem:[%s552 + $0xc8] sm:$0xff]
      %v579 = vld [vmem:[%s552 + $0xd0] sm:$0xff]
      %v580 = vld [vmem:[%s552 + $0xd8] sm:$0xff]
      %v581 = vld [vmem:[%s552 + $0xe0] sm:$0xff]
      %v582 = vld [vmem:[%s552 + $0xe8] sm:$0xff]
      %v583 = vld [vmem:[%s552 + $0xf0] sm:$0xff]
      %v584 = vld [vmem:[%s552 + $0xf8] sm:$0xff]
      %v585 = vld [vmem:[%s552 + $0x100] sm:$0xff]
      %v586 = vld [vmem:[%s552 + $0x108] sm:$0xff]
      %v587 = vld [vmem:[%s552 + $0x110] sm:$0xff]
      %v588 = vld [vmem:[%s552 + $0x118] sm:$0xff]
      %v589 = vld [vmem:[%s552 + $0x120] sm:$0xff]
      %v590 = vld [vmem:[%s552 + $0x128] sm:$0xff]
      %v591 = vld [vmem:[%s552 + $0x130] sm:$0xff]
      %v592 = vld [vmem:[%s552 + $0x138] sm:$0xff]
      %v593 = vld [vmem:[%s552 + $0x140] sm:$0xff]
      %v594 = vld [vmem:[%s552 + $0x148] sm:$0xff]
      %v595 = vld [vmem:[%s552 + $0x150] sm:$0xff]
      %v596 = vld [vmem:[%s552 + $0x158] sm:$0xff]
      %v597 = vld [vmem:[%s552 + $0x160] sm:$0xff]
      %v598 = vld [vmem:[%s552 + $0x168] sm:$0xff]
      %v599 = vld [vmem:[%s552 + $0x170] sm:$0xff]
      %v600 = vld [vmem:[%s552 + $0x178] sm:$0xff]
      %601 = vmatprep.subr.mxu0 %v599
      %602 = vmatpush1.msra.mxu0 %v598
      %603 = vmatprep.subr.mxu0 %v596
      %604 = vmatpush1.msra.mxu0 %v595
      %605 = vmatprep.subr.mxu0 %v593
      %606 = vmatpush1.msra.mxu0 %v592
      %607 = vmatprep.subr.mxu0 %v590
      %608 = vmatpush1.msra.mxu0 %v589
      %609 = vmatprep.subr.mxu0 %v587
      %610 = vmatpush1.msra.mxu0 %v586
      %611 = vmatprep.subr.mxu0 %v584
      %612 = vmatpush1.msra.mxu0 %v583
      %613 = vmatprep.subr.mxu0 %v581
      %614 = vmatpush1.msra.mxu0 %v580
      %615 = vmatprep.subr.mxu0 %v578
      %616 = vmatpush1.msra.mxu0 %v577
      %617 = vmatprep.subr.mxu0 %v575
      %618 = vmatpush1.msra.mxu0 %v574
      %619 = vmatprep.subr.mxu0 %v572
      %620 = vmatpush1.msra.mxu0 %v571
      %621 = vmatprep.subr.mxu0 %v569
      %622 = vmatpush1.msra.mxu0 %v568
      %623 = vmatprep.subr.mxu0 %v566
      %624 = vmatpush1.msra.mxu0 %v565
      %625 = vmatprep.subr.mxu0 %v563
      %626 = vmatpush1.msra.mxu0 %v562
      %627 = vmatprep.subr.mxu0 %v560
      %628 = vmatpush1.msra.mxu0 %v559
      %629 = vmatprep.subr.mxu0 %v557
      %630 = vmatpush1.msra.mxu0 %v556
      %631 = vmatprep.subr.mxu0 %v554
      %632 = vmatpush1.msra.mxu0 %v553
      %633 = vmatprep.subr.mxu0 0.0
      %634 = vmatpush2.msra.mxu0 0.0
      %635 = vmatprep.subr.mxu0 0.0
      %636 = vmatpush2.msra.mxu0 0.0
      %637 = vmatprep.subr.mxu0 0.0
      %638 = vmatpush2.msra.mxu0 0.0
      %639 = vmatprep.subr.mxu0 0.0
      %640 = vmatpush2.msra.mxu0 0.0
      %641 = vmatprep.subr.mxu0 0.0
      %642 = vmatpush2.msra.mxu0 0.0
      %643 = vmatprep.subr.mxu0 0.0
      %644 = vmatpush2.msra.mxu0 0.0
      %645 = vmatprep.subr.mxu0 0.0
      %646 = vmatpush2.msra.mxu0 0.0
      %647 = vmatprep.subr.mxu0 0.0
      %648 = vmatpush2.msra.mxu0 0.0
      %649 = vmatprep.subr.mxu0 0.0
      %650 = vmatpush2.msra.mxu0 0.0
      %651 = vmatprep.subr.mxu0 0.0
      %652 = vmatpush2.msra.mxu0 0.0
      %653 = vmatprep.subr.mxu0 0.0
      %654 = vmatpush2.msra.mxu0 0.0
      %655 = vmatprep.subr.mxu0 0.0
      %656 = vmatpush2.msra.mxu0 0.0
      %657 = vmatprep.subr.mxu0 0.0
      %658 = vmatpush2.msra.mxu0 0.0
      %659 = vmatprep.subr.mxu0 0.0
      %660 = vmatpush2.msra.mxu0 0.0
      %661 = vmatprep.subr.mxu0 0.0
      %662 = vmatpush2.msra.mxu0 0.0
      %663 = vmatprep.subr.mxu0 0.0
      %664 = vmatpush2.msra.mxu0 0.0
      %665 = vmatprep.mubr.f32.mxu0 0.0
      %666 = vmatmul.mubr.f32.gmra.mxu0 %v462
      %v667 = vpop.f32.mrf.mxu0
      %v668 = vadd.f32 0.0, %v667
      %v669 = vpop.f32.mrf.mxu0
      %v670 = vadd.f32 0.0, %v669
      %671 = vmatprep.mubr.f32.mxu0 0.0
      %672 = vmatmul.mubr.f32.gmra.mxu0 %v463
      %v673 = vpop.f32.mrf.mxu0
      %v674 = vadd.f32 0.0, %v673
      %v675 = vpop.f32.mrf.mxu0
      %v676 = vadd.f32 0.0, %v675
      %677 = vmatprep.mubr.f32.mxu0 0.0
      %678 = vmatmul.mubr.f32.gmra.mxu0 %v464
      %v679 = vpop.f32.mrf.mxu0
      %v680 = vadd.f32 0.0, %v679
      %v681 = vpop.f32.mrf.mxu0
      %v682 = vadd.f32 0.0, %v681
      %683 = vmatprep.mubr.f32.mxu0 0.0
      %684 = vmatmul.mubr.f32.gmra.mxu0 %v465
      %v685 = vpop.f32.mrf.mxu0
      %v686 = vadd.f32 0.0, %v685
      %v687 = vpop.f32.mrf.mxu0
      %v688 = vadd.f32 0.0, %v687
      %689 = vmatprep.mubr.f32.mxu0 0.0
      %690 = vmatmul.mubr.f32.gmra.mxu0 %v466
      %v691 = vpop.f32.mrf.mxu0
      %v692 = vadd.f32 0.0, %v691
      %v693 = vpop.f32.mrf.mxu0
      %v694 = vadd.f32 0.0, %v693
      %695 = vmatprep.mubr.f32.mxu0 0.0
      %696 = vmatmul.mubr.f32.gmra.mxu0 %v467
      %v697 = vpop.f32.mrf.mxu0
      %v698 = vadd.f32 0.0, %v697
      %v699 = vpop.f32.mrf.mxu0
      %v700 = vadd.f32 0.0, %v699
      %701 = vmatprep.mubr.f32.mxu0 0.0
      %702 = vmatmul.mubr.f32.gmra.mxu0 %v468
      %v703 = vpop.f32.mrf.mxu0
      %v704 = vadd.f32 0.0, %v703
      %v705 = vpop.f32.mrf.mxu0
      %v706 = vadd.f32 0.0, %v705
      %707 = vmatprep.mubr.f32.mxu0 0.0
      %708 = vmatmul.mubr.f32.gmra.mxu0 %v469
      %v709 = vpop.f32.mrf.mxu0
      %v710 = vadd.f32 0.0, %v709
      %v711 = vpop.f32.mrf.mxu0
      %v712 = vadd.f32 0.0, %v711
      %713 = vmatprep.mubr.f32.mxu0 0.0
      %714 = vmatmul.mubr.f32.gmra.mxu0 %v470
      %v715 = vpop.f32.mrf.mxu0
      %v716 = vadd.f32 0.0, %v715
      %v717 = vpop.f32.mrf.mxu0
      %v718 = vadd.f32 0.0, %v717
      %719 = vmatprep.mubr.f32.mxu0 0.0
      %720 = vmatmul.mubr.f32.gmra.mxu0 %v471
      %v721 = vpop.f32.mrf.mxu0
      %v722 = vadd.f32 0.0, %v721
      %v723 = vpop.f32.mrf.mxu0
      %v724 = vadd.f32 0.0, %v723
      %725 = vmatprep.mubr.f32.mxu0 0.0
      %726 = vmatmul.mubr.f32.gmra.mxu0 %v472
      %v727 = vpop.f32.mrf.mxu0
      %v728 = vadd.f32 0.0, %v727
      %v729 = vpop.f32.mrf.mxu0
      %v730 = vadd.f32 0.0, %v729
      %731 = vmatprep.mubr.f32.mxu0 0.0
      %732 = vmatmul.mubr.f32.gmra.mxu0 %v473
      %v733 = vpop.f32.mrf.mxu0
      %v734 = vadd.f32 0.0, %v733
      %v735 = vpop.f32.mrf.mxu0
      %v736 = vadd.f32 0.0, %v735
      %737 = vmatprep.mubr.f32.mxu0 0.0
      %738 = vmatmul.mubr.f32.gmra.mxu0 %v474
      %v739 = vpop.f32.mrf.mxu0
      %v740 = vadd.f32 0.0, %v739
      %v741 = vpop.f32.mrf.mxu0
      %v742 = vadd.f32 0.0, %v741
      %743 = vmatprep.mubr.f32.mxu0 0.0
      %744 = vmatmul.mubr.f32.gmra.mxu0 %v475
      %v745 = vpop.f32.mrf.mxu0
      %v746 = vadd.f32 0.0, %v745
      %v747 = vpop.f32.mrf.mxu0
      %v748 = vadd.f32 0.0, %v747
      %749 = vmatprep.mubr.f32.mxu0 0.0
      %750 = vmatmul.mubr.f32.gmra.mxu0 %v476
      %v751 = vpop.f32.mrf.mxu0
      %v752 = vadd.f32 0.0, %v751
      %v753 = vpop.f32.mrf.mxu0
      %v754 = vadd.f32 0.0, %v753
      %755 = vmatprep.mubr.f32.mxu0 0.0
      %756 = vmatmul.mubr.f32.gmra.mxu0 %v477
      %v757 = vpop.f32.mrf.mxu0
      %v758 = vadd.f32 0.0, %v757
      %v759 = vpop.f32.mrf.mxu0
      %v760 = vadd.f32 0.0, %v759
      %761 = vmatprep.mubr.f32.mxu0 0.0
      %762 = vmatmul.mubr.f32.gmra.mxu0 %v478
      %v763 = vpop.f32.mrf.mxu0
      %v764 = vadd.f32 0.0, %v763
      %v765 = vpop.f32.mrf.mxu0
      %v766 = vadd.f32 0.0, %v765
      %767 = vmatprep.mubr.f32.mxu0 0.0
      %768 = vmatmul.mubr.f32.gmra.mxu0 %v479
      %v769 = vpop.f32.mrf.mxu0
      %v770 = vadd.f32 0.0, %v769
      %v771 = vpop.f32.mrf.mxu0
      %v772 = vadd.f32 0.0, %v771
      %773 = vmatprep.mubr.f32.mxu0 0.0
      %774 = vmatmul.mubr.f32.gmra.mxu0 %v480
      %v775 = vpop.f32.mrf.mxu0
      %v776 = vadd.f32 0.0, %v775
      %v777 = vpop.f32.mrf.mxu0
      %v778 = vadd.f32 0.0, %v777
      %779 = vmatprep.mubr.f32.mxu0 0.0
      %780 = vmatmul.mubr.f32.gmra.mxu0 %v481
      %v781 = vpop.f32.mrf.mxu0
      %v782 = vadd.f32 0.0, %v781
      %v783 = vpop.f32.mrf.mxu0
      %v784 = vadd.f32 0.0, %v783
      %785 = vmatprep.mubr.f32.mxu0 0.0
      %786 = vmatmul.mubr.f32.gmra.mxu0 %v482
      %v787 = vpop.f32.mrf.mxu0
      %v788 = vadd.f32 0.0, %v787
      %v789 = vpop.f32.mrf.mxu0
      %v790 = vadd.f32 0.0, %v789
      %791 = vmatprep.mubr.f32.mxu0 0.0
      %792 = vmatmul.mubr.f32.gmra.mxu0 %v483
      %v793 = vpop.f32.mrf.mxu0
      %v794 = vadd.f32 0.0, %v793
      %v795 = vpop.f32.mrf.mxu0
      %v796 = vadd.f32 0.0, %v795
      %797 = vmatprep.mubr.f32.mxu0 0.0
      %798 = vmatmul.mubr.f32.gmra.mxu0 %v484
      %v799 = vpop.f32.mrf.mxu0
      %v800 = vadd.f32 0.0, %v799
      %v801 = vpop.f32.mrf.mxu0
      %v802 = vadd.f32 0.0, %v801
      %803 = vmatprep.mubr.f32.mxu0 0.0
      %804 = vmatmul.mubr.f32.gmra.mxu0 %v485
      %v805 = vpop.f32.mrf.mxu0
      %v806 = vadd.f32 0.0, %v805
      %v807 = vpop.f32.mrf.mxu0
      %v808 = vadd.f32 0.0, %v807
      %809 = vmatprep.mubr.f32.mxu0 0.0
      %810 = vmatmul.mubr.f32.gmra.mxu0 %v486
      %v811 = vpop.f32.mrf.mxu0
      %v812 = vadd.f32 0.0, %v811
      %v813 = vpop.f32.mrf.mxu0
      %v814 = vadd.f32 0.0, %v813
      %815 = vmatprep.mubr.f32.mxu0 0.0
      %816 = vmatmul.mubr.f32.gmra.mxu0 %v487
      %v817 = vpop.f32.mrf.mxu0
      %v818 = vadd.f32 0.0, %v817
      %v819 = vpop.f32.mrf.mxu0
      %v820 = vadd.f32 0.0, %v819
      %821 = vmatprep.mubr.f32.mxu0 0.0
      %822 = vmatmul.mubr.f32.gmra.mxu0 %v488
      %v823 = vpop.f32.mrf.mxu0
      %v824 = vadd.f32 0.0, %v823
      %v825 = vpop.f32.mrf.mxu0
      %v826 = vadd.f32 0.0, %v825
      %827 = vmatprep.mubr.f32.mxu0 0.0
      %828 = vmatmul.mubr.f32.gmra.mxu0 %v489
      %v829 = vpop.f32.mrf.mxu0
      %v830 = vadd.f32 0.0, %v829
      %v831 = vpop.f32.mrf.mxu0
      %v832 = vadd.f32 0.0, %v831
      %833 = vmatprep.mubr.f32.mxu0 0.0
      %834 = vmatmul.mubr.f32.gmra.mxu0 %v490
      %v835 = vpop.f32.mrf.mxu0
      %v836 = vadd.f32 0.0, %v835
      %v837 = vpop.f32.mrf.mxu0
      %v838 = vadd.f32 0.0, %v837
      %839 = vmatprep.mubr.f32.mxu0 0.0
      %840 = vmatmul.mubr.f32.gmra.mxu0 %v491
      %v841 = vpop.f32.mrf.mxu0
      %v842 = vadd.f32 0.0, %v841
      %v843 = vpop.f32.mrf.mxu0
      %v844 = vadd.f32 0.0, %v843
      %845 = vmatprep.mubr.f32.mxu0 0.0
      %846 = vmatmul.mubr.f32.gmra.mxu0 %v492
      %v847 = vpop.f32.mrf.mxu0
      %v848 = vadd.f32 0.0, %v847
      %v849 = vpop.f32.mrf.mxu0
      %v850 = vadd.f32 0.0, %v849
      %851 = vmatprep.mubr.f32.mxu0 0.0
      %852 = vmatmul.mubr.f32.gmra.mxu0 %v493
      %v853 = vpop.f32.mrf.mxu0
      %v854 = vadd.f32 0.0, %v853
      %v855 = vpop.f32.mrf.mxu0
      %v856 = vadd.f32 0.0, %v855
      %857 = vdwg.mxu0
      %858 = vmatprep.subr.mxu0 0.0
      %859 = vmatpush1.msra.mxu0 %v600
      %860 = vmatprep.subr.mxu0 0.0
      %861 = vmatpush1.msra.mxu0 %v597
      %862 = vmatprep.subr.mxu0 0.0
      %863 = vmatpush1.msra.mxu0 %v594
      %864 = vmatprep.subr.mxu0 0.0
      %865 = vmatpush1.msra.mxu0 %v591
      %866 = vmatprep.subr.mxu0 0.0
      %867 = vmatpush1.msra.mxu0 %v588
      %868 = vmatprep.subr.mxu0 0.0
      %869 = vmatpush1.msra.mxu0 %v585
      %870 = vmatprep.subr.mxu0 0.0
      %871 = vmatpush1.msra.mxu0 %v582
      %872 = vmatprep.subr.mxu0 0.0
      %873 = vmatpush1.msra.mxu0 %v579
      %874 = vmatprep.subr.mxu0 0.0
      %875 = vmatpush1.msra.mxu0 %v576
      %876 = vmatprep.subr.mxu0 0.0
      %877 = vmatpush1.msra.mxu0 %v573
      %878 = vmatprep.subr.mxu0 0.0
      %879 = vmatpush1.msra.mxu0 %v570
      %880 = vmatprep.subr.mxu0 0.0
      %881 = vmatpush1.msra.mxu0 %v567
      %882 = vmatprep.subr.mxu0 0.0
      %883 = vmatpush1.msra.mxu0 %v564
      %884 = vmatprep.subr.mxu0 0.0
      %885 = vmatpush1.msra.mxu0 %v561
      %886 = vmatprep.subr.mxu0 0.0
      %887 = vmatpush1.msra.mxu0 %v558
      %888 = vmatprep.subr.mxu0 0.0
      %889 = vmatpush1.msra.mxu0 %v555
      %890 = vmatprep.subr.mxu0 0.0
      %891 = vmatpush2.msra.mxu0 0.0
      %892 = vmatprep.subr.mxu0 0.0
      %893 = vmatpush2.msra.mxu0 0.0
      %894 = vmatprep.subr.mxu0 0.0
      %895 = vmatpush2.msra.mxu0 0.0
      %896 = vmatprep.subr.mxu0 0.0
      %897 = vmatpush2.msra.mxu0 0.0
      %898 = vmatprep.subr.mxu0 0.0
      %899 = vmatpush2.msra.mxu0 0.0
      %900 = vmatprep.subr.mxu0 0.0
      %901 = vmatpush2.msra.mxu0 0.0
      %902 = vmatprep.subr.mxu0 0.0
      %903 = vmatpush2.msra.mxu0 0.0
      %904 = vmatprep.subr.mxu0 0.0
      %905 = vmatpush2.msra.mxu0 0.0
      %906 = vmatprep.subr.mxu0 0.0
      %907 = vmatpush2.msra.mxu0 0.0
      %908 = vmatprep.subr.mxu0 0.0
      %909 = vmatpush2.msra.mxu0 0.0
      %910 = vmatprep.subr.mxu0 0.0
      %911 = vmatpush2.msra.mxu0 0.0
      %912 = vmatprep.subr.mxu0 0.0
      %913 = vmatpush2.msra.mxu0 0.0
      %914 = vmatprep.subr.mxu0 0.0
      %915 = vmatpush2.msra.mxu0 0.0
      %916 = vmatprep.subr.mxu0 0.0
      %917 = vmatpush2.msra.mxu0 0.0
      %918 = vmatprep.subr.mxu0 0.0
      %919 = vmatpush2.msra.mxu0 0.0
      %920 = vmatprep.subr.mxu0 0.0
      %921 = vmatpush2.msra.mxu0 0.0
      %922 = vmatprep.mubr.f32.mxu0 0.0
      %923 = vmatmul.mubr.f32.gmra.mxu0 %v462
      %v924 = vpop.f32.mrf.mxu0
      %v925 = vadd.f32 0.0, %v924
      %v926 = vpop.f32.mrf.mxu0
      %927 = vmatprep.mubr.f32.mxu0 0.0
      %928 = vmatmul.mubr.f32.gmra.mxu0 %v463
      %v929 = vpop.f32.mrf.mxu0
      %v930 = vadd.f32 0.0, %v929
      %v931 = vpop.f32.mrf.mxu0
      %932 = vmatprep.mubr.f32.mxu0 0.0
      %933 = vmatmul.mubr.f32.gmra.mxu0 %v464
      %v934 = vpop.f32.mrf.mxu0
      %v935 = vadd.f32 0.0, %v934
      %v936 = vpop.f32.mrf.mxu0
      %937 = vmatprep.mubr.f32.mxu0 0.0
      %938 = vmatmul.mubr.f32.gmra.mxu0 %v465
      %v939 = vpop.f32.mrf.mxu0
      %v940 = vadd.f32 0.0, %v939
      %v941 = vpop.f32.mrf.mxu0
      %942 = vmatprep.mubr.f32.mxu0 0.0
      %943 = vmatmul.mubr.f32.gmra.mxu0 %v466
      %v944 = vpop.f32.mrf.mxu0
      %v945 = vadd.f32 0.0, %v944
      %v946 = vpop.f32.mrf.mxu0
      %947 = vmatprep.mubr.f32.mxu0 0.0
      %948 = vmatmul.mubr.f32.gmra.mxu0 %v467
      %v949 = vpop.f32.mrf.mxu0
      %v950 = vadd.f32 0.0, %v949
      %v951 = vpop.f32.mrf.mxu0
      %952 = vmatprep.mubr.f32.mxu0 0.0
      %953 = vmatmul.mubr.f32.gmra.mxu0 %v468
      %v954 = vpop.f32.mrf.mxu0
      %v955 = vadd.f32 0.0, %v954
      %v956 = vpop.f32.mrf.mxu0
      %957 = vmatprep.mubr.f32.mxu0 0.0
      %958 = vmatmul.mubr.f32.gmra.mxu0 %v469
      %v959 = vpop.f32.mrf.mxu0
      %v960 = vadd.f32 0.0, %v959
      %v961 = vpop.f32.mrf.mxu0
      %962 = vmatprep.mubr.f32.mxu0 0.0
      %963 = vmatmul.mubr.f32.gmra.mxu0 %v470
      %v964 = vpop.f32.mrf.mxu0
      %v965 = vadd.f32 0.0, %v964
      %v966 = vpop.f32.mrf.mxu0
      %967 = vmatprep.mubr.f32.mxu0 0.0
      %968 = vmatmul.mubr.f32.gmra.mxu0 %v471
      %v969 = vpop.f32.mrf.mxu0
      %v970 = vadd.f32 0.0, %v969
      %v971 = vpop.f32.mrf.mxu0
      %972 = vmatprep.mubr.f32.mxu0 0.0
      %973 = vmatmul.mubr.f32.gmra.mxu0 %v472
      %v974 = vpop.f32.mrf.mxu0
      %v975 = vadd.f32 0.0, %v974
      %v976 = vpop.f32.mrf.mxu0
      %977 = vmatprep.mubr.f32.mxu0 0.0
      %978 = vmatmul.mubr.f32.gmra.mxu0 %v473
      %v979 = vpop.f32.mrf.mxu0
      %v980 = vadd.f32 0.0, %v979
      %v981 = vpop.f32.mrf.mxu0
      %982 = vmatprep.mubr.f32.mxu0 0.0
      %983 = vmatmul.mubr.f32.gmra.mxu0 %v474
      %v984 = vpop.f32.mrf.mxu0
      %v985 = vadd.f32 0.0, %v984
      %v986 = vpop.f32.mrf.mxu0
      %987 = vmatprep.mubr.f32.mxu0 0.0
      %988 = vmatmul.mubr.f32.gmra.mxu0 %v475
      %v989 = vpop.f32.mrf.mxu0
      %v990 = vadd.f32 0.0, %v989
      %v991 = vpop.f32.mrf.mxu0
      %992 = vmatprep.mubr.f32.mxu0 0.0
      %993 = vmatmul.mubr.f32.gmra.mxu0 %v476
      %v994 = vpop.f32.mrf.mxu0
      %v995 = vadd.f32 0.0, %v994
      %v996 = vpop.f32.mrf.mxu0
      %997 = vmatprep.mubr.f32.mxu0 0.0
      %998 = vmatmul.mubr.f32.gmra.mxu0 %v477
      %v999 = vpop.f32.mrf.mxu0
      %v1000 = vadd.f32 0.0, %v999
      %v1001 = vpop.f32.mrf.mxu0
      %1002 = vmatprep.mubr.f32.mxu0 0.0
      %1003 = vmatmul.mubr.f32.gmra.mxu0 %v478
      %v1004 = vpop.f32.mrf.mxu0
      %v1005 = vadd.f32 0.0, %v1004
      %v1006 = vpop.f32.mrf.mxu0
      %1007 = vmatprep.mubr.f32.mxu0 0.0
      %1008 = vmatmul.mubr.f32.gmra.mxu0 %v479
      %v1009 = vpop.f32.mrf.mxu0
      %v1010 = vadd.f32 0.0, %v1009
      %v1011 = vpop.f32.mrf.mxu0
      %1012 = vmatprep.mubr.f32.mxu0 0.0
      %1013 = vmatmul.mubr.f32.gmra.mxu0 %v480
      %v1014 = vpop.f32.mrf.mxu0
      %v1015 = vadd.f32 0.0, %v1014
      %v1016 = vpop.f32.mrf.mxu0
      %1017 = vmatprep.mubr.f32.mxu0 0.0
      %1018 = vmatmul.mubr.f32.gmra.mxu0 %v481
      %v1019 = vpop.f32.mrf.mxu0
      %v1020 = vadd.f32 0.0, %v1019
      %v1021 = vpop.f32.mrf.mxu0
      %1022 = vmatprep.mubr.f32.mxu0 0.0
      %1023 = vmatmul.mubr.f32.gmra.mxu0 %v482
      %v1024 = vpop.f32.mrf.mxu0
      %v1025 = vadd.f32 0.0, %v1024
      %v1026 = vpop.f32.mrf.mxu0
      %1027 = vmatprep.mubr.f32.mxu0 0.0
      %1028 = vmatmul.mubr.f32.gmra.mxu0 %v483
      %v1029 = vpop.f32.mrf.mxu0
      %v1030 = vadd.f32 0.0, %v1029
      %v1031 = vpop.f32.mrf.mxu0
      %1032 = vmatprep.mubr.f32.mxu0 0.0
      %1033 = vmatmul.mubr.f32.gmra.mxu0 %v484
      %v1034 = vpop.f32.mrf.mxu0
      %v1035 = vadd.f32 0.0, %v1034
      %v1036 = vpop.f32.mrf.mxu0
      %1037 = vmatprep.mubr.f32.mxu0 0.0
      %1038 = vmatmul.mubr.f32.gmra.mxu0 %v485
      %v1039 = vpop.f32.mrf.mxu0
      %v1040 = vadd.f32 0.0, %v1039
      %v1041 = vpop.f32.mrf.mxu0
      %1042 = vmatprep.mubr.f32.mxu0 0.0
      %1043 = vmatmul.mubr.f32.gmra.mxu0 %v486
      %v1044 = vpop.f32.mrf.mxu0
      %v1045 = vadd.f32 0.0, %v1044
      %v1046 = vpop.f32.mrf.mxu0
      %1047 = vmatprep.mubr.f32.mxu0 0.0
      %1048 = vmatmul.mubr.f32.gmra.mxu0 %v487
      %v1049 = vpop.f32.mrf.mxu0
      %v1050 = vadd.f32 0.0, %v1049
      %v1051 = vpop.f32.mrf.mxu0
      %1052 = vmatprep.mubr.f32.mxu0 0.0
      %1053 = vmatmul.mubr.f32.gmra.mxu0 %v488
      %v1054 = vpop.f32.mrf.mxu0
      %v1055 = vadd.f32 0.0, %v1054
      %v1056 = vpop.f32.mrf.mxu0
      %1057 = vmatprep.mubr.f32.mxu0 0.0
      %1058 = vmatmul.mubr.f32.gmra.mxu0 %v489
      %v1059 = vpop.f32.mrf.mxu0
      %v1060 = vadd.f32 0.0, %v1059
      %v1061 = vpop.f32.mrf.mxu0
      %1062 = vmatprep.mubr.f32.mxu0 0.0
      %1063 = vmatmul.mubr.f32.gmra.mxu0 %v490
      %v1064 = vpop.f32.mrf.mxu0
      %v1065 = vadd.f32 0.0, %v1064
      %v1066 = vpop.f32.mrf.mxu0
      %1067 = vmatprep.mubr.f32.mxu0 0.0
      %1068 = vmatmul.mubr.f32.gmra.mxu0 %v491
      %v1069 = vpop.f32.mrf.mxu0
      %v1070 = vadd.f32 0.0, %v1069
      %v1071 = vpop.f32.mrf.mxu0
      %1072 = vmatprep.mubr.f32.mxu0 0.0
      %1073 = vmatmul.mubr.f32.gmra.mxu0 %v492
      %v1074 = vpop.f32.mrf.mxu0
      %v1075 = vadd.f32 0.0, %v1074
      %v1076 = vpop.f32.mrf.mxu0
      %1077 = vmatprep.mubr.f32.mxu0 0.0
      %1078 = vmatmul.mubr.f32.gmra.mxu0 %v493
      %v1079 = vpop.f32.mrf.mxu0
      %v1080 = vadd.f32 0.0, %v1079
      %v1081 = vpop.f32.mrf.mxu0
      %1082 = vdwg.mxu0
      %1083 = vmatprep.subr.mxu0 %v550
      %1084 = vmatpush1.msra.mxu0 %v549
      %1085 = vmatprep.subr.mxu0 %v547
      %1086 = vmatpush1.msra.mxu0 %v546
      %1087 = vmatprep.subr.mxu0 %v544
      %1088 = vmatpush1.msra.mxu0 %v543
      %1089 = vmatprep.subr.mxu0 %v541
      %1090 = vmatpush1.msra.mxu0 %v540
      %1091 = vmatprep.subr.mxu0 %v538
      %1092 = vmatpush1.msra.mxu0 %v537
      %1093 = vmatprep.subr.mxu0 %v535
      %1094 = vmatpush1.msra.mxu0 %v534
      %1095 = vmatprep.subr.mxu0 %v532
      %1096 = vmatpush1.msra.mxu0 %v531
      %1097 = vmatprep.subr.mxu0 %v529
      %1098 = vmatpush1.msra.mxu0 %v528
      %1099 = vmatprep.subr.mxu0 %v526
      %1100 = vmatpush1.msra.mxu0 %v525
      %1101 = vmatprep.subr.mxu0 %v523
      %1102 = vmatpush1.msra.mxu0 %v522
      %1103 = vmatprep.subr.mxu0 %v520
      %1104 = vmatpush1.msra.mxu0 %v519
      %1105 = vmatprep.subr.mxu0 %v517
      %1106 = vmatpush1.msra.mxu0 %v516
      %1107 = vmatprep.subr.mxu0 %v514
      %1108 = vmatpush1.msra.mxu0 %v513
      %1109 = vmatprep.subr.mxu0 %v511
      %1110 = vmatpush1.msra.mxu0 %v510
      %1111 = vmatprep.subr.mxu0 %v508
      %1112 = vmatpush1.msra.mxu0 %v507
      %1113 = vmatprep.subr.mxu0 %v505
      %1114 = vmatpush1.msra.mxu0 %v504
      %1115 = vmatprep.subr.mxu0 0.0
      %1116 = vmatpush2.msra.mxu0 0.0
      %1117 = vmatprep.subr.mxu0 0.0
      %1118 = vmatpush2.msra.mxu0 0.0
      %1119 = vmatprep.subr.mxu0 0.0
      %1120 = vmatpush2.msra.mxu0 0.0
      %1121 = vmatprep.subr.mxu0 0.0
      %1122 = vmatpush2.msra.mxu0 0.0
      %1123 = vmatprep.subr.mxu0 0.0
      %1124 = vmatpush2.msra.mxu0 0.0
      %1125 = vmatprep.subr.mxu0 0.0
      %1126 = vmatpush2.msra.mxu0 0.0
      %1127 = vmatprep.subr.mxu0 0.0
      %1128 = vmatpush2.msra.mxu0 0.0
      %1129 = vmatprep.subr.mxu0 0.0
      %1130 = vmatpush2.msra.mxu0 0.0
      %1131 = vmatprep.subr.mxu0 0.0
      %1132 = vmatpush2.msra.mxu0 0.0
      %1133 = vmatprep.subr.mxu0 0.0
      %1134 = vmatpush2.msra.mxu0 0.0
      %1135 = vmatprep.subr.mxu0 0.0
      %1136 = vmatpush2.msra.mxu0 0.0
      %1137 = vmatprep.subr.mxu0 0.0
      %1138 = vmatpush2.msra.mxu0 0.0
      %1139 = vmatprep.subr.mxu0 0.0
      %1140 = vmatpush2.msra.mxu0 0.0
      %1141 = vmatprep.subr.mxu0 0.0
      %1142 = vmatpush2.msra.mxu0 0.0
      %1143 = vmatprep.subr.mxu0 0.0
      %1144 = vmatpush2.msra.mxu0 0.0
      %1145 = vmatprep.subr.mxu0 0.0
      %1146 = vmatpush2.msra.mxu0 0.0
      %1147 = vmatprep.mubr.f32.mxu0 0.0
      %1148 = vmatmul.mubr.f32.gmra.mxu0 %v497
      %v1149 = vpop.f32.mrf.mxu0
      %v1150 = vadd.f32 %v668, %v1149
      %v1151 = vpop.f32.mrf.mxu0
      %v1152 = vadd.f32 %v670, %v1151
      %1153 = vmatprep.mubr.f32.mxu0 0.0
      %1154 = vmatmul.mubr.f32.gmra.mxu0 %v498
      %v1155 = vpop.f32.mrf.mxu0
      %v1156 = vadd.f32 %v674, %v1155
      %v1157 = vpop.f32.mrf.mxu0
      %v1158 = vadd.f32 %v676, %v1157
      %1159 = vmatprep.mubr.f32.mxu0 0.0
      %1160 = vmatmul.mubr.f32.gmra.mxu0 %v462
      %v1161 = vpop.f32.mrf.mxu0
      %v1162 = vadd.f32 %v680, %v1161
      %v1163 = vpop.f32.mrf.mxu0
      %v1164 = vadd.f32 %v682, %v1163
      %1165 = vmatprep.mubr.f32.mxu0 0.0
      %1166 = vmatmul.mubr.f32.gmra.mxu0 %v463
      %v1167 = vpop.f32.mrf.mxu0
      %v1168 = vadd.f32 %v686, %v1167
      %v1169 = vpop.f32.mrf.mxu0
      %v1170 = vadd.f32 %v688, %v1169
      %1171 = vmatprep.mubr.f32.mxu0 0.0
      %1172 = vmatmul.mubr.f32.gmra.mxu0 %v464
      %v1173 = vpop.f32.mrf.mxu0
      %v1174 = vadd.f32 %v692, %v1173
      %v1175 = vpop.f32.mrf.mxu0
      %v1176 = vadd.f32 %v694, %v1175
      %1177 = vmatprep.mubr.f32.mxu0 0.0
      %1178 = vmatmul.mubr.f32.gmra.mxu0 %v465
      %v1179 = vpop.f32.mrf.mxu0
      %v1180 = vadd.f32 %v698, %v1179
      %v1181 = vpop.f32.mrf.mxu0
      %v1182 = vadd.f32 %v700, %v1181
      %1183 = vmatprep.mubr.f32.mxu0 0.0
      %1184 = vmatmul.mubr.f32.gmra.mxu0 %v466
      %v1185 = vpop.f32.mrf.mxu0
      %v1186 = vadd.f32 %v704, %v1185
      %v1187 = vpop.f32.mrf.mxu0
      %v1188 = vadd.f32 %v706, %v1187
      %1189 = vmatprep.mubr.f32.mxu0 0.0
      %1190 = vmatmul.mubr.f32.gmra.mxu0 %v467
      %v1191 = vpop.f32.mrf.mxu0
      %v1192 = vadd.f32 %v710, %v1191
      %v1193 = vpop.f32.mrf.mxu0
      %v1194 = vadd.f32 %v712, %v1193
      %1195 = vmatprep.mubr.f32.mxu0 0.0
      %1196 = vmatmul.mubr.f32.gmra.mxu0 %v468
      %v1197 = vpop.f32.mrf.mxu0
      %v1198 = vadd.f32 %v716, %v1197
      %v1199 = vpop.f32.mrf.mxu0
      %v1200 = vadd.f32 %v718, %v1199
      %1201 = vmatprep.mubr.f32.mxu0 0.0
      %1202 = vmatmul.mubr.f32.gmra.mxu0 %v469
      %v1203 = vpop.f32.mrf.mxu0
      %v1204 = vadd.f32 %v722, %v1203
      %v1205 = vpop.f32.mrf.mxu0
      %v1206 = vadd.f32 %v724, %v1205
      %1207 = vmatprep.mubr.f32.mxu0 0.0
      %1208 = vmatmul.mubr.f32.gmra.mxu0 %v470
      %v1209 = vpop.f32.mrf.mxu0
      %v1210 = vadd.f32 %v728, %v1209
      %v1211 = vpop.f32.mrf.mxu0
      %v1212 = vadd.f32 %v730, %v1211
      %1213 = vmatprep.mubr.f32.mxu0 0.0
      %1214 = vmatmul.mubr.f32.gmra.mxu0 %v471
      %v1215 = vpop.f32.mrf.mxu0
      %v1216 = vadd.f32 %v734, %v1215
      %v1217 = vpop.f32.mrf.mxu0
      %v1218 = vadd.f32 %v736, %v1217
      %1219 = vmatprep.mubr.f32.mxu0 0.0
      %1220 = vmatmul.mubr.f32.gmra.mxu0 %v472
      %v1221 = vpop.f32.mrf.mxu0
      %v1222 = vadd.f32 %v740, %v1221
      %v1223 = vpop.f32.mrf.mxu0
      %v1224 = vadd.f32 %v742, %v1223
      %1225 = vmatprep.mubr.f32.mxu0 0.0
      %1226 = vmatmul.mubr.f32.gmra.mxu0 %v473
      %v1227 = vpop.f32.mrf.mxu0
      %v1228 = vadd.f32 %v746, %v1227
      %v1229 = vpop.f32.mrf.mxu0
      %v1230 = vadd.f32 %v748, %v1229
      %1231 = vmatprep.mubr.f32.mxu0 0.0
      %1232 = vmatmul.mubr.f32.gmra.mxu0 %v474
      %v1233 = vpop.f32.mrf.mxu0
      %v1234 = vadd.f32 %v752, %v1233
      %v1235 = vpop.f32.mrf.mxu0
      %v1236 = vadd.f32 %v754, %v1235
      %1237 = vmatprep.mubr.f32.mxu0 0.0
      %1238 = vmatmul.mubr.f32.gmra.mxu0 %v475
      %v1239 = vpop.f32.mrf.mxu0
      %v1240 = vadd.f32 %v758, %v1239
      %v1241 = vpop.f32.mrf.mxu0
      %v1242 = vadd.f32 %v760, %v1241
      %1243 = vmatprep.mubr.f32.mxu0 0.0
      %1244 = vmatmul.mubr.f32.gmra.mxu0 %v476
      %v1245 = vpop.f32.mrf.mxu0
      %v1246 = vadd.f32 %v764, %v1245
      %v1247 = vpop.f32.mrf.mxu0
      %v1248 = vadd.f32 %v766, %v1247
      %1249 = vmatprep.mubr.f32.mxu0 0.0
      %1250 = vmatmul.mubr.f32.gmra.mxu0 %v477
      %v1251 = vpop.f32.mrf.mxu0
      %v1252 = vadd.f32 %v770, %v1251
      %v1253 = vpop.f32.mrf.mxu0
      %v1254 = vadd.f32 %v772, %v1253
      %1255 = vmatprep.mubr.f32.mxu0 0.0
      %1256 = vmatmul.mubr.f32.gmra.mxu0 %v478
      %v1257 = vpop.f32.mrf.mxu0
      %v1258 = vadd.f32 %v776, %v1257
      %v1259 = vpop.f32.mrf.mxu0
      %v1260 = vadd.f32 %v778, %v1259
      %1261 = vmatprep.mubr.f32.mxu0 0.0
      %1262 = vmatmul.mubr.f32.gmra.mxu0 %v479
      %v1263 = vpop.f32.mrf.mxu0
      %v1264 = vadd.f32 %v782, %v1263
      %v1265 = vpop.f32.mrf.mxu0
      %v1266 = vadd.f32 %v784, %v1265
      %1267 = vmatprep.mubr.f32.mxu0 0.0
      %1268 = vmatmul.mubr.f32.gmra.mxu0 %v480
      %v1269 = vpop.f32.mrf.mxu0
      %v1270 = vadd.f32 %v788, %v1269
      %v1271 = vpop.f32.mrf.mxu0
      %v1272 = vadd.f32 %v790, %v1271
      %1273 = vmatprep.mubr.f32.mxu0 0.0
      %1274 = vmatmul.mubr.f32.gmra.mxu0 %v481
      %v1275 = vpop.f32.mrf.mxu0
      %v1276 = vadd.f32 %v794, %v1275
      %v1277 = vpop.f32.mrf.mxu0
      %v1278 = vadd.f32 %v796, %v1277
      %1279 = vmatprep.mubr.f32.mxu0 0.0
      %1280 = vmatmul.mubr.f32.gmra.mxu0 %v482
      %v1281 = vpop.f32.mrf.mxu0
      %v1282 = vadd.f32 %v800, %v1281
      %v1283 = vpop.f32.mrf.mxu0
      %v1284 = vadd.f32 %v802, %v1283
      %1285 = vmatprep.mubr.f32.mxu0 0.0
      %1286 = vmatmul.mubr.f32.gmra.mxu0 %v483
      %v1287 = vpop.f32.mrf.mxu0
      %v1288 = vadd.f32 %v806, %v1287
      %v1289 = vpop.f32.mrf.mxu0
      %v1290 = vadd.f32 %v808, %v1289
      %1291 = vmatprep.mubr.f32.mxu0 0.0
      %1292 = vmatmul.mubr.f32.gmra.mxu0 %v484
      %v1293 = vpop.f32.mrf.mxu0
      %v1294 = vadd.f32 %v812, %v1293
      %v1295 = vpop.f32.mrf.mxu0
      %v1296 = vadd.f32 %v814, %v1295
      %1297 = vmatprep.mubr.f32.mxu0 0.0
      %1298 = vmatmul.mubr.f32.gmra.mxu0 %v485
      %v1299 = vpop.f32.mrf.mxu0
      %v1300 = vadd.f32 %v818, %v1299
      %v1301 = vpop.f32.mrf.mxu0
      %v1302 = vadd.f32 %v820, %v1301
      %1303 = vmatprep.mubr.f32.mxu0 0.0
      %1304 = vmatmul.mubr.f32.gmra.mxu0 %v486
      %v1305 = vpop.f32.mrf.mxu0
      %v1306 = vadd.f32 %v824, %v1305
      %v1307 = vpop.f32.mrf.mxu0
      %v1308 = vadd.f32 %v826, %v1307
      %1309 = vmatprep.mubr.f32.mxu0 0.0
      %1310 = vmatmul.mubr.f32.gmra.mxu0 %v487
      %v1311 = vpop.f32.mrf.mxu0
      %v1312 = vadd.f32 %v830, %v1311
      %v1313 = vpop.f32.mrf.mxu0
      %v1314 = vadd.f32 %v832, %v1313
      %1315 = vmatprep.mubr.f32.mxu0 0.0
      %1316 = vmatmul.mubr.f32.gmra.mxu0 %v488
      %v1317 = vpop.f32.mrf.mxu0
      %v1318 = vadd.f32 %v836, %v1317
      %v1319 = vpop.f32.mrf.mxu0
      %v1320 = vadd.f32 %v838, %v1319
      %1321 = vmatprep.mubr.f32.mxu0 0.0
      %1322 = vmatmul.mubr.f32.gmra.mxu0 %v489
      %v1323 = vpop.f32.mrf.mxu0
      %v1324 = vadd.f32 %v842, %v1323
      %v1325 = vpop.f32.mrf.mxu0
      %v1326 = vadd.f32 %v844, %v1325
      %1327 = vmatprep.mubr.f32.mxu0 0.0
      %1328 = vmatmul.mubr.f32.gmra.mxu0 %v490
      %v1329 = vpop.f32.mrf.mxu0
      %v1330 = vadd.f32 %v848, %v1329
      %v1331 = vpop.f32.mrf.mxu0
      %v1332 = vadd.f32 %v850, %v1331
      %1333 = vmatprep.mubr.f32.mxu0 0.0
      %1334 = vmatmul.mubr.f32.gmra.mxu0 %v491
      %v1335 = vpop.f32.mrf.mxu0
      %v1336 = vadd.f32 %v854, %v1335
      %v1337 = vpop.f32.mrf.mxu0
      %v1338 = vadd.f32 %v856, %v1337
      %1339 = vdwg.mxu0
      %1340 = vmatprep.subr.mxu0 0.0
      %1341 = vmatpush1.msra.mxu0 %v551
      %1342 = vmatprep.subr.mxu0 0.0
      %1343 = vmatpush1.msra.mxu0 %v548
      %1344 = vmatprep.subr.mxu0 0.0
      %1345 = vmatpush1.msra.mxu0 %v545
      %1346 = vmatprep.subr.mxu0 0.0
      %1347 = vmatpush1.msra.mxu0 %v542
      %1348 = vmatprep.subr.mxu0 0.0
      %1349 = vmatpush1.msra.mxu0 %v539
      %1350 = vmatprep.subr.mxu0 0.0
      %1351 = vmatpush1.msra.mxu0 %v536
      %1352 = vmatprep.subr.mxu0 0.0
      %1353 = vmatpush1.msra.mxu0 %v533
      %1354 = vmatprep.subr.mxu0 0.0
      %1355 = vmatpush1.msra.mxu0 %v530
      %1356 = vmatprep.subr.mxu0 0.0
      %1357 = vmatpush1.msra.mxu0 %v527
      %1358 = vmatprep.subr.mxu0 0.0
      %1359 = vmatpush1.msra.mxu0 %v524
      %1360 = vmatprep.subr.mxu0 0.0
      %1361 = vmatpush1.msra.mxu0 %v521
      %1362 = vmatprep.subr.mxu0 0.0
      %1363 = vmatpush1.msra.mxu0 %v518
      %1364 = vmatprep.subr.mxu0 0.0
      %1365 = vmatpush1.msra.mxu0 %v515
      %1366 = vmatprep.subr.mxu0 0.0
      %1367 = vmatpush1.msra.mxu0 %v512
      %1368 = vmatprep.subr.mxu0 0.0
      %1369 = vmatpush1.msra.mxu0 %v509
      %1370 = vmatprep.subr.mxu0 0.0
      %1371 = vmatpush1.msra.mxu0 %v506
      %1372 = vmatprep.subr.mxu0 0.0
      %1373 = vmatpush2.msra.mxu0 0.0
      %1374 = vmatprep.subr.mxu0 0.0
      %1375 = vmatpush2.msra.mxu0 0.0
      %1376 = vmatprep.subr.mxu0 0.0
      %1377 = vmatpush2.msra.mxu0 0.0
      %1378 = vmatprep.subr.mxu0 0.0
      %1379 = vmatpush2.msra.mxu0 0.0
      %1380 = vmatprep.subr.mxu0 0.0
      %1381 = vmatpush2.msra.mxu0 0.0
      %1382 = vmatprep.subr.mxu0 0.0
      %1383 = vmatpush2.msra.mxu0 0.0
      %1384 = vmatprep.subr.mxu0 0.0
      %1385 = vmatpush2.msra.mxu0 0.0
      %1386 = vmatprep.subr.mxu0 0.0
      %1387 = vmatpush2.msra.mxu0 0.0
      %1388 = vmatprep.subr.mxu0 0.0
      %1389 = vmatpush2.msra.mxu0 0.0
      %1390 = vmatprep.subr.mxu0 0.0
      %1391 = vmatpush2.msra.mxu0 0.0
      %1392 = vmatprep.subr.mxu0 0.0
      %1393 = vmatpush2.msra.mxu0 0.0
      %1394 = vmatprep.subr.mxu0 0.0
      %1395 = vmatpush2.msra.mxu0 0.0
      %1396 = vmatprep.subr.mxu0 0.0
      %1397 = vmatpush2.msra.mxu0 0.0
      %1398 = vmatprep.subr.mxu0 0.0
      %1399 = vmatpush2.msra.mxu0 0.0
      %1400 = vmatprep.subr.mxu0 0.0
      %1401 = vmatpush2.msra.mxu0 0.0
      %1402 = vmatprep.subr.mxu0 0.0
      %1403 = vmatpush2.msra.mxu0 0.0
      %1404 = vmatprep.mubr.f32.mxu0 0.0
      %1405 = vmatmul.mubr.f32.gmra.mxu0 %v497
      %v1406 = vpop.f32.mrf.mxu0
      %v1407 = vadd.f32 %v925, %v1406
      %v1408 = vpop.f32.mrf.mxu0
      %1409 = vmatprep.mubr.f32.mxu0 0.0
      %1410 = vmatmul.mubr.f32.gmra.mxu0 %v498
      %v1411 = vpop.f32.mrf.mxu0
      %v1412 = vadd.f32 %v930, %v1411
      %v1413 = vpop.f32.mrf.mxu0
      %1414 = vmatprep.mubr.f32.mxu0 0.0
      %1415 = vmatmul.mubr.f32.gmra.mxu0 %v462
      %v1416 = vpop.f32.mrf.mxu0
      %v1417 = vadd.f32 %v935, %v1416
      %v1418 = vpop.f32.mrf.mxu0
      %1419 = vmatprep.mubr.f32.mxu0 0.0
      %1420 = vmatmul.mubr.f32.gmra.mxu0 %v463
      %v1421 = vpop.f32.mrf.mxu0
      %v1422 = vadd.f32 %v940, %v1421
      %v1423 = vpop.f32.mrf.mxu0
      %1424 = vmatprep.mubr.f32.mxu0 0.0
      %1425 = vmatmul.mubr.f32.gmra.mxu0 %v464
      %v1426 = vpop.f32.mrf.mxu0
      %v1427 = vadd.f32 %v945, %v1426
      %v1428 = vpop.f32.mrf.mxu0
      %1429 = vmatprep.mubr.f32.mxu0 0.0
      %1430 = vmatmul.mubr.f32.gmra.mxu0 %v465
      %v1431 = vpop.f32.mrf.mxu0
      %v1432 = vadd.f32 %v950, %v1431
      %v1433 = vpop.f32.mrf.mxu0
      %1434 = vmatprep.mubr.f32.mxu0 0.0
      %1435 = vmatmul.mubr.f32.gmra.mxu0 %v466
      %v1436 = vpop.f32.mrf.mxu0
      %v1437 = vadd.f32 %v955, %v1436
      %v1438 = vpop.f32.mrf.mxu0
      %1439 = vmatprep.mubr.f32.mxu0 0.0
      %1440 = vmatmul.mubr.f32.gmra.mxu0 %v467
      %v1441 = vpop.f32.mrf.mxu0
      %v1442 = vadd.f32 %v960, %v1441
      %v1443 = vpop.f32.mrf.mxu0
      %1444 = vmatprep.mubr.f32.mxu0 0.0
      %1445 = vmatmul.mubr.f32.gmra.mxu0 %v468
      %v1446 = vpop.f32.mrf.mxu0
      %v1447 = vadd.f32 %v965, %v1446
      %v1448 = vpop.f32.mrf.mxu0
      %1449 = vmatprep.mubr.f32.mxu0 0.0
      %1450 = vmatmul.mubr.f32.gmra.mxu0 %v469
      %v1451 = vpop.f32.mrf.mxu0
      %v1452 = vadd.f32 %v970, %v1451
      %v1453 = vpop.f32.mrf.mxu0
      %1454 = vmatprep.mubr.f32.mxu0 0.0
      %1455 = vmatmul.mubr.f32.gmra.mxu0 %v470
      %v1456 = vpop.f32.mrf.mxu0
      %v1457 = vadd.f32 %v975, %v1456
      %v1458 = vpop.f32.mrf.mxu0
      %1459 = vmatprep.mubr.f32.mxu0 0.0
      %1460 = vmatmul.mubr.f32.gmra.mxu0 %v471
      %v1461 = vpop.f32.mrf.mxu0
      %v1462 = vadd.f32 %v980, %v1461
      %v1463 = vpop.f32.mrf.mxu0
      %1464 = vmatprep.mubr.f32.mxu0 0.0
      %1465 = vmatmul.mubr.f32.gmra.mxu0 %v472
      %v1466 = vpop.f32.mrf.mxu0
      %v1467 = vadd.f32 %v985, %v1466
      %v1468 = vpop.f32.mrf.mxu0
      %1469 = vmatprep.mubr.f32.mxu0 0.0
      %1470 = vmatmul.mubr.f32.gmra.mxu0 %v473
      %v1471 = vpop.f32.mrf.mxu0
      %v1472 = vadd.f32 %v990, %v1471
      %v1473 = vpop.f32.mrf.mxu0
      %1474 = vmatprep.mubr.f32.mxu0 0.0
      %1475 = vmatmul.mubr.f32.gmra.mxu0 %v474
      %v1476 = vpop.f32.mrf.mxu0
      %v1477 = vadd.f32 %v995, %v1476
      %v1478 = vpop.f32.mrf.mxu0
      %1479 = vmatprep.mubr.f32.mxu0 0.0
      %1480 = vmatmul.mubr.f32.gmra.mxu0 %v475
      %v1481 = vpop.f32.mrf.mxu0
      %v1482 = vadd.f32 %v1000, %v1481
      %v1483 = vpop.f32.mrf.mxu0
      %1484 = vmatprep.mubr.f32.mxu0 0.0
      %1485 = vmatmul.mubr.f32.gmra.mxu0 %v476
      %v1486 = vpop.f32.mrf.mxu0
      %v1487 = vadd.f32 %v1005, %v1486
      %v1488 = vpop.f32.mrf.mxu0
      %1489 = vmatprep.mubr.f32.mxu0 0.0
      %1490 = vmatmul.mubr.f32.gmra.mxu0 %v477
      %v1491 = vpop.f32.mrf.mxu0
      %v1492 = vadd.f32 %v1010, %v1491
      %v1493 = vpop.f32.mrf.mxu0
      %1494 = vmatprep.mubr.f32.mxu0 0.0
      %1495 = vmatmul.mubr.f32.gmra.mxu0 %v478
      %v1496 = vpop.f32.mrf.mxu0
      %v1497 = vadd.f32 %v1015, %v1496
      %v1498 = vpop.f32.mrf.mxu0
      %1499 = vmatprep.mubr.f32.mxu0 0.0
      %1500 = vmatmul.mubr.f32.gmra.mxu0 %v479
      %v1501 = vpop.f32.mrf.mxu0
      %v1502 = vadd.f32 %v1020, %v1501
      %v1503 = vpop.f32.mrf.mxu0
      %1504 = vmatprep.mubr.f32.mxu0 0.0
      %1505 = vmatmul.mubr.f32.gmra.mxu0 %v480
      %v1506 = vpop.f32.mrf.mxu0
      %v1507 = vadd.f32 %v1025, %v1506
      %v1508 = vpop.f32.mrf.mxu0
      %1509 = vmatprep.mubr.f32.mxu0 0.0
      %1510 = vmatmul.mubr.f32.gmra.mxu0 %v481
      %v1511 = vpop.f32.mrf.mxu0
      %v1512 = vadd.f32 %v1030, %v1511
      %v1513 = vpop.f32.mrf.mxu0
      %1514 = vmatprep.mubr.f32.mxu0 0.0
      %1515 = vmatmul.mubr.f32.gmra.mxu0 %v482
      %v1516 = vpop.f32.mrf.mxu0
      %v1517 = vadd.f32 %v1035, %v1516
      %v1518 = vpop.f32.mrf.mxu0
      %1519 = vmatprep.mubr.f32.mxu0 0.0
      %1520 = vmatmul.mubr.f32.gmra.mxu0 %v483
      %v1521 = vpop.f32.mrf.mxu0
      %v1522 = vadd.f32 %v1040, %v1521
      %v1523 = vpop.f32.mrf.mxu0
      %1524 = vmatprep.mubr.f32.mxu0 0.0
      %1525 = vmatmul.mubr.f32.gmra.mxu0 %v484
      %v1526 = vpop.f32.mrf.mxu0
      %v1527 = vadd.f32 %v1045, %v1526
      %v1528 = vpop.f32.mrf.mxu0
      %1529 = vmatprep.mubr.f32.mxu0 0.0
      %1530 = vmatmul.mubr.f32.gmra.mxu0 %v485
      %v1531 = vpop.f32.mrf.mxu0
      %v1532 = vadd.f32 %v1050, %v1531
      %v1533 = vpop.f32.mrf.mxu0
      %1534 = vmatprep.mubr.f32.mxu0 0.0
      %1535 = vmatmul.mubr.f32.gmra.mxu0 %v486
      %v1536 = vpop.f32.mrf.mxu0
      %v1537 = vadd.f32 %v1055, %v1536
      %v1538 = vpop.f32.mrf.mxu0
      %1539 = vmatprep.mubr.f32.mxu0 0.0
      %1540 = vmatmul.mubr.f32.gmra.mxu0 %v487
      %v1541 = vpop.f32.mrf.mxu0
      %v1542 = vadd.f32 %v1060, %v1541
      %v1543 = vpop.f32.mrf.mxu0
      %1544 = vmatprep.mubr.f32.mxu0 0.0
      %1545 = vmatmul.mubr.f32.gmra.mxu0 %v488
      %v1546 = vpop.f32.mrf.mxu0
      %v1547 = vadd.f32 %v1065, %v1546
      %v1548 = vpop.f32.mrf.mxu0
      %1549 = vmatprep.mubr.f32.mxu0 0.0
      %1550 = vmatmul.mubr.f32.gmra.mxu0 %v489
      %v1551 = vpop.f32.mrf.mxu0
      %v1552 = vadd.f32 %v1070, %v1551
      %v1553 = vpop.f32.mrf.mxu0
      %1554 = vmatprep.mubr.f32.mxu0 0.0
      %1555 = vmatmul.mubr.f32.gmra.mxu0 %v490
      %v1556 = vpop.f32.mrf.mxu0
      %v1557 = vadd.f32 %v1075, %v1556
      %v1558 = vpop.f32.mrf.mxu0
      %1559 = vmatprep.mubr.f32.mxu0 0.0
      %1560 = vmatmul.mubr.f32.gmra.mxu0 %v491
      %v1561 = vpop.f32.mrf.mxu0
      %v1562 = vadd.f32 %v1080, %v1561
      %v1563 = vpop.f32.mrf.mxu0
      %1564 = vdwg.mxu0
      %s1565 = scalar_lea.vmem %s2, 768
      %v1566 = vld [vmem:[%s1565] sm:$0xff]
      %v1567 = vld [vmem:[%s1565 + $0x8] sm:$0xff]
      %v1568 = vld [vmem:[%s1565 + $0x10] sm:$0xff]
      %v1569 = vld [vmem:[%s1565 + $0x18] sm:$0xff]
      %v1570 = vld [vmem:[%s1565 + $0x20] sm:$0xff]
      %v1571 = vld [vmem:[%s1565 + $0x28] sm:$0xff]
      %v1572 = vld [vmem:[%s1565 + $0x30] sm:$0xff]
      %v1573 = vld [vmem:[%s1565 + $0x38] sm:$0xff]
      %v1574 = vld [vmem:[%s1565 + $0x40] sm:$0xff]
      %v1575 = vld [vmem:[%s1565 + $0x48] sm:$0xff]
      %v1576 = vld [vmem:[%s1565 + $0x50] sm:$0xff]
      %v1577 = vld [vmem:[%s1565 + $0x58] sm:$0xff]
      %v1578 = vld [vmem:[%s1565 + $0x60] sm:$0xff]
      %v1579 = vld [vmem:[%s1565 + $0x68] sm:$0xff]
      %v1580 = vld [vmem:[%s1565 + $0x70] sm:$0xff]
      %v1581 = vld [vmem:[%s1565 + $0x78] sm:$0xff]
      %v1582 = vld [vmem:[%s1565 + $0x80] sm:$0xff]
      %v1583 = vld [vmem:[%s1565 + $0x88] sm:$0xff]
      %v1584 = vld [vmem:[%s1565 + $0x90] sm:$0xff]
      %v1585 = vld [vmem:[%s1565 + $0x98] sm:$0xff]
      %v1586 = vld [vmem:[%s1565 + $0xa0] sm:$0xff]
      %v1587 = vld [vmem:[%s1565 + $0xa8] sm:$0xff]
      %v1588 = vld [vmem:[%s1565 + $0xb0] sm:$0xff]
      %v1589 = vld [vmem:[%s1565 + $0xb8] sm:$0xff]
      %v1590 = vld [vmem:[%s1565 + $0xc0] sm:$0xff]
      %v1591 = vld [vmem:[%s1565 + $0xc8] sm:$0xff]
      %v1592 = vld [vmem:[%s1565 + $0xd0] sm:$0xff]
      %v1593 = vld [vmem:[%s1565 + $0xd8] sm:$0xff]
      %v1594 = vld [vmem:[%s1565 + $0xe0] sm:$0xff]
      %v1595 = vld [vmem:[%s1565 + $0xe8] sm:$0xff]
      %v1596 = vld [vmem:[%s1565 + $0xf0] sm:$0xff]
      %v1597 = vld [vmem:[%s1565 + $0xf8] sm:$0xff]
      %v1598 = vld [vmem:[%s1565 + $0x100] sm:$0xff]
      %v1599 = vld [vmem:[%s1565 + $0x108] sm:$0xff]
      %v1600 = vld [vmem:[%s1565 + $0x110] sm:$0xff]
      %v1601 = vld [vmem:[%s1565 + $0x118] sm:$0xff]
      %v1602 = vld [vmem:[%s1565 + $0x120] sm:$0xff]
      %v1603 = vld [vmem:[%s1565 + $0x128] sm:$0xff]
      %v1604 = vld [vmem:[%s1565 + $0x130] sm:$0xff]
      %v1605 = vld [vmem:[%s1565 + $0x138] sm:$0xff]
      %v1606 = vld [vmem:[%s1565 + $0x140] sm:$0xff]
      %v1607 = vld [vmem:[%s1565 + $0x148] sm:$0xff]
      %v1608 = vld [vmem:[%s1565 + $0x150] sm:$0xff]
      %v1609 = vld [vmem:[%s1565 + $0x158] sm:$0xff]
      %v1610 = vld [vmem:[%s1565 + $0x160] sm:$0xff]
      %v1611 = vld [vmem:[%s1565 + $0x168] sm:$0xff]
      %v1612 = vld [vmem:[%s1565 + $0x170] sm:$0xff]
      %v1613 = vld [vmem:[%s1565 + $0x178] sm:$0xff]
      %1614 = vmatprep.subr.mxu0 %v1612
      %1615 = vmatpush1.msra.mxu0 %v1611
      %1616 = vmatprep.subr.mxu0 %v1609
      %1617 = vmatpush1.msra.mxu0 %v1608
      %1618 = vmatprep.subr.mxu0 %v1606
      %1619 = vmatpush1.msra.mxu0 %v1605
      %1620 = vmatprep.subr.mxu0 %v1603
      %1621 = vmatpush1.msra.mxu0 %v1602
      %1622 = vmatprep.subr.mxu0 %v1600
      %1623 = vmatpush1.msra.mxu0 %v1599
      %1624 = vmatprep.subr.mxu0 %v1597
      %1625 = vmatpush1.msra.mxu0 %v1596
      %1626 = vmatprep.subr.mxu0 %v1594
      %1627 = vmatpush1.msra.mxu0 %v1593
      %1628 = vmatprep.subr.mxu0 %v1591
      %1629 = vmatpush1.msra.mxu0 %v1590
      %1630 = vmatprep.subr.mxu0 %v1588
      %1631 = vmatpush1.msra.mxu0 %v1587
      %1632 = vmatprep.subr.mxu0 %v1585
      %1633 = vmatpush1.msra.mxu0 %v1584
      %1634 = vmatprep.subr.mxu0 %v1582
      %1635 = vmatpush1.msra.mxu0 %v1581
      %1636 = vmatprep.subr.mxu0 %v1579
      %1637 = vmatpush1.msra.mxu0 %v1578
      %1638 = vmatprep.subr.mxu0 %v1576
      %1639 = vmatpush1.msra.mxu0 %v1575
      %1640 = vmatprep.subr.mxu0 %v1573
      %1641 = vmatpush1.msra.mxu0 %v1572
      %1642 = vmatprep.subr.mxu0 %v1570
      %1643 = vmatpush1.msra.mxu0 %v1569
      %1644 = vmatprep.subr.mxu0 %v1567
      %1645 = vmatpush1.msra.mxu0 %v1566
      %1646 = vmatprep.subr.mxu0 0.0
      %1647 = vmatpush2.msra.mxu0 0.0
      %1648 = vmatprep.subr.mxu0 0.0
      %1649 = vmatpush2.msra.mxu0 0.0
      %1650 = vmatprep.subr.mxu0 0.0
      %1651 = vmatpush2.msra.mxu0 0.0
      %1652 = vmatprep.subr.mxu0 0.0
      %1653 = vmatpush2.msra.mxu0 0.0
      %1654 = vmatprep.subr.mxu0 0.0
      %1655 = vmatpush2.msra.mxu0 0.0
      %1656 = vmatprep.subr.mxu0 0.0
      %1657 = vmatpush2.msra.mxu0 0.0
      %1658 = vmatprep.subr.mxu0 0.0
      %1659 = vmatpush2.msra.mxu0 0.0
      %1660 = vmatprep.subr.mxu0 0.0
      %1661 = vmatpush2.msra.mxu0 0.0
      %1662 = vmatprep.subr.mxu0 0.0
      %1663 = vmatpush2.msra.mxu0 0.0
      %1664 = vmatprep.subr.mxu0 0.0
      %1665 = vmatpush2.msra.mxu0 0.0
      %1666 = vmatprep.subr.mxu0 0.0
      %1667 = vmatpush2.msra.mxu0 0.0
      %1668 = vmatprep.subr.mxu0 0.0
      %1669 = vmatpush2.msra.mxu0 0.0
      %1670 = vmatprep.subr.mxu0 0.0
      %1671 = vmatpush2.msra.mxu0 0.0
      %1672 = vmatprep.subr.mxu0 0.0
      %1673 = vmatpush2.msra.mxu0 0.0
      %1674 = vmatprep.subr.mxu0 0.0
      %1675 = vmatpush2.msra.mxu0 0.0
      %1676 = vmatprep.subr.mxu0 0.0
      %1677 = vmatpush2.msra.mxu0 0.0
      %1678 = vmatprep.mubr.f32.mxu0 0.0
      %1679 = vmatmul.mubr.f32.gmra.mxu0 %v464
      %v1680 = vpop.f32.mrf.mxu0
      %v1681 = vadd.f32 0.0, %v1680
      %v1682 = vpop.f32.mrf.mxu0
      %v1683 = vadd.f32 0.0, %v1682
      %1684 = vmatprep.mubr.f32.mxu0 0.0
      %1685 = vmatmul.mubr.f32.gmra.mxu0 %v465
      %v1686 = vpop.f32.mrf.mxu0
      %v1687 = vadd.f32 0.0, %v1686
      %v1688 = vpop.f32.mrf.mxu0
      %v1689 = vadd.f32 0.0, %v1688
      %1690 = vmatprep.mubr.f32.mxu0 0.0
      %1691 = vmatmul.mubr.f32.gmra.mxu0 %v466
      %v1692 = vpop.f32.mrf.mxu0
      %v1693 = vadd.f32 0.0, %v1692
      %v1694 = vpop.f32.mrf.mxu0
      %v1695 = vadd.f32 0.0, %v1694
      %1696 = vmatprep.mubr.f32.mxu0 0.0
      %1697 = vmatmul.mubr.f32.gmra.mxu0 %v467
      %v1698 = vpop.f32.mrf.mxu0
      %v1699 = vadd.f32 0.0, %v1698
      %v1700 = vpop.f32.mrf.mxu0
      %v1701 = vadd.f32 0.0, %v1700
      %1702 = vmatprep.mubr.f32.mxu0 0.0
      %1703 = vmatmul.mubr.f32.gmra.mxu0 %v468
      %v1704 = vpop.f32.mrf.mxu0
      %v1705 = vadd.f32 0.0, %v1704
      %v1706 = vpop.f32.mrf.mxu0
      %v1707 = vadd.f32 0.0, %v1706
      %1708 = vmatprep.mubr.f32.mxu0 0.0
      %1709 = vmatmul.mubr.f32.gmra.mxu0 %v469
      %v1710 = vpop.f32.mrf.mxu0
      %v1711 = vadd.f32 0.0, %v1710
      %v1712 = vpop.f32.mrf.mxu0
      %v1713 = vadd.f32 0.0, %v1712
      %1714 = vmatprep.mubr.f32.mxu0 0.0
      %1715 = vmatmul.mubr.f32.gmra.mxu0 %v470
      %v1716 = vpop.f32.mrf.mxu0
      %v1717 = vadd.f32 0.0, %v1716
      %v1718 = vpop.f32.mrf.mxu0
      %v1719 = vadd.f32 0.0, %v1718
      %1720 = vmatprep.mubr.f32.mxu0 0.0
      %1721 = vmatmul.mubr.f32.gmra.mxu0 %v471
      %v1722 = vpop.f32.mrf.mxu0
      %v1723 = vadd.f32 0.0, %v1722
      %v1724 = vpop.f32.mrf.mxu0
      %v1725 = vadd.f32 0.0, %v1724
      %1726 = vmatprep.mubr.f32.mxu0 0.0
      %1727 = vmatmul.mubr.f32.gmra.mxu0 %v472
      %v1728 = vpop.f32.mrf.mxu0
      %v1729 = vadd.f32 0.0, %v1728
      %v1730 = vpop.f32.mrf.mxu0
      %v1731 = vadd.f32 0.0, %v1730
      %1732 = vmatprep.mubr.f32.mxu0 0.0
      %1733 = vmatmul.mubr.f32.gmra.mxu0 %v473
      %v1734 = vpop.f32.mrf.mxu0
      %v1735 = vadd.f32 0.0, %v1734
      %v1736 = vpop.f32.mrf.mxu0
      %v1737 = vadd.f32 0.0, %v1736
      %1738 = vmatprep.mubr.f32.mxu0 0.0
      %1739 = vmatmul.mubr.f32.gmra.mxu0 %v474
      %v1740 = vpop.f32.mrf.mxu0
      %v1741 = vadd.f32 0.0, %v1740
      %v1742 = vpop.f32.mrf.mxu0
      %v1743 = vadd.f32 0.0, %v1742
      %1744 = vmatprep.mubr.f32.mxu0 0.0
      %1745 = vmatmul.mubr.f32.gmra.mxu0 %v475
      %v1746 = vpop.f32.mrf.mxu0
      %v1747 = vadd.f32 0.0, %v1746
      %v1748 = vpop.f32.mrf.mxu0
      %v1749 = vadd.f32 0.0, %v1748
      %1750 = vmatprep.mubr.f32.mxu0 0.0
      %1751 = vmatmul.mubr.f32.gmra.mxu0 %v476
      %v1752 = vpop.f32.mrf.mxu0
      %v1753 = vadd.f32 0.0, %v1752
      %v1754 = vpop.f32.mrf.mxu0
      %v1755 = vadd.f32 0.0, %v1754
      %1756 = vmatprep.mubr.f32.mxu0 0.0
      %1757 = vmatmul.mubr.f32.gmra.mxu0 %v477
      %v1758 = vpop.f32.mrf.mxu0
      %v1759 = vadd.f32 0.0, %v1758
      %v1760 = vpop.f32.mrf.mxu0
      %v1761 = vadd.f32 0.0, %v1760
      %1762 = vmatprep.mubr.f32.mxu0 0.0
      %1763 = vmatmul.mubr.f32.gmra.mxu0 %v478
      %v1764 = vpop.f32.mrf.mxu0
      %v1765 = vadd.f32 0.0, %v1764
      %v1766 = vpop.f32.mrf.mxu0
      %v1767 = vadd.f32 0.0, %v1766
      %1768 = vmatprep.mubr.f32.mxu0 0.0
      %1769 = vmatmul.mubr.f32.gmra.mxu0 %v479
      %v1770 = vpop.f32.mrf.mxu0
      %v1771 = vadd.f32 0.0, %v1770
      %v1772 = vpop.f32.mrf.mxu0
      %v1773 = vadd.f32 0.0, %v1772
      %1774 = vmatprep.mubr.f32.mxu0 0.0
      %1775 = vmatmul.mubr.f32.gmra.mxu0 %v480
      %v1776 = vpop.f32.mrf.mxu0
      %v1777 = vadd.f32 0.0, %v1776
      %v1778 = vpop.f32.mrf.mxu0
      %v1779 = vadd.f32 0.0, %v1778
      %1780 = vmatprep.mubr.f32.mxu0 0.0
      %1781 = vmatmul.mubr.f32.gmra.mxu0 %v481
      %v1782 = vpop.f32.mrf.mxu0
      %v1783 = vadd.f32 0.0, %v1782
      %v1784 = vpop.f32.mrf.mxu0
      %v1785 = vadd.f32 0.0, %v1784
      %1786 = vmatprep.mubr.f32.mxu0 0.0
      %1787 = vmatmul.mubr.f32.gmra.mxu0 %v482
      %v1788 = vpop.f32.mrf.mxu0
      %v1789 = vadd.f32 0.0, %v1788
      %v1790 = vpop.f32.mrf.mxu0
      %v1791 = vadd.f32 0.0, %v1790
      %1792 = vmatprep.mubr.f32.mxu0 0.0
      %1793 = vmatmul.mubr.f32.gmra.mxu0 %v483
      %v1794 = vpop.f32.mrf.mxu0
      %v1795 = vadd.f32 0.0, %v1794
      %v1796 = vpop.f32.mrf.mxu0
      %v1797 = vadd.f32 0.0, %v1796
      %1798 = vmatprep.mubr.f32.mxu0 0.0
      %1799 = vmatmul.mubr.f32.gmra.mxu0 %v484
      %v1800 = vpop.f32.mrf.mxu0
      %v1801 = vadd.f32 0.0, %v1800
      %v1802 = vpop.f32.mrf.mxu0
      %v1803 = vadd.f32 0.0, %v1802
      %1804 = vmatprep.mubr.f32.mxu0 0.0
      %1805 = vmatmul.mubr.f32.gmra.mxu0 %v485
      %v1806 = vpop.f32.mrf.mxu0
      %v1807 = vadd.f32 0.0, %v1806
      %v1808 = vpop.f32.mrf.mxu0
      %v1809 = vadd.f32 0.0, %v1808
      %1810 = vmatprep.mubr.f32.mxu0 0.0
      %1811 = vmatmul.mubr.f32.gmra.mxu0 %v486
      %v1812 = vpop.f32.mrf.mxu0
      %v1813 = vadd.f32 0.0, %v1812
      %v1814 = vpop.f32.mrf.mxu0
      %v1815 = vadd.f32 0.0, %v1814
      %1816 = vmatprep.mubr.f32.mxu0 0.0
      %1817 = vmatmul.mubr.f32.gmra.mxu0 %v487
      %v1818 = vpop.f32.mrf.mxu0
      %v1819 = vadd.f32 0.0, %v1818
      %v1820 = vpop.f32.mrf.mxu0
      %v1821 = vadd.f32 0.0, %v1820
      %1822 = vmatprep.mubr.f32.mxu0 0.0
      %1823 = vmatmul.mubr.f32.gmra.mxu0 %v488
      %v1824 = vpop.f32.mrf.mxu0
      %v1825 = vadd.f32 0.0, %v1824
      %v1826 = vpop.f32.mrf.mxu0
      %v1827 = vadd.f32 0.0, %v1826
      %1828 = vmatprep.mubr.f32.mxu0 0.0
      %1829 = vmatmul.mubr.f32.gmra.mxu0 %v489
      %v1830 = vpop.f32.mrf.mxu0
      %v1831 = vadd.f32 0.0, %v1830
      %v1832 = vpop.f32.mrf.mxu0
      %v1833 = vadd.f32 0.0, %v1832
      %1834 = vmatprep.mubr.f32.mxu0 0.0
      %1835 = vmatmul.mubr.f32.gmra.mxu0 %v490
      %v1836 = vpop.f32.mrf.mxu0
      %v1837 = vadd.f32 0.0, %v1836
      %v1838 = vpop.f32.mrf.mxu0
      %v1839 = vadd.f32 0.0, %v1838
      %1840 = vmatprep.mubr.f32.mxu0 0.0
      %1841 = vmatmul.mubr.f32.gmra.mxu0 %v491
      %v1842 = vpop.f32.mrf.mxu0
      %v1843 = vadd.f32 0.0, %v1842
      %v1844 = vpop.f32.mrf.mxu0
      %v1845 = vadd.f32 0.0, %v1844
      %1846 = vmatprep.mubr.f32.mxu0 0.0
      %1847 = vmatmul.mubr.f32.gmra.mxu0 %v492
      %v1848 = vpop.f32.mrf.mxu0
      %v1849 = vadd.f32 0.0, %v1848
      %v1850 = vpop.f32.mrf.mxu0
      %v1851 = vadd.f32 0.0, %v1850
      %1852 = vmatprep.mubr.f32.mxu0 0.0
      %1853 = vmatmul.mubr.f32.gmra.mxu0 %v493
      %v1854 = vpop.f32.mrf.mxu0
      %v1855 = vadd.f32 0.0, %v1854
      %v1856 = vpop.f32.mrf.mxu0
      %v1857 = vadd.f32 0.0, %v1856
      %1858 = vmatprep.mubr.f32.mxu0 0.0
      %1859 = vmatmul.mubr.f32.gmra.mxu0 %v502
      %v1860 = vpop.f32.mrf.mxu0
      %v1861 = vadd.f32 0.0, %v1860
      %v1862 = vpop.f32.mrf.mxu0
      %v1863 = vadd.f32 0.0, %v1862
      %1864 = vmatprep.mubr.f32.mxu0 0.0
      %1865 = vmatmul.mubr.f32.gmra.mxu0 %v503
      %v1866 = vpop.f32.mrf.mxu0
      %v1867 = vadd.f32 0.0, %v1866
      %v1868 = vpop.f32.mrf.mxu0
      %v1869 = vadd.f32 0.0, %v1868
      %1870 = vdwg.mxu0
      %1871 = vmatprep.subr.mxu0 0.0
      %1872 = vmatpush1.msra.mxu0 %v1613
      %1873 = vmatprep.subr.mxu0 0.0
      %1874 = vmatpush1.msra.mxu0 %v1610
      %1875 = vmatprep.subr.mxu0 0.0
      %1876 = vmatpush1.msra.mxu0 %v1607
      %1877 = vmatprep.subr.mxu0 0.0
      %1878 = vmatpush1.msra.mxu0 %v1604
      %1879 = vmatprep.subr.mxu0 0.0
      %1880 = vmatpush1.msra.mxu0 %v1601
      %1881 = vmatprep.subr.mxu0 0.0
      %1882 = vmatpush1.msra.mxu0 %v1598
      %1883 = vmatprep.subr.mxu0 0.0
      %1884 = vmatpush1.msra.mxu0 %v1595
      %1885 = vmatprep.subr.mxu0 0.0
      %1886 = vmatpush1.msra.mxu0 %v1592
      %1887 = vmatprep.subr.mxu0 0.0
      %1888 = vmatpush1.msra.mxu0 %v1589
      %1889 = vmatprep.subr.mxu0 0.0
      %1890 = vmatpush1.msra.mxu0 %v1586
      %1891 = vmatprep.subr.mxu0 0.0
      %1892 = vmatpush1.msra.mxu0 %v1583
      %1893 = vmatprep.subr.mxu0 0.0
      %1894 = vmatpush1.msra.mxu0 %v1580
      %1895 = vmatprep.subr.mxu0 0.0
      %1896 = vmatpush1.msra.mxu0 %v1577
      %1897 = vmatprep.subr.mxu0 0.0
      %1898 = vmatpush1.msra.mxu0 %v1574
      %1899 = vmatprep.subr.mxu0 0.0
      %1900 = vmatpush1.msra.mxu0 %v1571
      %1901 = vmatprep.subr.mxu0 0.0
      %1902 = vmatpush1.msra.mxu0 %v1568
      %1903 = vmatprep.subr.mxu0 0.0
      %1904 = vmatpush2.msra.mxu0 0.0
      %1905 = vmatprep.subr.mxu0 0.0
      %1906 = vmatpush2.msra.mxu0 0.0
      %1907 = vmatprep.subr.mxu0 0.0
      %1908 = vmatpush2.msra.mxu0 0.0
      %1909 = vmatprep.subr.mxu0 0.0
      %1910 = vmatpush2.msra.mxu0 0.0
      %1911 = vmatprep.subr.mxu0 0.0
      %1912 = vmatpush2.msra.mxu0 0.0
      %1913 = vmatprep.subr.mxu0 0.0
      %1914 = vmatpush2.msra.mxu0 0.0
      %1915 = vmatprep.subr.mxu0 0.0
      %1916 = vmatpush2.msra.mxu0 0.0
      %1917 = vmatprep.subr.mxu0 0.0
      %1918 = vmatpush2.msra.mxu0 0.0
      %1919 = vmatprep.subr.mxu0 0.0
      %1920 = vmatpush2.msra.mxu0 0.0
      %1921 = vmatprep.subr.mxu0 0.0
      %1922 = vmatpush2.msra.mxu0 0.0
      %1923 = vmatprep.subr.mxu0 0.0
      %1924 = vmatpush2.msra.mxu0 0.0
      %1925 = vmatprep.subr.mxu0 0.0
      %1926 = vmatpush2.msra.mxu0 0.0
      %1927 = vmatprep.subr.mxu0 0.0
      %1928 = vmatpush2.msra.mxu0 0.0
      %1929 = vmatprep.subr.mxu0 0.0
      %1930 = vmatpush2.msra.mxu0 0.0
      %1931 = vmatprep.subr.mxu0 0.0
      %1932 = vmatpush2.msra.mxu0 0.0
      %1933 = vmatprep.subr.mxu0 0.0
      %1934 = vmatpush2.msra.mxu0 0.0
      %1935 = vmatprep.mubr.f32.mxu0 0.0
      %1936 = vmatmul.mubr.f32.gmra.mxu0 %v464
      %v1937 = vpop.f32.mrf.mxu0
      %v1938 = vadd.f32 0.0, %v1937
      %v1939 = vpop.f32.mrf.mxu0
      %1940 = vmatprep.mubr.f32.mxu0 0.0
      %1941 = vmatmul.mubr.f32.gmra.mxu0 %v465
      %v1942 = vpop.f32.mrf.mxu0
      %v1943 = vadd.f32 0.0, %v1942
      %v1944 = vpop.f32.mrf.mxu0
      %1945 = vmatprep.mubr.f32.mxu0 0.0
      %1946 = vmatmul.mubr.f32.gmra.mxu0 %v466
      %v1947 = vpop.f32.mrf.mxu0
      %v1948 = vadd.f32 0.0, %v1947
      %v1949 = vpop.f32.mrf.mxu0
      %1950 = vmatprep.mubr.f32.mxu0 0.0
      %1951 = vmatmul.mubr.f32.gmra.mxu0 %v467
      %v1952 = vpop.f32.mrf.mxu0
      %v1953 = vadd.f32 0.0, %v1952
      %v1954 = vpop.f32.mrf.mxu0
      %1955 = vmatprep.mubr.f32.mxu0 0.0
      %1956 = vmatmul.mubr.f32.gmra.mxu0 %v468
      %v1957 = vpop.f32.mrf.mxu0
      %v1958 = vadd.f32 0.0, %v1957
      %v1959 = vpop.f32.mrf.mxu0
      %1960 = vmatprep.mubr.f32.mxu0 0.0
      %1961 = vmatmul.mubr.f32.gmra.mxu0 %v469
      %v1962 = vpop.f32.mrf.mxu0
      %v1963 = vadd.f32 0.0, %v1962
      %v1964 = vpop.f32.mrf.mxu0
      %1965 = vmatprep.mubr.f32.mxu0 0.0
      %1966 = vmatmul.mubr.f32.gmra.mxu0 %v470
      %v1967 = vpop.f32.mrf.mxu0
      %v1968 = vadd.f32 0.0, %v1967
      %v1969 = vpop.f32.mrf.mxu0
      %1970 = vmatprep.mubr.f32.mxu0 0.0
      %1971 = vmatmul.mubr.f32.gmra.mxu0 %v471
      %v1972 = vpop.f32.mrf.mxu0
      %v1973 = vadd.f32 0.0, %v1972
      %v1974 = vpop.f32.mrf.mxu0
      %1975 = vmatprep.mubr.f32.mxu0 0.0
      %1976 = vmatmul.mubr.f32.gmra.mxu0 %v472
      %v1977 = vpop.f32.mrf.mxu0
      %v1978 = vadd.f32 0.0, %v1977
      %v1979 = vpop.f32.mrf.mxu0
      %1980 = vmatprep.mubr.f32.mxu0 0.0
      %1981 = vmatmul.mubr.f32.gmra.mxu0 %v473
      %v1982 = vpop.f32.mrf.mxu0
      %v1983 = vadd.f32 0.0, %v1982
      %v1984 = vpop.f32.mrf.mxu0
      %1985 = vmatprep.mubr.f32.mxu0 0.0
      %1986 = vmatmul.mubr.f32.gmra.mxu0 %v474
      %v1987 = vpop.f32.mrf.mxu0
      %v1988 = vadd.f32 0.0, %v1987
      %v1989 = vpop.f32.mrf.mxu0
      %1990 = vmatprep.mubr.f32.mxu0 0.0
      %1991 = vmatmul.mubr.f32.gmra.mxu0 %v475
      %v1992 = vpop.f32.mrf.mxu0
      %v1993 = vadd.f32 0.0, %v1992
      %v1994 = vpop.f32.mrf.mxu0
      %1995 = vmatprep.mubr.f32.mxu0 0.0
      %1996 = vmatmul.mubr.f32.gmra.mxu0 %v476
      %v1997 = vpop.f32.mrf.mxu0
      %v1998 = vadd.f32 0.0, %v1997
      %v1999 = vpop.f32.mrf.mxu0
      %2000 = vmatprep.mubr.f32.mxu0 0.0
      %2001 = vmatmul.mubr.f32.gmra.mxu0 %v477
      %v2002 = vpop.f32.mrf.mxu0
      %v2003 = vadd.f32 0.0, %v2002
      %v2004 = vpop.f32.mrf.mxu0
      %2005 = vmatprep.mubr.f32.mxu0 0.0
      %2006 = vmatmul.mubr.f32.gmra.mxu0 %v478
      %v2007 = vpop.f32.mrf.mxu0
      %v2008 = vadd.f32 0.0, %v2007
      %v2009 = vpop.f32.mrf.mxu0
      %2010 = vmatprep.mubr.f32.mxu0 0.0
      %2011 = vmatmul.mubr.f32.gmra.mxu0 %v479
      %v2012 = vpop.f32.mrf.mxu0
      %v2013 = vadd.f32 0.0, %v2012
      %v2014 = vpop.f32.mrf.mxu0
      %2015 = vmatprep.mubr.f32.mxu0 0.0
      %2016 = vmatmul.mubr.f32.gmra.mxu0 %v480
      %v2017 = vpop.f32.mrf.mxu0
      %v2018 = vadd.f32 0.0, %v2017
      %v2019 = vpop.f32.mrf.mxu0
      %2020 = vmatprep.mubr.f32.mxu0 0.0
      %2021 = vmatmul.mubr.f32.gmra.mxu0 %v481
      %v2022 = vpop.f32.mrf.mxu0
      %v2023 = vadd.f32 0.0, %v2022
      %v2024 = vpop.f32.mrf.mxu0
      %2025 = vmatprep.mubr.f32.mxu0 0.0
      %2026 = vmatmul.mubr.f32.gmra.mxu0 %v482
      %v2027 = vpop.f32.mrf.mxu0
      %v2028 = vadd.f32 0.0, %v2027
      %v2029 = vpop.f32.mrf.mxu0
      %2030 = vmatprep.mubr.f32.mxu0 0.0
      %2031 = vmatmul.mubr.f32.gmra.mxu0 %v483
      %v2032 = vpop.f32.mrf.mxu0
      %v2033 = vadd.f32 0.0, %v2032
      %v2034 = vpop.f32.mrf.mxu0
      %2035 = vmatprep.mubr.f32.mxu0 0.0
      %2036 = vmatmul.mubr.f32.gmra.mxu0 %v484
      %v2037 = vpop.f32.mrf.mxu0
      %v2038 = vadd.f32 0.0, %v2037
      %v2039 = vpop.f32.mrf.mxu0
      %2040 = vmatprep.mubr.f32.mxu0 0.0
      %2041 = vmatmul.mubr.f32.gmra.mxu0 %v485
      %v2042 = vpop.f32.mrf.mxu0
      %v2043 = vadd.f32 0.0, %v2042
      %v2044 = vpop.f32.mrf.mxu0
      %2045 = vmatprep.mubr.f32.mxu0 0.0
      %2046 = vmatmul.mubr.f32.gmra.mxu0 %v486
      %v2047 = vpop.f32.mrf.mxu0
      %v2048 = vadd.f32 0.0, %v2047
      %v2049 = vpop.f32.mrf.mxu0
      %2050 = vmatprep.mubr.f32.mxu0 0.0
      %2051 = vmatmul.mubr.f32.gmra.mxu0 %v487
      %v2052 = vpop.f32.mrf.mxu0
      %v2053 = vadd.f32 0.0, %v2052
      %v2054 = vpop.f32.mrf.mxu0
      %2055 = vmatprep.mubr.f32.mxu0 0.0
      %2056 = vmatmul.mubr.f32.gmra.mxu0 %v488
      %v2057 = vpop.f32.mrf.mxu0
      %v2058 = vadd.f32 0.0, %v2057
      %v2059 = vpop.f32.mrf.mxu0
      %2060 = vmatprep.mubr.f32.mxu0 0.0
      %2061 = vmatmul.mubr.f32.gmra.mxu0 %v489
      %v2062 = vpop.f32.mrf.mxu0
      %v2063 = vadd.f32 0.0, %v2062
      %v2064 = vpop.f32.mrf.mxu0
      %2065 = vmatprep.mubr.f32.mxu0 0.0
      %2066 = vmatmul.mubr.f32.gmra.mxu0 %v490
      %v2067 = vpop.f32.mrf.mxu0
      %v2068 = vadd.f32 0.0, %v2067
      %v2069 = vpop.f32.mrf.mxu0
      %2070 = vmatprep.mubr.f32.mxu0 0.0
      %2071 = vmatmul.mubr.f32.gmra.mxu0 %v491
      %v2072 = vpop.f32.mrf.mxu0
      %v2073 = vadd.f32 0.0, %v2072
      %v2074 = vpop.f32.mrf.mxu0
      %2075 = vmatprep.mubr.f32.mxu0 0.0
      %2076 = vmatmul.mubr.f32.gmra.mxu0 %v492
      %v2077 = vpop.f32.mrf.mxu0
      %v2078 = vadd.f32 0.0, %v2077
      %v2079 = vpop.f32.mrf.mxu0
      %2080 = vmatprep.mubr.f32.mxu0 0.0
      %2081 = vmatmul.mubr.f32.gmra.mxu0 %v493
      %v2082 = vpop.f32.mrf.mxu0
      %v2083 = vadd.f32 0.0, %v2082
      %v2084 = vpop.f32.mrf.mxu0
      %2085 = vmatprep.mubr.f32.mxu0 0.0
      %2086 = vmatmul.mubr.f32.gmra.mxu0 %v502
      %v2087 = vpop.f32.mrf.mxu0
      %v2088 = vadd.f32 0.0, %v2087
      %v2089 = vpop.f32.mrf.mxu0
      %2090 = vmatprep.mubr.f32.mxu0 0.0
      %2091 = vmatmul.mubr.f32.gmra.mxu0 %v503
      %v2092 = vpop.f32.mrf.mxu0
      %v2093 = vadd.f32 0.0, %v2092
      %v2094 = vpop.f32.mrf.mxu0
      %2095 = vdwg.mxu0
      %v2096 = vadd.f32 %v1150, %v1681
      %v2097 = vadd.f32 %v1152, %v1683
      %v2098 = vadd.f32 %v1407, %v1938
      %v2099 = vadd.f32 %v1156, %v1687
      %v2100 = vadd.f32 %v1158, %v1689
      %v2101 = vadd.f32 %v1412, %v1943
      %v2102 = vadd.f32 %v1162, %v1693
      %v2103 = vadd.f32 %v1164, %v1695
      %v2104 = vadd.f32 %v1417, %v1948
      %v2105 = vadd.f32 %v1168, %v1699
      %v2106 = vadd.f32 %v1170, %v1701
      %v2107 = vadd.f32 %v1422, %v1953
      %v2108 = vadd.f32 %v1174, %v1705
      %v2109 = vadd.f32 %v1176, %v1707
      %v2110 = vadd.f32 %v1427, %v1958
      %v2111 = vadd.f32 %v1180, %v1711
      %v2112 = vadd.f32 %v1182, %v1713
      %v2113 = vadd.f32 %v1432, %v1963
      %v2114 = vadd.f32 %v1186, %v1717
      %v2115 = vadd.f32 %v1188, %v1719
      %v2116 = vadd.f32 %v1437, %v1968
      %v2117 = vadd.f32 %v1192, %v1723
      %v2118 = vadd.f32 %v1194, %v1725
      %v2119 = vadd.f32 %v1442, %v1973
      %v2120 = vadd.f32 %v1198, %v1729
      %v2121 = vadd.f32 %v1200, %v1731
      %v2122 = vadd.f32 %v1447, %v1978
      %v2123 = vadd.f32 %v1204, %v1735
      %v2124 = vadd.f32 %v1206, %v1737
      %v2125 = vadd.f32 %v1452, %v1983
      %v2126 = vadd.f32 %v1210, %v1741
      %v2127 = vadd.f32 %v1212, %v1743
      %v2128 = vadd.f32 %v1457, %v1988
      %v2129 = vadd.f32 %v1216, %v1747
      %v2130 = vadd.f32 %v1218, %v1749
      %v2131 = vadd.f32 %v1462, %v1993
      %v2132 = vadd.f32 %v1222, %v1753
      %v2133 = vadd.f32 %v1224, %v1755
      %v2134 = vadd.f32 %v1467, %v1998
      %v2135 = vadd.f32 %v1228, %v1759
      %v2136 = vadd.f32 %v1230, %v1761
      %v2137 = vadd.f32 %v1472, %v2003
      %v2138 = vadd.f32 %v1234, %v1765
      %v2139 = vadd.f32 %v1236, %v1767
      %v2140 = vadd.f32 %v1477, %v2008
      %v2141 = vadd.f32 %v1240, %v1771
      %v2142 = vadd.f32 %v1242, %v1773
      %v2143 = vadd.f32 %v1482, %v2013
      %v2144 = vadd.f32 %v1246, %v1777
      %v2145 = vadd.f32 %v1248, %v1779
      %v2146 = vadd.f32 %v1487, %v2018
      %v2147 = vadd.f32 %v1252, %v1783
      %v2148 = vadd.f32 %v1254, %v1785
      %v2149 = vadd.f32 %v1492, %v2023
      %v2150 = vadd.f32 %v1258, %v1789
      %v2151 = vadd.f32 %v1260, %v1791
      %v2152 = vadd.f32 %v1497, %v2028
      %v2153 = vadd.f32 %v1264, %v1795
      %v2154 = vadd.f32 %v1266, %v1797
      %v2155 = vadd.f32 %v1502, %v2033
      %v2156 = vadd.f32 %v1270, %v1801
      %v2157 = vadd.f32 %v1272, %v1803
      %v2158 = vadd.f32 %v1507, %v2038
      %v2159 = vadd.f32 %v1276, %v1807
      %v2160 = vadd.f32 %v1278, %v1809
      %v2161 = vadd.f32 %v1512, %v2043
      %v2162 = vadd.f32 %v1282, %v1813
      %v2163 = vadd.f32 %v1284, %v1815
      %v2164 = vadd.f32 %v1517, %v2048
      %v2165 = vadd.f32 %v1288, %v1819
      %v2166 = vadd.f32 %v1290, %v1821
      %v2167 = vadd.f32 %v1522, %v2053
      %v2168 = vadd.f32 %v1294, %v1825
      %v2169 = vadd.f32 %v1296, %v1827
      %v2170 = vadd.f32 %v1527, %v2058
      %v2171 = vadd.f32 %v1300, %v1831
      %v2172 = vadd.f32 %v1302, %v1833
      %v2173 = vadd.f32 %v1532, %v2063
      %v2174 = vadd.f32 %v1306, %v1837
      %v2175 = vadd.f32 %v1308, %v1839
      %v2176 = vadd.f32 %v1537, %v2068
      %v2177 = vadd.f32 %v1312, %v1843
      %v2178 = vadd.f32 %v1314, %v1845
      %v2179 = vadd.f32 %v1542, %v2073
      %v2180 = vadd.f32 %v1318, %v1849
      %v2181 = vadd.f32 %v1320, %v1851
      %v2182 = vadd.f32 %v1547, %v2078
      %v2183 = vadd.f32 %v1324, %v1855
      %v2184 = vadd.f32 %v1326, %v1857
      %v2185 = vadd.f32 %v1552, %v2083
      %v2186 = vadd.f32 %v1330, %v1861
      %v2187 = vadd.f32 %v1332, %v1863
      %v2188 = vadd.f32 %v1557, %v2088
      %v2189 = vadd.f32 %v1336, %v1867
      %v2190 = vadd.f32 %v1338, %v1869
      %v2191 = vadd.f32 %v1562, %v2093
      %vm2224 = vcmask 1040384
      %v2225 = vrot.slane %v2096, 7
      %v2226 = vrot.slane %v2099, 7
      %v2227 = vsel %vm2224, %v2225, %v2226
      %v2228 = vrot.slane %v2102, 7
      %v2229 = vrot.slane %v2105, 7
      %v2230 = vsel %vm2224, %v2228, %v2229
      %v2231 = vrot.slane %v2108, 7
      %v2232 = vrot.slane %v2111, 7
      %v2233 = vsel %vm2224, %v2231, %v2232
      %v2234 = vrot.slane %v2114, 7
      %v2235 = vrot.slane %v2117, 7
      %v2236 = vsel %vm2224, %v2234, %v2235
      %v2237 = vrot.slane %v2120, 7
      %v2238 = vrot.slane %v2123, 7
      %v2239 = vsel %vm2224, %v2237, %v2238
      %v2240 = vrot.slane %v2126, 7
      %v2241 = vrot.slane %v2129, 7
      %v2242 = vsel %vm2224, %v2240, %v2241
      %v2243 = vrot.slane %v2132, 7
      %v2244 = vrot.slane %v2135, 7
      %v2245 = vsel %vm2224, %v2243, %v2244
      %v2246 = vrot.slane %v2138, 7
      %v2247 = vrot.slane %v2141, 7
      %v2248 = vsel %vm2224, %v2246, %v2247
      %v2249 = vrot.slane %v2144, 7
      %v2250 = vrot.slane %v2147, 7
      %v2251 = vsel %vm2224, %v2249, %v2250
      %v2252 = vrot.slane %v2150, 7
      %v2253 = vrot.slane %v2153, 7
      %v2254 = vsel %vm2224, %v2252, %v2253
      %v2255 = vrot.slane %v2156, 7
      %v2256 = vrot.slane %v2159, 7
      %v2257 = vsel %vm2224, %v2255, %v2256
      %v2258 = vrot.slane %v2162, 7
      %v2259 = vrot.slane %v2165, 7
      %v2260 = vsel %vm2224, %v2258, %v2259
      %v2261 = vrot.slane %v2168, 7
      %v2262 = vrot.slane %v2171, 7
      %v2263 = vsel %vm2224, %v2261, %v2262
      %v2264 = vrot.slane %v2174, 7
      %v2265 = vrot.slane %v2177, 7
      %v2266 = vsel %vm2224, %v2264, %v2265
      %v2267 = vrot.slane %v2180, 7
      %v2268 = vrot.slane %v2183, 7
      %v2269 = vsel %vm2224, %v2267, %v2268
      %v2270 = vrot.slane %v2186, 7
      %v2271 = vrot.slane %v2189, 7
      %v2272 = vsel %vm2224, %v2270, %v2271
      %v2305 = vsel %vm2224, 0.0, %v2225
      %v2306 = vsel %vm2224, 0.0, %v2228
      %v2307 = vsel %vm2224, 0.0, %v2231
      %v2308 = vsel %vm2224, 0.0, %v2234
      %v2309 = vsel %vm2224, 0.0, %v2237
      %v2310 = vsel %vm2224, 0.0, %v2240
      %v2311 = vsel %vm2224, 0.0, %v2243
      %v2312 = vsel %vm2224, 0.0, %v2246
      %v2313 = vsel %vm2224, 0.0, %v2249
      %v2314 = vsel %vm2224, 0.0, %v2252
      %v2315 = vsel %vm2224, 0.0, %v2255
      %v2316 = vsel %vm2224, 0.0, %v2258
      %v2317 = vsel %vm2224, 0.0, %v2261
      %v2318 = vsel %vm2224, 0.0, %v2264
      %v2319 = vsel %vm2224, 0.0, %v2267
      %v2320 = vsel %vm2224, 0.0, %v2270
      %v2321 = vadd.f32 %v2097, %v2305
      %v2322 = vadd.f32 %v2100, %v2227
      %v2323 = vadd.f32 %v2103, %v2306
      %v2324 = vadd.f32 %v2106, %v2230
      %v2325 = vadd.f32 %v2109, %v2307
      %v2326 = vadd.f32 %v2112, %v2233
      %v2327 = vadd.f32 %v2115, %v2308
      %v2328 = vadd.f32 %v2118, %v2236
      %v2329 = vadd.f32 %v2121, %v2309
      %v2330 = vadd.f32 %v2124, %v2239
      %v2331 = vadd.f32 %v2127, %v2310
      %v2332 = vadd.f32 %v2130, %v2242
      %v2333 = vadd.f32 %v2133, %v2311
      %v2334 = vadd.f32 %v2136, %v2245
      %v2335 = vadd.f32 %v2139, %v2312
      %v2336 = vadd.f32 %v2142, %v2248
      %v2337 = vadd.f32 %v2145, %v2313
      %v2338 = vadd.f32 %v2148, %v2251
      %v2339 = vadd.f32 %v2151, %v2314
      %v2340 = vadd.f32 %v2154, %v2254
      %v2341 = vadd.f32 %v2157, %v2315
      %v2342 = vadd.f32 %v2160, %v2257
      %v2343 = vadd.f32 %v2163, %v2316
      %v2344 = vadd.f32 %v2166, %v2260
      %v2345 = vadd.f32 %v2169, %v2317
      %v2346 = vadd.f32 %v2172, %v2263
      %v2347 = vadd.f32 %v2175, %v2318
      %v2348 = vadd.f32 %v2178, %v2266
      %v2349 = vadd.f32 %v2181, %v2319
      %v2350 = vadd.f32 %v2184, %v2269
      %v2351 = vadd.f32 %v2187, %v2320
      %v2352 = vadd.f32 %v2190, %v2272
      %vm2385 = vcmask 1046528
      %v2386 = vrot.slane %v2098, 1
      %v2387 = vrot.slane %v2101, 1
      %v2388 = vsel %vm2385, %v2386, %v2387
      %v2389 = vrot.slane %v2104, 1
      %v2390 = vrot.slane %v2107, 1
      %v2391 = vsel %vm2385, %v2389, %v2390
      %v2392 = vrot.slane %v2110, 1
      %v2393 = vrot.slane %v2113, 1
      %v2394 = vsel %vm2385, %v2392, %v2393
      %v2395 = vrot.slane %v2116, 1
      %v2396 = vrot.slane %v2119, 1
      %v2397 = vsel %vm2385, %v2395, %v2396
      %v2398 = vrot.slane %v2122, 1
      %v2399 = vrot.slane %v2125, 1
      %v2400 = vsel %vm2385, %v2398, %v2399
      %v2401 = vrot.slane %v2128, 1
      %v2402 = vrot.slane %v2131, 1
      %v2403 = vsel %vm2385, %v2401, %v2402
      %v2404 = vrot.slane %v2134, 1
      %v2405 = vrot.slane %v2137, 1
      %v2406 = vsel %vm2385, %v2404, %v2405
      %v2407 = vrot.slane %v2140, 1
      %v2408 = vrot.slane %v2143, 1
      %v2409 = vsel %vm2385, %v2407, %v2408
      %v2410 = vrot.slane %v2146, 1
      %v2411 = vrot.slane %v2149, 1
      %v2412 = vsel %vm2385, %v2410, %v2411
      %v2413 = vrot.slane %v2152, 1
      %v2414 = vrot.slane %v2155, 1
      %v2415 = vsel %vm2385, %v2413, %v2414
      %v2416 = vrot.slane %v2158, 1
      %v2417 = vrot.slane %v2161, 1
      %v2418 = vsel %vm2385, %v2416, %v2417
      %v2419 = vrot.slane %v2164, 1
      %v2420 = vrot.slane %v2167, 1
      %v2421 = vsel %vm2385, %v2419, %v2420
      %v2422 = vrot.slane %v2170, 1
      %v2423 = vrot.slane %v2173, 1
      %v2424 = vsel %vm2385, %v2422, %v2423
      %v2425 = vrot.slane %v2176, 1
      %v2426 = vrot.slane %v2179, 1
      %v2427 = vsel %vm2385, %v2425, %v2426
      %v2428 = vrot.slane %v2182, 1
      %v2429 = vrot.slane %v2185, 1
      %v2430 = vsel %vm2385, %v2428, %v2429
      %v2431 = vrot.slane %v2188, 1
      %v2432 = vrot.slane %v2191, 1
      %v2433 = vsel %vm2385, %v2431, %v2432
      %v2466 = vsel %vm2385, %v2387, 0.0
      %v2467 = vsel %vm2385, %v2390, 0.0
      %v2468 = vsel %vm2385, %v2393, 0.0
      %v2469 = vsel %vm2385, %v2396, 0.0
      %v2470 = vsel %vm2385, %v2399, 0.0
      %v2471 = vsel %vm2385, %v2402, 0.0
      %v2472 = vsel %vm2385, %v2405, 0.0
      %v2473 = vsel %vm2385, %v2408, 0.0
      %v2474 = vsel %vm2385, %v2411, 0.0
      %v2475 = vsel %vm2385, %v2414, 0.0
      %v2476 = vsel %vm2385, %v2417, 0.0
      %v2477 = vsel %vm2385, %v2420, 0.0
      %v2478 = vsel %vm2385, %v2423, 0.0
      %v2479 = vsel %vm2385, %v2426, 0.0
      %v2480 = vsel %vm2385, %v2429, 0.0
      %v2481 = vsel %vm2385, %v2432, 0.0
      %v2482 = vadd.f32 %v2321, %v2388
      %v2483 = vadd.f32 %v2322, %v2466
      %v2484 = vadd.f32 %v2323, %v2391
      %v2485 = vadd.f32 %v2324, %v2467
      %v2486 = vadd.f32 %v2325, %v2394
      %v2487 = vadd.f32 %v2326, %v2468
      %v2488 = vadd.f32 %v2327, %v2397
      %v2489 = vadd.f32 %v2328, %v2469
      %v2490 = vadd.f32 %v2329, %v2400
      %v2491 = vadd.f32 %v2330, %v2470
      %v2492 = vadd.f32 %v2331, %v2403
      %v2493 = vadd.f32 %v2332, %v2471
      %v2494 = vadd.f32 %v2333, %v2406
      %v2495 = vadd.f32 %v2334, %v2472
      %v2496 = vadd.f32 %v2335, %v2409
      %v2497 = vadd.f32 %v2336, %v2473
      %v2498 = vadd.f32 %v2337, %v2412
      %v2499 = vadd.f32 %v2338, %v2474
      %v2500 = vadd.f32 %v2339, %v2415
      %v2501 = vadd.f32 %v2340, %v2475
      %v2502 = vadd.f32 %v2341, %v2418
      %v2503 = vadd.f32 %v2342, %v2476
      %v2504 = vadd.f32 %v2343, %v2421
      %v2505 = vadd.f32 %v2344, %v2477
      %v2506 = vadd.f32 %v2345, %v2424
      %v2507 = vadd.f32 %v2346, %v2478
      %v2508 = vadd.f32 %v2347, %v2427
      %v2509 = vadd.f32 %v2348, %v2479
      %v2510 = vadd.f32 %v2349, %v2430
      %v2511 = vadd.f32 %v2350, %v2480
      %v2512 = vadd.f32 %v2351, %v2433
      %v2513 = vadd.f32 %v2352, %v2481
      %2514 = vst [vmem:[%s316] sm:$0xff] %v2482
      %2515 = vst [vmem:[%s316 + $0x8] sm:$0xff] %v2483
      %2516 = vst [vmem:[%s316 + $0x10] sm:$0xff] %v2484
      %2517 = vst [vmem:[%s316 + $0x18] sm:$0xff] %v2485
      %2518 = vst [vmem:[%s316 + $0x20] sm:$0xff] %v2486
      %2519 = vst [vmem:[%s316 + $0x28] sm:$0xff] %v2487
      %2520 = vst [vmem:[%s316 + $0x30] sm:$0xff] %v2488
      %2521 = vst [vmem:[%s316 + $0x38] sm:$0xff] %v2489
      %2522 = vst [vmem:[%s316 + $0x40] sm:$0xff] %v2490
      %2523 = vst [vmem:[%s316 + $0x48] sm:$0xff] %v2491
      %2524 = vst [vmem:[%s316 + $0x50] sm:$0xff] %v2492
      %2525 = vst [vmem:[%s316 + $0x58] sm:$0xff] %v2493
      %2526 = vst [vmem:[%s316 + $0x60] sm:$0xff] %v2494
      %2527 = vst [vmem:[%s316 + $0x68] sm:$0xff] %v2495
      %2528 = vst [vmem:[%s316 + $0x70] sm:$0xff] %v2496
      %2529 = vst [vmem:[%s316 + $0x78] sm:$0xff] %v2497
      %2530 = vst [vmem:[%s316 + $0x80] sm:$0xff] %v2498
      %2531 = vst [vmem:[%s316 + $0x88] sm:$0xff] %v2499
      %2532 = vst [vmem:[%s316 + $0x90] sm:$0xff] %v2500
      %2533 = vst [vmem:[%s316 + $0x98] sm:$0xff] %v2501
      %2534 = vst [vmem:[%s316 + $0xa0] sm:$0xff] %v2502
      %2535 = vst [vmem:[%s316 + $0xa8] sm:$0xff] %v2503
      %2536 = vst [vmem:[%s316 + $0xb0] sm:$0xff] %v2504
      %2537 = vst [vmem:[%s316 + $0xb8] sm:$0xff] %v2505
      %2538 = vst [vmem:[%s316 + $0xc0] sm:$0xff] %v2506
      %2539 = vst [vmem:[%s316 + $0xc8] sm:$0xff] %v2507
      %2540 = vst [vmem:[%s316 + $0xd0] sm:$0xff] %v2508
      %2541 = vst [vmem:[%s316 + $0xd8] sm:$0xff] %v2509
      %2542 = vst [vmem:[%s316 + $0xe0] sm:$0xff] %v2510
      %2543 = vst [vmem:[%s316 + $0xe8] sm:$0xff] %v2511
      %2544 = vst [vmem:[%s316 + $0xf0] sm:$0xff] %v2512
      %2545 = vst [vmem:[%s316 + $0xf8] sm:$0xff] %v2513
      %v2546 = vadd.f32 %v2482, %v2483
      %v2547 = vadd.f32 %v2546, %v2484
      %v2548 = vadd.f32 %v2547, %v2485
      %v2549 = vadd.f32 %v2548, %v2486
      %v2550 = vadd.f32 %v2549, %v2487
      %v2551 = vadd.f32 %v2550, %v2488
      %v2552 = vadd.f32 %v2551, %v2489
      %v2553 = vadd.f32 %v2552, %v2490
      %v2554 = vadd.f32 %v2553, %v2491
      %v2555 = vadd.f32 %v2554, %v2492
      %v2556 = vadd.f32 %v2555, %v2493
      %v2557 = vadd.f32 %v2556, %v2494
      %v2558 = vadd.f32 %v2557, %v2495
      %v2559 = vadd.f32 %v2558, %v2496
      %v2560 = vadd.f32 %v2559, %v2497
      %v2561 = vadd.f32 %v2560, %v2498
      %v2562 = vadd.f32 %v2561, %v2499
      %v2563 = vadd.f32 %v2562, %v2500
      %v2564 = vadd.f32 %v2563, %v2501
      %v2565 = vadd.f32 %v2564, %v2502
      %v2566 = vadd.f32 %v2565, %v2503
      %v2567 = vadd.f32 %v2566, %v2504
      %v2568 = vadd.f32 %v2567, %v2505
      %v2569 = vadd.f32 %v2568, %v2506
      %v2570 = vadd.f32 %v2569, %v2507
      %v2571 = vadd.f32 %v2570, %v2508
      %v2572 = vadd.f32 %v2571, %v2509
      %v2573 = vadd.f32 %v2572, %v2510
      %v2574 = vadd.f32 %v2573, %v2511
      %v2575 = vadd.f32 %v2574, %v2512
      %v2576 = vadd.f32 %v2575, %v2513
      %v2577 = vrot.slane %v2576, 4
      %v2578 = vadd.f32 %v2576, %v2577
      %v2579 = vrot.slane %v2578, 2
      %v2580 = vadd.f32 %v2578, %v2579
      %v2581 = vrot.slane %v2580, 1
      %v2582 = vadd.f32 %v2580, %v2581
      %2583 = vst [vmem:[%s323] sm:$0x1] %v2582
      %v2584 = vmul.f32 %v2482, %v2482
      %v2585 = vmul.f32 %v2483, %v2483
      %v2586 = vmul.f32 %v2484, %v2484
      %v2587 = vmul.f32 %v2485, %v2485
      %v2588 = vmul.f32 %v2486, %v2486
      %v2589 = vmul.f32 %v2487, %v2487
      %v2590 = vmul.f32 %v2488, %v2488
      %v2591 = vmul.f32 %v2489, %v2489
      %v2592 = vmul.f32 %v2490, %v2490
      %v2593 = vmul.f32 %v2491, %v2491
      %v2594 = vmul.f32 %v2492, %v2492
      %v2595 = vmul.f32 %v2493, %v2493
      %v2596 = vmul.f32 %v2494, %v2494
      %v2597 = vmul.f32 %v2495, %v2495
      %v2598 = vmul.f32 %v2496, %v2496
      %v2599 = vmul.f32 %v2497, %v2497
      %v2600 = vmul.f32 %v2498, %v2498
      %v2601 = vmul.f32 %v2499, %v2499
      %v2602 = vmul.f32 %v2500, %v2500
      %v2603 = vmul.f32 %v2501, %v2501
      %v2604 = vmul.f32 %v2502, %v2502
      %v2605 = vmul.f32 %v2503, %v2503
      %v2606 = vmul.f32 %v2504, %v2504
      %v2607 = vmul.f32 %v2505, %v2505
      %v2608 = vmul.f32 %v2506, %v2506
      %v2609 = vmul.f32 %v2507, %v2507
      %v2610 = vmul.f32 %v2508, %v2508
      %v2611 = vmul.f32 %v2509, %v2509
      %v2612 = vmul.f32 %v2510, %v2510
      %v2613 = vmul.f32 %v2511, %v2511
      %v2614 = vmul.f32 %v2512, %v2512
      %v2615 = vmul.f32 %v2513, %v2513
      %v2616 = vadd.f32 %v2584, %v2585
      %v2617 = vadd.f32 %v2616, %v2586
      %v2618 = vadd.f32 %v2617, %v2587
      %v2619 = vadd.f32 %v2618, %v2588
      %v2620 = vadd.f32 %v2619, %v2589
      %v2621 = vadd.f32 %v2620, %v2590
      %v2622 = vadd.f32 %v2621, %v2591
      %v2623 = vadd.f32 %v2622, %v2592
      %v2624 = vadd.f32 %v2623, %v2593
      %v2625 = vadd.f32 %v2624, %v2594
      %v2626 = vadd.f32 %v2625, %v2595
      %v2627 = vadd.f32 %v2626, %v2596
      %v2628 = vadd.f32 %v2627, %v2597
      %v2629 = vadd.f32 %v2628, %v2598
      %v2630 = vadd.f32 %v2629, %v2599
      %v2631 = vadd.f32 %v2630, %v2600
      %v2632 = vadd.f32 %v2631, %v2601
      %v2633 = vadd.f32 %v2632, %v2602
      %v2634 = vadd.f32 %v2633, %v2603
      %v2635 = vadd.f32 %v2634, %v2604
      %v2636 = vadd.f32 %v2635, %v2605
      %v2637 = vadd.f32 %v2636, %v2606
      %v2638 = vadd.f32 %v2637, %v2607
      %v2639 = vadd.f32 %v2638, %v2608
      %v2640 = vadd.f32 %v2639, %v2609
      %v2641 = vadd.f32 %v2640, %v2610
      %v2642 = vadd.f32 %v2641, %v2611
      %v2643 = vadd.f32 %v2642, %v2612
      %v2644 = vadd.f32 %v2643, %v2613
      %v2645 = vadd.f32 %v2644, %v2614
      %v2646 = vadd.f32 %v2645, %v2615
      %v2647 = vrot.slane %v2646, 4
      %v2648 = vadd.f32 %v2646, %v2647
      %v2649 = vrot.slane %v2648, 2
      %v2650 = vadd.f32 %v2648, %v2649
      %v2651 = vrot.slane %v2650, 1
      %v2652 = vadd.f32 %v2650, %v2651
      %2653 = vst [vmem:[%s329] sm:$0x1] %v2652
      %s2654 = smul.u32 16, %s24
      %p2655 = scmp.lt.s32.totalorder %s23, 1
      %s2656 = scalar_select %p2655, %s23, 1
      %p2657 = scmp.lt.s32.totalorder %s2654, 15
      %s2658 = scalar_select %p2657, %s2654, 15
      %s2659 = smul.addr %s2658, 2
      %s2660 = smul.addr %s2656, 32
      %s2661 = sadd.s32 %s2659, %s2660
      %s2662 = smul.addr %s2661, 8
      %s2663 = scalar_lea.vmem %s5, %s2662
      %p2664 = scmp.lt.s32.totalorder %s23, 1
      %s2665 = scalar_select %p2664, %s23, 1
      %p2666 = scmp.lt.s32.totalorder %s24, 0
      %s2667 = scalar_select %p2666, %s24, 0
      %s2668 = sadd.s32 %s2667, %s2665
      %s2669 = scalar_lea.vmem %s6, %s2668
      %p2670 = scmp.lt.s32.totalorder %s23, 1
      %s2671 = scalar_select %p2670, %s23, 1
      %p2672 = scmp.lt.s32.totalorder %s24, 0
      %s2673 = scalar_select %p2672, %s24, 0
      %s2674 = sadd.s32 %s2673, %s2671
      %s2675 = scalar_lea.vmem %s7, %s2674
      // Predicated region
      $region121: #{double_conv.3} parent=35 // pred_check
        %p2676 = pneg %p142
      $region122: #{double_conv.3} parent=35 // pred_check_branch
        %2678 = sbr.rel (%p2676) target = $region124
      $region123: #{double_conv.3} parent=35 // pred_region
        %s2679 = smul.u32 16, %s24
      $region124: #{double_conv.3} parent=35 // pred_fallthru
        _
      // Predicated region
      $region125: #{double_conv.3} parent=35 // pred_check
        %p2680 = pneg %p170
      $region126: #{double_conv.3} parent=35 // pred_check_branch
        %2682 = sbr.rel (%p2680) target = $region128
      $region127: #{double_conv.3} parent=35 // pred_region
        _
      $region128: #{double_conv.3} parent=35 // pred_fallthru
        _
      // Predicated region
      $region129: #{double_conv.3} parent=35 // pred_check
        %p2683 = pneg %p198
      $region130: #{double_conv.3} parent=35 // pred_check_branch
        %2685 = sbr.rel (%p2683) target = $region132
      $region131: #{double_conv.3} parent=35 // pred_region
        _
      $region132: #{double_conv.3} parent=35 // pred_fallthru
        _
    $region36: #{double_conv.3} parent=5 // pred_fallthru
      _
    %p2686 = scmp.le.s32.totalorder 2, %s14
    // Predicated region
    $region133: #{double_conv.3} parent=5 // pred_check
      %p2687 = pneg %p2686
    $region134: #{double_conv.3} parent=5 // pred_check_branch
      %2689 = sbr.rel (%p2687) target = $region136
    $region135: #{double_conv.3} parent=5 // pred_region
      %s2690 = ssub.s32 %s14, 2
      // Predicated region
      $region137: #{double_conv.3} parent=135 // pred_check
        %p2691 = pneg %p148
      $region138: #{double_conv.3} parent=135 // pred_check_branch
        %2693 = sbr.rel (%p2691) target = $region140
      $region139: #{double_conv.3} parent=135 // pred_region
        %s2694 = smul.u32 16, %s26
        %p2695 = scmp.lt.s32.totalorder %s25, 1
        %s2696 = scalar_select %p2695, %s25, 1
        %p2697 = scmp.lt.s32.totalorder %s2694, 15
        %s2698 = scalar_select %p2697, %s2694, 15
        %s2699 = smul.addr %s2698, 2
        %s2700 = smul.addr %s2696, 32
        %s2701 = sadd.s32 %s2699, %s2700
        %s2702 = smul.addr %s2701, 8
        %s2703 = scalar_lea.vmem %s5, %s2702
      $region140: #{double_conv.3} parent=135 // pred_fallthru
        _
      // Predicated region
      $region141: #{double_conv.3} parent=135 // pred_check
        %p2704 = pneg %p176
      $region142: #{double_conv.3} parent=135 // pred_check_branch
        %2706 = sbr.rel (%p2704) target = $region144
      $region143: #{double_conv.3} parent=135 // pred_region
        %p2707 = scmp.lt.s32.totalorder %s25, 1
        %s2708 = scalar_select %p2707, %s25, 1
        %p2709 = scmp.lt.s32.totalorder %s26, 0
        %s2710 = scalar_select %p2709, %s26, 0
        %s2711 = sadd.s32 %s2710, %s2708
        %s2712 = scalar_lea.vmem %s6, %s2711
      $region144: #{double_conv.3} parent=135 // pred_fallthru
        _
      // Predicated region
      $region145: #{double_conv.3} parent=135 // pred_check
        %p2713 = pneg %p204
      $region146: #{double_conv.3} parent=135 // pred_check_branch
        %2715 = sbr.rel (%p2713) target = $region148
      $region147: #{double_conv.3} parent=135 // pred_region
        %p2716 = scmp.lt.s32.totalorder %s25, 1
        %s2717 = scalar_select %p2716, %s25, 1
        %p2718 = scmp.lt.s32.totalorder %s26, 0
        %s2719 = scalar_select %p2718, %s26, 0
        %s2720 = sadd.s32 %s2719, %s2717
        %s2721 = scalar_lea.vmem %s7, %s2720
      $region148: #{double_conv.3} parent=135 // pred_fallthru
        _
    $region136: #{double_conv.3} parent=5 // pred_fallthru
      _
  $region6: #{double_conv.3} parent=0 // loop_footer
    %s18 = sadd.s32 1, %s14
  $region7: #{double_conv.3} parent=0 // loop_footer_branch
    %13 = sbr.rel target = $region3
  $region8: #{double_conv.3} parent=0 // loop_exit
    _
  %2722 = vsyncmov [#allocation3]
  %s2723 = vpop.sfrf %2722
  %p2724 = scmp.eq.s32.totalorder %s2723, 0
  %p2725 = pneg %p2724
  %2727 = shalt.err (%p2725)
  %s2728 = scalar_lea.sflag [#allocation3], 1
  %2729 = vsyncmov %s2728
  %s2730 = vpop.sfrf %2729
  %p2731 = scmp.eq.s32.totalorder %s2730, 0
  %p2732 = pneg %p2731
  %2734 = shalt.err (%p2732)

// kernel: double_conv.4
$region0: #{double_conv.4}
  #allocation0 [shape = 'u32[]', space=smem, size = 0x4, offset = 0x4, fixed_abs, tag = 'smem constant byte address 0x4 - core index']
  #allocation1 [shape = 'u32[144,128]{1,0:T(1,128)}', space=vmem, size = 0x12000, scoped, tag = 'internal scratch']
  #allocation2 [shape = 'f32[2,1,16,128]{3,2,1,0:T(8,128)}', space=vmem, size = 0x4000, scoped, tag = 'scratch operand']
  #allocation3 [shape = 's32[2]{0}', space=sflag, size = 0x8, scoped, tag = 'scratch operand']
  #allocation4 [shape = 's32[]', space=sflag, size = 0x4, offset = 0, fixed_abs, tag = 'sflag constant byte address 0x0 - dummy sync flag']
  #allocation5 [shape = 's32[]', space=sflag, size = 0x4, offset = 0, fixed_abs, tag = 'sflag constant byte address 0x0 - dummy sync flag']
  %s0 = inlined_call_operand.vmem [shape: f32[2,16,16,128], index: 0, kind: input, shape index: {}, may-alias: {0,1}]
  %s1 = inlined_call_operand.vmem [shape: f32[2,16,16,128], index: 1, kind: input, shape index: {}, may-alias: {0,1}]
  %s2 = inlined_call_operand.vmem [shape: f32[3,128,384], index: 2, kind: input, shape index: {}]
  %s3 = inlined_call_operand.vmem [shape: f32[1,128], index: 3, kind: input, shape index: {}]
  %s4 = inlined_call_operand.vmem [shape: f32[1,128], index: 4, kind: input, shape index: {}]
  %s5 = inlined_call_operand.vmem [shape: f32[2,16,16,128], index: 5, kind: output, shape index: {0}]
  %s6 = inlined_call_operand.vmem [shape: f32[2,1,1,128], index: 6, kind: output, shape index: {1}]
  %s7 = inlined_call_operand.vmem [shape: f32[2,1,1,128], index: 7, kind: output, shape index: {2}]
  %8 = xla_tuple %s5, %s6, %s7
  %s9 = sld [smem:[#allocation0]]
  $region149: #{double_conv.4} parent=0
    _
  %s11 = ssub.s32 1, %s9
  %s12 = scalar_select 0, %s11, %s9
  loop: start=0, step=1, limit=4
  $region2: #{double_conv.4} parent=0 // loop_pre_header
    _
  $region3: #{double_conv.4} parent=0 // loop_header
    %s14 = sphi 0, %s18
    %p15 = scmp.ge.s32.totalorder %s14, 4
    %s21 = sphi 0, %s33
    %s22 = sphi 0, %s29
    %s23 = sphi 0, %s21
    %s24 = sphi 0, %s22
    %s25 = sphi 0, %s23
    %s26 = sphi 0, %s24
    %s38 = sphi 0, %s40
    %s41 = sphi 0, %s38
    %s42 = sphi 0, %s41
    %s58 = sphi 0, %s42
    %s62 = sphi 0, %s62
    %s64 = sphi 0, %s62
    %s65 = sphi 0, %s64
    %s79 = sphi 0, %s65
    %s83 = sphi 0, %s83
    %s85 = sphi 0, %s83
    %s86 = sphi 0, %s85
    %s100 = sphi 0, %s86
    %s104 = sphi 0, %s104
    %s106 = sphi 0, %s104
    %s107 = sphi 0, %s106
    %s121 = sphi 0, %s107
    %s129 = sphi 0, %s131
    %s132 = sphi 0, %s129
    %s133 = sphi 0, %s132
    %s149 = sphi 0, %s133
    %s157 = sphi 0, %s159
    %s160 = sphi 0, %s157
    %s161 = sphi 0, %s160
    %s177 = sphi 0, %s161
    %s185 = sphi 0, %s187
    %s188 = sphi 0, %s185
    %s189 = sphi 0, %s188
    %s205 = sphi 0, %s189
  $region4: #{double_conv.4} parent=0 // loop_header_branch
    %17 = sbr.rel (%p15) target = $region8
  $region5: #{double_conv.4} parent=0 // loop_body
    %s19 = ssub.s32 %s14, 1
    %s20 = ssub.s32 %s14, 2
    %s27 = sadd.s32 1, %s22
    %p28 = scmp.ge.s32.totalorder %s27, 1
    %s29 = scalar_select %p28, 0, %s27
    %s30 = sadd.s32 1, %s21
    %s31 = scalar_select %p28, %s30, %s21
    %p32 = scmp.ge.s32.totalorder %s31, 2
    %s33 = scalar_select %p32, 0, %s31
    %s34 = ssub.s32 %s21, %s33
    %s35 = ssub.s32 %s22, %s29
    %s36 = sor.u32 %s34, %s35
    %p37 = scmp.eq.s32.totalorder %s36, 0
    %s39 = sadd.s32 %s38, 1
    %s40 = scalar_select %p37, %s38, %s39
    %p43 = pneg %p37
    %p44 = scmp.eq.s32.totalorder %s14, 1
    %p45 = por %p43, %p44
    %p46 = scmp.ne.s32.totalorder %s38, %s41
    %p47 = scmp.eq.s32.totalorder %s14, 0
    %p48 = por %p46, %p47
    %p49 = scmp.ne.s32.totalorder %s38, %s41
    %p50 = scmp.eq.s32.totalorder %s19, 1
    %p51 = por %p49, %p50
    %p52 = scmp.ne.s32.totalorder %s41, %s42
    %p53 = scmp.eq.s32.totalorder %s19, 0
    %p54 = por %p52, %p53
    %p55 = scmp.ne.s32.totalorder %s41, %s42
    %p56 = scmp.eq.s32.totalorder %s20, 1
    %p57 = por %p55, %p56
    %p59 = scmp.ne.s32.totalorder %s42, %s58
    %p60 = scmp.eq.s32.totalorder %s20, 0
    %p61 = por %p59, %p60
    %s63 = sadd.s32 %s62, 1
    %p66 = scmp.eq.s32.totalorder %s14, 1
    %p67 = scmp.ne.s32.totalorder %s62, %s64
    %p68 = scmp.eq.s32.totalorder %s14, 0
    %p69 = por %p67, %p68
    %p70 = scmp.ne.s32.totalorder %s62, %s64
    %p71 = scmp.eq.s32.totalorder %s19, 1
    %p72 = por %p70, %p71
    %p73 = scmp.ne.s32.totalorder %s64, %s65
    %p74 = scmp.eq.s32.totalorder %s19, 0
    %p75 = por %p73, %p74
    %p76 = scmp.ne.s32.totalorder %s64, %s65
    %p77 = scmp.eq.s32.totalorder %s20, 1
    %p78 = por %p76, %p77
    %p80 = scmp.ne.s32.totalorder %s65, %s79
    %p81 = scmp.eq.s32.totalorder %s20, 0
    %p82 = por %p80, %p81
    %s84 = sadd.s32 %s83, 1
    %p87 = scmp.eq.s32.totalorder %s14, 1
    %p88 = scmp.ne.s32.totalorder %s83, %s85
    %p89 = scmp.eq.s32.totalorder %s14, 0
    %p90 = por %p88, %p89
    %p91 = scmp.ne.s32.totalorder %s83, %s85
    %p92 = scmp.eq.s32.totalorder %s19, 1
    %p93 = por %p91, %p92
    %p94 = scmp.ne.s32.totalorder %s85, %s86
    %p95 = scmp.eq.s32.totalorder %s19, 0
    %p96 = por %p94, %p95
    %p97 = scmp.ne.s32.totalorder %s85, %s86
    %p98 = scmp.eq.s32.totalorder %s20, 1
    %p99 = por %p97, %p98
    %p101 = scmp.ne.s32.totalorder %s86, %s100
    %p102 = scmp.eq.s32.totalorder %s20, 0
    %p103 = por %p101, %p102
    %s105 = sadd.s32 %s104, 1
    %p108 = scmp.eq.s32.totalorder %s14, 1
    %p109 = scmp.ne.s32.totalorder %s104, %s106
    %p110 = scmp.eq.s32.totalorder %s14, 0
    %p111 = por %p109, %p110
    %p112 = scmp.ne.s32.totalorder %s104, %s106
    %p113 = scmp.eq.s32.totalorder %s19, 1
    %p114 = por %p112, %p113
    %p115 = scmp.ne.s32.totalorder %s106, %s107
    %p116 = scmp.eq.s32.totalorder %s19, 0
    %p117 = por %p115, %p116
    %p118 = scmp.ne.s32.totalorder %s106, %s107
    %p119 = scmp.eq.s32.totalorder %s20, 1
    %p120 = por %p118, %p119
    %p122 = scmp.ne.s32.totalorder %s107, %s121
    %p123 = scmp.eq.s32.totalorder %s20, 0
    %p124 = por %p122, %p123
    %s125 = ssub.s32 %s21, %s33
    %s126 = ssub.s32 %s22, %s29
    %s127 = sor.u32 %s125, %s126
    %p128 = scmp.eq.s32.totalorder %s127, 0
    %s130 = sadd.s32 %s129, 1
    %s131 = scalar_select %p128, %s129, %s130
    %p134 = pneg %p128
    %p135 = scmp.eq.s32.totalorder %s14, 1
    %p136 = por %p134, %p135
    %p137 = scmp.ne.s32.totalorder %s129, %s132
    %p138 = scmp.eq.s32.totalorder %s14, 0
    %p139 = por %p137, %p138
    %p140 = scmp.ne.s32.totalorder %s129, %s132
    %p141 = scmp.eq.s32.totalorder %s19, 1
    %p142 = por %p140, %p141
    %p143 = scmp.ne.s32.totalorder %s132, %s133
    %p144 = scmp.eq.s32.totalorder %s19, 0
    %p145 = por %p143, %p144
    %p146 = scmp.ne.s32.totalorder %s132, %s133
    %p147 = scmp.eq.s32.totalorder %s20, 1
    %p148 = por %p146, %p147
    %p150 = scmp.ne.s32.totalorder %s133, %s149
    %p151 = scmp.eq.s32.totalorder %s20, 0
    %p152 = por %p150, %p151
    %s153 = ssub.s32 %s21, %s33
    %s154 = ssub.s32 %s22, %s29
    %s155 = sor.u32 %s153, %s154
    %p156 = scmp.eq.s32.totalorder %s155, 0
    %s158 = sadd.s32 %s157, 1
    %s159 = scalar_select %p156, %s157, %s158
    %p162 = pneg %p156
    %p163 = scmp.eq.s32.totalorder %s14, 1
    %p164 = por %p162, %p163
    %p165 = scmp.ne.s32.totalorder %s157, %s160
    %p166 = scmp.eq.s32.totalorder %s14, 0
    %p167 = por %p165, %p166
    %p168 = scmp.ne.s32.totalorder %s157, %s160
    %p169 = scmp.eq.s32.totalorder %s19, 1
    %p170 = por %p168, %p169
    %p171 = scmp.ne.s32.totalorder %s160, %s161
    %p172 = scmp.eq.s32.totalorder %s19, 0
    %p173 = por %p171, %p172
    %p174 = scmp.ne.s32.totalorder %s160, %s161
    %p175 = scmp.eq.s32.totalorder %s20, 1
    %p176 = por %p174, %p175
    %p178 = scmp.ne.s32.totalorder %s161, %s177
    %p179 = scmp.eq.s32.totalorder %s20, 0
    %p180 = por %p178, %p179
    %s181 = ssub.s32 %s21, %s33
    %s182 = ssub.s32 %s22, %s29
    %s183 = sor.u32 %s181, %s182
    %p184 = scmp.eq.s32.totalorder %s183, 0
    %s186 = sadd.s32 %s185, 1
    %s187 = scalar_select %p184, %s185, %s186
    %p190 = pneg %p184
    %p191 = scmp.eq.s32.totalorder %s14, 1
    %p192 = por %p190, %p191
    %p193 = scmp.ne.s32.totalorder %s185, %s188
    %p194 = scmp.eq.s32.totalorder %s14, 0
    %p195 = por %p193, %p194
    %p196 = scmp.ne.s32.totalorder %s185, %s188
    %p197 = scmp.eq.s32.totalorder %s19, 1
    %p198 = por %p196, %p197
    %p199 = scmp.ne.s32.totalorder %s188, %s189
    %p200 = scmp.eq.s32.totalorder %s19, 0
    %p201 = por %p199, %p200
    %p202 = scmp.ne.s32.totalorder %s188, %s189
    %p203 = scmp.eq.s32.totalorder %s20, 1
    %p204 = por %p202, %p203
    %p206 = scmp.ne.s32.totalorder %s189, %s205
    %p207 = scmp.eq.s32.totalorder %s20, 0
    %p208 = por %p206, %p207
    %p209 = scmp.le.s32.totalorder 1, %s14
    %p210 = scmp.lt.s32.totalorder %s14, 3
    %p211 = pnand %p209, %p210
    %p212 = pneg %p211
    // Predicated region
    $region9: #{double_conv.4} parent=5 // pred_check
      _
    $region10: #{double_conv.4} parent=5 // pred_check_branch
      %214 = sbr.rel (%p211) target = $region12
    $region11: #{double_conv.4} parent=5 // pred_region
      %s215 = ssub.s32 %s14, 1
      // Predicated region
      $region13: #{double_conv.4} parent=11 // pred_check
        %p216 = pneg %p75
      $region14: #{double_conv.4} parent=11 // pred_check_branch
        %218 = sbr.rel (%p216) target = $region16
      $region15: #{double_conv.4} parent=11 // pred_region
        _
      $region16: #{double_conv.4} parent=11 // pred_fallthru
        _
      // Predicated region
      $region17: #{double_conv.4} parent=11 // pred_check
        %p219 = pneg %p96
      $region18: #{double_conv.4} parent=11 // pred_check_branch
        %221 = sbr.rel (%p219) target = $region20
      $region19: #{double_conv.4} parent=11 // pred_region
        _
      $region20: #{double_conv.4} parent=11 // pred_fallthru
        _
      // Predicated region
      $region21: #{double_conv.4} parent=11 // pred_check
        %p222 = pneg %p117
      $region22: #{double_conv.4} parent=11 // pred_check_branch
        %224 = sbr.rel (%p222) target = $region24
      $region23: #{double_conv.4} parent=11 // pred_region
        _
      $region24: #{double_conv.4} parent=11 // pred_fallthru
        _
    $region12: #{double_conv.4} parent=5 // pred_fallthru
      _
    %p225 = scmp.lt.s32.totalorder %s14, 2
    // Predicated region
    $region25: #{double_conv.4} parent=5 // pred_check
      %p226 = pneg %p225
    $region26: #{double_conv.4} parent=5 // pred_check_branch
      %228 = sbr.rel (%p226) target = $region28
    $region27: #{double_conv.4} parent=5 // pred_region
      // Predicated region
      $region29: #{double_conv.4} parent=27 // pred_check
        %p229 = pneg %p48
      $region30: #{double_conv.4} parent=27 // pred_check_branch
        %231 = sbr.rel (%p229) target = $region32
      $region31: #{double_conv.4} parent=27 // pred_region
        %s232 = smul.u32 16, %s22
        %p233 = scmp.lt.s32.totalorder %s21, 1
        %s234 = scalar_select %p233, %s21, 1
        %p235 = scmp.lt.s32.totalorder %s232, 15
        %s236 = scalar_select %p235, %s232, 15
        %s237 = smul.addr %s236, 2
        %s238 = smul.addr %s234, 32
        %s239 = sadd.s32 %s237, %s238
        %s240 = smul.addr %s239, 8
        %s241 = scalar_lea.vmem %s0, %s240
        %s242 = smul.u32 16, %s22
      $region32: #{double_conv.4} parent=27 // pred_fallthru
        _
    $region28: #{double_conv.4} parent=5 // pred_fallthru
      _
    %p243 = scmp.le.s32.totalorder 1, %s14
    %p244 = scmp.lt.s32.totalorder %s14, 3
    %p245 = pnand %p243, %p244
    %p246 = pneg %p245
    // Predicated region
    $region33: #{double_conv.4} parent=5 // pred_check
      _
    $region34: #{double_conv.4} parent=5 // pred_check_branch
      %248 = sbr.rel (%p245) target = $region36
    $region35: #{double_conv.4} parent=5 // pred_region
      %s249 = ssub.s32 %s14, 1
      %s250 = smul.u32 16, %s24
      %p251 = scmp.lt.s32.totalorder %s23, 1
      %s252 = scalar_select %p251, %s23, 1
      %p253 = scmp.lt.s32.totalorder %s250, 15
      %s254 = scalar_select %p253, %s250, 15
      %s255 = smul.addr %s254, 2
      %s256 = smul.addr %s252, 32
      %s257 = sadd.s32 %s255, %s256
      %s258 = smul.addr %s257, 8
      %s259 = scalar_lea.vmem %s0, %s258
      %p260 = pneg %p54
      %p261 = pneg %p51
      %p262 = pneg %p75
      %p263 = pneg %p72
      %p264 = pneg %p96
      %p265 = pneg %p93
      %p266 = pneg %p117
      %p267 = pneg %p114
      %p268 = pneg %p145
      %p269 = pneg %p142
      %s270 = smul.u32 16, %s24
      %p271 = scmp.lt.s32.totalorder %s23, 1
      %s272 = scalar_select %p271, %s23, 1
      %p273 = scmp.lt.s32.totalorder %s270, 15
      %s274 = scalar_select %p273, %s270, 15
      %s275 = smul.addr %s274, 2
      %s276 = smul.addr %s272, 32
      %s277 = sadd.s32 %s275, %s276
      %s278 = smul.addr %s277, 8
      %s279 = scalar_lea.vmem %s5, %s278
      %p280 = pneg %p173
      %p281 = pneg %p170
      %p282 = scmp.lt.s32.totalorder %s23, 1
      %s283 = scalar_select %p282, %s23, 1
      %p284 = scmp.lt.s32.totalorder %s24, 0
      %s285 = scalar_select %p284, %s24, 0
      %s286 = sadd.s32 %s285, %s283
      %s287 = scalar_lea.vmem %s6, %s286
      %p288 = pneg %p201
      %p289 = pneg %p198
      %p290 = scmp.lt.s32.totalorder %s23, 1
      %s291 = scalar_select %p290, %s23, 1
      %p292 = scmp.lt.s32.totalorder %s24, 0
      %s293 = scalar_select %p292, %s24, 0
      %s294 = sadd.s32 %s293, %s291
      %s295 = scalar_lea.vmem %s7, %s294
      %s296 = smul.u32 16, %s24
      %p297 = scmp.lt.s32.totalorder %s23, 1
      %s298 = scalar_select %p297, %s23, 1
      %p299 = scmp.lt.s32.totalorder %s296, 15
      %s300 = scalar_select %p299, %s296, 15
      %s301 = smul.addr %s300, 2
      %s302 = smul.addr %s298, 32
      %s303 = sadd.s32 %s301, %s302
      %s304 = smul.addr %s303, 8
      %s305 = scalar_lea.vmem %s0, %s304
      %s306 = smul.u32 16, %s24
      %s307 = smul.u32 16, %s24
      %p308 = scmp.lt.s32.totalorder %s23, 1
      %s309 = scalar_select %p308, %s23, 1
      %p310 = scmp.lt.s32.totalorder %s307, 15
      %s311 = scalar_select %p310, %s307, 15
      %s312 = smul.addr %s311, 2
      %s313 = smul.addr %s309, 32
      %s314 = sadd.s32 %s312, %s313
      %s315 = smul.addr %s314, 8
      %s316 = scalar_lea.vmem %s5, %s315
      %s317 = smul.u32 16, %s24
      %p318 = scmp.lt.s32.totalorder %s23, 1
      %s319 = scalar_select %p318, %s23, 1
      %p320 = scmp.lt.s32.totalorder %s24, 0
      %s321 = scalar_select %p320, %s24, 0
      %s322 = sadd.s32 %s321, %s319
      %s323 = scalar_lea.vmem %s6, %s322
      %p324 = scmp.lt.s32.totalorder %s23, 1
      %s325 = scalar_select %p324, %s23, 1
      %p326 = scmp.lt.s32.totalorder %s24, 0
      %s327 = scalar_select %p326, %s24, 0
      %s328 = sadd.s32 %s327, %s325
      %s329 = scalar_lea.vmem %s7, %s328
      %s330 = smul.u32 %s24, 16
      %p331 = scmp.gt.s32.totalorder %s24, 0
      %p332 = scmp.lt.s32.totalorder %s24, 0
      // Predicated region
      $region37: #{double_conv.4} parent=35 // pred_check
        %p333 = pneg %p331
      $region38: #{double_conv.4} parent=35 // pred_check_branch
        %335 = sbr.rel (%p333) target = $region40
      $region39: #{double_conv.4} parent=35 // pred_region
        %s336 = ssub.s32 %s330, 1
        %s337 = smul.u32 %s336, 16
        %s338 = smul.u32 %s23, 256
        %s339 = sadd.s32 %s337, %s338
        %s340 = scalar_lea.vmem %s1, %s339
        %p342 = scmp.lt.u32.totalorder 16, 8
        %p343 = pneg %p342
        // Predicated region
        $region41: #{double_conv.4} parent=39 // pred_check
          _
        $region42: #{double_conv.4} parent=39 // pred_check_branch
          %345 = sbr.rel (%p342) target = $region44
        $region43: #{double_conv.4} parent=39 // pred_region
          %s361 = sand.u32 16, 7
          %p362 = scmp.eq.s32.totalorder %s361, 0
          // Predicated region
          $region56: #{double_conv.4} parent=43 // pred_check
            %p363 = pneg %p362
          $region57: #{double_conv.4} parent=43 // pred_check_branch
            %365 = sbr.rel (%p363) target = $region59
          $region58: #{double_conv.4} parent=43 // pred_region
            loop: start=0, step=1, limit=1
            $region60: #{double_conv.4} parent=58 // loop_pre_header
              _
            $region61: #{double_conv.4} parent=58 // loop_header
              %s367 = sphi 0, %s371
              %p368 = scmp.ge.s32.totalorder %s367, 1
              %s372 = sphi %s340, %s340
              %s373 = sphi [#allocation2], [#allocation2]
            $region62: #{double_conv.4} parent=58 // loop_header_branch
              %370 = sbr.rel (%p368) target = $region66
            $region63: #{double_conv.4} parent=58 // loop_body
              %v374 = vld [vmem:[%s372] sm:$0xff]
              %375 = vst [vmem:[%s373] sm:$0xff] %v374
              %v376 = vld [vmem:[%s372 + $0x8] sm:$0xff]
              %377 = vst [vmem:[%s373 + $0x8] sm:$0xff] %v376
            $region64: #{double_conv.4} parent=58 // loop_footer
              %s371 = sadd.s32 1, %s367
            $region65: #{double_conv.4} parent=58 // loop_footer_branch
              %366 = sbr.rel target = $region61
            $region66: #{double_conv.4} parent=58 // loop_exit
              _
          $region59: #{double_conv.4} parent=43 // pred_fallthru
            _
          %p378 = pneg %p362
          // Predicated region
          $region67: #{double_conv.4} parent=43 // pred_check
            _
          $region68: #{double_conv.4} parent=43 // pred_check_branch
            %380 = sbr.rel (%p362) target = $region70
          $region69: #{double_conv.4} parent=43 // pred_region
            %s381 = sand.u32 16, 7
          $region70: #{double_conv.4} parent=43 // pred_fallthru
            _
        $region44: #{double_conv.4} parent=39 // pred_fallthru
          _
        // Predicated region
        $region45: #{double_conv.4} parent=39 // pred_check
          %p346 = pneg %p342
        $region46: #{double_conv.4} parent=39 // pred_check_branch
          %348 = sbr.rel (%p346) target = $region48
        $region47: #{double_conv.4} parent=39 // pred_region
          %s349 = sshll.u32 1, 16
          %s350 = ssub.s32 %s349, 1
          loop: start=0, step=1, limit=1
          $region49: #{double_conv.4} parent=47 // loop_pre_header
            _
          $region50: #{double_conv.4} parent=47 // loop_header
            %s352 = sphi 0, %s356
            %p353 = scmp.ge.s32.totalorder %s352, 1
            %s357 = sphi %s340, %s340
            %s358 = sphi [#allocation2], [#allocation2]
          $region51: #{double_conv.4} parent=47 // loop_header_branch
            %355 = sbr.rel (%p353) target = $region55
          $region52: #{double_conv.4} parent=47 // loop_body
            %v359 = vld [vmem:[%s357] sm:%s350]
            %360 = vst [vmem:[%s358] sm:%s350] %v359
          $region53: #{double_conv.4} parent=47 // loop_footer
            %s356 = sadd.s32 1, %s352
          $region54: #{double_conv.4} parent=47 // loop_footer_branch
            %351 = sbr.rel target = $region50
          $region55: #{double_conv.4} parent=47 // loop_exit
            _
        $region48: #{double_conv.4} parent=39 // pred_fallthru
          _
        // Predicated region
        $region71: #{double_conv.4} parent=39 // pred_check
          _
        $region72: #{double_conv.4} parent=39 // pred_check_branch
          %384 = sbr.rel (0) target = $region74
        $region73: #{double_conv.4} parent=39 // pred_region
          %385 = vsyncadd [#allocation3], 256
        $region74: #{double_conv.4} parent=39 // pred_fallthru
          _
      $region40: #{double_conv.4} parent=35 // pred_fallthru
        _
      // Predicated region
      $region75: #{double_conv.4} parent=35 // pred_check
        %p386 = pneg %p332
      $region76: #{double_conv.4} parent=35 // pred_check_branch
        %388 = sbr.rel (%p386) target = $region78
      $region77: #{double_conv.4} parent=35 // pred_region
        %s389 = sadd.s32 %s330, 16
        %s390 = smul.u32 %s389, 16
        %s391 = smul.u32 %s23, 256
        %s392 = sadd.s32 %s390, %s391
        %s393 = scalar_lea.vmem %s1, %s392
        %s394 = scalar_lea.vmem [#allocation2], 16
        %s395 = scalar_lea.sflag [#allocation3], 1
        %p397 = scmp.lt.u32.totalorder 16, 8
        %p398 = pneg %p397
        // Predicated region
        $region79: #{double_conv.4} parent=77 // pred_check
          _
        $region80: #{double_conv.4} parent=77 // pred_check_branch
          %400 = sbr.rel (%p397) target = $region82
        $region81: #{double_conv.4} parent=77 // pred_region
          %s416 = sand.u32 16, 7
          %p417 = scmp.eq.s32.totalorder %s416, 0
          // Predicated region
          $region94: #{double_conv.4} parent=81 // pred_check
            %p418 = pneg %p417
          $region95: #{double_conv.4} parent=81 // pred_check_branch
            %420 = sbr.rel (%p418) target = $region97
          $region96: #{double_conv.4} parent=81 // pred_region
            loop: start=0, step=1, limit=1
            $region98: #{double_conv.4} parent=96 // loop_pre_header
              _
            $region99: #{double_conv.4} parent=96 // loop_header
              %s422 = sphi 0, %s426
              %p423 = scmp.ge.s32.totalorder %s422, 1
              %s427 = sphi %s393, %s393
              %s428 = sphi %s394, %s394
            $region100: #{double_conv.4} parent=96 // loop_header_branch
              %425 = sbr.rel (%p423) target = $region104
            $region101: #{double_conv.4} parent=96 // loop_body
              %v429 = vld [vmem:[%s427] sm:$0xff]
              %430 = vst [vmem:[%s428] sm:$0xff] %v429
              %v431 = vld [vmem:[%s427 + $0x8] sm:$0xff]
              %432 = vst [vmem:[%s428 + $0x8] sm:$0xff] %v431
            $region102: #{double_conv.4} parent=96 // loop_footer
              %s426 = sadd.s32 1, %s422
            $region103: #{double_conv.4} parent=96 // loop_footer_branch
              %421 = sbr.rel target = $region99
            $region104: #{double_conv.4} parent=96 // loop_exit
              _
          $region97: #{double_conv.4} parent=81 // pred_fallthru
            _
          %p433 = pneg %p417
          // Predicated region
          $region105: #{double_conv.4} parent=81 // pred_check
            _
          $region106: #{double_conv.4} parent=81 // pred_check_branch
            %435 = sbr.rel (%p417) target = $region108
          $region107: #{double_conv.4} parent=81 // pred_region
            %s436 = sand.u32 16, 7
          $region108: #{double_conv.4} parent=81 // pred_fallthru
            _
        $region82: #{double_conv.4} parent=77 // pred_fallthru
          _
        // Predicated region
        $region83: #{double_conv.4} parent=77 // pred_check
          %p401 = pneg %p397
        $region84: #{double_conv.4} parent=77 // pred_check_branch
          %403 = sbr.rel (%p401) target = $region86
        $region85: #{double_conv.4} parent=77 // pred_region
          %s404 = sshll.u32 1, 16
          %s405 = ssub.s32 %s404, 1
          loop: start=0, step=1, limit=1
          $region87: #{double_conv.4} parent=85 // loop_pre_header
            _
          $region88: #{double_conv.4} parent=85 // loop_header
            %s407 = sphi 0, %s411
            %p408 = scmp.ge.s32.totalorder %s407, 1
            %s412 = sphi %s393, %s393
            %s413 = sphi %s394, %s394
          $region89: #{double_conv.4} parent=85 // loop_header_branch
            %410 = sbr.rel (%p408) target = $region93
          $region90: #{double_conv.4} parent=85 // loop_body
            %v414 = vld [vmem:[%s412] sm:%s405]
            %415 = vst [vmem:[%s413] sm:%s405] %v414
          $region91: #{double_conv.4} parent=85 // loop_footer
            %s411 = sadd.s32 1, %s407
          $region92: #{double_conv.4} parent=85 // loop_footer_branch
            %406 = sbr.rel target = $region88
          $region93: #{double_conv.4} parent=85 // loop_exit
            _
        $region86: #{double_conv.4} parent=77 // pred_fallthru
          _
        // Predicated region
        $region109: #{double_conv.4} parent=77 // pred_check
          _
        $region110: #{double_conv.4} parent=77 // pred_check_branch
          %439 = sbr.rel (0) target = $region112
        $region111: #{double_conv.4} parent=77 // pred_region
          %440 = vsyncadd %s395, 256
        $region112: #{double_conv.4} parent=77 // pred_fallthru
          _
      $region78: #{double_conv.4} parent=35 // pred_fallthru
        _
      // Predicated region
      $region113: #{double_conv.4} parent=35 // pred_check
        %p441 = pneg %p331
      $region114: #{double_conv.4} parent=35 // pred_check_branch
        %443 = sbr.rel (%p441) target = $region116
      $region115: #{double_conv.4} parent=35 // pred_region
        %s444 = smul.u32 1, 1
        %s445 = smul.u32 %s444, 16
        %s446 = smul.u32 %s445, 1
        %s447 = sshll.u32 %s446, 4
        %448 = dma.done [#allocation3], %s447
      $region116: #{double_conv.4} parent=35 // pred_fallthru
        _
      // Predicated region
      $region117: #{double_conv.4} parent=35 // pred_check
        %p449 = pneg %p332
      $region118: #{double_conv.4} parent=35 // pred_check_branch
        %451 = sbr.rel (%p449) target = $region120
      $region119: #{double_conv.4} parent=35 // pred_region
        %s452 = scalar_lea.sflag [#allocation3], 1
        %s453 = smul.u32 1, 1
        %s454 = smul.u32 %s453, 16
        %s455 = smul.u32 %s454, 1
        %s456 = sshll.u32 %s455, 4
        %457 = dma.done %s452, %s456
      $region120: #{double_conv.4} parent=35 // pred_fallthru
        _
      %v458 = vld [vmem:[#allocation2] sm:$0xff]
      %v459 = vld [vmem:[#allocation2 + $0x8] sm:$0xff]
      %v460 = vld [vmem:[#allocation2 + $0x10] sm:$0xff]
      %v461 = vld [vmem:[#allocation2 + $0x18] sm:$0xff]
      %v462 = vld [vmem:[%s305] sm:$0xff]
      %v463 = vld [vmem:[%s305 + $0x8] sm:$0xff]
      %v464 = vld [vmem:[%s305 + $0x10] sm:$0xff]
      %v465 = vld [vmem:[%s305 + $0x18] sm:$0xff]
      %v466 = vld [vmem:[%s305 + $0x20] sm:$0xff]
      %v467 = vld [vmem:[%s305 + $0x28] sm:$0xff]
      %v468 = vld [vmem:[%s305 + $0x30] sm:$0xff]
      %v469 = vld [vmem:[%s305 + $0x38] sm:$0xff]
      %v470 = vld [vmem:[%s305 + $0x40] sm:$0xff]
      %v471 = vld [vmem:[%s305 + $0x48] sm:$0xff]
      %v472 = vld [vmem:[%s305 + $0x50] sm:$0xff]
      %v473 = vld [vmem:[%s305 + $0x58] sm:$0xff]
      %v474 = vld [vmem:[%s305 + $0x60] sm:$0xff]
      %v475 = vld [vmem:[%s305 + $0x68] sm:$0xff]
      %v476 = vld [vmem:[%s305 + $0x70] sm:$0xff]
      %v477 = vld [vmem:[%s305 + $0x78] sm:$0xff]
      %v478 = vld [vmem:[%s305 + $0x80] sm:$0xff]
      %v479 = vld [vmem:[%s305 + $0x88] sm:$0xff]
      %v480 = vld [vmem:[%s305 + $0x90] sm:$0xff]
      %v481 = vld [vmem:[%s305 + $0x98] sm:$0xff]
      %v482 = vld [vmem:[%s305 + $0xa0] sm:$0xff]
      %v483 = vld [vmem:[%s305 + $0xa8] sm:$0xff]
      %v484 = vld [vmem:[%s305 + $0xb0] sm:$0xff]
      %v485 = vld [vmem:[%s305 + $0xb8] sm:$0xff]
      %v486 = vld [vmem:[%s305 + $0xc0] sm:$0xff]
      %v487 = vld [vmem:[%s305 + $0xc8] sm:$0xff]
      %v488 = vld [vmem:[%s305 + $0xd0] sm:$0xff]
      %v489 = vld [vmem:[%s305 + $0xd8] sm:$0xff]
      %v490 = vld [vmem:[%s305 + $0xe0] sm:$0xff]
      %v491 = vld [vmem:[%s305 + $0xe8] sm:$0xff]
      %v492 = vld [vmem:[%s305 + $0xf0] sm:$0xff]
      %v493 = vld [vmem:[%s305 + $0xf8] sm:$0xff]
      %v494 = vld [vmem:[%s3] sm:$0x1]
      %v495 = vld [vmem:[%s4] sm:$0x1]
      %v497 = vlaneseq
      %v498 = vshrl.u32 %v497, 7
      %v499 = vsub.s32 0, %v498
      %v500 = vrot.slane %v494, %v499
      %v502 = vmul.f32 %v458, %v500
      %v503 = vmul.f32 %v459, %v500
      %v505 = vlaneseq
      %v506 = vshrl.u32 %v505, 7
      %v507 = vsub.s32 0, %v506
      %v508 = vrot.slane %v495, %v507
      %v510 = vadd.f32 %v502, %v508
      %v511 = vadd.f32 %v503, %v508
      %v512 = vmax.f32 %v510, 0.0
      %v513 = vmax.f32 %v511, 0.0
      %v514 = vmul.f32 %v462, %v500
      %v515 = vmul.f32 %v463, %v500
      %v516 = vmul.f32 %v464, %v500
      %v517 = vmul.f32 %v465, %v500
      %v518 = vmul.f32 %v466, %v500
      %v519 = vmul.f32 %v467, %v500
      %v520 = vmul.f32 %v468, %v500
      %v521 = vmul.f32 %v469, %v500
      %v522 = vmul.f32 %v470, %v500
      %v523 = vmul.f32 %v471, %v500
      %v524 = vmul.f32 %v472, %v500
      %v525 = vmul.f32 %v473, %v500
      %v526 = vmul.f32 %v474, %v500
      %v527 = vmul.f32 %v475, %v500
      %v528 = vmul.f32 %v476, %v500
      %v529 = vmul.f32 %v477, %v500
      %v530 = vmul.f32 %v478, %v500
      %v531 = vmul.f32 %v479, %v500
      %v532 = vmul.f32 %v480, %v500
      %v533 = vmul.f32 %v481, %v500
      %v534 = vmul.f32 %v482, %v500
      %v535 = vmul.f32 %v483, %v500
      %v536 = vmul.f32 %v484, %v500
      %v537 = vmul.f32 %v485, %v500
      %v538 = vmul.f32 %v486, %v500
      %v539 = vmul.f32 %v487, %v500
      %v540 = vmul.f32 %v488, %v500
      %v541 = vmul.f32 %v489, %v500
      %v542 = vmul.f32 %v490, %v500
      %v543 = vmul.f32 %v491, %v500
      %v544 = vmul.f32 %v492, %v500
      %v545 = vmul.f32 %v493, %v500
      %v546 = vadd.f32 %v514, %v508
      %v547 = vadd.f32 %v515, %v508
      %v548 = vadd.f32 %v516, %v508
      %v549 = vadd.f32 %v517, %v508
      %v550 = vadd.f32 %v518, %v508
      %v551 = vadd.f32 %v519, %v508
      %v552 = vadd.f32 %v520, %v508
      %v553 = vadd.f32 %v521, %v508
      %v554 = vadd.f32 %v522, %v508
      %v555 = vadd.f32 %v523, %v508
      %v556 = vadd.f32 %v524, %v508
      %v557 = vadd.f32 %v525, %v508
      %v558 = vadd.f32 %v526, %v508
      %v559 = vadd.f32 %v527, %v508
      %v560 = vadd.f32 %v528, %v508
      %v561 = vadd.f32 %v529, %v508
      %v562 = vadd.f32 %v530, %v508
      %v563 = vadd.f32 %v531, %v508
      %v564 = vadd.f32 %v532, %v508
      %v565 = vadd.f32 %v533, %v508
      %v566 = vadd.f32 %v534, %v508
      %v567 = vadd.f32 %v535, %v508
      %v568 = vadd.f32 %v536, %v508
      %v569 = vadd.f32 %v537, %v508
      %v570 = vadd.f32 %v538, %v508
      %v571 = vadd.f32 %v539, %v508
      %v572 = vadd.f32 %v540, %v508
      %v573 = vadd.f32 %v541, %v508
      %v574 = vadd.f32 %v542, %v508
      %v575 = vadd.f32 %v543, %v508
      %v576 = vadd.f32 %v544, %v508
      %v577 = vadd.f32 %v545, %v508
      %v578 = vmax.f32 %v546, 0.0
      %v579 = vmax.f32 %v547, 0.0
      %v580 = vmax.f32 %v548, 0.0
      %v581 = vmax.f32 %v549, 0.0
      %v582 = vmax.f32 %v550, 0.0
      %v583 = vmax.f32 %v551, 0.0
      %v584 = vmax.f32 %v552, 0.0
      %v585 = vmax.f32 %v553, 0.0
      %v586 = vmax.f32 %v554, 0.0
      %v587 = vmax.f32 %v555, 0.0
      %v588 = vmax.f32 %v556, 0.0
      %v589 = vmax.f32 %v557, 0.0
      %v590 = vmax.f32 %v558, 0.0
      %v591 = vmax.f32 %v559, 0.0
      %v592 = vmax.f32 %v560, 0.0
      %v593 = vmax.f32 %v561, 0.0
      %v594 = vmax.f32 %v562, 0.0
      %v595 = vmax.f32 %v563, 0.0
      %v596 = vmax.f32 %v564, 0.0
      %v597 = vmax.f32 %v565, 0.0
      %v598 = vmax.f32 %v566, 0.0
      %v599 = vmax.f32 %v567, 0.0
      %v600 = vmax.f32 %v568, 0.0
      %v601 = vmax.f32 %v569, 0.0
      %v602 = vmax.f32 %v570, 0.0
      %v603 = vmax.f32 %v571, 0.0
      %v604 = vmax.f32 %v572, 0.0
      %v605 = vmax.f32 %v573, 0.0
      %v606 = vmax.f32 %v574, 0.0
      %v607 = vmax.f32 %v575, 0.0
      %v608 = vmax.f32 %v576, 0.0
      %v609 = vmax.f32 %v577, 0.0
      %v610 = vmul.f32 %v460, %v500
      %v611 = vmul.f32 %v461, %v500
      %v612 = vadd.f32 %v610, %v508
      %v613 = vadd.f32 %v611, %v508
      %v614 = vmax.f32 %v612, 0.0
      %v615 = vmax.f32 %v613, 0.0
      %s616 = scalar_select %p331, 1, 0
      %v617 = vstv %s616
      %vm618 = vcmp.eq.s32.totalorder %v617, 1
      %v619 = vsel %vm618, %v512, 0.0
      %v620 = vsel %vm618, %v513, 0.0
      %s621 = scalar_select %p332, 1, 0
      %v622 = vstv %s621
      %vm623 = vcmp.eq.s32.totalorder %v622, 1
      %v624 = vsel %vm623, %v614, 0.0
      %v625 = vsel %vm623, %v615, 0.0
      %v626 = vld [vmem:[%s2] sm:$0xff]
      %v627 = vld [vmem:[%s2 + $0x8] sm:$0xff]
      %v628 = vld [vmem:[%s2 + $0x10] sm:$0xff]
      %v629 = vld [vmem:[%s2 + $0x18] sm:$0xff]
      %v630 = vld [vmem:[%s2 + $0x20] sm:$0xff]
      %v631 = vld [vmem:[%s2 + $0x28] sm:$0xff]
      %v632 = vld [vmem:[%s2 + $0x30] sm:$0xff]
      %v633 = vld [vmem:[%s2 + $0x38] sm:$0xff]
      %v634 = vld [vmem:[%s2 + $0x40] sm:$0xff]
      %v635 = vld [vmem:[%s2 + $0x48] sm:$0xff]
      %v636 = vld [vmem:[%s2 + $0x50] sm:$0xff]
      %v637 = vld [vmem:[%s2 + $0x58] sm:$0xff]
      %v638 = vld [vmem:[%s2 + $0x60] sm:$0xff]
      %v639 = vld [vmem:[%s2 + $0x68] sm:$0xff]
      %v640 = vld [vmem:[%s2 + $0x70] sm:$0xff]
      %v641 = vld [vmem:[%s2 + $0x78] sm:$0xff]
      %v642 = vld [vmem:[%s2 + $0x80] sm:$0xff]
      %v643 = vld [vmem:[%s2 + $0x88] sm:$0xff]
      %v644 = vld [vmem:[%s2 + $0x90] sm:$0xff]
      %v645 = vld [vmem:[%s2 + $0x98] sm:$0xff]
      %v646 = vld [vmem:[%s2 + $0xa0] sm:$0xff]
      %v647 = vld [vmem:[%s2 + $0xa8] sm:$0xff]
      %v648 = vld [vmem:[%s2 + $0xb0] sm:$0xff]
      %v649 = vld [vmem:[%s2 + $0xb8] sm:$0xff]
      %v650 = vld [vmem:[%s2 + $0xc0] sm:$0xff]
      %v651 = vld [vmem:[%s2 + $0xc8] sm:$0xff]
      %v652 = vld [vmem:[%s2 + $0xd0] sm:$0xff]
      %v653 = vld [vmem:[%s2 + $0xd8] sm:$0xff]
      %v654 = vld [vmem:[%s2 + $0xe0] sm:$0xff]
      %v655 = vld [vmem:[%s2 + $0xe8] sm:$0xff]
      %v656 = vld [vmem:[%s2 + $0xf0] sm:$0xff]
      %v657 = vld [vmem:[%s2 + $0xf8] sm:$0xff]
      %v658 = vld [vmem:[%s2 + $0x100] sm:$0xff]
      %v659 = vld [vmem:[%s2 + $0x108] sm:$0xff]
      %v660 = vld [vmem:[%s2 + $0x110] sm:$0xff]
      %v661 = vld [vmem:[%s2 + $0x118] sm:$0xff]
      %v662 = vld [vmem:[%s2 + $0x120] sm:$0xff]
      %v663 = vld [vmem:[%s2 + $0x128] sm:$0xff]
      %v664 = vld [vmem:[%s2 + $0x130] sm:$0xff]
      %v665 = vld [vmem:[%s2 + $0x138] sm:$0xff]
      %v666 = vld [vmem:[%s2 + $0x140] sm:$0xff]
      %v667 = vld [vmem:[%s2 + $0x148] sm:$0xff]
      %v668 = vld [vmem:[%s2 + $0x150] sm:$0xff]
      %v669 = vld [vmem:[%s2 + $0x158] sm:$0xff]
      %v670 = vld [vmem:[%s2 + $0x160] sm:$0xff]
      %v671 = vld [vmem:[%s2 + $0x168] sm:$0xff]
      %v672 = vld [vmem:[%s2 + $0x170] sm:$0xff]
      %v673 = vld [vmem:[%s2 + $0x178] sm:$0xff]
      %s674 = scalar_lea.vmem %s2, 384
      %v675 = vld [vmem:[%s674] sm:$0xff]
      %v676 = vld [vmem:[%s674 + $0x8] sm:$0xff]
      %v677 = vld [vmem:[%s674 + $0x10] sm:$0xff]
      %v678 = vld [vmem:[%s674 + $0x18] sm:$0xff]
      %v679 = vld [vmem:[%s674 + $0x20] sm:$0xff]
      %v680 = vld [vmem:[%s674 + $0x28] sm:$0xff]
      %v681 = vld [vmem:[%s674 + $0x30] sm:$0xff]
      %v682 = vld [vmem:[%s674 + $0x38] sm:$0xff]
      %v683 = vld [vmem:[%s674 + $0x40] sm:$0xff]
      %v684 = vld [vmem:[%s674 + $0x48] sm:$0xff]
      %v685 = vld [vmem:[%s674 + $0x50] sm:$0xff]
      %v686 = vld [vmem:[%s674 + $0x58] sm:$0xff]
      %v687 = vld [vmem:[%s674 + $0x60] sm:$0xff]
      %v688 = vld [vmem:[%s674 + $0x68] sm:$0xff]
      %v689 = vld [vmem:[%s674 + $0x70] sm:$0xff]
      %v690 = vld [vmem:[%s674 + $0x78] sm:$0xff]
      %v691 = vld [vmem:[%s674 + $0x80] sm:$0xff]
      %v692 = vld [vmem:[%s674 + $0x88] sm:$0xff]
      %v693 = vld [vmem:[%s674 + $0x90] sm:$0xff]
      %v694 = vld [vmem:[%s674 + $0x98] sm:$0xff]
      %v695 = vld [vmem:[%s674 + $0xa0] sm:$0xff]
      %v696 = vld [vmem:[%s674 + $0xa8] sm:$0xff]
      %v697 = vld [vmem:[%s674 + $0xb0] sm:$0xff]
      %v698 = vld [vmem:[%s674 + $0xb8] sm:$0xff]
      %v699 = vld [vmem:[%s674 + $0xc0] sm:$0xff]
      %v700 = vld [vmem:[%s674 + $0xc8] sm:$0xff]
      %v701 = vld [vmem:[%s674 + $0xd0] sm:$0xff]
      %v702 = vld [vmem:[%s674 + $0xd8] sm:$0xff]
      %v703 = vld [vmem:[%s674 + $0xe0] sm:$0xff]
      %v704 = vld [vmem:[%s674 + $0xe8] sm:$0xff]
      %v705 = vld [vmem:[%s674 + $0xf0] sm:$0xff]
      %v706 = vld [vmem:[%s674 + $0xf8] sm:$0xff]
      %v707 = vld [vmem:[%s674 + $0x100] sm:$0xff]
      %v708 = vld [vmem:[%s674 + $0x108] sm:$0xff]
      %v709 = vld [vmem:[%s674 + $0x110] sm:$0xff]
      %v710 = vld [vmem:[%s674 + $0x118] sm:$0xff]
      %v711 = vld [vmem:[%s674 + $0x120] sm:$0xff]
      %v712 = vld [vmem:[%s674 + $0x128] sm:$0xff]
      %v713 = vld [vmem:[%s674 + $0x130] sm:$0xff]
      %v714 = vld [vmem:[%s674 + $0x138] sm:$0xff]
      %v715 = vld [vmem:[%s674 + $0x140] sm:$0xff]
      %v716 = vld [vmem:[%s674 + $0x148] sm:$0xff]
      %v717 = vld [vmem:[%s674 + $0x150] sm:$0xff]
      %v718 = vld [vmem:[%s674 + $0x158] sm:$0xff]
      %v719 = vld [vmem:[%s674 + $0x160] sm:$0xff]
      %v720 = vld [vmem:[%s674 + $0x168] sm:$0xff]
      %v721 = vld [vmem:[%s674 + $0x170] sm:$0xff]
      %v722 = vld [vmem:[%s674 + $0x178] sm:$0xff]
      %723 = vmatprep.subr.mxu0 %v721
      %724 = vmatpush1.msra.mxu0 %v720
      %725 = vmatprep.subr.mxu0 %v718
      %726 = vmatpush1.msra.mxu0 %v717
      %727 = vmatprep.subr.mxu0 %v715
      %728 = vmatpush1.msra.mxu0 %v714
      %729 = vmatprep.subr.mxu0 %v712
      %730 = vmatpush1.msra.mxu0 %v711
      %731 = vmatprep.subr.mxu0 %v709
      %732 = vmatpush1.msra.mxu0 %v708
      %733 = vmatprep.subr.mxu0 %v706
      %734 = vmatpush1.msra.mxu0 %v705
      %735 = vmatprep.subr.mxu0 %v703
      %736 = vmatpush1.msra.mxu0 %v702
      %737 = vmatprep.subr.mxu0 %v700
      %738 = vmatpush1.msra.mxu0 %v699
      %739 = vmatprep.subr.mxu0 %v697
      %740 = vmatpush1.msra.mxu0 %v696
      %741 = vmatprep.subr.mxu0 %v694
      %742 = vmatpush1.msra.mxu0 %v693
      %743 = vmatprep.subr.mxu0 %v691
      %744 = vmatpush1.msra.mxu0 %v690
      %745 = vmatprep.subr.mxu0 %v688
      %746 = vmatpush1.msra.mxu0 %v687
      %747 = vmatprep.subr.mxu0 %v685
      %748 = vmatpush1.msra.mxu0 %v684
      %749 = vmatprep.subr.mxu0 %v682
      %750 = vmatpush1.msra.mxu0 %v681
      %751 = vmatprep.subr.mxu0 %v679
      %752 = vmatpush1.msra.mxu0 %v678
      %753 = vmatprep.subr.mxu0 %v676
      %754 = vmatpush1.msra.mxu0 %v675
      %755 = vmatprep.subr.mxu0 0.0
      %756 = vmatpush2.msra.mxu0 0.0
      %757 = vmatprep.subr.mxu0 0.0
      %758 = vmatpush2.msra.mxu0 0.0
      %759 = vmatprep.subr.mxu0 0.0
      %760 = vmatpush2.msra.mxu0 0.0
      %761 = vmatprep.subr.mxu0 0.0
      %762 = vmatpush2.msra.mxu0 0.0
      %763 = vmatprep.subr.mxu0 0.0
      %764 = vmatpush2.msra.mxu0 0.0
      %765 = vmatprep.subr.mxu0 0.0
      %766 = vmatpush2.msra.mxu0 0.0
      %767 = vmatprep.subr.mxu0 0.0
      %768 = vmatpush2.msra.mxu0 0.0
      %769 = vmatprep.subr.mxu0 0.0
      %770 = vmatpush2.msra.mxu0 0.0
      %771 = vmatprep.subr.mxu0 0.0
      %772 = vmatpush2.msra.mxu0 0.0
      %773 = vmatprep.subr.mxu0 0.0
      %774 = vmatpush2.msra.mxu0 0.0
      %775 = vmatprep.subr.mxu0 0.0
      %776 = vmatpush2.msra.mxu0 0.0
      %777 = vmatprep.subr.mxu0 0.0
      %778 = vmatpush2.msra.mxu0 0.0
      %779 = vmatprep.subr.mxu0 0.0
      %780 = vmatpush2.msra.mxu0 0.0
      %781 = vmatprep.subr.mxu0 0.0
      %782 = vmatpush2.msra.mxu0 0.0
      %783 = vmatprep.subr.mxu0 0.0
      %784 = vmatpush2.msra.mxu0 0.0
      %785 = vmatprep.subr.mxu0 0.0
      %786 = vmatpush2.msra.mxu0 0.0
      %787 = vmatprep.mubr.f32.mxu0 0.0
      %788 = vmatmul.mubr.f32.gmra.mxu0 %v578
      %v789 = vpop.f32.mrf.mxu0
      %v790 = vadd.f32 0.0, %v789
      %v791 = vpop.f32.mrf.mxu0
      %v792 = vadd.f32 0.0, %v791
      %793 = vmatprep.mubr.f32.mxu0 0.0
      %794 = vmatmul.mubr.f32.gmra.mxu0 %v579
      %v795 = vpop.f32.mrf.mxu0
      %v796 = vadd.f32 0.0, %v795
      %v797 = vpop.f32.mrf.mxu0
      %v798 = vadd.f32 0.0, %v797
      %799 = vmatprep.mubr.f32.mxu0 0.0
      %800 = vmatmul.mubr.f32.gmra.mxu0 %v580
      %v801 = vpop.f32.mrf.mxu0
      %v802 = vadd.f32 0.0, %v801
      %v803 = vpop.f32.mrf.mxu0
      %v804 = vadd.f32 0.0, %v803
      %805 = vmatprep.mubr.f32.mxu0 0.0
      %806 = vmatmul.mubr.f32.gmra.mxu0 %v581
      %v807 = vpop.f32.mrf.mxu0
      %v808 = vadd.f32 0.0, %v807
      %v809 = vpop.f32.mrf.mxu0
      %v810 = vadd.f32 0.0, %v809
      %811 = vmatprep.mubr.f32.mxu0 0.0
      %812 = vmatmul.mubr.f32.gmra.mxu0 %v582
      %v813 = vpop.f32.mrf.mxu0
      %v814 = vadd.f32 0.0, %v813
      %v815 = vpop.f32.mrf.mxu0
      %v816 = vadd.f32 0.0, %v815
      %817 = vmatprep.mubr.f32.mxu0 0.0
      %818 = vmatmul.mubr.f32.gmra.mxu0 %v583
      %v819 = vpop.f32.mrf.mxu0
      %v820 = vadd.f32 0.0, %v819
      %v821 = vpop.f32.mrf.mxu0
      %v822 = vadd.f32 0.0, %v821
      %823 = vmatprep.mubr.f32.mxu0 0.0
      %824 = vmatmul.mubr.f32.gmra.mxu0 %v584
      %v825 = vpop.f32.mrf.mxu0
      %v826 = vadd.f32 0.0, %v825
      %v827 = vpop.f32.mrf.mxu0
      %v828 = vadd.f32 0.0, %v827
      %829 = vmatprep.mubr.f32.mxu0 0.0
      %830 = vmatmul.mubr.f32.gmra.mxu0 %v585
      %v831 = vpop.f32.mrf.mxu0
      %v832 = vadd.f32 0.0, %v831
      %v833 = vpop.f32.mrf.mxu0
      %v834 = vadd.f32 0.0, %v833
      %835 = vmatprep.mubr.f32.mxu0 0.0
      %836 = vmatmul.mubr.f32.gmra.mxu0 %v586
      %v837 = vpop.f32.mrf.mxu0
      %v838 = vadd.f32 0.0, %v837
      %v839 = vpop.f32.mrf.mxu0
      %v840 = vadd.f32 0.0, %v839
      %841 = vmatprep.mubr.f32.mxu0 0.0
      %842 = vmatmul.mubr.f32.gmra.mxu0 %v587
      %v843 = vpop.f32.mrf.mxu0
      %v844 = vadd.f32 0.0, %v843
      %v845 = vpop.f32.mrf.mxu0
      %v846 = vadd.f32 0.0, %v845
      %847 = vmatprep.mubr.f32.mxu0 0.0
      %848 = vmatmul.mubr.f32.gmra.mxu0 %v588
      %v849 = vpop.f32.mrf.mxu0
      %v850 = vadd.f32 0.0, %v849
      %v851 = vpop.f32.mrf.mxu0
      %v852 = vadd.f32 0.0, %v851
      %853 = vmatprep.mubr.f32.mxu0 0.0
      %854 = vmatmul.mubr.f32.gmra.mxu0 %v589
      %v855 = vpop.f32.mrf.mxu0
      %v856 = vadd.f32 0.0, %v855
      %v857 = vpop.f32.mrf.mxu0
      %v858 = vadd.f32 0.0, %v857
      %859 = vmatprep.mubr.f32.mxu0 0.0
      %860 = vmatmul.mubr.f32.gmra.mxu0 %v590
      %v861 = vpop.f32.mrf.mxu0
      %v862 = vadd.f32 0.0, %v861
      %v863 = vpop.f32.mrf.mxu0
      %v864 = vadd.f32 0.0, %v863
      %865 = vmatprep.mubr.f32.mxu0 0.0
      %866 = vmatmul.mubr.f32.gmra.mxu0 %v591
      %v867 = vpop.f32.mrf.mxu0
      %v868 = vadd.f32 0.0, %v867
      %v869 = vpop.f32.mrf.mxu0
      %v870 = vadd.f32 0.0, %v869
      %871 = vmatprep.mubr.f32.mxu0 0.0
      %872 = vmatmul.mubr.f32.gmra.mxu0 %v592
      %v873 = vpop.f32.mrf.mxu0
      %v874 = vadd.f32 0.0, %v873
      %v875 = vpop.f32.mrf.mxu0
      %v876 = vadd.f32 0.0, %v875
      %877 = vmatprep.mubr.f32.mxu0 0.0
      %878 = vmatmul.mubr.f32.gmra.mxu0 %v593
      %v879 = vpop.f32.mrf.mxu0
      %v880 = vadd.f32 0.0, %v879
      %v881 = vpop.f32.mrf.mxu0
      %v882 = vadd.f32 0.0, %v881
      %883 = vmatprep.mubr.f32.mxu0 0.0
      %884 = vmatmul.mubr.f32.gmra.mxu0 %v594
      %v885 = vpop.f32.mrf.mxu0
      %v886 = vadd.f32 0.0, %v885
      %v887 = vpop.f32.mrf.mxu0
      %v888 = vadd.f32 0.0, %v887
      %889 = vmatprep.mubr.f32.mxu0 0.0
      %890 = vmatmul.mubr.f32.gmra.mxu0 %v595
      %v891 = vpop.f32.mrf.mxu0
      %v892 = vadd.f32 0.0, %v891
      %v893 = vpop.f32.mrf.mxu0
      %v894 = vadd.f32 0.0, %v893
      %895 = vmatprep.mubr.f32.mxu0 0.0
      %896 = vmatmul.mubr.f32.gmra.mxu0 %v596
      %v897 = vpop.f32.mrf.mxu0
      %v898 = vadd.f32 0.0, %v897
      %v899 = vpop.f32.mrf.mxu0
      %v900 = vadd.f32 0.0, %v899
      %901 = vmatprep.mubr.f32.mxu0 0.0
      %902 = vmatmul.mubr.f32.gmra.mxu0 %v597
      %v903 = vpop.f32.mrf.mxu0
      %v904 = vadd.f32 0.0, %v903
      %v905 = vpop.f32.mrf.mxu0
      %v906 = vadd.f32 0.0, %v905
      %907 = vmatprep.mubr.f32.mxu0 0.0
      %908 = vmatmul.mubr.f32.gmra.mxu0 %v598
      %v909 = vpop.f32.mrf.mxu0
      %v910 = vadd.f32 0.0, %v909
      %v911 = vpop.f32.mrf.mxu0
      %v912 = vadd.f32 0.0, %v911
      %913 = vmatprep.mubr.f32.mxu0 0.0
      %914 = vmatmul.mubr.f32.gmra.mxu0 %v599
      %v915 = vpop.f32.mrf.mxu0
      %v916 = vadd.f32 0.0, %v915
      %v917 = vpop.f32.mrf.mxu0
      %v918 = vadd.f32 0.0, %v917
      %919 = vmatprep.mubr.f32.mxu0 0.0
      %920 = vmatmul.mubr.f32.gmra.mxu0 %v600
      %v921 = vpop.f32.mrf.mxu0
      %v922 = vadd.f32 0.0, %v921
      %v923 = vpop.f32.mrf.mxu0
      %v924 = vadd.f32 0.0, %v923
      %925 = vmatprep.mubr.f32.mxu0 0.0
      %926 = vmatmul.mubr.f32.gmra.mxu0 %v601
      %v927 = vpop.f32.mrf.mxu0
      %v928 = vadd.f32 0.0, %v927
      %v929 = vpop.f32.mrf.mxu0
      %v930 = vadd.f32 0.0, %v929
      %931 = vmatprep.mubr.f32.mxu0 0.0
      %932 = vmatmul.mubr.f32.gmra.mxu0 %v602
      %v933 = vpop.f32.mrf.mxu0
      %v934 = vadd.f32 0.0, %v933
      %v935 = vpop.f32.mrf.mxu0
      %v936 = vadd.f32 0.0, %v935
      %937 = vmatprep.mubr.f32.mxu0 0.0
      %938 = vmatmul.mubr.f32.gmra.mxu0 %v603
      %v939 = vpop.f32.mrf.mxu0
      %v940 = vadd.f32 0.0, %v939
      %v941 = vpop.f32.mrf.mxu0
      %v942 = vadd.f32 0.0, %v941
      %943 = vmatprep.mubr.f32.mxu0 0.0
      %944 = vmatmul.mubr.f32.gmra.mxu0 %v604
      %v945 = vpop.f32.mrf.mxu0
      %v946 = vadd.f32 0.0, %v945
      %v947 = vpop.f32.mrf.mxu0
      %v948 = vadd.f32 0.0, %v947
      %949 = vmatprep.mubr.f32.mxu0 0.0
      %950 = vmatmul.mubr.f32.gmra.mxu0 %v605
      %v951 = vpop.f32.mrf.mxu0
      %v952 = vadd.f32 0.0, %v951
      %v953 = vpop.f32.mrf.mxu0
      %v954 = vadd.f32 0.0, %v953
      %955 = vmatprep.mubr.f32.mxu0 0.0
      %956 = vmatmul.mubr.f32.gmra.mxu0 %v606
      %v957 = vpop.f32.mrf.mxu0
      %v958 = vadd.f32 0.0, %v957
      %v959 = vpop.f32.mrf.mxu0
      %v960 = vadd.f32 0.0, %v959
      %961 = vmatprep.mubr.f32.mxu0 0.0
      %962 = vmatmul.mubr.f32.gmra.mxu0 %v607
      %v963 = vpop.f32.mrf.mxu0
      %v964 = vadd.f32 0.0, %v963
      %v965 = vpop.f32.mrf.mxu0
      %v966 = vadd.f32 0.0, %v965
      %967 = vmatprep.mubr.f32.mxu0 0.0
      %968 = vmatmul.mubr.f32.gmra.mxu0 %v608
      %v969 = vpop.f32.mrf.mxu0
      %v970 = vadd.f32 0.0, %v969
      %v971 = vpop.f32.mrf.mxu0
      %v972 = vadd.f32 0.0, %v971
      %973 = vmatprep.mubr.f32.mxu0 0.0
      %974 = vmatmul.mubr.f32.gmra.mxu0 %v609
      %v975 = vpop.f32.mrf.mxu0
      %v976 = vadd.f32 0.0, %v975
      %v977 = vpop.f32.mrf.mxu0
      %v978 = vadd.f32 0.0, %v977
      %979 = vdwg.mxu0
      %980 = vmatprep.subr.mxu0 0.0
      %981 = vmatpush1.msra.mxu0 %v722
      %982 = vmatprep.subr.mxu0 0.0
      %983 = vmatpush1.msra.mxu0 %v719
      %984 = vmatprep.subr.mxu0 0.0
      %985 = vmatpush1.msra.mxu0 %v716
      %986 = vmatprep.subr.mxu0 0.0
      %987 = vmatpush1.msra.mxu0 %v713
      %988 = vmatprep.subr.mxu0 0.0
      %989 = vmatpush1.msra.mxu0 %v710
      %990 = vmatprep.subr.mxu0 0.0
      %991 = vmatpush1.msra.mxu0 %v707
      %992 = vmatprep.subr.mxu0 0.0
      %993 = vmatpush1.msra.mxu0 %v704
      %994 = vmatprep.subr.mxu0 0.0
      %995 = vmatpush1.msra.mxu0 %v701
      %996 = vmatprep.subr.mxu0 0.0
      %997 = vmatpush1.msra.mxu0 %v698
      %998 = vmatprep.subr.mxu0 0.0
      %999 = vmatpush1.msra.mxu0 %v695
      %1000 = vmatprep.subr.mxu0 0.0
      %1001 = vmatpush1.msra.mxu0 %v692
      %1002 = vmatprep.subr.mxu0 0.0
      %1003 = vmatpush1.msra.mxu0 %v689
      %1004 = vmatprep.subr.mxu0 0.0
      %1005 = vmatpush1.msra.mxu0 %v686
      %1006 = vmatprep.subr.mxu0 0.0
      %1007 = vmatpush1.msra.mxu0 %v683
      %1008 = vmatprep.subr.mxu0 0.0
      %1009 = vmatpush1.msra.mxu0 %v680
      %1010 = vmatprep.subr.mxu0 0.0
      %1011 = vmatpush1.msra.mxu0 %v677
      %1012 = vmatprep.subr.mxu0 0.0
      %1013 = vmatpush2.msra.mxu0 0.0
      %1014 = vmatprep.subr.mxu0 0.0
      %1015 = vmatpush2.msra.mxu0 0.0
      %1016 = vmatprep.subr.mxu0 0.0
      %1017 = vmatpush2.msra.mxu0 0.0
      %1018 = vmatprep.subr.mxu0 0.0
      %1019 = vmatpush2.msra.mxu0 0.0
      %1020 = vmatprep.subr.mxu0 0.0
      %1021 = vmatpush2.msra.mxu0 0.0
      %1022 = vmatprep.subr.mxu0 0.0
      %1023 = vmatpush2.msra.mxu0 0.0
      %1024 = vmatprep.subr.mxu0 0.0
      %1025 = vmatpush2.msra.mxu0 0.0
      %1026 = vmatprep.subr.mxu0 0.0
      %1027 = vmatpush2.msra.mxu0 0.0
      %1028 = vmatprep.subr.mxu0 0.0
      %1029 = vmatpush2.msra.mxu0 0.0
      %1030 = vmatprep.subr.mxu0 0.0
      %1031 = vmatpush2.msra.mxu0 0.0
      %1032 = vmatprep.subr.mxu0 0.0
      %1033 = vmatpush2.msra.mxu0 0.0
      %1034 = vmatprep.subr.mxu0 0.0
      %1035 = vmatpush2.msra.mxu0 0.0
      %1036 = vmatprep.subr.mxu0 0.0
      %1037 = vmatpush2.msra.mxu0 0.0
      %1038 = vmatprep.subr.mxu0 0.0
      %1039 = vmatpush2.msra.mxu0 0.0
      %1040 = vmatprep.subr.mxu0 0.0
      %1041 = vmatpush2.msra.mxu0 0.0
      %1042 = vmatprep.subr.mxu0 0.0
      %1043 = vmatpush2.msra.mxu0 0.0
      %1044 = vmatprep.mubr.f32.mxu0 0.0
      %1045 = vmatmul.mubr.f32.gmra.mxu0 %v578
      %v1046 = vpop.f32.mrf.mxu0
      %v1047 = vadd.f32 0.0, %v1046
      %v1048 = vpop.f32.mrf.mxu0
      %1049 = vmatprep.mubr.f32.mxu0 0.0
      %1050 = vmatmul.mubr.f32.gmra.mxu0 %v579
      %v1051 = vpop.f32.mrf.mxu0
      %v1052 = vadd.f32 0.0, %v1051
      %v1053 = vpop.f32.mrf.mxu0
      %1054 = vmatprep.mubr.f32.mxu0 0.0
      %1055 = vmatmul.mubr.f32.gmra.mxu0 %v580
      %v1056 = vpop.f32.mrf.mxu0
      %v1057 = vadd.f32 0.0, %v1056
      %v1058 = vpop.f32.mrf.mxu0
      %1059 = vmatprep.mubr.f32.mxu0 0.0
      %1060 = vmatmul.mubr.f32.gmra.mxu0 %v581
      %v1061 = vpop.f32.mrf.mxu0
      %v1062 = vadd.f32 0.0, %v1061
      %v1063 = vpop.f32.mrf.mxu0
      %1064 = vmatprep.mubr.f32.mxu0 0.0
      %1065 = vmatmul.mubr.f32.gmra.mxu0 %v582
      %v1066 = vpop.f32.mrf.mxu0
      %v1067 = vadd.f32 0.0, %v1066
      %v1068 = vpop.f32.mrf.mxu0
      %1069 = vmatprep.mubr.f32.mxu0 0.0
      %1070 = vmatmul.mubr.f32.gmra.mxu0 %v583
      %v1071 = vpop.f32.mrf.mxu0
      %v1072 = vadd.f32 0.0, %v1071
      %v1073 = vpop.f32.mrf.mxu0
      %1074 = vmatprep.mubr.f32.mxu0 0.0
      %1075 = vmatmul.mubr.f32.gmra.mxu0 %v584
      %v1076 = vpop.f32.mrf.mxu0
      %v1077 = vadd.f32 0.0, %v1076
      %v1078 = vpop.f32.mrf.mxu0
      %1079 = vmatprep.mubr.f32.mxu0 0.0
      %1080 = vmatmul.mubr.f32.gmra.mxu0 %v585
      %v1081 = vpop.f32.mrf.mxu0
      %v1082 = vadd.f32 0.0, %v1081
      %v1083 = vpop.f32.mrf.mxu0
      %1084 = vmatprep.mubr.f32.mxu0 0.0
      %1085 = vmatmul.mubr.f32.gmra.mxu0 %v586
      %v1086 = vpop.f32.mrf.mxu0
      %v1087 = vadd.f32 0.0, %v1086
      %v1088 = vpop.f32.mrf.mxu0
      %1089 = vmatprep.mubr.f32.mxu0 0.0
      %1090 = vmatmul.mubr.f32.gmra.mxu0 %v587
      %v1091 = vpop.f32.mrf.mxu0
      %v1092 = vadd.f32 0.0, %v1091
      %v1093 = vpop.f32.mrf.mxu0
      %1094 = vmatprep.mubr.f32.mxu0 0.0
      %1095 = vmatmul.mubr.f32.gmra.mxu0 %v588
      %v1096 = vpop.f32.mrf.mxu0
      %v1097 = vadd.f32 0.0, %v1096
      %v1098 = vpop.f32.mrf.mxu0
      %1099 = vmatprep.mubr.f32.mxu0 0.0
      %1100 = vmatmul.mubr.f32.gmra.mxu0 %v589
      %v1101 = vpop.f32.mrf.mxu0
      %v1102 = vadd.f32 0.0, %v1101
      %v1103 = vpop.f32.mrf.mxu0
      %1104 = vmatprep.mubr.f32.mxu0 0.0
      %1105 = vmatmul.mubr.f32.gmra.mxu0 %v590
      %v1106 = vpop.f32.mrf.mxu0
      %v1107 = vadd.f32 0.0, %v1106
      %v1108 = vpop.f32.mrf.mxu0
      %1109 = vmatprep.mubr.f32.mxu0 0.0
      %1110 = vmatmul.mubr.f32.gmra.mxu0 %v591
      %v1111 = vpop.f32.mrf.mxu0
      %v1112 = vadd.f32 0.0, %v1111
      %v1113 = vpop.f32.mrf.mxu0
      %1114 = vmatprep.mubr.f32.mxu0 0.0
      %1115 = vmatmul.mubr.f32.gmra.mxu0 %v592
      %v1116 = vpop.f32.mrf.mxu0
      %v1117 = vadd.f32 0.0, %v1116
      %v1118 = vpop.f32.mrf.mxu0
      %1119 = vmatprep.mubr.f32.mxu0 0.0
      %1120 = vmatmul.mubr.f32.gmra.mxu0 %v593
      %v1121 = vpop.f32.mrf.mxu0
      %v1122 = vadd.f32 0.0, %v1121
      %v1123 = vpop.f32.mrf.mxu0
      %1124 = vmatprep.mubr.f32.mxu0 0.0
      %1125 = vmatmul.mubr.f32.gmra.mxu0 %v594
      %v1126 = vpop.f32.mrf.mxu0
      %v1127 = vadd.f32 0.0, %v1126
      %v1128 = vpop.f32.mrf.mxu0
      %1129 = vmatprep.mubr.f32.mxu0 0.0
      %1130 = vmatmul.mubr.f32.gmra.mxu0 %v595
      %v1131 = vpop.f32.mrf.mxu0
      %v1132 = vadd.f32 0.0, %v1131
      %v1133 = vpop.f32.mrf.mxu0
      %1134 = vmatprep.mubr.f32.mxu0 0.0
      %1135 = vmatmul.mubr.f32.gmra.mxu0 %v596
      %v1136 = vpop.f32.mrf.mxu0
      %v1137 = vadd.f32 0.0, %v1136
      %v1138 = vpop.f32.mrf.mxu0
      %1139 = vmatprep.mubr.f32.mxu0 0.0
      %1140 = vmatmul.mubr.f32.gmra.mxu0 %v597
      %v1141 = vpop.f32.mrf.mxu0
      %v1142 = vadd.f32 0.0, %v1141
      %v1143 = vpop.f32.mrf.mxu0
      %1144 = vmatprep.mubr.f32.mxu0 0.0
      %1145 = vmatmul.mubr.f32.gmra.mxu0 %v598
      %v1146 = vpop.f32.mrf.mxu0
      %v1147 = vadd.f32 0.0, %v1146
      %v1148 = vpop.f32.mrf.mxu0
      %1149 = vmatprep.mubr.f32.mxu0 0.0
      %1150 = vmatmul.mubr.f32.gmra.mxu0 %v599
      %v1151 = vpop.f32.mrf.mxu0
      %v1152 = vadd.f32 0.0, %v1151
      %v1153 = vpop.f32.mrf.mxu0
      %1154 = vmatprep.mubr.f32.mxu0 0.0
      %1155 = vmatmul.mubr.f32.gmra.mxu0 %v600
      %v1156 = vpop.f32.mrf.mxu0
      %v1157 = vadd.f32 0.0, %v1156
      %v1158 = vpop.f32.mrf.mxu0
      %1159 = vmatprep.mubr.f32.mxu0 0.0
      %1160 = vmatmul.mubr.f32.gmra.mxu0 %v601
      %v1161 = vpop.f32.mrf.mxu0
      %v1162 = vadd.f32 0.0, %v1161
      %v1163 = vpop.f32.mrf.mxu0
      %1164 = vmatprep.mubr.f32.mxu0 0.0
      %1165 = vmatmul.mubr.f32.gmra.mxu0 %v602
      %v1166 = vpop.f32.mrf.mxu0
      %v1167 = vadd.f32 0.0, %v1166
      %v1168 = vpop.f32.mrf.mxu0
      %1169 = vmatprep.mubr.f32.mxu0 0.0
      %1170 = vmatmul.mubr.f32.gmra.mxu0 %v603
      %v1171 = vpop.f32.mrf.mxu0
      %v1172 = vadd.f32 0.0, %v1171
      %v1173 = vpop.f32.mrf.mxu0
      %1174 = vmatprep.mubr.f32.mxu0 0.0
      %1175 = vmatmul.mubr.f32.gmra.mxu0 %v604
      %v1176 = vpop.f32.mrf.mxu0
      %v1177 = vadd.f32 0.0, %v1176
      %v1178 = vpop.f32.mrf.mxu0
      %1179 = vmatprep.mubr.f32.mxu0 0.0
      %1180 = vmatmul.mubr.f32.gmra.mxu0 %v605
      %v1181 = vpop.f32.mrf.mxu0
      %v1182 = vadd.f32 0.0, %v1181
      %v1183 = vpop.f32.mrf.mxu0
      %1184 = vmatprep.mubr.f32.mxu0 0.0
      %1185 = vmatmul.mubr.f32.gmra.mxu0 %v606
      %v1186 = vpop.f32.mrf.mxu0
      %v1187 = vadd.f32 0.0, %v1186
      %v1188 = vpop.f32.mrf.mxu0
      %1189 = vmatprep.mubr.f32.mxu0 0.0
      %1190 = vmatmul.mubr.f32.gmra.mxu0 %v607
      %v1191 = vpop.f32.mrf.mxu0
      %v1192 = vadd.f32 0.0, %v1191
      %v1193 = vpop.f32.mrf.mxu0
      %1194 = vmatprep.mubr.f32.mxu0 0.0
      %1195 = vmatmul.mubr.f32.gmra.mxu0 %v608
      %v1196 = vpop.f32.mrf.mxu0
      %v1197 = vadd.f32 0.0, %v1196
      %v1198 = vpop.f32.mrf.mxu0
      %1199 = vmatprep.mubr.f32.mxu0 0.0
      %1200 = vmatmul.mubr.f32.gmra.mxu0 %v609
      %v1201 = vpop.f32.mrf.mxu0
      %v1202 = vadd.f32 0.0, %v1201
      %v1203 = vpop.f32.mrf.mxu0
      %1204 = vdwg.mxu0
      %1205 = vmatprep.subr.mxu0 %v672
      %1206 = vmatpush1.msra.mxu0 %v671
      %1207 = vmatprep.subr.mxu0 %v669
      %1208 = vmatpush1.msra.mxu0 %v668
      %1209 = vmatprep.subr.mxu0 %v666
      %1210 = vmatpush1.msra.mxu0 %v665
      %1211 = vmatprep.subr.mxu0 %v663
      %1212 = vmatpush1.msra.mxu0 %v662
      %1213 = vmatprep.subr.mxu0 %v660
      %1214 = vmatpush1.msra.mxu0 %v659
      %1215 = vmatprep.subr.mxu0 %v657
      %1216 = vmatpush1.msra.mxu0 %v656
      %1217 = vmatprep.subr.mxu0 %v654
      %1218 = vmatpush1.msra.mxu0 %v653
      %1219 = vmatprep.subr.mxu0 %v651
      %1220 = vmatpush1.msra.mxu0 %v650
      %1221 = vmatprep.subr.mxu0 %v648
      %1222 = vmatpush1.msra.mxu0 %v647
      %1223 = vmatprep.subr.mxu0 %v645
      %1224 = vmatpush1.msra.mxu0 %v644
      %1225 = vmatprep.subr.mxu0 %v642
      %1226 = vmatpush1.msra.mxu0 %v641
      %1227 = vmatprep.subr.mxu0 %v639
      %1228 = vmatpush1.msra.mxu0 %v638
      %1229 = vmatprep.subr.mxu0 %v636
      %1230 = vmatpush1.msra.mxu0 %v635
      %1231 = vmatprep.subr.mxu0 %v633
      %1232 = vmatpush1.msra.mxu0 %v632
      %1233 = vmatprep.subr.mxu0 %v630
      %1234 = vmatpush1.msra.mxu0 %v629
      %1235 = vmatprep.subr.mxu0 %v627
      %1236 = vmatpush1.msra.mxu0 %v626
      %1237 = vmatprep.subr.mxu0 0.0
      %1238 = vmatpush2.msra.mxu0 0.0
      %1239 = vmatprep.subr.mxu0 0.0
      %1240 = vmatpush2.msra.mxu0 0.0
      %1241 = vmatprep.subr.mxu0 0.0
      %1242 = vmatpush2.msra.mxu0 0.0
      %1243 = vmatprep.subr.mxu0 0.0
      %1244 = vmatpush2.msra.mxu0 0.0
      %1245 = vmatprep.subr.mxu0 0.0
      %1246 = vmatpush2.msra.mxu0 0.0
      %1247 = vmatprep.subr.mxu0 0.0
      %1248 = vmatpush2.msra.mxu0 0.0
      %1249 = vmatprep.subr.mxu0 0.0
      %1250 = vmatpush2.msra.mxu0 0.0
      %1251 = vmatprep.subr.mxu0 0.0
      %1252 = vmatpush2.msra.mxu0 0.0
      %1253 = vmatprep.subr.mxu0 0.0
      %1254 = vmatpush2.msra.mxu0 0.0
      %1255 = vmatprep.subr.mxu0 0.0
      %1256 = vmatpush2.msra.mxu0 0.0
      %1257 = vmatprep.subr.mxu0 0.0
      %1258 = vmatpush2.msra.mxu0 0.0
      %1259 = vmatprep.subr.mxu0 0.0
      %1260 = vmatpush2.msra.mxu0 0.0
      %1261 = vmatprep.subr.mxu0 0.0
      %1262 = vmatpush2.msra.mxu0 0.0
      %1263 = vmatprep.subr.mxu0 0.0
      %1264 = vmatpush2.msra.mxu0 0.0
      %1265 = vmatprep.subr.mxu0 0.0
      %1266 = vmatpush2.msra.mxu0 0.0
      %1267 = vmatprep.subr.mxu0 0.0
      %1268 = vmatpush2.msra.mxu0 0.0
      %1269 = vmatprep.mubr.f32.mxu0 0.0
      %1270 = vmatmul.mubr.f32.gmra.mxu0 %v619
      %v1271 = vpop.f32.mrf.mxu0
      %v1272 = vadd.f32 %v790, %v1271
      %v1273 = vpop.f32.mrf.mxu0
      %v1274 = vadd.f32 %v792, %v1273
      %1275 = vmatprep.mubr.f32.mxu0 0.0
      %1276 = vmatmul.mubr.f32.gmra.mxu0 %v620
      %v1277 = vpop.f32.mrf.mxu0
      %v1278 = vadd.f32 %v796, %v1277
      %v1279 = vpop.f32.mrf.mxu0
      %v1280 = vadd.f32 %v798, %v1279
      %1281 = vmatprep.mubr.f32.mxu0 0.0
      %1282 = vmatmul.mubr.f32.gmra.mxu0 %v578
      %v1283 = vpop.f32.mrf.mxu0
      %v1284 = vadd.f32 %v802, %v1283
      %v1285 = vpop.f32.mrf.mxu0
      %v1286 = vadd.f32 %v804, %v1285
      %1287 = vmatprep.mubr.f32.mxu0 0.0
      %1288 = vmatmul.mubr.f32.gmra.mxu0 %v579
      %v1289 = vpop.f32.mrf.mxu0
      %v1290 = vadd.f32 %v808, %v1289
      %v1291 = vpop.f32.mrf.mxu0
      %v1292 = vadd.f32 %v810, %v1291
      %1293 = vmatprep.mubr.f32.mxu0 0.0
      %1294 = vmatmul.mubr.f32.gmra.mxu0 %v580
      %v1295 = vpop.f32.mrf.mxu0
      %v1296 = vadd.f32 %v814, %v1295
      %v1297 = vpop.f32.mrf.mxu0
      %v1298 = vadd.f32 %v816, %v1297
      %1299 = vmatprep.mubr.f32.mxu0 0.0
      %1300 = vmatmul.mubr.f32.gmra.mxu0 %v581
      %v1301 = vpop.f32.mrf.mxu0
      %v1302 = vadd.f32 %v820, %v1301
      %v1303 = vpop.f32.mrf.mxu0
      %v1304 = vadd.f32 %v822, %v1303
      %1305 = vmatprep.mubr.f32.mxu0 0.0
      %1306 = vmatmul.mubr.f32.gmra.mxu0 %v582
      %v1307 = vpop.f32.mrf.mxu0
      %v1308 = vadd.f32 %v826, %v1307
      %v1309 = vpop.f32.mrf.mxu0
      %v1310 = vadd.f32 %v828, %v1309
      %1311 = vmatprep.mubr.f32.mxu0 0.0
      %1312 = vmatmul.mubr.f32.gmra.mxu0 %v583
      %v1313 = vpop.f32.mrf.mxu0
      %v1314 = vadd.f32 %v832, %v1313
      %v1315 = vpop.f32.mrf.mxu0
      %v1316 = vadd.f32 %v834, %v1315
      %1317 = vmatprep.mubr.f32.mxu0 0.0
      %1318 = vmatmul.mubr.f32.gmra.mxu0 %v584
      %v1319 = vpop.f32.mrf.mxu0
      %v1320 = vadd.f32 %v838, %v1319
      %v1321 = vpop.f32.mrf.mxu0
      %v1322 = vadd.f32 %v840, %v1321
      %1323 = vmatprep.mubr.f32.mxu0 0.0
      %1324 = vmatmul.mubr.f32.gmra.mxu0 %v585
      %v1325 = vpop.f32.mrf.mxu0
      %v1326 = vadd.f32 %v844, %v1325
      %v1327 = vpop.f32.mrf.mxu0
      %v1328 = vadd.f32 %v846, %v1327
      %1329 = vmatprep.mubr.f32.mxu0 0.0
      %1330 = vmatmul.mubr.f32.gmra.mxu0 %v586
      %v1331 = vpop.f32.mrf.mxu0
      %v1332 = vadd.f32 %v850, %v1331
      %v1333 = vpop.f32.mrf.mxu0
      %v1334 = vadd.f32 %v852, %v1333
      %1335 = vmatprep.mubr.f32.mxu0 0.0
      %1336 = vmatmul.mubr.f32.gmra.mxu0 %v587
      %v1337 = vpop.f32.mrf.mxu0
      %v1338 = vadd.f32 %v856, %v1337
      %v1339 = vpop.f32.mrf.mxu0
      %v1340 = vadd.f32 %v858, %v1339
      %1341 = vmatprep.mubr.f32.mxu0 0.0
      %1342 = vmatmul.mubr.f32.gmra.mxu0 %v588
      %v1343 = vpop.f32.mrf.mxu0
      %v1344 = vadd.f32 %v862, %v1343
      %v1345 = vpop.f32.mrf.mxu0
      %v1346 = vadd.f32 %v864, %v1345
      %1347 = vmatprep.mubr.f32.mxu0 0.0
      %1348 = vmatmul.mubr.f32.gmra.mxu0 %v589
      %v1349 = vpop.f32.mrf.mxu0
      %v1350 = vadd.f32 %v868, %v1349
      %v1351 = vpop.f32.mrf.mxu0
      %v1352 = vadd.f32 %v870, %v1351
      %1353 = vmatprep.mubr.f32.mxu0 0.0
      %1354 = vmatmul.mubr.f32.gmra.mxu0 %v590
      %v1355 = vpop.f32.mrf.mxu0
      %v1356 = vadd.f32 %v874, %v1355
      %v1357 = vpop.f32.mrf.mxu0
      %v1358 = vadd.f32 %v876, %v1357
      %1359 = vmatprep.mubr.f32.mxu0 0.0
      %1360 = vmatmul.mubr.f32.gmra.mxu0 %v591
      %v1361 = vpop.f32.mrf.mxu0
      %v1362 = vadd.f32 %v880, %v1361
      %v1363 = vpop.f32.mrf.mxu0
      %v1364 = vadd.f32 %v882, %v1363
      %1365 = vmatprep.mubr.f32.mxu0 0.0
      %1366 = vmatmul.mubr.f32.gmra.mxu0 %v592
      %v1367 = vpop.f32.mrf.mxu0
      %v1368 = vadd.f32 %v886, %v1367
      %v1369 = vpop.f32.mrf.mxu0
      %v1370 = vadd.f32 %v888, %v1369
      %1371 = vmatprep.mubr.f32.mxu0 0.0
      %1372 = vmatmul.mubr.f32.gmra.mxu0 %v593
      %v1373 = vpop.f32.mrf.mxu0
      %v1374 = vadd.f32 %v892, %v1373
      %v1375 = vpop.f32.mrf.mxu0
      %v1376 = vadd.f32 %v894, %v1375
      %1377 = vmatprep.mubr.f32.mxu0 0.0
      %1378 = vmatmul.mubr.f32.gmra.mxu0 %v594
      %v1379 = vpop.f32.mrf.mxu0
      %v1380 = vadd.f32 %v898, %v1379
      %v1381 = vpop.f32.mrf.mxu0
      %v1382 = vadd.f32 %v900, %v1381
      %1383 = vmatprep.mubr.f32.mxu0 0.0
      %1384 = vmatmul.mubr.f32.gmra.mxu0 %v595
      %v1385 = vpop.f32.mrf.mxu0
      %v1386 = vadd.f32 %v904, %v1385
      %v1387 = vpop.f32.mrf.mxu0
      %v1388 = vadd.f32 %v906, %v1387
      %1389 = vmatprep.mubr.f32.mxu0 0.0
      %1390 = vmatmul.mubr.f32.gmra.mxu0 %v596
      %v1391 = vpop.f32.mrf.mxu0
      %v1392 = vadd.f32 %v910, %v1391
      %v1393 = vpop.f32.mrf.mxu0
      %v1394 = vadd.f32 %v912, %v1393
      %1395 = vmatprep.mubr.f32.mxu0 0.0
      %1396 = vmatmul.mubr.f32.gmra.mxu0 %v597
      %v1397 = vpop.f32.mrf.mxu0
      %v1398 = vadd.f32 %v916, %v1397
      %v1399 = vpop.f32.mrf.mxu0
      %v1400 = vadd.f32 %v918, %v1399
      %1401 = vmatprep.mubr.f32.mxu0 0.0
      %1402 = vmatmul.mubr.f32.gmra.mxu0 %v598
      %v1403 = vpop.f32.mrf.mxu0
      %v1404 = vadd.f32 %v922, %v1403
      %v1405 = vpop.f32.mrf.mxu0
      %v1406 = vadd.f32 %v924, %v1405
      %1407 = vmatprep.mubr.f32.mxu0 0.0
      %1408 = vmatmul.mubr.f32.gmra.mxu0 %v599
      %v1409 = vpop.f32.mrf.mxu0
      %v1410 = vadd.f32 %v928, %v1409
      %v1411 = vpop.f32.mrf.mxu0
      %v1412 = vadd.f32 %v930, %v1411
      %1413 = vmatprep.mubr.f32.mxu0 0.0
      %1414 = vmatmul.mubr.f32.gmra.mxu0 %v600
      %v1415 = vpop.f32.mrf.mxu0
      %v1416 = vadd.f32 %v934, %v1415
      %v1417 = vpop.f32.mrf.mxu0
      %v1418 = vadd.f32 %v936, %v1417
      %1419 = vmatprep.mubr.f32.mxu0 0.0
      %1420 = vmatmul.mubr.f32.gmra.mxu0 %v601
      %v1421 = vpop.f32.mrf.mxu0
      %v1422 = vadd.f32 %v940, %v1421
      %v1423 = vpop.f32.mrf.mxu0
      %v1424 = vadd.f32 %v942, %v1423
      %1425 = vmatprep.mubr.f32.mxu0 0.0
      %1426 = vmatmul.mubr.f32.gmra.mxu0 %v602
      %v1427 = vpop.f32.mrf.mxu0
      %v1428 = vadd.f32 %v946, %v1427
      %v1429 = vpop.f32.mrf.mxu0
      %v1430 = vadd.f32 %v948, %v1429
      %1431 = vmatprep.mubr.f32.mxu0 0.0
      %1432 = vmatmul.mubr.f32.gmra.mxu0 %v603
      %v1433 = vpop.f32.mrf.mxu0
      %v1434 = vadd.f32 %v952, %v1433
      %v1435 = vpop.f32.mrf.mxu0
      %v1436 = vadd.f32 %v954, %v1435
      %1437 = vmatprep.mubr.f32.mxu0 0.0
      %1438 = vmatmul.mubr.f32.gmra.mxu0 %v604
      %v1439 = vpop.f32.mrf.mxu0
      %v1440 = vadd.f32 %v958, %v1439
      %v1441 = vpop.f32.mrf.mxu0
      %v1442 = vadd.f32 %v960, %v1441
      %1443 = vmatprep.mubr.f32.mxu0 0.0
      %1444 = vmatmul.mubr.f32.gmra.mxu0 %v605
      %v1445 = vpop.f32.mrf.mxu0
      %v1446 = vadd.f32 %v964, %v1445
      %v1447 = vpop.f32.mrf.mxu0
      %v1448 = vadd.f32 %v966, %v1447
      %1449 = vmatprep.mubr.f32.mxu0 0.0
      %1450 = vmatmul.mubr.f32.gmra.mxu0 %v606
      %v1451 = vpop.f32.mrf.mxu0
      %v1452 = vadd.f32 %v970, %v1451
      %v1453 = vpop.f32.mrf.mxu0
      %v1454 = vadd.f32 %v972, %v1453
      %1455 = vmatprep.mubr.f32.mxu0 0.0
      %1456 = vmatmul.mubr.f32.gmra.mxu0 %v607
      %v1457 = vpop.f32.mrf.mxu0
      %v1458 = vadd.f32 %v976, %v1457
      %v1459 = vpop.f32.mrf.mxu0
      %v1460 = vadd.f32 %v978, %v1459
      %1461 = vdwg.mxu0
      %1462 = vmatprep.subr.mxu0 0.0
      %1463 = vmatpush1.msra.mxu0 %v673
      %1464 = vmatprep.subr.mxu0 0.0
      %1465 = vmatpush1.msra.mxu0 %v670
      %1466 = vmatprep.subr.mxu0 0.0
      %1467 = vmatpush1.msra.mxu0 %v667
      %1468 = vmatprep.subr.mxu0 0.0
      %1469 = vmatpush1.msra.mxu0 %v664
      %1470 = vmatprep.subr.mxu0 0.0
      %1471 = vmatpush1.msra.mxu0 %v661
      %1472 = vmatprep.subr.mxu0 0.0
      %1473 = vmatpush1.msra.mxu0 %v658
      %1474 = vmatprep.subr.mxu0 0.0
      %1475 = vmatpush1.msra.mxu0 %v655
      %1476 = vmatprep.subr.mxu0 0.0
      %1477 = vmatpush1.msra.mxu0 %v652
      %1478 = vmatprep.subr.mxu0 0.0
      %1479 = vmatpush1.msra.mxu0 %v649
      %1480 = vmatprep.subr.mxu0 0.0
      %1481 = vmatpush1.msra.mxu0 %v646
      %1482 = vmatprep.subr.mxu0 0.0
      %1483 = vmatpush1.msra.mxu0 %v643
      %1484 = vmatprep.subr.mxu0 0.0
      %1485 = vmatpush1.msra.mxu0 %v640
      %1486 = vmatprep.subr.mxu0 0.0
      %1487 = vmatpush1.msra.mxu0 %v637
      %1488 = vmatprep.subr.mxu0 0.0
      %1489 = vmatpush1.msra.mxu0 %v634
      %1490 = vmatprep.subr.mxu0 0.0
      %1491 = vmatpush1.msra.mxu0 %v631
      %1492 = vmatprep.subr.mxu0 0.0
      %1493 = vmatpush1.msra.mxu0 %v628
      %1494 = vmatprep.subr.mxu0 0.0
      %1495 = vmatpush2.msra.mxu0 0.0
      %1496 = vmatprep.subr.mxu0 0.0
      %1497 = vmatpush2.msra.mxu0 0.0
      %1498 = vmatprep.subr.mxu0 0.0
      %1499 = vmatpush2.msra.mxu0 0.0
      %1500 = vmatprep.subr.mxu0 0.0
      %1501 = vmatpush2.msra.mxu0 0.0
      %1502 = vmatprep.subr.mxu0 0.0
      %1503 = vmatpush2.msra.mxu0 0.0
      %1504 = vmatprep.subr.mxu0 0.0
      %1505 = vmatpush2.msra.mxu0 0.0
      %1506 = vmatprep.subr.mxu0 0.0
      %1507 = vmatpush2.msra.mxu0 0.0
      %1508 = vmatprep.subr.mxu0 0.0
      %1509 = vmatpush2.msra.mxu0 0.0
      %1510 = vmatprep.subr.mxu0 0.0
      %1511 = vmatpush2.msra.mxu0 0.0
      %1512 = vmatprep.subr.mxu0 0.0
      %1513 = vmatpush2.msra.mxu0 0.0
      %1514 = vmatprep.subr.mxu0 0.0
      %1515 = vmatpush2.msra.mxu0 0.0
      %1516 = vmatprep.subr.mxu0 0.0
      %1517 = vmatpush2.msra.mxu0 0.0
      %1518 = vmatprep.subr.mxu0 0.0
      %1519 = vmatpush2.msra.mxu0 0.0
      %1520 = vmatprep.subr.mxu0 0.0
      %1521 = vmatpush2.msra.mxu0 0.0
      %1522 = vmatprep.subr.mxu0 0.0
      %1523 = vmatpush2.msra.mxu0 0.0
      %1524 = vmatprep.subr.mxu0 0.0
      %1525 = vmatpush2.msra.mxu0 0.0
      %1526 = vmatprep.mubr.f32.mxu0 0.0
      %1527 = vmatmul.mubr.f32.gmra.mxu0 %v619
      %v1528 = vpop.f32.mrf.mxu0
      %v1529 = vadd.f32 %v1047, %v1528
      %v1530 = vpop.f32.mrf.mxu0
      %1531 = vmatprep.mubr.f32.mxu0 0.0
      %1532 = vmatmul.mubr.f32.gmra.mxu0 %v620
      %v1533 = vpop.f32.mrf.mxu0
      %v1534 = vadd.f32 %v1052, %v1533
      %v1535 = vpop.f32.mrf.mxu0
      %1536 = vmatprep.mubr.f32.mxu0 0.0
      %1537 = vmatmul.mubr.f32.gmra.mxu0 %v578
      %v1538 = vpop.f32.mrf.mxu0
      %v1539 = vadd.f32 %v1057, %v1538
      %v1540 = vpop.f32.mrf.mxu0
      %1541 = vmatprep.mubr.f32.mxu0 0.0
      %1542 = vmatmul.mubr.f32.gmra.mxu0 %v579
      %v1543 = vpop.f32.mrf.mxu0
      %v1544 = vadd.f32 %v1062, %v1543
      %v1545 = vpop.f32.mrf.mxu0
      %1546 = vmatprep.mubr.f32.mxu0 0.0
      %1547 = vmatmul.mubr.f32.gmra.mxu0 %v580
      %v1548 = vpop.f32.mrf.mxu0
      %v1549 = vadd.f32 %v1067, %v1548
      %v1550 = vpop.f32.mrf.mxu0
      %1551 = vmatprep.mubr.f32.mxu0 0.0
      %1552 = vmatmul.mubr.f32.gmra.mxu0 %v581
      %v1553 = vpop.f32.mrf.mxu0
      %v1554 = vadd.f32 %v1072, %v1553
      %v1555 = vpop.f32.mrf.mxu0
      %1556 = vmatprep.mubr.f32.mxu0 0.0
      %1557 = vmatmul.mubr.f32.gmra.mxu0 %v582
      %v1558 = vpop.f32.mrf.mxu0
      %v1559 = vadd.f32 %v1077, %v1558
      %v1560 = vpop.f32.mrf.mxu0
      %1561 = vmatprep.mubr.f32.mxu0 0.0
      %1562 = vmatmul.mubr.f32.gmra.mxu0 %v583
      %v1563 = vpop.f32.mrf.mxu0
      %v1564 = vadd.f32 %v1082, %v1563
      %v1565 = vpop.f32.mrf.mxu0
      %1566 = vmatprep.mubr.f32.mxu0 0.0
      %1567 = vmatmul.mubr.f32.gmra.mxu0 %v584
      %v1568 = vpop.f32.mrf.mxu0
      %v1569 = vadd.f32 %v1087, %v1568
      %v1570 = vpop.f32.mrf.mxu0
      %1571 = vmatprep.mubr.f32.mxu0 0.0
      %1572 = vmatmul.mubr.f32.gmra.mxu0 %v585
      %v1573 = vpop.f32.mrf.mxu0
      %v1574 = vadd.f32 %v1092, %v1573
      %v1575 = vpop.f32.mrf.mxu0
      %1576 = vmatprep.mubr.f32.mxu0 0.0
      %1577 = vmatmul.mubr.f32.gmra.mxu0 %v586
      %v1578 = vpop.f32.mrf.mxu0
      %v1579 = vadd.f32 %v1097, %v1578
      %v1580 = vpop.f32.mrf.mxu0
      %1581 = vmatprep.mubr.f32.mxu0 0.0
      %1582 = vmatmul.mubr.f32.gmra.mxu0 %v587
      %v1583 = vpop.f32.mrf.mxu0
      %v1584 = vadd.f32 %v1102, %v1583
      %v1585 = vpop.f32.mrf.mxu0
      %1586 = vmatprep.mubr.f32.mxu0 0.0
      %1587 = vmatmul.mubr.f32.gmra.mxu0 %v588
      %v1588 = vpop.f32.mrf.mxu0
      %v1589 = vadd.f32 %v1107, %v1588
      %v1590 = vpop.f32.mrf.mxu0
      %1591 = vmatprep.mubr.f32.mxu0 0.0
      %1592 = vmatmul.mubr.f32.gmra.mxu0 %v589
      %v1593 = vpop.f32.mrf.mxu0
      %v1594 = vadd.f32 %v1112, %v1593
      %v1595 = vpop.f32.mrf.mxu0
      %1596 = vmatprep.mubr.f32.mxu0 0.0
      %1597 = vmatmul.mubr.f32.gmra.mxu0 %v590
      %v1598 = vpop.f32.mrf.mxu0
      %v1599 = vadd.f32 %v1117, %v1598
      %v1600 = vpop.f32.mrf.mxu0
      %1601 = vmatprep.mubr.f32.mxu0 0.0
      %1602 = vmatmul.mubr.f32.gmra.mxu0 %v591
      %v1603 = vpop.f32.mrf.mxu0
      %v1604 = vadd.f32 %v1122, %v1603
      %v1605 = vpop.f32.mrf.mxu0
      %1606 = vmatprep.mubr.f32.mxu0 0.0
      %1607 = vmatmul.mubr.f32.gmra.mxu0 %v592
      %v1608 = vpop.f32.mrf.mxu0
      %v1609 = vadd.f32 %v1127, %v1608
      %v1610 = vpop.f32.mrf.mxu0
      %1611 = vmatprep.mubr.f32.mxu0 0.0
      %1612 = vmatmul.mubr.f32.gmra.mxu0 %v593
      %v1613 = vpop.f32.mrf.mxu0
      %v1614 = vadd.f32 %v1132, %v1613
      %v1615 = vpop.f32.mrf.mxu0
      %1616 = vmatprep.mubr.f32.mxu0 0.0
      %1617 = vmatmul.mubr.f32.gmra.mxu0 %v594
      %v1618 = vpop.f32.mrf.mxu0
      %v1619 = vadd.f32 %v1137, %v1618
      %v1620 = vpop.f32.mrf.mxu0
      %1621 = vmatprep.mubr.f32.mxu0 0.0
      %1622 = vmatmul.mubr.f32.gmra.mxu0 %v595
      %v1623 = vpop.f32.mrf.mxu0
      %v1624 = vadd.f32 %v1142, %v1623
      %v1625 = vpop.f32.mrf.mxu0
      %1626 = vmatprep.mubr.f32.mxu0 0.0
      %1627 = vmatmul.mubr.f32.gmra.mxu0 %v596
      %v1628 = vpop.f32.mrf.mxu0
      %v1629 = vadd.f32 %v1147, %v1628
      %v1630 = vpop.f32.mrf.mxu0
      %1631 = vmatprep.mubr.f32.mxu0 0.0
      %1632 = vmatmul.mubr.f32.gmra.mxu0 %v597
      %v1633 = vpop.f32.mrf.mxu0
      %v1634 = vadd.f32 %v1152, %v1633
      %v1635 = vpop.f32.mrf.mxu0
      %1636 = vmatprep.mubr.f32.mxu0 0.0
      %1637 = vmatmul.mubr.f32.gmra.mxu0 %v598
      %v1638 = vpop.f32.mrf.mxu0
      %v1639 = vadd.f32 %v1157, %v1638
      %v1640 = vpop.f32.mrf.mxu0
      %1641 = vmatprep.mubr.f32.mxu0 0.0
      %1642 = vmatmul.mubr.f32.gmra.mxu0 %v599
      %v1643 = vpop.f32.mrf.mxu0
      %v1644 = vadd.f32 %v1162, %v1643
      %v1645 = vpop.f32.mrf.mxu0
      %1646 = vmatprep.mubr.f32.mxu0 0.0
      %1647 = vmatmul.mubr.f32.gmra.mxu0 %v600
      %v1648 = vpop.f32.mrf.mxu0
      %v1649 = vadd.f32 %v1167, %v1648
      %v1650 = vpop.f32.mrf.mxu0
      %1651 = vmatprep.mubr.f32.mxu0 0.0
      %1652 = vmatmul.mubr.f32.gmra.mxu0 %v601
      %v1653 = vpop.f32.mrf.mxu0
      %v1654 = vadd.f32 %v1172, %v1653
      %v1655 = vpop.f32.mrf.mxu0
      %1656 = vmatprep.mubr.f32.mxu0 0.0
      %1657 = vmatmul.mubr.f32.gmra.mxu0 %v602
      %v1658 = vpop.f32.mrf.mxu0
      %v1659 = vadd.f32 %v1177, %v1658
      %v1660 = vpop.f32.mrf.mxu0
      %1661 = vmatprep.mubr.f32.mxu0 0.0
      %1662 = vmatmul.mubr.f32.gmra.mxu0 %v603
      %v1663 = vpop.f32.mrf.mxu0
      %v1664 = vadd.f32 %v1182, %v1663
      %v1665 = vpop.f32.mrf.mxu0
      %1666 = vmatprep.mubr.f32.mxu0 0.0
      %1667 = vmatmul.mubr.f32.gmra.mxu0 %v604
      %v1668 = vpop.f32.mrf.mxu0
      %v1669 = vadd.f32 %v1187, %v1668
      %v1670 = vpop.f32.mrf.mxu0
      %1671 = vmatprep.mubr.f32.mxu0 0.0
      %1672 = vmatmul.mubr.f32.gmra.mxu0 %v605
      %v1673 = vpop.f32.mrf.mxu0
      %v1674 = vadd.f32 %v1192, %v1673
      %v1675 = vpop.f32.mrf.mxu0
      %1676 = vmatprep.mubr.f32.mxu0 0.0
      %1677 = vmatmul.mubr.f32.gmra.mxu0 %v606
      %v1678 = vpop.f32.mrf.mxu0
      %v1679 = vadd.f32 %v1197, %v1678
      %v1680 = vpop.f32.mrf.mxu0
      %1681 = vmatprep.mubr.f32.mxu0 0.0
      %1682 = vmatmul.mubr.f32.gmra.mxu0 %v607
      %v1683 = vpop.f32.mrf.mxu0
      %v1684 = vadd.f32 %v1202, %v1683
      %v1685 = vpop.f32.mrf.mxu0
      %1686 = vdwg.mxu0
      %s1687 = scalar_lea.vmem %s2, 768
      %v1688 = vld [vmem:[%s1687] sm:$0xff]
      %v1689 = vld [vmem:[%s1687 + $0x8] sm:$0xff]
      %v1690 = vld [vmem:[%s1687 + $0x10] sm:$0xff]
      %v1691 = vld [vmem:[%s1687 + $0x18] sm:$0xff]
      %v1692 = vld [vmem:[%s1687 + $0x20] sm:$0xff]
      %v1693 = vld [vmem:[%s1687 + $0x28] sm:$0xff]
      %v1694 = vld [vmem:[%s1687 + $0x30] sm:$0xff]
      %v1695 = vld [vmem:[%s1687 + $0x38] sm:$0xff]
      %v1696 = vld [vmem:[%s1687 + $0x40] sm:$0xff]
      %v1697 = vld [vmem:[%s1687 + $0x48] sm:$0xff]
      %v1698 = vld [vmem:[%s1687 + $0x50] sm:$0xff]
      %v1699 = vld [vmem:[%s1687 + $0x58] sm:$0xff]
      %v1700 = vld [vmem:[%s1687 + $0x60] sm:$0xff]
      %v1701 = vld [vmem:[%s1687 + $0x68] sm:$0xff]
      %v1702 = vld [vmem:[%s1687 + $0x70] sm:$0xff]
      %v1703 = vld [vmem:[%s1687 + $0x78] sm:$0xff]
      %v1704 = vld [vmem:[%s1687 + $0x80] sm:$0xff]
      %v1705 = vld [vmem:[%s1687 + $0x88] sm:$0xff]
      %v1706 = vld [vmem:[%s1687 + $0x90] sm:$0xff]
      %v1707 = vld [vmem:[%s1687 + $0x98] sm:$0xff]
      %v1708 = vld [vmem:[%s1687 + $0xa0] sm:$0xff]
      %v1709 = vld [vmem:[%s1687 + $0xa8] sm:$0xff]
      %v1710 = vld [vmem:[%s1687 + $0xb0] sm:$0xff]
      %v1711 = vld [vmem:[%s1687 + $0xb8] sm:$0xff]
      %v1712 = vld [vmem:[%s1687 + $0xc0] sm:$0xff]
      %v1713 = vld [vmem:[%s1687 + $0xc8] sm:$0xff]
      %v1714 = vld [vmem:[%s1687 + $0xd0] sm:$0xff]
      %v1715 = vld [vmem:[%s1687 + $0xd8] sm:$0xff]
      %v1716 = vld [vmem:[%s1687 + $0xe0] sm:$0xff]
      %v1717 = vld [vmem:[%s1687 + $0xe8] sm:$0xff]
      %v1718 = vld [vmem:[%s1687 + $0xf0] sm:$0xff]
      %v1719 = vld [vmem:[%s1687 + $0xf8] sm:$0xff]
      %v1720 = vld [vmem:[%s1687 + $0x100] sm:$0xff]
      %v1721 = vld [vmem:[%s1687 + $0x108] sm:$0xff]
      %v1722 = vld [vmem:[%s1687 + $0x110] sm:$0xff]
      %v1723 = vld [vmem:[%s1687 + $0x118] sm:$0xff]
      %v1724 = vld [vmem:[%s1687 + $0x120] sm:$0xff]
      %v1725 = vld [vmem:[%s1687 + $0x128] sm:$0xff]
      %v1726 = vld [vmem:[%s1687 + $0x130] sm:$0xff]
      %v1727 = vld [vmem:[%s1687 + $0x138] sm:$0xff]
      %v1728 = vld [vmem:[%s1687 + $0x140] sm:$0xff]
      %v1729 = vld [vmem:[%s1687 + $0x148] sm:$0xff]
      %v1730 = vld [vmem:[%s1687 + $0x150] sm:$0xff]
      %v1731 = vld [vmem:[%s1687 + $0x158] sm:$0xff]
      %v1732 = vld [vmem:[%s1687 + $0x160] sm:$0xff]
      %v1733 = vld [vmem:[%s1687 + $0x168] sm:$0xff]
      %v1734 = vld [vmem:[%s1687 + $0x170] sm:$0xff]
      %v1735 = vld [vmem:[%s1687 + $0x178] sm:$0xff]
      %1736 = vmatprep.subr.mxu0 %v1734
      %1737 = vmatpush1.msra.mxu0 %v1733
      %1738 = vmatprep.subr.mxu0 %v1731
      %1739 = vmatpush1.msra.mxu0 %v1730
      %1740 = vmatprep.subr.mxu0 %v1728
      %1741 = vmatpush1.msra.mxu0 %v1727
      %1742 = vmatprep.subr.mxu0 %v1725
      %1743 = vmatpush1.msra.mxu0 %v1724
      %1744 = vmatprep.subr.mxu0 %v1722
      %1745 = vmatpush1.msra.mxu0 %v1721
      %1746 = vmatprep.subr.mxu0 %v1719
      %1747 = vmatpush1.msra.mxu0 %v1718
      %1748 = vmatprep.subr.mxu0 %v1716
      %1749 = vmatpush1.msra.mxu0 %v1715
      %1750 = vmatprep.subr.mxu0 %v1713
      %1751 = vmatpush1.msra.mxu0 %v1712
      %1752 = vmatprep.subr.mxu0 %v1710
      %1753 = vmatpush1.msra.mxu0 %v1709
      %1754 = vmatprep.subr.mxu0 %v1707
      %1755 = vmatpush1.msra.mxu0 %v1706
      %1756 = vmatprep.subr.mxu0 %v1704
      %1757 = vmatpush1.msra.mxu0 %v1703
      %1758 = vmatprep.subr.mxu0 %v1701
      %1759 = vmatpush1.msra.mxu0 %v1700
      %1760 = vmatprep.subr.mxu0 %v1698
      %1761 = vmatpush1.msra.mxu0 %v1697
      %1762 = vmatprep.subr.mxu0 %v1695
      %1763 = vmatpush1.msra.mxu0 %v1694
      %1764 = vmatprep.subr.mxu0 %v1692
      %1765 = vmatpush1.msra.mxu0 %v1691
      %1766 = vmatprep.subr.mxu0 %v1689
      %1767 = vmatpush1.msra.mxu0 %v1688
      %1768 = vmatprep.subr.mxu0 0.0
      %1769 = vmatpush2.msra.mxu0 0.0
      %1770 = vmatprep.subr.mxu0 0.0
      %1771 = vmatpush2.msra.mxu0 0.0
      %1772 = vmatprep.subr.mxu0 0.0
      %1773 = vmatpush2.msra.mxu0 0.0
      %1774 = vmatprep.subr.mxu0 0.0
      %1775 = vmatpush2.msra.mxu0 0.0
      %1776 = vmatprep.subr.mxu0 0.0
      %1777 = vmatpush2.msra.mxu0 0.0
      %1778 = vmatprep.subr.mxu0 0.0
      %1779 = vmatpush2.msra.mxu0 0.0
      %1780 = vmatprep.subr.mxu0 0.0
      %1781 = vmatpush2.msra.mxu0 0.0
      %1782 = vmatprep.subr.mxu0 0.0
      %1783 = vmatpush2.msra.mxu0 0.0
      %1784 = vmatprep.subr.mxu0 0.0
      %1785 = vmatpush2.msra.mxu0 0.0
      %1786 = vmatprep.subr.mxu0 0.0
      %1787 = vmatpush2.msra.mxu0 0.0
      %1788 = vmatprep.subr.mxu0 0.0
      %1789 = vmatpush2.msra.mxu0 0.0
      %1790 = vmatprep.subr.mxu0 0.0
      %1791 = vmatpush2.msra.mxu0 0.0
      %1792 = vmatprep.subr.mxu0 0.0
      %1793 = vmatpush2.msra.mxu0 0.0
      %1794 = vmatprep.subr.mxu0 0.0
      %1795 = vmatpush2.msra.mxu0 0.0
      %1796 = vmatprep.subr.mxu0 0.0
      %1797 = vmatpush2.msra.mxu0 0.0
      %1798 = vmatprep.subr.mxu0 0.0
      %1799 = vmatpush2.msra.mxu0 0.0
      %1800 = vmatprep.mubr.f32.mxu0 0.0
      %1801 = vmatmul.mubr.f32.gmra.mxu0 %v580
      %v1802 = vpop.f32.mrf.mxu0
      %v1803 = vadd.f32 0.0, %v1802
      %v1804 = vpop.f32.mrf.mxu0
      %v1805 = vadd.f32 0.0, %v1804
      %1806 = vmatprep.mubr.f32.mxu0 0.0
      %1807 = vmatmul.mubr.f32.gmra.mxu0 %v581
      %v1808 = vpop.f32.mrf.mxu0
      %v1809 = vadd.f32 0.0, %v1808
      %v1810 = vpop.f32.mrf.mxu0
      %v1811 = vadd.f32 0.0, %v1810
      %1812 = vmatprep.mubr.f32.mxu0 0.0
      %1813 = vmatmul.mubr.f32.gmra.mxu0 %v582
      %v1814 = vpop.f32.mrf.mxu0
      %v1815 = vadd.f32 0.0, %v1814
      %v1816 = vpop.f32.mrf.mxu0
      %v1817 = vadd.f32 0.0, %v1816
      %1818 = vmatprep.mubr.f32.mxu0 0.0
      %1819 = vmatmul.mubr.f32.gmra.mxu0 %v583
      %v1820 = vpop.f32.mrf.mxu0
      %v1821 = vadd.f32 0.0, %v1820
      %v1822 = vpop.f32.mrf.mxu0
      %v1823 = vadd.f32 0.0, %v1822
      %1824 = vmatprep.mubr.f32.mxu0 0.0
      %1825 = vmatmul.mubr.f32.gmra.mxu0 %v584
      %v1826 = vpop.f32.mrf.mxu0
      %v1827 = vadd.f32 0.0, %v1826
      %v1828 = vpop.f32.mrf.mxu0
      %v1829 = vadd.f32 0.0, %v1828
      %1830 = vmatprep.mubr.f32.mxu0 0.0
      %1831 = vmatmul.mubr.f32.gmra.mxu0 %v585
      %v1832 = vpop.f32.mrf.mxu0
      %v1833 = vadd.f32 0.0, %v1832
      %v1834 = vpop.f32.mrf.mxu0
      %v1835 = vadd.f32 0.0, %v1834
      %1836 = vmatprep.mubr.f32.mxu0 0.0
      %1837 = vmatmul.mubr.f32.gmra.mxu0 %v586
      %v1838 = vpop.f32.mrf.mxu0
      %v1839 = vadd.f32 0.0, %v1838
      %v1840 = vpop.f32.mrf.mxu0
      %v1841 = vadd.f32 0.0, %v1840
      %1842 = vmatprep.mubr.f32.mxu0 0.0
      %1843 = vmatmul.mubr.f32.gmra.mxu0 %v587
      %v1844 = vpop.f32.mrf.mxu0
      %v1845 = vadd.f32 0.0, %v1844
      %v1846 = vpop.f32.mrf.mxu0
      %v1847 = vadd.f32 0.0, %v1846
      %1848 = vmatprep.mubr.f32.mxu0 0.0
      %1849 = vmatmul.mubr.f32.gmra.mxu0 %v588
      %v1850 = vpop.f32.mrf.mxu0
      %v1851 = vadd.f32 0.0, %v1850
      %v1852 = vpop.f32.mrf.mxu0
      %v1853 = vadd.f32 0.0, %v1852
      %1854 = vmatprep.mubr.f32.mxu0 0.0
      %1855 = vmatmul.mubr.f32.gmra.mxu0 %v589
      %v1856 = vpop.f32.mrf.mxu0
      %v1857 = vadd.f32 0.0, %v1856
      %v1858 = vpop.f32.mrf.mxu0
      %v1859 = vadd.f32 0.0, %v1858
      %1860 = vmatprep.mubr.f32.mxu0 0.0
      %1861 = vmatmul.mubr.f32.gmra.mxu0 %v590
      %v1862 = vpop.f32.mrf.mxu0
      %v1863 = vadd.f32 0.0, %v1862
      %v1864 = vpop.f32.mrf.mxu0
      %v1865 = vadd.f32 0.0, %v1864
      %1866 = vmatprep.mubr.f32.mxu0 0.0
      %1867 = vmatmul.mubr.f32.gmra.mxu0 %v591
      %v1868 = vpop.f32.mrf.mxu0
      %v1869 = vadd.f32 0.0, %v1868
      %v1870 = vpop.f32.mrf.mxu0
      %v1871 = vadd.f32 0.0, %v1870
      %1872 = vmatprep.mubr.f32.mxu0 0.0
      %1873 = vmatmul.mubr.f32.gmra.mxu0 %v592
      %v1874 = vpop.f32.mrf.mxu0
      %v1875 = vadd.f32 0.0, %v1874
      %v1876 = vpop.f32.mrf.mxu0
      %v1877 = vadd.f32 0.0, %v1876
      %1878 = vmatprep.mubr.f32.mxu0 0.0
      %1879 = vmatmul.mubr.f32.gmra.mxu0 %v593
      %v1880 = vpop.f32.mrf.mxu0
      %v1881 = vadd.f32 0.0, %v1880
      %v1882 = vpop.f32.mrf.mxu0
      %v1883 = vadd.f32 0.0, %v1882
      %1884 = vmatprep.mubr.f32.mxu0 0.0
      %1885 = vmatmul.mubr.f32.gmra.mxu0 %v594
      %v1886 = vpop.f32.mrf.mxu0
      %v1887 = vadd.f32 0.0, %v1886
      %v1888 = vpop.f32.mrf.mxu0
      %v1889 = vadd.f32 0.0, %v1888
      %1890 = vmatprep.mubr.f32.mxu0 0.0
      %1891 = vmatmul.mubr.f32.gmra.mxu0 %v595
      %v1892 = vpop.f32.mrf.mxu0
      %v1893 = vadd.f32 0.0, %v1892
      %v1894 = vpop.f32.mrf.mxu0
      %v1895 = vadd.f32 0.0, %v1894
      %1896 = vmatprep.mubr.f32.mxu0 0.0
      %1897 = vmatmul.mubr.f32.gmra.mxu0 %v596
      %v1898 = vpop.f32.mrf.mxu0
      %v1899 = vadd.f32 0.0, %v1898
      %v1900 = vpop.f32.mrf.mxu0
      %v1901 = vadd.f32 0.0, %v1900
      %1902 = vmatprep.mubr.f32.mxu0 0.0
      %1903 = vmatmul.mubr.f32.gmra.mxu0 %v597
      %v1904 = vpop.f32.mrf.mxu0
      %v1905 = vadd.f32 0.0, %v1904
      %v1906 = vpop.f32.mrf.mxu0
      %v1907 = vadd.f32 0.0, %v1906
      %1908 = vmatprep.mubr.f32.mxu0 0.0
      %1909 = vmatmul.mubr.f32.gmra.mxu0 %v598
      %v1910 = vpop.f32.mrf.mxu0
      %v1911 = vadd.f32 0.0, %v1910
      %v1912 = vpop.f32.mrf.mxu0
      %v1913 = vadd.f32 0.0, %v1912
      %1914 = vmatprep.mubr.f32.mxu0 0.0
      %1915 = vmatmul.mubr.f32.gmra.mxu0 %v599
      %v1916 = vpop.f32.mrf.mxu0
      %v1917 = vadd.f32 0.0, %v1916
      %v1918 = vpop.f32.mrf.mxu0
      %v1919 = vadd.f32 0.0, %v1918
      %1920 = vmatprep.mubr.f32.mxu0 0.0
      %1921 = vmatmul.mubr.f32.gmra.mxu0 %v600
      %v1922 = vpop.f32.mrf.mxu0
      %v1923 = vadd.f32 0.0, %v1922
      %v1924 = vpop.f32.mrf.mxu0
      %v1925 = vadd.f32 0.0, %v1924
      %1926 = vmatprep.mubr.f32.mxu0 0.0
      %1927 = vmatmul.mubr.f32.gmra.mxu0 %v601
      %v1928 = vpop.f32.mrf.mxu0
      %v1929 = vadd.f32 0.0, %v1928
      %v1930 = vpop.f32.mrf.mxu0
      %v1931 = vadd.f32 0.0, %v1930
      %1932 = vmatprep.mubr.f32.mxu0 0.0
      %1933 = vmatmul.mubr.f32.gmra.mxu0 %v602
      %v1934 = vpop.f32.mrf.mxu0
      %v1935 = vadd.f32 0.0, %v1934
      %v1936 = vpop.f32.mrf.mxu0
      %v1937 = vadd.f32 0.0, %v1936
      %1938 = vmatprep.mubr.f32.mxu0 0.0
      %1939 = vmatmul.mubr.f32.gmra.mxu0 %v603
      %v1940 = vpop.f32.mrf.mxu0
      %v1941 = vadd.f32 0.0, %v1940
      %v1942 = vpop.f32.mrf.mxu0
      %v1943 = vadd.f32 0.0, %v1942
      %1944 = vmatprep.mubr.f32.mxu0 0.0
      %1945 = vmatmul.mubr.f32.gmra.mxu0 %v604
      %v1946 = vpop.f32.mrf.mxu0
      %v1947 = vadd.f32 0.0, %v1946
      %v1948 = vpop.f32.mrf.mxu0
      %v1949 = vadd.f32 0.0, %v1948
      %1950 = vmatprep.mubr.f32.mxu0 0.0
      %1951 = vmatmul.mubr.f32.gmra.mxu0 %v605
      %v1952 = vpop.f32.mrf.mxu0
      %v1953 = vadd.f32 0.0, %v1952
      %v1954 = vpop.f32.mrf.mxu0
      %v1955 = vadd.f32 0.0, %v1954
      %1956 = vmatprep.mubr.f32.mxu0 0.0
      %1957 = vmatmul.mubr.f32.gmra.mxu0 %v606
      %v1958 = vpop.f32.mrf.mxu0
      %v1959 = vadd.f32 0.0, %v1958
      %v1960 = vpop.f32.mrf.mxu0
      %v1961 = vadd.f32 0.0, %v1960
      %1962 = vmatprep.mubr.f32.mxu0 0.0
      %1963 = vmatmul.mubr.f32.gmra.mxu0 %v607
      %v1964 = vpop.f32.mrf.mxu0
      %v1965 = vadd.f32 0.0, %v1964
      %v1966 = vpop.f32.mrf.mxu0
      %v1967 = vadd.f32 0.0, %v1966
      %1968 = vmatprep.mubr.f32.mxu0 0.0
      %1969 = vmatmul.mubr.f32.gmra.mxu0 %v608
      %v1970 = vpop.f32.mrf.mxu0
      %v1971 = vadd.f32 0.0, %v1970
      %v1972 = vpop.f32.mrf.mxu0
      %v1973 = vadd.f32 0.0, %v1972
      %1974 = vmatprep.mubr.f32.mxu0 0.0
      %1975 = vmatmul.mubr.f32.gmra.mxu0 %v609
      %v1976 = vpop.f32.mrf.mxu0
      %v1977 = vadd.f32 0.0, %v1976
      %v1978 = vpop.f32.mrf.mxu0
      %v1979 = vadd.f32 0.0, %v1978
      %1980 = vmatprep.mubr.f32.mxu0 0.0
      %1981 = vmatmul.mubr.f32.gmra.mxu0 %v624
      %v1982 = vpop.f32.mrf.mxu0
      %v1983 = vadd.f32 0.0, %v1982
      %v1984 = vpop.f32.mrf.mxu0
      %v1985 = vadd.f32 0.0, %v1984
      %1986 = vmatprep.mubr.f32.mxu0 0.0
      %1987 = vmatmul.mubr.f32.gmra.mxu0 %v625
      %v1988 = vpop.f32.mrf.mxu0
      %v1989 = vadd.f32 0.0, %v1988
      %v1990 = vpop.f32.mrf.mxu0
      %v1991 = vadd.f32 0.0, %v1990
      %1992 = vdwg.mxu0
      %1993 = vmatprep.subr.mxu0 0.0
      %1994 = vmatpush1.msra.mxu0 %v1735
      %1995 = vmatprep.subr.mxu0 0.0
      %1996 = vmatpush1.msra.mxu0 %v1732
      %1997 = vmatprep.subr.mxu0 0.0
      %1998 = vmatpush1.msra.mxu0 %v1729
      %1999 = vmatprep.subr.mxu0 0.0
      %2000 = vmatpush1.msra.mxu0 %v1726
      %2001 = vmatprep.subr.mxu0 0.0
      %2002 = vmatpush1.msra.mxu0 %v1723
      %2003 = vmatprep.subr.mxu0 0.0
      %2004 = vmatpush1.msra.mxu0 %v1720
      %2005 = vmatprep.subr.mxu0 0.0
      %2006 = vmatpush1.msra.mxu0 %v1717
      %2007 = vmatprep.subr.mxu0 0.0
      %2008 = vmatpush1.msra.mxu0 %v1714
      %2009 = vmatprep.subr.mxu0 0.0
      %2010 = vmatpush1.msra.mxu0 %v1711
      %2011 = vmatprep.subr.mxu0 0.0
      %2012 = vmatpush1.msra.mxu0 %v1708
      %2013 = vmatprep.subr.mxu0 0.0
      %2014 = vmatpush1.msra.mxu0 %v1705
      %2015 = vmatprep.subr.mxu0 0.0
      %2016 = vmatpush1.msra.mxu0 %v1702
      %2017 = vmatprep.subr.mxu0 0.0
      %2018 = vmatpush1.msra.mxu0 %v1699
      %2019 = vmatprep.subr.mxu0 0.0
      %2020 = vmatpush1.msra.mxu0 %v1696
      %2021 = vmatprep.subr.mxu0 0.0
      %2022 = vmatpush1.msra.mxu0 %v1693
      %2023 = vmatprep.subr.mxu0 0.0
      %2024 = vmatpush1.msra.mxu0 %v1690
      %2025 = vmatprep.subr.mxu0 0.0
      %2026 = vmatpush2.msra.mxu0 0.0
      %2027 = vmatprep.subr.mxu0 0.0
      %2028 = vmatpush2.msra.mxu0 0.0
      %2029 = vmatprep.subr.mxu0 0.0
      %2030 = vmatpush2.msra.mxu0 0.0
      %2031 = vmatprep.subr.mxu0 0.0
      %2032 = vmatpush2.msra.mxu0 0.0
      %2033 = vmatprep.subr.mxu0 0.0
      %2034 = vmatpush2.msra.mxu0 0.0
      %2035 = vmatprep.subr.mxu0 0.0
      %2036 = vmatpush2.msra.mxu0 0.0
      %2037 = vmatprep.subr.mxu0 0.0
      %2038 = vmatpush2.msra.mxu0 0.0
      %2039 = vmatprep.subr.mxu0 0.0
      %2040 = vmatpush2.msra.mxu0 0.0
      %2041 = vmatprep.subr.mxu0 0.0
      %2042 = vmatpush2.msra.mxu0 0.0
      %2043 = vmatprep.subr.mxu0 0.0
      %2044 = vmatpush2.msra.mxu0 0.0
      %2045 = vmatprep.subr.mxu0 0.0
      %2046 = vmatpush2.msra.mxu0 0.0
      %2047 = vmatprep.subr.mxu0 0.0
      %2048 = vmatpush2.msra.mxu0 0.0
      %2049 = vmatprep.subr.mxu0 0.0
      %2050 = vmatpush2.msra.mxu0 0.0
      %2051 = vmatprep.subr.mxu0 0.0
      %2052 = vmatpush2.msra.mxu0 0.0
      %2053 = vmatprep.subr.mxu0 0.0
      %2054 = vmatpush2.msra.mxu0 0.0
      %2055 = vmatprep.subr.mxu0 0.0
      %2056 = vmatpush2.msra.mxu0 0.0
      %2057 = vmatprep.mubr.f32.mxu0 0.0
      %2058 = vmatmul.mubr.f32.gmra.mxu0 %v580
      %v2059 = vpop.f32.mrf.mxu0
      %v2060 = vadd.f32 0.0, %v2059
      %v2061 = vpop.f32.mrf.mxu0
      %2062 = vmatprep.mubr.f32.mxu0 0.0
      %2063 = vmatmul.mubr.f32.gmra.mxu0 %v581
      %v2064 = vpop.f32.mrf.mxu0
      %v2065 = vadd.f32 0.0, %v2064
      %v2066 = vpop.f32.mrf.mxu0
      %2067 = vmatprep.mubr.f32.mxu0 0.0
      %2068 = vmatmul.mubr.f32.gmra.mxu0 %v582
      %v2069 = vpop.f32.mrf.mxu0
      %v2070 = vadd.f32 0.0, %v2069
      %v2071 = vpop.f32.mrf.mxu0
      %2072 = vmatprep.mubr.f32.mxu0 0.0
      %2073 = vmatmul.mubr.f32.gmra.mxu0 %v583
      %v2074 = vpop.f32.mrf.mxu0
      %v2075 = vadd.f32 0.0, %v2074
      %v2076 = vpop.f32.mrf.mxu0
      %2077 = vmatprep.mubr.f32.mxu0 0.0
      %2078 = vmatmul.mubr.f32.gmra.mxu0 %v584
      %v2079 = vpop.f32.mrf.mxu0
      %v2080 = vadd.f32 0.0, %v2079
      %v2081 = vpop.f32.mrf.mxu0
      %2082 = vmatprep.mubr.f32.mxu0 0.0
      %2083 = vmatmul.mubr.f32.gmra.mxu0 %v585
      %v2084 = vpop.f32.mrf.mxu0
      %v2085 = vadd.f32 0.0, %v2084
      %v2086 = vpop.f32.mrf.mxu0
      %2087 = vmatprep.mubr.f32.mxu0 0.0
      %2088 = vmatmul.mubr.f32.gmra.mxu0 %v586
      %v2089 = vpop.f32.mrf.mxu0
      %v2090 = vadd.f32 0.0, %v2089
      %v2091 = vpop.f32.mrf.mxu0
      %2092 = vmatprep.mubr.f32.mxu0 0.0
      %2093 = vmatmul.mubr.f32.gmra.mxu0 %v587
      %v2094 = vpop.f32.mrf.mxu0
      %v2095 = vadd.f32 0.0, %v2094
      %v2096 = vpop.f32.mrf.mxu0
      %2097 = vmatprep.mubr.f32.mxu0 0.0
      %2098 = vmatmul.mubr.f32.gmra.mxu0 %v588
      %v2099 = vpop.f32.mrf.mxu0
      %v2100 = vadd.f32 0.0, %v2099
      %v2101 = vpop.f32.mrf.mxu0
      %2102 = vmatprep.mubr.f32.mxu0 0.0
      %2103 = vmatmul.mubr.f32.gmra.mxu0 %v589
      %v2104 = vpop.f32.mrf.mxu0
      %v2105 = vadd.f32 0.0, %v2104
      %v2106 = vpop.f32.mrf.mxu0
      %2107 = vmatprep.mubr.f32.mxu0 0.0
      %2108 = vmatmul.mubr.f32.gmra.mxu0 %v590
      %v2109 = vpop.f32.mrf.mxu0
      %v2110 = vadd.f32 0.0, %v2109
      %v2111 = vpop.f32.mrf.mxu0
      %2112 = vmatprep.mubr.f32.mxu0 0.0
      %2113 = vmatmul.mubr.f32.gmra.mxu0 %v591
      %v2114 = vpop.f32.mrf.mxu0
      %v2115 = vadd.f32 0.0, %v2114
      %v2116 = vpop.f32.mrf.mxu0
      %2117 = vmatprep.mubr.f32.mxu0 0.0
      %2118 = vmatmul.mubr.f32.gmra.mxu0 %v592
      %v2119 = vpop.f32.mrf.mxu0
      %v2120 = vadd.f32 0.0, %v2119
      %v2121 = vpop.f32.mrf.mxu0
      %2122 = vmatprep.mubr.f32.mxu0 0.0
      %2123 = vmatmul.mubr.f32.gmra.mxu0 %v593
      %v2124 = vpop.f32.mrf.mxu0
      %v2125 = vadd.f32 0.0, %v2124
      %v2126 = vpop.f32.mrf.mxu0
      %2127 = vmatprep.mubr.f32.mxu0 0.0
      %2128 = vmatmul.mubr.f32.gmra.mxu0 %v594
      %v2129 = vpop.f32.mrf.mxu0
      %v2130 = vadd.f32 0.0, %v2129
      %v2131 = vpop.f32.mrf.mxu0
      %2132 = vmatprep.mubr.f32.mxu0 0.0
      %2133 = vmatmul.mubr.f32.gmra.mxu0 %v595
      %v2134 = vpop.f32.mrf.mxu0
      %v2135 = vadd.f32 0.0, %v2134
      %v2136 = vpop.f32.mrf.mxu0
      %2137 = vmatprep.mubr.f32.mxu0 0.0
      %2138 = vmatmul.mubr.f32.gmra.mxu0 %v596
      %v2139 = vpop.f32.mrf.mxu0
      %v2140 = vadd.f32 0.0, %v2139
      %v2141 = vpop.f32.mrf.mxu0
      %2142 = vmatprep.mubr.f32.mxu0 0.0
      %2143 = vmatmul.mubr.f32.gmra.mxu0 %v597
      %v2144 = vpop.f32.mrf.mxu0
      %v2145 = vadd.f32 0.0, %v2144
      %v2146 = vpop.f32.mrf.mxu0
      %2147 = vmatprep.mubr.f32.mxu0 0.0
      %2148 = vmatmul.mubr.f32.gmra.mxu0 %v598
      %v2149 = vpop.f32.mrf.mxu0
      %v2150 = vadd.f32 0.0, %v2149
      %v2151 = vpop.f32.mrf.mxu0
      %2152 = vmatprep.mubr.f32.mxu0 0.0
      %2153 = vmatmul.mubr.f32.gmra.mxu0 %v599
      %v2154 = vpop.f32.mrf.mxu0
      %v2155 = vadd.f32 0.0, %v2154
      %v2156 = vpop.f32.mrf.mxu0
      %2157 = vmatprep.mubr.f32.mxu0 0.0
      %2158 = vmatmul.mubr.f32.gmra.mxu0 %v600
      %v2159 = vpop.f32.mrf.mxu0
      %v2160 = vadd.f32 0.0, %v2159
      %v2161 = vpop.f32.mrf.mxu0
      %2162 = vmatprep.mubr.f32.mxu0 0.0
      %2163 = vmatmul.mubr.f32.gmra.mxu0 %v601
      %v2164 = vpop.f32.mrf.mxu0
      %v2165 = vadd.f32 0.0, %v2164
      %v2166 = vpop.f32.mrf.mxu0
      %2167 = vmatprep.mubr.f32.mxu0 0.0
      %2168 = vmatmul.mubr.f32.gmra.mxu0 %v602
      %v2169 = vpop.f32.mrf.mxu0
      %v2170 = vadd.f32 0.0, %v2169
      %v2171 = vpop.f32.mrf.mxu0
      %2172 = vmatprep.mubr.f32.mxu0 0.0
      %2173 = vmatmul.mubr.f32.gmra.mxu0 %v603
      %v2174 = vpop.f32.mrf.mxu0
      %v2175 = vadd.f32 0.0, %v2174
      %v2176 = vpop.f32.mrf.mxu0
      %2177 = vmatprep.mubr.f32.mxu0 0.0
      %2178 = vmatmul.mubr.f32.gmra.mxu0 %v604
      %v2179 = vpop.f32.mrf.mxu0
      %v2180 = vadd.f32 0.0, %v2179
      %v2181 = vpop.f32.mrf.mxu0
      %2182 = vmatprep.mubr.f32.mxu0 0.0
      %2183 = vmatmul.mubr.f32.gmra.mxu0 %v605
      %v2184 = vpop.f32.mrf.mxu0
      %v2185 = vadd.f32 0.0, %v2184
      %v2186 = vpop.f32.mrf.mxu0
      %2187 = vmatprep.mubr.f32.mxu0 0.0
      %2188 = vmatmul.mubr.f32.gmra.mxu0 %v606
      %v2189 = vpop.f32.mrf.mxu0
      %v2190 = vadd.f32 0.0, %v2189
      %v2191 = vpop.f32.mrf.mxu0
      %2192 = vmatprep.mubr.f32.mxu0 0.0
      %2193 = vmatmul.mubr.f32.gmra.mxu0 %v607
      %v2194 = vpop.f32.mrf.mxu0
      %v2195 = vadd.f32 0.0, %v2194
      %v2196 = vpop.f32.mrf.mxu0
      %2197 = vmatprep.mubr.f32.mxu0 0.0
      %2198 = vmatmul.mubr.f32.gmra.mxu0 %v608
      %v2199 = vpop.f32.mrf.mxu0
      %v2200 = vadd.f32 0.0, %v2199
      %v2201 = vpop.f32.mrf.mxu0
      %2202 = vmatprep.mubr.f32.mxu0 0.0
      %2203 = vmatmul.mubr.f32.gmra.mxu0 %v609
      %v2204 = vpop.f32.mrf.mxu0
      %v2205 = vadd.f32 0.0, %v2204
      %v2206 = vpop.f32.mrf.mxu0
      %2207 = vmatprep.mubr.f32.mxu0 0.0
      %2208 = vmatmul.mubr.f32.gmra.mxu0 %v624
      %v2209 = vpop.f32.mrf.mxu0
      %v2210 = vadd.f32 0.0, %v2209
      %v2211 = vpop.f32.mrf.mxu0
      %2212 = vmatprep.mubr.f32.mxu0 0.0
      %2213 = vmatmul.mubr.f32.gmra.mxu0 %v625
      %v2214 = vpop.f32.mrf.mxu0
      %v2215 = vadd.f32 0.0, %v2214
      %v2216 = vpop.f32.mrf.mxu0
      %2217 = vdwg.mxu0
      %v2218 = vadd.f32 %v1272, %v1803
      %v2219 = vadd.f32 %v1274, %v1805
      %v2220 = vadd.f32 %v1529, %v2060
      %v2221 = vadd.f32 %v1278, %v1809
      %v2222 = vadd.f32 %v1280, %v1811
      %v2223 = vadd.f32 %v1534, %v2065
      %v2224 = vadd.f32 %v1284, %v1815
      %v2225 = vadd.f32 %v1286, %v1817
      %v2226 = vadd.f32 %v1539, %v2070
      %v2227 = vadd.f32 %v1290, %v1821
      %v2228 = vadd.f32 %v1292, %v1823
      %v2229 = vadd.f32 %v1544, %v2075
      %v2230 = vadd.f32 %v1296, %v1827
      %v2231 = vadd.f32 %v1298, %v1829
      %v2232 = vadd.f32 %v1549, %v2080
      %v2233 = vadd.f32 %v1302, %v1833
      %v2234 = vadd.f32 %v1304, %v1835
      %v2235 = vadd.f32 %v1554, %v2085
      %v2236 = vadd.f32 %v1308, %v1839
      %v2237 = vadd.f32 %v1310, %v1841
      %v2238 = vadd.f32 %v1559, %v2090
      %v2239 = vadd.f32 %v1314, %v1845
      %v2240 = vadd.f32 %v1316, %v1847
      %v2241 = vadd.f32 %v1564, %v2095
      %v2242 = vadd.f32 %v1320, %v1851
      %v2243 = vadd.f32 %v1322, %v1853
      %v2244 = vadd.f32 %v1569, %v2100
      %v2245 = vadd.f32 %v1326, %v1857
      %v2246 = vadd.f32 %v1328, %v1859
      %v2247 = vadd.f32 %v1574, %v2105
      %v2248 = vadd.f32 %v1332, %v1863
      %v2249 = vadd.f32 %v1334, %v1865
      %v2250 = vadd.f32 %v1579, %v2110
      %v2251 = vadd.f32 %v1338, %v1869
      %v2252 = vadd.f32 %v1340, %v1871
      %v2253 = vadd.f32 %v1584, %v2115
      %v2254 = vadd.f32 %v1344, %v1875
      %v2255 = vadd.f32 %v1346, %v1877
      %v2256 = vadd.f32 %v1589, %v2120
      %v2257 = vadd.f32 %v1350, %v1881
      %v2258 = vadd.f32 %v1352, %v1883
      %v2259 = vadd.f32 %v1594, %v2125
      %v2260 = vadd.f32 %v1356, %v1887
      %v2261 = vadd.f32 %v1358, %v1889
      %v2262 = vadd.f32 %v1599, %v2130
      %v2263 = vadd.f32 %v1362, %v1893
      %v2264 = vadd.f32 %v1364, %v1895
      %v2265 = vadd.f32 %v1604, %v2135
      %v2266 = vadd.f32 %v1368, %v1899
      %v2267 = vadd.f32 %v1370, %v1901
      %v2268 = vadd.f32 %v1609, %v2140
      %v2269 = vadd.f32 %v1374, %v1905
      %v2270 = vadd.f32 %v1376, %v1907
      %v2271 = vadd.f32 %v1614, %v2145
      %v2272 = vadd.f32 %v1380, %v1911
      %v2273 = vadd.f32 %v1382, %v1913
      %v2274 = vadd.f32 %v1619, %v2150
      %v2275 = vadd.f32 %v1386, %v1917
      %v2276 = vadd.f32 %v1388, %v1919
      %v2277 = vadd.f32 %v1624, %v2155
      %v2278 = vadd.f32 %v1392, %v1923
      %v2279 = vadd.f32 %v1394, %v1925
      %v2280 = vadd.f32 %v1629, %v2160
      %v2281 = vadd.f32 %v1398, %v1929
      %v2282 = vadd.f32 %v1400, %v1931
      %v2283 = vadd.f32 %v1634, %v2165
      %v2284 = vadd.f32 %v1404, %v1935
      %v2285 = vadd.f32 %v1406, %v1937
      %v2286 = vadd.f32 %v1639, %v2170
      %v2287 = vadd.f32 %v1410, %v1941
      %v2288 = vadd.f32 %v1412, %v1943
      %v2289 = vadd.f32 %v1644, %v2175
      %v2290 = vadd.f32 %v1416, %v1947
      %v2291 = vadd.f32 %v1418, %v1949
      %v2292 = vadd.f32 %v1649, %v2180
      %v2293 = vadd.f32 %v1422, %v1953
      %v2294 = vadd.f32 %v1424, %v1955
      %v2295 = vadd.f32 %v1654, %v2185
      %v2296 = vadd.f32 %v1428, %v1959
      %v2297 = vadd.f32 %v1430, %v1961
      %v2298 = vadd.f32 %v1659, %v2190
      %v2299 = vadd.f32 %v1434, %v1965
      %v2300 = vadd.f32 %v1436, %v1967
      %v2301 = vadd.f32 %v1664, %v2195
      %v2302 = vadd.f32 %v1440, %v1971
      %v2303 = vadd.f32 %v1442, %v1973
      %v2304 = vadd.f32 %v1669, %v2200
      %v2305 = vadd.f32 %v1446, %v1977
      %v2306 = vadd.f32 %v1448, %v1979
      %v2307 = vadd.f32 %v1674, %v2205
      %v2308 = vadd.f32 %v1452, %v1983
      %v2309 = vadd.f32 %v1454, %v1985
      %v2310 = vadd.f32 %v1679, %v2210
      %v2311 = vadd.f32 %v1458, %v1989
      %v2312 = vadd.f32 %v1460, %v1991
      %v2313 = vadd.f32 %v1684, %v2215
      %vm2346 = vcmask 1040384
      %v2347 = vrot.slane %v2218, 7
      %v2348 = vrot.slane %v2221, 7
      %v2349 = vsel %vm2346, %v2347, %v2348
      %v2350 = vrot.slane %v2224, 7
      %v2351 = vrot.slane %v2227, 7
      %v2352 = vsel %vm2346, %v2350, %v2351
      %v2353 = vrot.slane %v2230, 7
      %v2354 = vrot.slane %v2233, 7
      %v2355 = vsel %vm2346, %v2353, %v2354
      %v2356 = vrot.slane %v2236, 7
      %v2357 = vrot.slane %v2239, 7
      %v2358 = vsel %vm2346, %v2356, %v2357
      %v2359 = vrot.slane %v2242, 7
      %v2360 = vrot.slane %v2245, 7
      %v2361 = vsel %vm2346, %v2359, %v2360
      %v2362 = vrot.slane %v2248, 7
      %v2363 = vrot.slane %v2251, 7
      %v2364 = vsel %vm2346, %v2362, %v2363
      %v2365 = vrot.slane %v2254, 7
      %v2366 = vrot.slane %v2257, 7
      %v2367 = vsel %vm2346, %v2365, %v2366
      %v2368 = vrot.slane %v2260, 7
      %v2369 = vrot.slane %v2263, 7
      %v2370 = vsel %vm2346, %v2368, %v2369
      %v2371 = vrot.slane %v2266, 7
      %v2372 = vrot.slane %v2269, 7
      %v2373 = vsel %vm2346, %v2371, %v2372
      %v2374 = vrot.slane %v2272, 7
      %v2375 = vrot.slane %v2275, 7
      %v2376 = vsel %vm2346, %v2374, %v2375
      %v2377 = vrot.slane %v2278, 7
      %v2378 = vrot.slane %v2281, 7
      %v2379 = vsel %vm2346, %v2377, %v2378
      %v2380 = vrot.slane %v2284, 7
      %v2381 = vrot.slane %v2287, 7
      %v2382 = vsel %vm2346, %v2380, %v2381
      %v2383 = vrot.slane %v2290, 7
      %v2384 = vrot.slane %v2293, 7
      %v2385 = vsel %vm2346, %v2383, %v2384
      %v2386 = vrot.slane %v2296, 7
      %v2387 = vrot.slane %v2299, 7
      %v2388 = vsel %vm2346, %v2386, %v2387
      %v2389 = vrot.slane %v2302, 7
      %v2390 = vrot.slane %v2305, 7
      %v2391 = vsel %vm2346, %v2389, %v2390
      %v2392 = vrot.slane %v2308, 7
      %v2393 = vrot.slane %v2311, 7
      %v2394 = vsel %vm2346, %v2392, %v2393
      %v2427 = vsel %vm2346, 0.0, %v2347
      %v2428 = vsel %vm2346, 0.0, %v2350
      %v2429 = vsel %vm2346, 0.0, %v2353
      %v2430 = vsel %vm2346, 0.0, %v2356
      %v2431 = vsel %vm2346, 0.0, %v2359
      %v2432 = vsel %vm2346, 0.0, %v2362
      %v2433 = vsel %vm2346, 0.0, %v2365
      %v2434 = vsel %vm2346, 0.0, %v2368
      %v2435 = vsel %vm2346, 0.0, %v2371
      %v2436 = vsel %vm2346, 0.0, %v2374
      %v2437 = vsel %vm2346, 0.0, %v2377
      %v2438 = vsel %vm2346, 0.0, %v2380
      %v2439 = vsel %vm2346, 0.0, %v2383
      %v2440 = vsel %vm2346, 0.0, %v2386
      %v2441 = vsel %vm2346, 0.0, %v2389
      %v2442 = vsel %vm2346, 0.0, %v2392
      %v2443 = vadd.f32 %v2219, %v2427
      %v2444 = vadd.f32 %v2222, %v2349
      %v2445 = vadd.f32 %v2225, %v2428
      %v2446 = vadd.f32 %v2228, %v2352
      %v2447 = vadd.f32 %v2231, %v2429
      %v2448 = vadd.f32 %v2234, %v2355
      %v2449 = vadd.f32 %v2237, %v2430
      %v2450 = vadd.f32 %v2240, %v2358
      %v2451 = vadd.f32 %v2243, %v2431
      %v2452 = vadd.f32 %v2246, %v2361
      %v2453 = vadd.f32 %v2249, %v2432
      %v2454 = vadd.f32 %v2252, %v2364
      %v2455 = vadd.f32 %v2255, %v2433
      %v2456 = vadd.f32 %v2258, %v2367
      %v2457 = vadd.f32 %v2261, %v2434
      %v2458 = vadd.f32 %v2264, %v2370
      %v2459 = vadd.f32 %v2267, %v2435
      %v2460 = vadd.f32 %v2270, %v2373
      %v2461 = vadd.f32 %v2273, %v2436
      %v2462 = vadd.f32 %v2276, %v2376
      %v2463 = vadd.f32 %v2279, %v2437
      %v2464 = vadd.f32 %v2282, %v2379
      %v2465 = vadd.f32 %v2285, %v2438
      %v2466 = vadd.f32 %v2288, %v2382
      %v2467 = vadd.f32 %v2291, %v2439
      %v2468 = vadd.f32 %v2294, %v2385
      %v2469 = vadd.f32 %v2297, %v2440
      %v2470 = vadd.f32 %v2300, %v2388
      %v2471 = vadd.f32 %v2303, %v2441
      %v2472 = vadd.f32 %v2306, %v2391
      %v2473 = vadd.f32 %v2309, %v2442
      %v2474 = vadd.f32 %v2312, %v2394
      %vm2507 = vcmask 1046528
      %v2508 = vrot.slane %v2220, 1
      %v2509 = vrot.slane %v2223, 1
      %v2510 = vsel %vm2507, %v2508, %v2509
      %v2511 = vrot.slane %v2226, 1
      %v2512 = vrot.slane %v2229, 1
      %v2513 = vsel %vm2507, %v2511, %v2512
      %v2514 = vrot.slane %v2232, 1
      %v2515 = vrot.slane %v2235, 1
      %v2516 = vsel %vm2507, %v2514, %v2515
      %v2517 = vrot.slane %v2238, 1
      %v2518 = vrot.slane %v2241, 1
      %v2519 = vsel %vm2507, %v2517, %v2518
      %v2520 = vrot.slane %v2244, 1
      %v2521 = vrot.slane %v2247, 1
      %v2522 = vsel %vm2507, %v2520, %v2521
      %v2523 = vrot.slane %v2250, 1
      %v2524 = vrot.slane %v2253, 1
      %v2525 = vsel %vm2507, %v2523, %v2524
      %v2526 = vrot.slane %v2256, 1
      %v2527 = vrot.slane %v2259, 1
      %v2528 = vsel %vm2507, %v2526, %v2527
      %v2529 = vrot.slane %v2262, 1
      %v2530 = vrot.slane %v2265, 1
      %v2531 = vsel %vm2507, %v2529, %v2530
      %v2532 = vrot.slane %v2268, 1
      %v2533 = vrot.slane %v2271, 1
      %v2534 = vsel %vm2507, %v2532, %v2533
      %v2535 = vrot.slane %v2274, 1
      %v2536 = vrot.slane %v2277, 1
      %v2537 = vsel %vm2507, %v2535, %v2536
      %v2538 = vrot.slane %v2280, 1
      %v2539 = vrot.slane %v2283, 1
      %v2540 = vsel %vm2507, %v2538, %v2539
      %v2541 = vrot.slane %v2286, 1
      %v2542 = vrot.slane %v2289, 1
      %v2543 = vsel %vm2507, %v2541, %v2542
      %v2544 = vrot.slane %v2292, 1
      %v2545 = vrot.slane %v2295, 1
      %v2546 = vsel %vm2507, %v2544, %v2545
      %v2547 = vrot.slane %v2298, 1
      %v2548 = vrot.slane %v2301, 1
      %v2549 = vsel %vm2507, %v2547, %v2548
      %v2550 = vrot.slane %v2304, 1
      %v2551 = vrot.slane %v2307, 1
      %v2552 = vsel %vm2507, %v2550, %v2551
      %v2553 = vrot.slane %v2310, 1
      %v2554 = vrot.slane %v2313, 1
      %v2555 = vsel %vm2507, %v2553, %v2554
      %v2588 = vsel %vm2507, %v2509, 0.0
      %v2589 = vsel %vm2507, %v2512, 0.0
      %v2590 = vsel %vm2507, %v2515, 0.0
      %v2591 = vsel %vm2507, %v2518, 0.0
      %v2592 = vsel %vm2507, %v2521, 0.0
      %v2593 = vsel %vm2507, %v2524, 0.0
      %v2594 = vsel %vm2507, %v2527, 0.0
      %v2595 = vsel %vm2507, %v2530, 0.0
      %v2596 = vsel %vm2507, %v2533, 0.0
      %v2597 = vsel %vm2507, %v2536, 0.0
      %v2598 = vsel %vm2507, %v2539, 0.0
      %v2599 = vsel %vm2507, %v2542, 0.0
      %v2600 = vsel %vm2507, %v2545, 0.0
      %v2601 = vsel %vm2507, %v2548, 0.0
      %v2602 = vsel %vm2507, %v2551, 0.0
      %v2603 = vsel %vm2507, %v2554, 0.0
      %v2604 = vadd.f32 %v2443, %v2510
      %v2605 = vadd.f32 %v2444, %v2588
      %v2606 = vadd.f32 %v2445, %v2513
      %v2607 = vadd.f32 %v2446, %v2589
      %v2608 = vadd.f32 %v2447, %v2516
      %v2609 = vadd.f32 %v2448, %v2590
      %v2610 = vadd.f32 %v2449, %v2519
      %v2611 = vadd.f32 %v2450, %v2591
      %v2612 = vadd.f32 %v2451, %v2522
      %v2613 = vadd.f32 %v2452, %v2592
      %v2614 = vadd.f32 %v2453, %v2525
      %v2615 = vadd.f32 %v2454, %v2593
      %v2616 = vadd.f32 %v2455, %v2528
      %v2617 = vadd.f32 %v2456, %v2594
      %v2618 = vadd.f32 %v2457, %v2531
      %v2619 = vadd.f32 %v2458, %v2595
      %v2620 = vadd.f32 %v2459, %v2534
      %v2621 = vadd.f32 %v2460, %v2596
      %v2622 = vadd.f32 %v2461, %v2537
      %v2623 = vadd.f32 %v2462, %v2597
      %v2624 = vadd.f32 %v2463, %v2540
      %v2625 = vadd.f32 %v2464, %v2598
      %v2626 = vadd.f32 %v2465, %v2543
      %v2627 = vadd.f32 %v2466, %v2599
      %v2628 = vadd.f32 %v2467, %v2546
      %v2629 = vadd.f32 %v2468, %v2600
      %v2630 = vadd.f32 %v2469, %v2549
      %v2631 = vadd.f32 %v2470, %v2601
      %v2632 = vadd.f32 %v2471, %v2552
      %v2633 = vadd.f32 %v2472, %v2602
      %v2634 = vadd.f32 %v2473, %v2555
      %v2635 = vadd.f32 %v2474, %v2603
      %2636 = vst [vmem:[%s316] sm:$0xff] %v2604
      %2637 = vst [vmem:[%s316 + $0x8] sm:$0xff] %v2605
      %2638 = vst [vmem:[%s316 + $0x10] sm:$0xff] %v2606
      %2639 = vst [vmem:[%s316 + $0x18] sm:$0xff] %v2607
      %2640 = vst [vmem:[%s316 + $0x20] sm:$0xff] %v2608
      %2641 = vst [vmem:[%s316 + $0x28] sm:$0xff] %v2609
      %2642 = vst [vmem:[%s316 + $0x30] sm:$0xff] %v2610
      %2643 = vst [vmem:[%s316 + $0x38] sm:$0xff] %v2611
      %2644 = vst [vmem:[%s316 + $0x40] sm:$0xff] %v2612
      %2645 = vst [vmem:[%s316 + $0x48] sm:$0xff] %v2613
      %2646 = vst [vmem:[%s316 + $0x50] sm:$0xff] %v2614
      %2647 = vst [vmem:[%s316 + $0x58] sm:$0xff] %v2615
      %2648 = vst [vmem:[%s316 + $0x60] sm:$0xff] %v2616
      %2649 = vst [vmem:[%s316 + $0x68] sm:$0xff] %v2617
      %2650 = vst [vmem:[%s316 + $0x70] sm:$0xff] %v2618
      %2651 = vst [vmem:[%s316 + $0x78] sm:$0xff] %v2619
      %2652 = vst [vmem:[%s316 + $0x80] sm:$0xff] %v2620
      %2653 = vst [vmem:[%s316 + $0x88] sm:$0xff] %v2621
      %2654 = vst [vmem:[%s316 + $0x90] sm:$0xff] %v2622
      %2655 = vst [vmem:[%s316 + $0x98] sm:$0xff] %v2623
      %2656 = vst [vmem:[%s316 + $0xa0] sm:$0xff] %v2624
      %2657 = vst [vmem:[%s316 + $0xa8] sm:$0xff] %v2625
      %2658 = vst [vmem:[%s316 + $0xb0] sm:$0xff] %v2626
      %2659 = vst [vmem:[%s316 + $0xb8] sm:$0xff] %v2627
      %2660 = vst [vmem:[%s316 + $0xc0] sm:$0xff] %v2628
      %2661 = vst [vmem:[%s316 + $0xc8] sm:$0xff] %v2629
      %2662 = vst [vmem:[%s316 + $0xd0] sm:$0xff] %v2630
      %2663 = vst [vmem:[%s316 + $0xd8] sm:$0xff] %v2631
      %2664 = vst [vmem:[%s316 + $0xe0] sm:$0xff] %v2632
      %2665 = vst [vmem:[%s316 + $0xe8] sm:$0xff] %v2633
      %2666 = vst [vmem:[%s316 + $0xf0] sm:$0xff] %v2634
      %2667 = vst [vmem:[%s316 + $0xf8] sm:$0xff] %v2635
      %v2668 = vadd.f32 %v2604, %v2605
      %v2669 = vadd.f32 %v2668, %v2606
      %v2670 = vadd.f32 %v2669, %v2607
      %v2671 = vadd.f32 %v2670, %v2608
      %v2672 = vadd.f32 %v2671, %v2609
      %v2673 = vadd.f32 %v2672, %v2610
      %v2674 = vadd.f32 %v2673, %v2611
      %v2675 = vadd.f32 %v2674, %v2612
      %v2676 = vadd.f32 %v2675, %v2613
      %v2677 = vadd.f32 %v2676, %v2614
      %v2678 = vadd.f32 %v2677, %v2615
      %v2679 = vadd.f32 %v2678, %v2616
      %v2680 = vadd.f32 %v2679, %v2617
      %v2681 = vadd.f32 %v2680, %v2618
      %v2682 = vadd.f32 %v2681, %v2619
      %v2683 = vadd.f32 %v2682, %v2620
      %v2684 = vadd.f32 %v2683, %v2621
      %v2685 = vadd.f32 %v2684, %v2622
      %v2686 = vadd.f32 %v2685, %v2623
      %v2687 = vadd.f32 %v2686, %v2624
      %v2688 = vadd.f32 %v2687, %v2625
      %v2689 = vadd.f32 %v2688, %v2626
      %v2690 = vadd.f32 %v2689, %v2627
      %v2691 = vadd.f32 %v2690, %v2628
      %v2692 = vadd.f32 %v2691, %v2629
      %v2693 = vadd.f32 %v2692, %v2630
      %v2694 = vadd.f32 %v2693, %v2631
      %v2695 = vadd.f32 %v2694, %v2632
      %v2696 = vadd.f32 %v2695, %v2633
      %v2697 = vadd.f32 %v2696, %v2634
      %v2698 = vadd.f32 %v2697, %v2635
      %v2699 = vrot.slane %v2698, 4
      %v2700 = vadd.f32 %v2698, %v2699
      %v2701 = vrot.slane %v2700, 2
      %v2702 = vadd.f32 %v2700, %v2701
      %v2703 = vrot.slane %v2702, 1
      %v2704 = vadd.f32 %v2702, %v2703
      %2705 = vst [vmem:[%s323] sm:$0x1] %v2704
      %v2706 = vmul.f32 %v2604, %v2604
      %v2707 = vmul.f32 %v2605, %v2605
      %v2708 = vmul.f32 %v2606, %v2606
      %v2709 = vmul.f32 %v2607, %v2607
      %v2710 = vmul.f32 %v2608, %v2608
      %v2711 = vmul.f32 %v2609, %v2609
      %v2712 = vmul.f32 %v2610, %v2610
      %v2713 = vmul.f32 %v2611, %v2611
      %v2714 = vmul.f32 %v2612, %v2612
      %v2715 = vmul.f32 %v2613, %v2613
      %v2716 = vmul.f32 %v2614, %v2614
      %v2717 = vmul.f32 %v2615, %v2615
      %v2718 = vmul.f32 %v2616, %v2616
      %v2719 = vmul.f32 %v2617, %v2617
      %v2720 = vmul.f32 %v2618, %v2618
      %v2721 = vmul.f32 %v2619, %v2619
      %v2722 = vmul.f32 %v2620, %v2620
      %v2723 = vmul.f32 %v2621, %v2621
      %v2724 = vmul.f32 %v2622, %v2622
      %v2725 = vmul.f32 %v2623, %v2623
      %v2726 = vmul.f32 %v2624, %v2624
      %v2727 = vmul.f32 %v2625, %v2625
      %v2728 = vmul.f32 %v2626, %v2626
      %v2729 = vmul.f32 %v2627, %v2627
      %v2730 = vmul.f32 %v2628, %v2628
      %v2731 = vmul.f32 %v2629, %v2629
      %v2732 = vmul.f32 %v2630, %v2630
      %v2733 = vmul.f32 %v2631, %v2631
      %v2734 = vmul.f32 %v2632, %v2632
      %v2735 = vmul.f32 %v2633, %v2633
      %v2736 = vmul.f32 %v2634, %v2634
      %v2737 = vmul.f32 %v2635, %v2635
      %v2738 = vadd.f32 %v2706, %v2707
      %v2739 = vadd.f32 %v2738, %v2708
      %v2740 = vadd.f32 %v2739, %v2709
      %v2741 = vadd.f32 %v2740, %v2710
      %v2742 = vadd.f32 %v2741, %v2711
      %v2743 = vadd.f32 %v2742, %v2712
      %v2744 = vadd.f32 %v2743, %v2713
      %v2745 = vadd.f32 %v2744, %v2714
      %v2746 = vadd.f32 %v2745, %v2715
      %v2747 = vadd.f32 %v2746, %v2716
      %v2748 = vadd.f32 %v2747, %v2717
      %v2749 = vadd.f32 %v2748, %v2718
      %v2750 = vadd.f32 %v2749, %v2719
      %v2751 = vadd.f32 %v2750, %v2720
      %v2752 = vadd.f32 %v2751, %v2721
      %v2753 = vadd.f32 %v2752, %v2722
      %v2754 = vadd.f32 %v2753, %v2723
      %v2755 = vadd.f32 %v2754, %v2724
      %v2756 = vadd.f32 %v2755, %v2725
      %v2757 = vadd.f32 %v2756, %v2726
      %v2758 = vadd.f32 %v2757, %v2727
      %v2759 = vadd.f32 %v2758, %v2728
      %v2760 = vadd.f32 %v2759, %v2729
      %v2761 = vadd.f32 %v2760, %v2730
      %v2762 = vadd.f32 %v2761, %v2731
      %v2763 = vadd.f32 %v2762, %v2732
      %v2764 = vadd.f32 %v2763, %v2733
      %v2765 = vadd.f32 %v2764, %v2734
      %v2766 = vadd.f32 %v2765, %v2735
      %v2767 = vadd.f32 %v2766, %v2736
      %v2768 = vadd.f32 %v2767, %v2737
      %v2769 = vrot.slane %v2768, 4
      %v2770 = vadd.f32 %v2768, %v2769
      %v2771 = vrot.slane %v2770, 2
      %v2772 = vadd.f32 %v2770, %v2771
      %v2773 = vrot.slane %v2772, 1
      %v2774 = vadd.f32 %v2772, %v2773
      %2775 = vst [vmem:[%s329] sm:$0x1] %v2774
      %s2776 = smul.u32 16, %s24
      %p2777 = scmp.lt.s32.totalorder %s23, 1
      %s2778 = scalar_select %p2777, %s23, 1
      %p2779 = scmp.lt.s32.totalorder %s2776, 15
      %s2780 = scalar_select %p2779, %s2776, 15
      %s2781 = smul.addr %s2780, 2
      %s2782 = smul.addr %s2778, 32
      %s2783 = sadd.s32 %s2781, %s2782
      %s2784 = smul.addr %s2783, 8
      %s2785 = scalar_lea.vmem %s5, %s2784
      %p2786 = scmp.lt.s32.totalorder %s23, 1
      %s2787 = scalar_select %p2786, %s23, 1
      %p2788 = scmp.lt.s32.totalorder %s24, 0
      %s2789 = scalar_select %p2788, %s24, 0
      %s2790 = sadd.s32 %s2789, %s2787
      %s2791 = scalar_lea.vmem %s6, %s2790
      %p2792 = scmp.lt.s32.totalorder %s23, 1
      %s2793 = scalar_select %p2792, %s23, 1
      %p2794 = scmp.lt.s32.totalorder %s24, 0
      %s2795 = scalar_select %p2794, %s24, 0
      %s2796 = sadd.s32 %s2795, %s2793
      %s2797 = scalar_lea.vmem %s7, %s2796
      // Predicated region
      $region121: #{double_conv.4} parent=35 // pred_check
        %p2798 = pneg %p142
      $region122: #{double_conv.4} parent=35 // pred_check_branch
        %2800 = sbr.rel (%p2798) target = $region124
      $region123: #{double_conv.4} parent=35 // pred_region
        %s2801 = smul.u32 16, %s24
      $region124: #{double_conv.4} parent=35 // pred_fallthru
        _
      // Predicated region
      $region125: #{double_conv.4} parent=35 // pred_check
        %p2802 = pneg %p170
      $region126: #{double_conv.4} parent=35 // pred_check_branch
        %2804 = sbr.rel (%p2802) target = $region128
      $region127: #{double_conv.4} parent=35 // pred_region
        _
      $region128: #{double_conv.4} parent=35 // pred_fallthru
        _
      // Predicated region
      $region129: #{double_conv.4} parent=35 // pred_check
        %p2805 = pneg %p198
      $region130: #{double_conv.4} parent=35 // pred_check_branch
        %2807 = sbr.rel (%p2805) target = $region132
      $region131: #{double_conv.4} parent=35 // pred_region
        _
      $region132: #{double_conv.4} parent=35 // pred_fallthru
        _
    $region36: #{double_conv.4} parent=5 // pred_fallthru
      _
    %p2808 = scmp.le.s32.totalorder 2, %s14
    // Predicated region
    $region133: #{double_conv.4} parent=5 // pred_check
      %p2809 = pneg %p2808
    $region134: #{double_conv.4} parent=5 // pred_check_branch
      %2811 = sbr.rel (%p2809) target = $region136
    $region135: #{double_conv.4} parent=5 // pred_region
      %s2812 = ssub.s32 %s14, 2
      // Predicated region
      $region137: #{double_conv.4} parent=135 // pred_check
        %p2813 = pneg %p148
      $region138: #{double_conv.4} parent=135 // pred_check_branch
        %2815 = sbr.rel (%p2813) target = $region140
      $region139: #{double_conv.4} parent=135 // pred_region
        %s2816 = smul.u32 16, %s26
        %p2817 = scmp.lt.s32.totalorder %s25, 1
        %s2818 = scalar_select %p2817, %s25, 1
        %p2819 = scmp.lt.s32.totalorder %s2816, 15
        %s2820 = scalar_select %p2819, %s2816, 15
        %s2821 = smul.addr %s2820, 2
        %s2822 = smul.addr %s2818, 32
        %s2823 = sadd.s32 %s2821, %s2822
        %s2824 = smul.addr %s2823, 8
        %s2825 = scalar_lea.vmem %s5, %s2824
      $region140: #{double_conv.4} parent=135 // pred_fallthru
        _
      // Predicated region
      $region141: #{double_conv.4} parent=135 // pred_check
        %p2826 = pneg %p176
      $region142: #{double_conv.4} parent=135 // pred_check_branch
        %2828 = sbr.rel (%p2826) target = $region144
      $region143: #{double_conv.4} parent=135 // pred_region
        %p2829 = scmp.lt.s32.totalorder %s25, 1
        %s2830 = scalar_select %p2829, %s25, 1
        %p2831 = scmp.lt.s32.totalorder %s26, 0
        %s2832 = scalar_select %p2831, %s26, 0
        %s2833 = sadd.s32 %s2832, %s2830
        %s2834 = scalar_lea.vmem %s6, %s2833
      $region144: #{double_conv.4} parent=135 // pred_fallthru
        _
      // Predicated region
      $region145: #{double_conv.4} parent=135 // pred_check
        %p2835 = pneg %p204
      $region146: #{double_conv.4} parent=135 // pred_check_branch
        %2837 = sbr.rel (%p2835) target = $region148
      $region147: #{double_conv.4} parent=135 // pred_region
        %p2838 = scmp.lt.s32.totalorder %s25, 1
        %s2839 = scalar_select %p2838, %s25, 1
        %p2840 = scmp.lt.s32.totalorder %s26, 0
        %s2841 = scalar_select %p2840, %s26, 0
        %s2842 = sadd.s32 %s2841, %s2839
        %s2843 = scalar_lea.vmem %s7, %s2842
      $region148: #{double_conv.4} parent=135 // pred_fallthru
        _
    $region136: #{double_conv.4} parent=5 // pred_fallthru
      _
  $region6: #{double_conv.4} parent=0 // loop_footer
    %s18 = sadd.s32 1, %s14
  $region7: #{double_conv.4} parent=0 // loop_footer_branch
    %13 = sbr.rel target = $region3
  $region8: #{double_conv.4} parent=0 // loop_exit
    _
  %2844 = vsyncmov [#allocation3]
  %s2845 = vpop.sfrf %2844
  %p2846 = scmp.eq.s32.totalorder %s2845, 0
  %p2847 = pneg %p2846
  %2849 = shalt.err (%p2847)
  %s2850 = scalar_lea.sflag [#allocation3], 1
  %2851 = vsyncmov %s2850
  %s2852 = vpop.sfrf %2851
  %p2853 = scmp.eq.s32.totalorder %s2852, 0
  %p2854 = pneg %p2853
  %2856 = shalt.err (%p2854)

</llo_original>
